<compile_context>
chip_gen: v7x
topology: tpu7x:2x2x1
jax: 0.10.0
libtpu: 0.0.40
codegen_flags: <defaults>
</compile_context>

<pallas_src>
import functools

import jax
import jax.numpy as jnp
from jax import lax
from jax.experimental import pallas as pl
from jax.experimental.pallas import tpu as pltpu


def _espcn_kernel(x_ref, w1_ref, b1_ref, w2_ref, b2_ref, w3_ref, b3_ref,
                  o_ref, a1_ref, a2_ref, *, H, W, th):
    # x_ref : (1, 1, th+8, W+4, 1) f32   input row slab (pre-padded 4 rows / 2 cols)
    # w1_ref: (25, 1, 64) f32            w2_ref: (9, 64, 32) bf16   w3_ref: (9, 32, 4) bf16
    # b*_ref: (1, C) f32
    # o_ref : (1, th, W, 4) f32          conv3 output tile (pixel-shuffled in wrapper)
    # a1_ref: (th+4, W+2, 64) bf16       conv1 output scratch (+ zero cols = conv2 pad)
    # a2_ref: (th+2, W+2, 32) bf16       conv2 output scratch (+ zero cols = conv3 pad)
    r0 = pl.program_id(1) * th            # first image row covered by this tile
    H1, H2, H3 = th + 4, th + 2, th       # rows produced by conv1 / conv2 / conv3

    x3 = x_ref[0, 0]                      # (th+8, W+4, 1)

    # ---- conv1: 5x5, 1 -> 64 channels. K=1 makes the MXU useless; use VPU broadcast-FMA.
    acc1 = jnp.zeros((H1 * W, 64), jnp.float32)
    for di in range(5):
        for dj in range(5):
            col = x3[di:di + H1, dj:dj + W, :].reshape(H1 * W, 1)
            acc1 = acc1 + col * w1_ref[di * 5 + dj]          # (M,1)*(1,64) -> (M,64)
    a1 = jnp.tanh(acc1 + b1_ref[...]).reshape(H1, W, 64)
    # conv1-output rows outside the image are conv2's zero padding -> mask them to 0
    rows1 = r0 - 2 + lax.broadcasted_iota(jnp.int32, (H1, W, 64), 0)
    a1 = jnp.where((rows1 >= 0) & (rows1 < H), a1, 0.0).astype(jnp.bfloat16)
    a1_ref[:, 1:W + 1, :] = a1
    zc1 = jnp.zeros((H1, 1, 64), jnp.bfloat16)
    a1_ref[:, 0:1, :] = zc1               # zero border columns = conv2 "same" W padding
    a1_ref[:, W + 1:W + 2, :] = zc1

    # ---- conv2: 3x3, 64 -> 32.  Per-tap bf16 MXU matmuls, f32 accumulation.
    acc2 = jnp.zeros((H2 * W, 32), jnp.float32)
    for di in range(3):
        for dj in range(3):
            p = a1_ref[di:di + H2, dj:dj + W, :].reshape(H2 * W, 64)
            acc2 = acc2 + jnp.dot(p, w2_ref[di * 3 + dj],
                                  preferred_element_type=jnp.float32)
    a2 = jnp.tanh(acc2 + b2_ref[...]).reshape(H2, W, 32)
    rows2 = r0 - 1 + lax.broadcasted_iota(jnp.int32, (H2, W, 32), 0)
    a2 = jnp.where((rows2 >= 0) & (rows2 < H), a2, 0.0).astype(jnp.bfloat16)
    a2_ref[:, 1:W + 1, :] = a2
    zc2 = jnp.zeros((H2, 1, 32), jnp.bfloat16)
    a2_ref[:, 0:1, :] = zc2
    a2_ref[:, W + 1:W + 2, :] = zc2

    # ---- conv3: 3x3, 32 -> 4 (the r*r sub-pixel channels), bf16 MXU, f32 accumulation.
    acc3 = jnp.zeros((H3 * W, 4), jnp.float32)
    for di in range(3):
        for dj in range(3):
            p = a2_ref[di:di + H3, dj:dj + W, :].reshape(H3 * W, 32)
            acc3 = acc3 + jnp.dot(p, w3_ref[di * 3 + dj],
                                  preferred_element_type=jnp.float32)
    acc3 = acc3 + b3_ref[...]
    # NOTE: a further optimization would emit the pixel-shuffled (th, 2, 2W) layout here
    # for fully lane-dense stores; kept as (th, W, 4) + XLA shuffle for robustness.
    o_ref[0] = acc3.reshape(H3, W, 4).astype(o_ref.dtype)


def _pick_tile_h(H, W, budget_bytes=6 * 1024 * 1024):
    # rough per-output-row VMEM cost of one fused tile (double-buffered in/out blocks,
    # bf16 64/32-ch scratch, incl. 128-lane padding of the 1-/4-channel buffers)
    per_row = 2560 * (W + 16)
    cap = max(8, budget_bytes // per_row)
    if H <= cap:
        return H
    for th in range(int(cap), 0, -1):
        if H % th == 0:
            return th
    return H


def pixel_shuffle_nchw(x, r):
    # PyTorch pixel_shuffle: (N, C*r*r, H, W) -> (N, C, H*r, W*r)
    N, C, H, W = x.shape
    Cout = C // (r * r)
    x = x.reshape(N, Cout, r, r, H, W)
    x = jnp.transpose(x, (0, 1, 4, 2, 5, 3))
    return x.reshape(N, Cout, H * r, W * r)


def espcn_forward(x_nchw, params, tile_h=None):
    N, Cin, H, W = x_nchw.shape
    assert Cin == 1
    th = _pick_tile_h(H, W) if tile_h is None else int(tile_h)
    if H % th != 0:
        th = H
    n_t = H // th

    # Pre-pad the cheap single-channel input once: 2 cols (conv1 "same") and 4 rows
    # (conv1 pad 2 + halo 1+1 for the fused 3x3 convs), then cut overlapping row slabs
    # so every grid step gets its halo through a plain BlockSpec DMA.
    xp = jnp.pad(x_nchw[:, 0], ((0, 0), (4, 4), (2, 2)))               # (N, H+8, W+4)
    x_tiles = jnp.stack([xp[:, t * th:t * th + th + 8, :] for t in range(n_t)],
                        axis=1)[..., None]                             # (N, n_t, th+8, W+4, 1)

    # Weights: OIHW -> (KH*KW, Cin, Cout); conv1 has Cin=1 -> (25, 1, 64).
    w1 = jnp.transpose(params["w1"][:, 0], (1, 2, 0)).reshape(25, 1, 64).astype(jnp.float32)
    w2 = jnp.transpose(params["w2"], (2, 3, 1, 0)).reshape(9, 64, 32).astype(jnp.bfloat16)
    w3 = jnp.transpose(params["w3"], (2, 3, 1, 0)).reshape(9, 32, 4).astype(jnp.bfloat16)
    b1 = params["b1"].reshape(1, 64).astype(jnp.float32)
    b2 = params["b2"].reshape(1, 32).astype(jnp.float32)
    b3 = params["b3"].reshape(1, 4).astype(jnp.float32)

    kernel = functools.partial(_espcn_kernel, H=H, W=W, th=th)
    y = pl.pallas_call(
        kernel,
        out_shape=jax.ShapeDtypeStruct((N, H, W, 4), jnp.float32),
        grid_spec=pltpu.PrefetchScalarGridSpec(
            num_scalar_prefetch=0,
            grid=(N, n_t),
            in_specs=[
                pl.BlockSpec((1, 1, th + 8, W + 4, 1), lambda n, t: (n, t, 0, 0, 0)),
                pl.BlockSpec((25, 1, 64), lambda n, t: (0, 0, 0)),
                pl.BlockSpec((1, 64), lambda n, t: (0, 0)),
                pl.BlockSpec((9, 64, 32), lambda n, t: (0, 0, 0)),
                pl.BlockSpec((1, 32), lambda n, t: (0, 0)),
                pl.BlockSpec((9, 32, 4), lambda n, t: (0, 0, 0)),
                pl.BlockSpec((1, 4), lambda n, t: (0, 0)),
            ],
            out_specs=pl.BlockSpec((1, th, W, 4), lambda n, t: (n, t, 0, 0)),
            scratch_shapes=[
                pltpu.VMEM((th + 4, W + 2, 64), jnp.bfloat16),   # conv1 activations
                pltpu.VMEM((th + 2, W + 2, 32), jnp.bfloat16),   # conv2 activations
            ]),
        compiler_params=pltpu.CompilerParams(
            dimension_semantics=("parallel", "parallel"),
            vmem_limit_bytes=32 * 1024 * 1024),
    )(x_tiles.astype(jnp.float32), w1, b1, w2, b2, w3, b3)

    # (N, H, W, 4) -> NCHW -> pixel_shuffle(r=2) -> (N, 1, 2H, 2W)
    return pixel_shuffle_nchw(jnp.transpose(y, (0, 3, 1, 2)), 2)


def init_params(key):
    k1, k2, k3, k4, k5, k6 = jax.random.split(key, 6)
    return {
        "w1": 0.1 * jax.random.normal(k1, (64, 1, 5, 5), jnp.float32),
        "b1": 0.1 * jax.random.normal(k2, (64,), jnp.float32),
        "w2": 0.1 * jax.random.normal(k3, (32, 64, 3, 3), jnp.float32),
        "b2": 0.1 * jax.random.normal(k4, (32,), jnp.float32),
        "w3": 0.1 * jax.random.normal(k5, (4, 32, 3, 3), jnp.float32),
        "b3": 0.1 * jax.random.normal(k6, (4,), jnp.float32),
    }


# ---------------- pure-JAX references ----------------
def _conv_same_nhwc(x, w_oihw, b):
    w_hwio = jnp.transpose(w_oihw, (2, 3, 1, 0))
    y = lax.conv_general_dilated(x, w_hwio, (1, 1), "SAME",
                                 dimension_numbers=("NHWC", "HWIO", "NHWC"))
    return y + b[None, None, None, :]


def _espcn_ref(x_nchw, params, mixed=False):
    # mixed=True mirrors the kernel's precision: conv2/conv3 inputs rounded to bf16,
    # all accumulation / bias / tanh in f32.  mixed=False is the pure-f32 PyTorch model.
    q = (lambda v: v.astype(jnp.bfloat16).astype(jnp.float32)) if mixed else (lambda v: v)
    x = jnp.transpose(x_nchw, (0, 2, 3, 1))
    a1 = jnp.tanh(_conv_same_nhwc(x, params["w1"], params["b1"]))
    a2 = jnp.tanh(_conv_same_nhwc(q(a1), q(params["w2"]), params["b2"]))
    a3 = _conv_same_nhwc(q(a2), q(params["w3"]), params["b3"])
    return pixel_shuffle_nchw(jnp.transpose(a3, (0, 3, 1, 2)), 2)


if __name__ == "__main__":
    key = jax.random.PRNGKey(0)
    kx, kp = jax.random.split(key)
    # ESPCN input is single-channel NCHW; small spatial size for the demo.
    x = jax.random.normal(kx, (2, 1, 16, 16), jnp.float32)
    params = init_params(kp)

    # tile_h=8 (< H) exercises the spatial-tiling / halo / masking path.
    fwd = jax.jit(functools.partial(espcn_forward, tile_h=8))
    out = jax.block_until_ready(fwd(x, params))
    assert out.shape == (2, 1, 32, 32), out.shape

    ref_mixed = _espcn_ref(x, params, mixed=True)    # same bf16/f32 mix as the kernel
    ref_f32 = _espcn_ref(x, params, mixed=False)     # pure-f32 PyTorch-equivalent
    err_mixed = float(jnp.max(jnp.abs(out - ref_mixed)))
    err_f32 = float(jnp.max(jnp.abs(out - ref_f32)))
    assert err_mixed < 1e-2, f"mixed-precision ref mismatch: {err_mixed}"
    assert err_f32 < 1e-1, f"f32 ref mismatch: {err_f32}"
    print("KERNEL_OK")
</pallas_src>

<mosaic_0001>
module attributes {stable_mosaic.version = 11 : i64} {
  func.func @_espcn_kernel(%arg0: i32, %arg1: i32, %arg2: memref<1x1x16x20x1xf32, #tpu.memory_space<vmem>>, %arg3: memref<25x1x64xf32, #tpu.memory_space<vmem>>, %arg4: memref<1x64xf32, #tpu.memory_space<vmem>>, %arg5: memref<9x64x32xbf16, #tpu.memory_space<vmem>>, %arg6: memref<1x32xf32, #tpu.memory_space<vmem>>, %arg7: memref<9x32x4xbf16, #tpu.memory_space<vmem>>, %arg8: memref<1x4xf32, #tpu.memory_space<vmem>>, %arg9: memref<1x8x16x4xf32, #tpu.memory_space<vmem>>, %arg10: memref<12x18x64xbf16, #tpu.memory_space<vmem>>, %arg11: memref<10x18x32xbf16, #tpu.memory_space<vmem>>) attributes {dimension_semantics = [#tpu.dimension_semantics<parallel>, #tpu.dimension_semantics<parallel>], iteration_bounds = array<i64: 2, 2>, scalar_prefetch = 0 : i64, scratch_operands = 2 : i64, tpu.core_type = #tpu.core_type<tc>, window_params = [{transform_indices = @transform_0, window_bounds = array<i64: 1, 1, 16, 20, 1>}, {pipeline_mode = #tpu.pipeline_mode<synchronous>, transform_indices = @transform_1, window_bounds = array<i64: 25, 1, 64>}, {pipeline_mode = #tpu.pipeline_mode<synchronous>, transform_indices = @transform_2, window_bounds = array<i64: 1, 64>}, {pipeline_mode = #tpu.pipeline_mode<synchronous>, transform_indices = @transform_3, window_bounds = array<i64: 9, 64, 32>}, {pipeline_mode = #tpu.pipeline_mode<synchronous>, transform_indices = @transform_4, window_bounds = array<i64: 1, 32>}, {pipeline_mode = #tpu.pipeline_mode<synchronous>, transform_indices = @transform_5, window_bounds = array<i64: 9, 32, 4>}, {pipeline_mode = #tpu.pipeline_mode<synchronous>, transform_indices = @transform_6, window_bounds = array<i64: 1, 4>}, {transform_indices = @transform_7, window_bounds = array<i64: 1, 8, 16, 4>}]} {
    %c8_i32 = arith.constant 8 : i32
    %0 = arith.muli %arg1, %c8_i32 : i32
    %c0 = arith.constant 0 : index
    %c0_0 = arith.constant 0 : index
    %c0_1 = arith.constant 0 : index
    %c0_2 = arith.constant 0 : index
    %c0_3 = arith.constant 0 : index
    %1 = vector.load %arg2[%c0, %c0_0, %c0_1, %c0_2, %c0_3] : memref<1x1x16x20x1xf32, #tpu.memory_space<vmem>>, vector<1x1x16x20x1xf32>
    %2 = vector.shape_cast %1 : vector<1x1x16x20x1xf32> to vector<16x20x1xf32>
    %cst = arith.constant 0.000000e+00 : f32
    %3 = vector.broadcast %cst : f32 to vector<192x64xf32>
    %4 = vector.extract_strided_slice %2 {offsets = [0, 0, 0], sizes = [12, 16, 1], strides = [1, 1, 1]} : vector<16x20x1xf32> to vector<12x16x1xf32>
    %5 = vector.shape_cast %4 : vector<12x16x1xf32> to vector<192x1xf32>
    %c0_4 = arith.constant 0 : index
    %c0_5 = arith.constant 0 : index
    %c0_6 = arith.constant 0 : index
    %6 = vector.load %arg3[%c0_4, %c0_5, %c0_6] : memref<25x1x64xf32, #tpu.memory_space<vmem>>, vector<1x1x64xf32>
    %7 = vector.shape_cast %6 : vector<1x1x64xf32> to vector<1x64xf32>
    %8 = vector.broadcast %5 : vector<192x1xf32> to vector<192x64xf32>
    %9 = vector.broadcast %7 : vector<1x64xf32> to vector<192x64xf32>
    %10 = arith.mulf %8, %9 : vector<192x64xf32>
    %11 = arith.addf %3, %10 : vector<192x64xf32>
    %12 = vector.extract_strided_slice %2 {offsets = [0, 1, 0], sizes = [12, 16, 1], strides = [1, 1, 1]} : vector<16x20x1xf32> to vector<12x16x1xf32>
    %13 = vector.shape_cast %12 : vector<12x16x1xf32> to vector<192x1xf32>
    %c1 = arith.constant 1 : index
    %c0_7 = arith.constant 0 : index
    %c0_8 = arith.constant 0 : index
    %14 = vector.load %arg3[%c1, %c0_7, %c0_8] : memref<25x1x64xf32, #tpu.memory_space<vmem>>, vector<1x1x64xf32>
    %15 = vector.shape_cast %14 : vector<1x1x64xf32> to vector<1x64xf32>
    %16 = vector.broadcast %13 : vector<192x1xf32> to vector<192x64xf32>
    %17 = vector.broadcast %15 : vector<1x64xf32> to vector<192x64xf32>
    %18 = arith.mulf %16, %17 : vector<192x64xf32>
    %19 = arith.addf %11, %18 : vector<192x64xf32>
    %20 = vector.extract_strided_slice %2 {offsets = [0, 2, 0], sizes = [12, 16, 1], strides = [1, 1, 1]} : vector<16x20x1xf32> to vector<12x16x1xf32>
    %21 = vector.shape_cast %20 : vector<12x16x1xf32> to vector<192x1xf32>
    %c2 = arith.constant 2 : index
    %c0_9 = arith.constant 0 : index
    %c0_10 = arith.constant 0 : index
    %22 = vector.load %arg3[%c2, %c0_9, %c0_10] : memref<25x1x64xf32, #tpu.memory_space<vmem>>, vector<1x1x64xf32>
    %23 = vector.shape_cast %22 : vector<1x1x64xf32> to vector<1x64xf32>
    %24 = vector.broadcast %21 : vector<192x1xf32> to vector<192x64xf32>
    %25 = vector.broadcast %23 : vector<1x64xf32> to vector<192x64xf32>
    %26 = arith.mulf %24, %25 : vector<192x64xf32>
    %27 = arith.addf %19, %26 : vector<192x64xf32>
    %28 = vector.extract_strided_slice %2 {offsets = [0, 3, 0], sizes = [12, 16, 1], strides = [1, 1, 1]} : vector<16x20x1xf32> to vector<12x16x1xf32>
    %29 = vector.shape_cast %28 : vector<12x16x1xf32> to vector<192x1xf32>
    %c3 = arith.constant 3 : index
    %c0_11 = arith.constant 0 : index
    %c0_12 = arith.constant 0 : index
    %30 = vector.load %arg3[%c3, %c0_11, %c0_12] : memref<25x1x64xf32, #tpu.memory_space<vmem>>, vector<1x1x64xf32>
    %31 = vector.shape_cast %30 : vector<1x1x64xf32> to vector<1x64xf32>
    %32 = vector.broadcast %29 : vector<192x1xf32> to vector<192x64xf32>
    %33 = vector.broadcast %31 : vector<1x64xf32> to vector<192x64xf32>
    %34 = arith.mulf %32, %33 : vector<192x64xf32>
    %35 = arith.addf %27, %34 : vector<192x64xf32>
    %36 = vector.extract_strided_slice %2 {offsets = [0, 4, 0], sizes = [12, 16, 1], strides = [1, 1, 1]} : vector<16x20x1xf32> to vector<12x16x1xf32>
    %37 = vector.shape_cast %36 : vector<12x16x1xf32> to vector<192x1xf32>
    %c4 = arith.constant 4 : index
    %c0_13 = arith.constant 0 : index
    %c0_14 = arith.constant 0 : index
    %38 = vector.load %arg3[%c4, %c0_13, %c0_14] : memref<25x1x64xf32, #tpu.memory_space<vmem>>, vector<1x1x64xf32>
    %39 = vector.shape_cast %38 : vector<1x1x64xf32> to vector<1x64xf32>
    %40 = vector.broadcast %37 : vector<192x1xf32> to vector<192x64xf32>
    %41 = vector.broadcast %39 : vector<1x64xf32> to vector<192x64xf32>
    %42 = arith.mulf %40, %41 : vector<192x64xf32>
    %43 = arith.addf %35, %42 : vector<192x64xf32>
    %44 = vector.extract_strided_slice %2 {offsets = [1, 0, 0], sizes = [12, 16, 1], strides = [1, 1, 1]} : vector<16x20x1xf32> to vector<12x16x1xf32>
    %45 = vector.shape_cast %44 : vector<12x16x1xf32> to vector<192x1xf32>
    %c5 = arith.constant 5 : index
    %c0_15 = arith.constant 0 : index
    %c0_16 = arith.constant 0 : index
    %46 = vector.load %arg3[%c5, %c0_15, %c0_16] : memref<25x1x64xf32, #tpu.memory_space<vmem>>, vector<1x1x64xf32>
    %47 = vector.shape_cast %46 : vector<1x1x64xf32> to vector<1x64xf32>
    %48 = vector.broadcast %45 : vector<192x1xf32> to vector<192x64xf32>
    %49 = vector.broadcast %47 : vector<1x64xf32> to vector<192x64xf32>
    %50 = arith.mulf %48, %49 : vector<192x64xf32>
    %51 = arith.addf %43, %50 : vector<192x64xf32>
    %52 = vector.extract_strided_slice %2 {offsets = [1, 1, 0], sizes = [12, 16, 1], strides = [1, 1, 1]} : vector<16x20x1xf32> to vector<12x16x1xf32>
    %53 = vector.shape_cast %52 : vector<12x16x1xf32> to vector<192x1xf32>
    %c6 = arith.constant 6 : index
    %c0_17 = arith.constant 0 : index
    %c0_18 = arith.constant 0 : index
    %54 = vector.load %arg3[%c6, %c0_17, %c0_18] : memref<25x1x64xf32, #tpu.memory_space<vmem>>, vector<1x1x64xf32>
    %55 = vector.shape_cast %54 : vector<1x1x64xf32> to vector<1x64xf32>
    %56 = vector.broadcast %53 : vector<192x1xf32> to vector<192x64xf32>
    %57 = vector.broadcast %55 : vector<1x64xf32> to vector<192x64xf32>
    %58 = arith.mulf %56, %57 : vector<192x64xf32>
    %59 = arith.addf %51, %58 : vector<192x64xf32>
    %60 = vector.extract_strided_slice %2 {offsets = [1, 2, 0], sizes = [12, 16, 1], strides = [1, 1, 1]} : vector<16x20x1xf32> to vector<12x16x1xf32>
    %61 = vector.shape_cast %60 : vector<12x16x1xf32> to vector<192x1xf32>
    %c7 = arith.constant 7 : index
    %c0_19 = arith.constant 0 : index
    %c0_20 = arith.constant 0 : index
    %62 = vector.load %arg3[%c7, %c0_19, %c0_20] : memref<25x1x64xf32, #tpu.memory_space<vmem>>, vector<1x1x64xf32>
    %63 = vector.shape_cast %62 : vector<1x1x64xf32> to vector<1x64xf32>
    %64 = vector.broadcast %61 : vector<192x1xf32> to vector<192x64xf32>
    %65 = vector.broadcast %63 : vector<1x64xf32> to vector<192x64xf32>
    %66 = arith.mulf %64, %65 : vector<192x64xf32>
    %67 = arith.addf %59, %66 : vector<192x64xf32>
    %68 = vector.extract_strided_slice %2 {offsets = [1, 3, 0], sizes = [12, 16, 1], strides = [1, 1, 1]} : vector<16x20x1xf32> to vector<12x16x1xf32>
    %69 = vector.shape_cast %68 : vector<12x16x1xf32> to vector<192x1xf32>
    %c8 = arith.constant 8 : index
    %c0_21 = arith.constant 0 : index
    %c0_22 = arith.constant 0 : index
    %70 = vector.load %arg3[%c8, %c0_21, %c0_22] : memref<25x1x64xf32, #tpu.memory_space<vmem>>, vector<1x1x64xf32>
    %71 = vector.shape_cast %70 : vector<1x1x64xf32> to vector<1x64xf32>
    %72 = vector.broadcast %69 : vector<192x1xf32> to vector<192x64xf32>
    %73 = vector.broadcast %71 : vector<1x64xf32> to vector<192x64xf32>
    %74 = arith.mulf %72, %73 : vector<192x64xf32>
    %75 = arith.addf %67, %74 : vector<192x64xf32>
    %76 = vector.extract_strided_slice %2 {offsets = [1, 4, 0], sizes = [12, 16, 1], strides = [1, 1, 1]} : vector<16x20x1xf32> to vector<12x16x1xf32>
    %77 = vector.shape_cast %76 : vector<12x16x1xf32> to vector<192x1xf32>
    %c9 = arith.constant 9 : index
    %c0_23 = arith.constant 0 : index
    %c0_24 = arith.constant 0 : index
    %78 = vector.load %arg3[%c9, %c0_23, %c0_24] : memref<25x1x64xf32, #tpu.memory_space<vmem>>, vector<1x1x64xf32>
    %79 = vector.shape_cast %78 : vector<1x1x64xf32> to vector<1x64xf32>
    %80 = vector.broadcast %77 : vector<192x1xf32> to vector<192x64xf32>
    %81 = vector.broadcast %79 : vector<1x64xf32> to vector<192x64xf32>
    %82 = arith.mulf %80, %81 : vector<192x64xf32>
    %83 = arith.addf %75, %82 : vector<192x64xf32>
    %84 = vector.extract_strided_slice %2 {offsets = [2, 0, 0], sizes = [12, 16, 1], strides = [1, 1, 1]} : vector<16x20x1xf32> to vector<12x16x1xf32>
    %85 = vector.shape_cast %84 : vector<12x16x1xf32> to vector<192x1xf32>
    %c10 = arith.constant 10 : index
    %c0_25 = arith.constant 0 : index
    %c0_26 = arith.constant 0 : index
    %86 = vector.load %arg3[%c10, %c0_25, %c0_26] : memref<25x1x64xf32, #tpu.memory_space<vmem>>, vector<1x1x64xf32>
    %87 = vector.shape_cast %86 : vector<1x1x64xf32> to vector<1x64xf32>
    %88 = vector.broadcast %85 : vector<192x1xf32> to vector<192x64xf32>
    %89 = vector.broadcast %87 : vector<1x64xf32> to vector<192x64xf32>
    %90 = arith.mulf %88, %89 : vector<192x64xf32>
    %91 = arith.addf %83, %90 : vector<192x64xf32>
    %92 = vector.extract_strided_slice %2 {offsets = [2, 1, 0], sizes = [12, 16, 1], strides = [1, 1, 1]} : vector<16x20x1xf32> to vector<12x16x1xf32>
    %93 = vector.shape_cast %92 : vector<12x16x1xf32> to vector<192x1xf32>
    %c11 = arith.constant 11 : index
    %c0_27 = arith.constant 0 : index
    %c0_28 = arith.constant 0 : index
    %94 = vector.load %arg3[%c11, %c0_27, %c0_28] : memref<25x1x64xf32, #tpu.memory_space<vmem>>, vector<1x1x64xf32>
    %95 = vector.shape_cast %94 : vector<1x1x64xf32> to vector<1x64xf32>
    %96 = vector.broadcast %93 : vector<192x1xf32> to vector<192x64xf32>
    %97 = vector.broadcast %95 : vector<1x64xf32> to vector<192x64xf32>
    %98 = arith.mulf %96, %97 : vector<192x64xf32>
    %99 = arith.addf %91, %98 : vector<192x64xf32>
    %100 = vector.extract_strided_slice %2 {offsets = [2, 2, 0], sizes = [12, 16, 1], strides = [1, 1, 1]} : vector<16x20x1xf32> to vector<12x16x1xf32>
    %101 = vector.shape_cast %100 : vector<12x16x1xf32> to vector<192x1xf32>
    %c12 = arith.constant 12 : index
    %c0_29 = arith.constant 0 : index
    %c0_30 = arith.constant 0 : index
    %102 = vector.load %arg3[%c12, %c0_29, %c0_30] : memref<25x1x64xf32, #tpu.memory_space<vmem>>, vector<1x1x64xf32>
    %103 = vector.shape_cast %102 : vector<1x1x64xf32> to vector<1x64xf32>
    %104 = vector.broadcast %101 : vector<192x1xf32> to vector<192x64xf32>
    %105 = vector.broadcast %103 : vector<1x64xf32> to vector<192x64xf32>
    %106 = arith.mulf %104, %105 : vector<192x64xf32>
    %107 = arith.addf %99, %106 : vector<192x64xf32>
    %108 = vector.extract_strided_slice %2 {offsets = [2, 3, 0], sizes = [12, 16, 1], strides = [1, 1, 1]} : vector<16x20x1xf32> to vector<12x16x1xf32>
    %109 = vector.shape_cast %108 : vector<12x16x1xf32> to vector<192x1xf32>
    %c13 = arith.constant 13 : index
    %c0_31 = arith.constant 0 : index
    %c0_32 = arith.constant 0 : index
    %110 = vector.load %arg3[%c13, %c0_31, %c0_32] : memref<25x1x64xf32, #tpu.memory_space<vmem>>, vector<1x1x64xf32>
    %111 = vector.shape_cast %110 : vector<1x1x64xf32> to vector<1x64xf32>
    %112 = vector.broadcast %109 : vector<192x1xf32> to vector<192x64xf32>
    %113 = vector.broadcast %111 : vector<1x64xf32> to vector<192x64xf32>
    %114 = arith.mulf %112, %113 : vector<192x64xf32>
    %115 = arith.addf %107, %114 : vector<192x64xf32>
    %116 = vector.extract_strided_slice %2 {offsets = [2, 4, 0], sizes = [12, 16, 1], strides = [1, 1, 1]} : vector<16x20x1xf32> to vector<12x16x1xf32>
    %117 = vector.shape_cast %116 : vector<12x16x1xf32> to vector<192x1xf32>
    %c14 = arith.constant 14 : index
    %c0_33 = arith.constant 0 : index
    %c0_34 = arith.constant 0 : index
    %118 = vector.load %arg3[%c14, %c0_33, %c0_34] : memref<25x1x64xf32, #tpu.memory_space<vmem>>, vector<1x1x64xf32>
    %119 = vector.shape_cast %118 : vector<1x1x64xf32> to vector<1x64xf32>
    %120 = vector.broadcast %117 : vector<192x1xf32> to vector<192x64xf32>
    %121 = vector.broadcast %119 : vector<1x64xf32> to vector<192x64xf32>
    %122 = arith.mulf %120, %121 : vector<192x64xf32>
    %123 = arith.addf %115, %122 : vector<192x64xf32>
    %124 = vector.extract_strided_slice %2 {offsets = [3, 0, 0], sizes = [12, 16, 1], strides = [1, 1, 1]} : vector<16x20x1xf32> to vector<12x16x1xf32>
    %125 = vector.shape_cast %124 : vector<12x16x1xf32> to vector<192x1xf32>
    %c15 = arith.constant 15 : index
    %c0_35 = arith.constant 0 : index
    %c0_36 = arith.constant 0 : index
    %126 = vector.load %arg3[%c15, %c0_35, %c0_36] : memref<25x1x64xf32, #tpu.memory_space<vmem>>, vector<1x1x64xf32>
    %127 = vector.shape_cast %126 : vector<1x1x64xf32> to vector<1x64xf32>
    %128 = vector.broadcast %125 : vector<192x1xf32> to vector<192x64xf32>
    %129 = vector.broadcast %127 : vector<1x64xf32> to vector<192x64xf32>
    %130 = arith.mulf %128, %129 : vector<192x64xf32>
    %131 = arith.addf %123, %130 : vector<192x64xf32>
    %132 = vector.extract_strided_slice %2 {offsets = [3, 1, 0], sizes = [12, 16, 1], strides = [1, 1, 1]} : vector<16x20x1xf32> to vector<12x16x1xf32>
    %133 = vector.shape_cast %132 : vector<12x16x1xf32> to vector<192x1xf32>
    %c16 = arith.constant 16 : index
    %c0_37 = arith.constant 0 : index
    %c0_38 = arith.constant 0 : index
    %134 = vector.load %arg3[%c16, %c0_37, %c0_38] : memref<25x1x64xf32, #tpu.memory_space<vmem>>, vector<1x1x64xf32>
    %135 = vector.shape_cast %134 : vector<1x1x64xf32> to vector<1x64xf32>
    %136 = vector.broadcast %133 : vector<192x1xf32> to vector<192x64xf32>
    %137 = vector.broadcast %135 : vector<1x64xf32> to vector<192x64xf32>
    %138 = arith.mulf %136, %137 : vector<192x64xf32>
    %139 = arith.addf %131, %138 : vector<192x64xf32>
    %140 = vector.extract_strided_slice %2 {offsets = [3, 2, 0], sizes = [12, 16, 1], strides = [1, 1, 1]} : vector<16x20x1xf32> to vector<12x16x1xf32>
    %141 = vector.shape_cast %140 : vector<12x16x1xf32> to vector<192x1xf32>
    %c17 = arith.constant 17 : index
    %c0_39 = arith.constant 0 : index
    %c0_40 = arith.constant 0 : index
    %142 = vector.load %arg3[%c17, %c0_39, %c0_40] : memref<25x1x64xf32, #tpu.memory_space<vmem>>, vector<1x1x64xf32>
    %143 = vector.shape_cast %142 : vector<1x1x64xf32> to vector<1x64xf32>
    %144 = vector.broadcast %141 : vector<192x1xf32> to vector<192x64xf32>
    %145 = vector.broadcast %143 : vector<1x64xf32> to vector<192x64xf32>
    %146 = arith.mulf %144, %145 : vector<192x64xf32>
    %147 = arith.addf %139, %146 : vector<192x64xf32>
    %148 = vector.extract_strided_slice %2 {offsets = [3, 3, 0], sizes = [12, 16, 1], strides = [1, 1, 1]} : vector<16x20x1xf32> to vector<12x16x1xf32>
    %149 = vector.shape_cast %148 : vector<12x16x1xf32> to vector<192x1xf32>
    %c18 = arith.constant 18 : index
    %c0_41 = arith.constant 0 : index
    %c0_42 = arith.constant 0 : index
    %150 = vector.load %arg3[%c18, %c0_41, %c0_42] : memref<25x1x64xf32, #tpu.memory_space<vmem>>, vector<1x1x64xf32>
    %151 = vector.shape_cast %150 : vector<1x1x64xf32> to vector<1x64xf32>
    %152 = vector.broadcast %149 : vector<192x1xf32> to vector<192x64xf32>
    %153 = vector.broadcast %151 : vector<1x64xf32> to vector<192x64xf32>
    %154 = arith.mulf %152, %153 : vector<192x64xf32>
    %155 = arith.addf %147, %154 : vector<192x64xf32>
    %156 = vector.extract_strided_slice %2 {offsets = [3, 4, 0], sizes = [12, 16, 1], strides = [1, 1, 1]} : vector<16x20x1xf32> to vector<12x16x1xf32>
    %157 = vector.shape_cast %156 : vector<12x16x1xf32> to vector<192x1xf32>
    %c19 = arith.constant 19 : index
    %c0_43 = arith.constant 0 : index
    %c0_44 = arith.constant 0 : index
    %158 = vector.load %arg3[%c19, %c0_43, %c0_44] : memref<25x1x64xf32, #tpu.memory_space<vmem>>, vector<1x1x64xf32>
    %159 = vector.shape_cast %158 : vector<1x1x64xf32> to vector<1x64xf32>
    %160 = vector.broadcast %157 : vector<192x1xf32> to vector<192x64xf32>
    %161 = vector.broadcast %159 : vector<1x64xf32> to vector<192x64xf32>
    %162 = arith.mulf %160, %161 : vector<192x64xf32>
    %163 = arith.addf %155, %162 : vector<192x64xf32>
    %164 = vector.extract_strided_slice %2 {offsets = [4, 0, 0], sizes = [12, 16, 1], strides = [1, 1, 1]} : vector<16x20x1xf32> to vector<12x16x1xf32>
    %165 = vector.shape_cast %164 : vector<12x16x1xf32> to vector<192x1xf32>
    %c20 = arith.constant 20 : index
    %c0_45 = arith.constant 0 : index
    %c0_46 = arith.constant 0 : index
    %166 = vector.load %arg3[%c20, %c0_45, %c0_46] : memref<25x1x64xf32, #tpu.memory_space<vmem>>, vector<1x1x64xf32>
    %167 = vector.shape_cast %166 : vector<1x1x64xf32> to vector<1x64xf32>
    %168 = vector.broadcast %165 : vector<192x1xf32> to vector<192x64xf32>
    %169 = vector.broadcast %167 : vector<1x64xf32> to vector<192x64xf32>
    %170 = arith.mulf %168, %169 : vector<192x64xf32>
    %171 = arith.addf %163, %170 : vector<192x64xf32>
    %172 = vector.extract_strided_slice %2 {offsets = [4, 1, 0], sizes = [12, 16, 1], strides = [1, 1, 1]} : vector<16x20x1xf32> to vector<12x16x1xf32>
    %173 = vector.shape_cast %172 : vector<12x16x1xf32> to vector<192x1xf32>
    %c21 = arith.constant 21 : index
    %c0_47 = arith.constant 0 : index
    %c0_48 = arith.constant 0 : index
    %174 = vector.load %arg3[%c21, %c0_47, %c0_48] : memref<25x1x64xf32, #tpu.memory_space<vmem>>, vector<1x1x64xf32>
    %175 = vector.shape_cast %174 : vector<1x1x64xf32> to vector<1x64xf32>
    %176 = vector.broadcast %173 : vector<192x1xf32> to vector<192x64xf32>
    %177 = vector.broadcast %175 : vector<1x64xf32> to vector<192x64xf32>
    %178 = arith.mulf %176, %177 : vector<192x64xf32>
    %179 = arith.addf %171, %178 : vector<192x64xf32>
    %180 = vector.extract_strided_slice %2 {offsets = [4, 2, 0], sizes = [12, 16, 1], strides = [1, 1, 1]} : vector<16x20x1xf32> to vector<12x16x1xf32>
    %181 = vector.shape_cast %180 : vector<12x16x1xf32> to vector<192x1xf32>
    %c22 = arith.constant 22 : index
    %c0_49 = arith.constant 0 : index
    %c0_50 = arith.constant 0 : index
    %182 = vector.load %arg3[%c22, %c0_49, %c0_50] : memref<25x1x64xf32, #tpu.memory_space<vmem>>, vector<1x1x64xf32>
    %183 = vector.shape_cast %182 : vector<1x1x64xf32> to vector<1x64xf32>
    %184 = vector.broadcast %181 : vector<192x1xf32> to vector<192x64xf32>
    %185 = vector.broadcast %183 : vector<1x64xf32> to vector<192x64xf32>
    %186 = arith.mulf %184, %185 : vector<192x64xf32>
    %187 = arith.addf %179, %186 : vector<192x64xf32>
    %188 = vector.extract_strided_slice %2 {offsets = [4, 3, 0], sizes = [12, 16, 1], strides = [1, 1, 1]} : vector<16x20x1xf32> to vector<12x16x1xf32>
    %189 = vector.shape_cast %188 : vector<12x16x1xf32> to vector<192x1xf32>
    %c23 = arith.constant 23 : index
    %c0_51 = arith.constant 0 : index
    %c0_52 = arith.constant 0 : index
    %190 = vector.load %arg3[%c23, %c0_51, %c0_52] : memref<25x1x64xf32, #tpu.memory_space<vmem>>, vector<1x1x64xf32>
    %191 = vector.shape_cast %190 : vector<1x1x64xf32> to vector<1x64xf32>
    %192 = vector.broadcast %189 : vector<192x1xf32> to vector<192x64xf32>
    %193 = vector.broadcast %191 : vector<1x64xf32> to vector<192x64xf32>
    %194 = arith.mulf %192, %193 : vector<192x64xf32>
    %195 = arith.addf %187, %194 : vector<192x64xf32>
    %196 = vector.extract_strided_slice %2 {offsets = [4, 4, 0], sizes = [12, 16, 1], strides = [1, 1, 1]} : vector<16x20x1xf32> to vector<12x16x1xf32>
    %197 = vector.shape_cast %196 : vector<12x16x1xf32> to vector<192x1xf32>
    %c24 = arith.constant 24 : index
    %c0_53 = arith.constant 0 : index
    %c0_54 = arith.constant 0 : index
    %198 = vector.load %arg3[%c24, %c0_53, %c0_54] : memref<25x1x64xf32, #tpu.memory_space<vmem>>, vector<1x1x64xf32>
    %199 = vector.shape_cast %198 : vector<1x1x64xf32> to vector<1x64xf32>
    %200 = vector.broadcast %197 : vector<192x1xf32> to vector<192x64xf32>
    %201 = vector.broadcast %199 : vector<1x64xf32> to vector<192x64xf32>
    %202 = arith.mulf %200, %201 : vector<192x64xf32>
    %203 = arith.addf %195, %202 : vector<192x64xf32>
    %c0_55 = arith.constant 0 : index
    %c0_56 = arith.constant 0 : index
    %204 = vector.load %arg4[%c0_55, %c0_56] : memref<1x64xf32, #tpu.memory_space<vmem>>, vector<1x64xf32>
    %205 = vector.broadcast %204 : vector<1x64xf32> to vector<192x64xf32>
    %206 = arith.addf %203, %205 : vector<192x64xf32>
    %207 = math.tanh %206 : vector<192x64xf32>
    %208 = vector.shape_cast %207 : vector<192x64xf32> to vector<12x16x64xf32>
    %c2_i32 = arith.constant 2 : i32
    %209 = arith.subi %0, %c2_i32 : i32
    %210 = tpu.iota {dimensions = array<i32: 0>} : vector<12x16x64xi32>
    %211 = vector.broadcast %209 : i32 to vector<12x16x64xi32>
    %212 = arith.addi %211, %210 : vector<12x16x64xi32>
    %c0_i32 = arith.constant 0 : i32
    %213 = vector.broadcast %c0_i32 : i32 to vector<12x16x64xi32>
    %214 = arith.cmpi sge, %212, %213 : vector<12x16x64xi32>
    %c16_i32 = arith.constant 16 : i32
    %215 = vector.broadcast %c16_i32 : i32 to vector<12x16x64xi32>
    %216 = arith.cmpi slt, %212, %215 : vector<12x16x64xi32>
    %217 = arith.andi %214, %216 : vector<12x16x64xi1>
    %cst_57 = arith.constant 0.000000e+00 : f32
    %218 = vector.broadcast %cst_57 : f32 to vector<12x16x64xf32>
    %219 = arith.select %217, %208, %218 : vector<12x16x64xi1>, vector<12x16x64xf32>
    %220 = arith.truncf %219 : vector<12x16x64xf32> to vector<12x16x64xbf16>
    %c0_58 = arith.constant 0 : index
    %c1_59 = arith.constant 1 : index
    %c0_60 = arith.constant 0 : index
    %221 = vector.load %arg10[%c0_58, %c1_59, %c0_60] : memref<12x18x64xbf16, #tpu.memory_space<vmem>>, vector<12x16x64xbf16>
    tpu.vector_store %arg10[%c0_58, %c1_59, %c0_60], %220 {strides = array<i32>} : memref<12x18x64xbf16, #tpu.memory_space<vmem>>, vector<12x16x64xbf16>,
    %cst_61 = arith.constant 0.000000e+00 : bf16
    %222 = vector.broadcast %cst_61 : bf16 to vector<12x1x64xbf16>
    %c0_62 = arith.constant 0 : index
    %c0_63 = arith.constant 0 : index
    %c0_64 = arith.constant 0 : index
    %223 = vector.load %arg10[%c0_62, %c0_63, %c0_64] : memref<12x18x64xbf16, #tpu.memory_space<vmem>>, vector<12x1x64xbf16>
    tpu.vector_store %arg10[%c0_62, %c0_63, %c0_64], %222 {strides = array<i32>} : memref<12x18x64xbf16, #tpu.memory_space<vmem>>, vector<12x1x64xbf16>,
    %c0_65 = arith.constant 0 : index
    %c17_66 = arith.constant 17 : index
    %c0_67 = arith.constant 0 : index
    %224 = vector.load %arg10[%c0_65, %c17_66, %c0_67] : memref<12x18x64xbf16, #tpu.memory_space<vmem>>, vector<12x1x64xbf16>
    tpu.vector_store %arg10[%c0_65, %c17_66, %c0_67], %222 {strides = array<i32>} : memref<12x18x64xbf16, #tpu.memory_space<vmem>>, vector<12x1x64xbf16>,
    %cst_68 = arith.constant 0.000000e+00 : f32
    %225 = vector.broadcast %cst_68 : f32 to vector<160x32xf32>
    %c0_69 = arith.constant 0 : index
    %c0_70 = arith.constant 0 : index
    %c0_71 = arith.constant 0 : index
    %226 = vector.load %arg10[%c0_69, %c0_70, %c0_71] : memref<12x18x64xbf16, #tpu.memory_space<vmem>>, vector<10x16x64xbf16>
    %227 = vector.shape_cast %226 : vector<10x16x64xbf16> to vector<160x64xbf16>
    %c0_72 = arith.constant 0 : index
    %c0_73 = arith.constant 0 : index
    %c0_74 = arith.constant 0 : index
    %228 = vector.load %arg5[%c0_72, %c0_73, %c0_74] : memref<9x64x32xbf16, #tpu.memory_space<vmem>>, vector<1x64x32xbf16>
    %229 = vector.shape_cast %228 : vector<1x64x32xbf16> to vector<64x32xbf16>
    %cst_75 = arith.constant dense<0.000000e+00> : vector<160x32xf32>
    %230 = tpu.matmul %227, %229, %cst_75 {dimension_numbers = #tpu.dot_dimension_numbers<[1], [0], [0], [1], [0, 0, 1, 1], [], []>} : vector<160x64xbf16>, vector<64x32xbf16>, vector<160x32xf32> -> vector<160x32xf32>
    %231 = arith.addf %225, %230 : vector<160x32xf32>
    %c0_76 = arith.constant 0 : index
    %c1_77 = arith.constant 1 : index
    %c0_78 = arith.constant 0 : index
    %232 = vector.load %arg10[%c0_76, %c1_77, %c0_78] : memref<12x18x64xbf16, #tpu.memory_space<vmem>>, vector<10x16x64xbf16>
    %233 = vector.shape_cast %232 : vector<10x16x64xbf16> to vector<160x64xbf16>
    %c1_79 = arith.constant 1 : index
    %c0_80 = arith.constant 0 : index
    %c0_81 = arith.constant 0 : index
    %234 = vector.load %arg5[%c1_79, %c0_80, %c0_81] : memref<9x64x32xbf16, #tpu.memory_space<vmem>>, vector<1x64x32xbf16>
    %235 = vector.shape_cast %234 : vector<1x64x32xbf16> to vector<64x32xbf16>
    %cst_82 = arith.constant dense<0.000000e+00> : vector<160x32xf32>
    %236 = tpu.matmul %233, %235, %cst_82 {dimension_numbers = #tpu.dot_dimension_numbers<[1], [0], [0], [1], [0, 0, 1, 1], [], []>} : vector<160x64xbf16>, vector<64x32xbf16>, vector<160x32xf32> -> vector<160x32xf32>
    %237 = arith.addf %231, %236 : vector<160x32xf32>
    %c0_83 = arith.constant 0 : index
    %c2_84 = arith.constant 2 : index
    %c0_85 = arith.constant 0 : index
    %238 = vector.load %arg10[%c0_83, %c2_84, %c0_85] : memref<12x18x64xbf16, #tpu.memory_space<vmem>>, vector<10x16x64xbf16>
    %239 = vector.shape_cast %238 : vector<10x16x64xbf16> to vector<160x64xbf16>
    %c2_86 = arith.constant 2 : index
    %c0_87 = arith.constant 0 : index
    %c0_88 = arith.constant 0 : index
    %240 = vector.load %arg5[%c2_86, %c0_87, %c0_88] : memref<9x64x32xbf16, #tpu.memory_space<vmem>>, vector<1x64x32xbf16>
    %241 = vector.shape_cast %240 : vector<1x64x32xbf16> to vector<64x32xbf16>
    %cst_89 = arith.constant dense<0.000000e+00> : vector<160x32xf32>
    %242 = tpu.matmul %239, %241, %cst_89 {dimension_numbers = #tpu.dot_dimension_numbers<[1], [0], [0], [1], [0, 0, 1, 1], [], []>} : vector<160x64xbf16>, vector<64x32xbf16>, vector<160x32xf32> -> vector<160x32xf32>
    %243 = arith.addf %237, %242 : vector<160x32xf32>
    %c1_90 = arith.constant 1 : index
    %c0_91 = arith.constant 0 : index
    %c0_92 = arith.constant 0 : index
    %244 = vector.load %arg10[%c1_90, %c0_91, %c0_92] : memref<12x18x64xbf16, #tpu.memory_space<vmem>>, vector<10x16x64xbf16>
    %245 = vector.shape_cast %244 : vector<10x16x64xbf16> to vector<160x64xbf16>
    %c3_93 = arith.constant 3 : index
    %c0_94 = arith.constant 0 : index
    %c0_95 = arith.constant 0 : index
    %246 = vector.load %arg5[%c3_93, %c0_94, %c0_95] : memref<9x64x32xbf16, #tpu.memory_space<vmem>>, vector<1x64x32xbf16>
    %247 = vector.shape_cast %246 : vector<1x64x32xbf16> to vector<64x32xbf16>
    %cst_96 = arith.constant dense<0.000000e+00> : vector<160x32xf32>
    %248 = tpu.matmul %245, %247, %cst_96 {dimension_numbers = #tpu.dot_dimension_numbers<[1], [0], [0], [1], [0, 0, 1, 1], [], []>} : vector<160x64xbf16>, vector<64x32xbf16>, vector<160x32xf32> -> vector<160x32xf32>
    %249 = arith.addf %243, %248 : vector<160x32xf32>
    %c1_97 = arith.constant 1 : index
    %c1_98 = arith.constant 1 : index
    %c0_99 = arith.constant 0 : index
    %250 = vector.load %arg10[%c1_97, %c1_98, %c0_99] : memref<12x18x64xbf16, #tpu.memory_space<vmem>>, vector<10x16x64xbf16>
    %251 = vector.shape_cast %250 : vector<10x16x64xbf16> to vector<160x64xbf16>
    %c4_100 = arith.constant 4 : index
    %c0_101 = arith.constant 0 : index
    %c0_102 = arith.constant 0 : index
    %252 = vector.load %arg5[%c4_100, %c0_101, %c0_102] : memref<9x64x32xbf16, #tpu.memory_space<vmem>>, vector<1x64x32xbf16>
    %253 = vector.shape_cast %252 : vector<1x64x32xbf16> to vector<64x32xbf16>
    %cst_103 = arith.constant dense<0.000000e+00> : vector<160x32xf32>
    %254 = tpu.matmul %251, %253, %cst_103 {dimension_numbers = #tpu.dot_dimension_numbers<[1], [0], [0], [1], [0, 0, 1, 1], [], []>} : vector<160x64xbf16>, vector<64x32xbf16>, vector<160x32xf32> -> vector<160x32xf32>
    %255 = arith.addf %249, %254 : vector<160x32xf32>
    %c1_104 = arith.constant 1 : index
    %c2_105 = arith.constant 2 : index
    %c0_106 = arith.constant 0 : index
    %256 = vector.load %arg10[%c1_104, %c2_105, %c0_106] : memref<12x18x64xbf16, #tpu.memory_space<vmem>>, vector<10x16x64xbf16>
    %257 = vector.shape_cast %256 : vector<10x16x64xbf16> to vector<160x64xbf16>
    %c5_107 = arith.constant 5 : index
    %c0_108 = arith.constant 0 : index
    %c0_109 = arith.constant 0 : index
    %258 = vector.load %arg5[%c5_107, %c0_108, %c0_109] : memref<9x64x32xbf16, #tpu.memory_space<vmem>>, vector<1x64x32xbf16>
    %259 = vector.shape_cast %258 : vector<1x64x32xbf16> to vector<64x32xbf16>
    %cst_110 = arith.constant dense<0.000000e+00> : vector<160x32xf32>
    %260 = tpu.matmul %257, %259, %cst_110 {dimension_numbers = #tpu.dot_dimension_numbers<[1], [0], [0], [1], [0, 0, 1, 1], [], []>} : vector<160x64xbf16>, vector<64x32xbf16>, vector<160x32xf32> -> vector<160x32xf32>
    %261 = arith.addf %255, %260 : vector<160x32xf32>
    %c2_111 = arith.constant 2 : index
    %c0_112 = arith.constant 0 : index
    %c0_113 = arith.constant 0 : index
    %262 = vector.load %arg10[%c2_111, %c0_112, %c0_113] : memref<12x18x64xbf16, #tpu.memory_space<vmem>>, vector<10x16x64xbf16>
    %263 = vector.shape_cast %262 : vector<10x16x64xbf16> to vector<160x64xbf16>
    %c6_114 = arith.constant 6 : index
    %c0_115 = arith.constant 0 : index
    %c0_116 = arith.constant 0 : index
    %264 = vector.load %arg5[%c6_114, %c0_115, %c0_116] : memref<9x64x32xbf16, #tpu.memory_space<vmem>>, vector<1x64x32xbf16>
    %265 = vector.shape_cast %264 : vector<1x64x32xbf16> to vector<64x32xbf16>
    %cst_117 = arith.constant dense<0.000000e+00> : vector<160x32xf32>
    %266 = tpu.matmul %263, %265, %cst_117 {dimension_numbers = #tpu.dot_dimension_numbers<[1], [0], [0], [1], [0, 0, 1, 1], [], []>} : vector<160x64xbf16>, vector<64x32xbf16>, vector<160x32xf32> -> vector<160x32xf32>
    %267 = arith.addf %261, %266 : vector<160x32xf32>
    %c2_118 = arith.constant 2 : index
    %c1_119 = arith.constant 1 : index
    %c0_120 = arith.constant 0 : index
    %268 = vector.load %arg10[%c2_118, %c1_119, %c0_120] : memref<12x18x64xbf16, #tpu.memory_space<vmem>>, vector<10x16x64xbf16>
    %269 = vector.shape_cast %268 : vector<10x16x64xbf16> to vector<160x64xbf16>
    %c7_121 = arith.constant 7 : index
    %c0_122 = arith.constant 0 : index
    %c0_123 = arith.constant 0 : index
    %270 = vector.load %arg5[%c7_121, %c0_122, %c0_123] : memref<9x64x32xbf16, #tpu.memory_space<vmem>>, vector<1x64x32xbf16>
    %271 = vector.shape_cast %270 : vector<1x64x32xbf16> to vector<64x32xbf16>
    %cst_124 = arith.constant dense<0.000000e+00> : vector<160x32xf32>
    %272 = tpu.matmul %269, %271, %cst_124 {dimension_numbers = #tpu.dot_dimension_numbers<[1], [0], [0], [1], [0, 0, 1, 1], [], []>} : vector<160x64xbf16>, vector<64x32xbf16>, vector<160x32xf32> -> vector<160x32xf32>
    %273 = arith.addf %267, %272 : vector<160x32xf32>
    %c2_125 = arith.constant 2 : index
    %c2_126 = arith.constant 2 : index
    %c0_127 = arith.constant 0 : index
    %274 = vector.load %arg10[%c2_125, %c2_126, %c0_127] : memref<12x18x64xbf16, #tpu.memory_space<vmem>>, vector<10x16x64xbf16>
    %275 = vector.shape_cast %274 : vector<10x16x64xbf16> to vector<160x64xbf16>
    %c8_128 = arith.constant 8 : index
    %c0_129 = arith.constant 0 : index
    %c0_130 = arith.constant 0 : index
    %276 = vector.load %arg5[%c8_128, %c0_129, %c0_130] : memref<9x64x32xbf16, #tpu.memory_space<vmem>>, vector<1x64x32xbf16>
    %277 = vector.shape_cast %276 : vector<1x64x32xbf16> to vector<64x32xbf16>
    %cst_131 = arith.constant dense<0.000000e+00> : vector<160x32xf32>
    %278 = tpu.matmul %275, %277, %cst_131 {dimension_numbers = #tpu.dot_dimension_numbers<[1], [0], [0], [1], [0, 0, 1, 1], [], []>} : vector<160x64xbf16>, vector<64x32xbf16>, vector<160x32xf32> -> vector<160x32xf32>
    %279 = arith.addf %273, %278 : vector<160x32xf32>
    %c0_132 = arith.constant 0 : index
    %c0_133 = arith.constant 0 : index
    %280 = vector.load %arg6[%c0_132, %c0_133] : memref<1x32xf32, #tpu.memory_space<vmem>>, vector<1x32xf32>
    %281 = vector.broadcast %280 : vector<1x32xf32> to vector<160x32xf32>
    %282 = arith.addf %279, %281 : vector<160x32xf32>
    %283 = math.tanh %282 : vector<160x32xf32>
    %284 = vector.shape_cast %283 : vector<160x32xf32> to vector<10x16x32xf32>
    %c1_i32 = arith.constant 1 : i32
    %285 = arith.subi %0, %c1_i32 : i32
    %286 = tpu.iota {dimensions = array<i32: 0>} : vector<10x16x32xi32>
    %287 = vector.broadcast %285 : i32 to vector<10x16x32xi32>
    %288 = arith.addi %287, %286 : vector<10x16x32xi32>
    %c0_i32_134 = arith.constant 0 : i32
    %289 = vector.broadcast %c0_i32_134 : i32 to vector<10x16x32xi32>
    %290 = arith.cmpi sge, %288, %289 : vector<10x16x32xi32>
    %c16_i32_135 = arith.constant 16 : i32
    %291 = vector.broadcast %c16_i32_135 : i32 to vector<10x16x32xi32>
    %292 = arith.cmpi slt, %288, %291 : vector<10x16x32xi32>
    %293 = arith.andi %290, %292 : vector<10x16x32xi1>
    %cst_136 = arith.constant 0.000000e+00 : f32
    %294 = vector.broadcast %cst_136 : f32 to vector<10x16x32xf32>
    %295 = arith.select %293, %284, %294 : vector<10x16x32xi1>, vector<10x16x32xf32>
    %296 = arith.truncf %295 : vector<10x16x32xf32> to vector<10x16x32xbf16>
    %c0_137 = arith.constant 0 : index
    %c1_138 = arith.constant 1 : index
    %c0_139 = arith.constant 0 : index
    %297 = vector.load %arg11[%c0_137, %c1_138, %c0_139] : memref<10x18x32xbf16, #tpu.memory_space<vmem>>, vector<10x16x32xbf16>
    tpu.vector_store %arg11[%c0_137, %c1_138, %c0_139], %296 {strides = array<i32>} : memref<10x18x32xbf16, #tpu.memory_space<vmem>>, vector<10x16x32xbf16>,
    %cst_140 = arith.constant 0.000000e+00 : bf16
    %298 = vector.broadcast %cst_140 : bf16 to vector<10x1x32xbf16>
    %c0_141 = arith.constant 0 : index
    %c0_142 = arith.constant 0 : index
    %c0_143 = arith.constant 0 : index
    %299 = vector.load %arg11[%c0_141, %c0_142, %c0_143] : memref<10x18x32xbf16, #tpu.memory_space<vmem>>, vector<10x1x32xbf16>
    tpu.vector_store %arg11[%c0_141, %c0_142, %c0_143], %298 {strides = array<i32>} : memref<10x18x32xbf16, #tpu.memory_space<vmem>>, vector<10x1x32xbf16>,
    %c0_144 = arith.constant 0 : index
    %c17_145 = arith.constant 17 : index
    %c0_146 = arith.constant 0 : index
    %300 = vector.load %arg11[%c0_144, %c17_145, %c0_146] : memref<10x18x32xbf16, #tpu.memory_space<vmem>>, vector<10x1x32xbf16>
    tpu.vector_store %arg11[%c0_144, %c17_145, %c0_146], %298 {strides = array<i32>} : memref<10x18x32xbf16, #tpu.memory_space<vmem>>, vector<10x1x32xbf16>,
    %cst_147 = arith.constant 0.000000e+00 : f32
    %301 = vector.broadcast %cst_147 : f32 to vector<128x4xf32>
    %c0_148 = arith.constant 0 : index
    %c0_149 = arith.constant 0 : index
    %c0_150 = arith.constant 0 : index
    %302 = vector.load %arg11[%c0_148, %c0_149, %c0_150] : memref<10x18x32xbf16, #tpu.memory_space<vmem>>, vector<8x16x32xbf16>
    %303 = vector.shape_cast %302 : vector<8x16x32xbf16> to vector<128x32xbf16>
    %c0_151 = arith.constant 0 : index
    %c0_152 = arith.constant 0 : index
    %c0_153 = arith.constant 0 : index
    %304 = vector.load %arg7[%c0_151, %c0_152, %c0_153] : memref<9x32x4xbf16, #tpu.memory_space<vmem>>, vector<1x32x4xbf16>
    %305 = vector.shape_cast %304 : vector<1x32x4xbf16> to vector<32x4xbf16>
    %cst_154 = arith.constant dense<0.000000e+00> : vector<128x4xf32>
    %306 = tpu.matmul %303, %305, %cst_154 {dimension_numbers = #tpu.dot_dimension_numbers<[1], [0], [0], [1], [0, 0, 1, 1], [], []>} : vector<128x32xbf16>, vector<32x4xbf16>, vector<128x4xf32> -> vector<128x4xf32>
    %307 = arith.addf %301, %306 : vector<128x4xf32>
    %c0_155 = arith.constant 0 : index
    %c1_156 = arith.constant 1 : index
    %c0_157 = arith.constant 0 : index
    %308 = vector.load %arg11[%c0_155, %c1_156, %c0_157] : memref<10x18x32xbf16, #tpu.memory_space<vmem>>, vector<8x16x32xbf16>
    %309 = vector.shape_cast %308 : vector<8x16x32xbf16> to vector<128x32xbf16>
    %c1_158 = arith.constant 1 : index
    %c0_159 = arith.constant 0 : index
    %c0_160 = arith.constant 0 : index
    %310 = vector.load %arg7[%c1_158, %c0_159, %c0_160] : memref<9x32x4xbf16, #tpu.memory_space<vmem>>, vector<1x32x4xbf16>
    %311 = vector.shape_cast %310 : vector<1x32x4xbf16> to vector<32x4xbf16>
    %cst_161 = arith.constant dense<0.000000e+00> : vector<128x4xf32>
    %312 = tpu.matmul %309, %311, %cst_161 {dimension_numbers = #tpu.dot_dimension_numbers<[1], [0], [0], [1], [0, 0, 1, 1], [], []>} : vector<128x32xbf16>, vector<32x4xbf16>, vector<128x4xf32> -> vector<128x4xf32>
    %313 = arith.addf %307, %312 : vector<128x4xf32>
    %c0_162 = arith.constant 0 : index
    %c2_163 = arith.constant 2 : index
    %c0_164 = arith.constant 0 : index
    %314 = vector.load %arg11[%c0_162, %c2_163, %c0_164] : memref<10x18x32xbf16, #tpu.memory_space<vmem>>, vector<8x16x32xbf16>
    %315 = vector.shape_cast %314 : vector<8x16x32xbf16> to vector<128x32xbf16>
    %c2_165 = arith.constant 2 : index
    %c0_166 = arith.constant 0 : index
    %c0_167 = arith.constant 0 : index
    %316 = vector.load %arg7[%c2_165, %c0_166, %c0_167] : memref<9x32x4xbf16, #tpu.memory_space<vmem>>, vector<1x32x4xbf16>
    %317 = vector.shape_cast %316 : vector<1x32x4xbf16> to vector<32x4xbf16>
    %cst_168 = arith.constant dense<0.000000e+00> : vector<128x4xf32>
    %318 = tpu.matmul %315, %317, %cst_168 {dimension_numbers = #tpu.dot_dimension_numbers<[1], [0], [0], [1], [0, 0, 1, 1], [], []>} : vector<128x32xbf16>, vector<32x4xbf16>, vector<128x4xf32> -> vector<128x4xf32>
    %319 = arith.addf %313, %318 : vector<128x4xf32>
    %c1_169 = arith.constant 1 : index
    %c0_170 = arith.constant 0 : index
    %c0_171 = arith.constant 0 : index
    %320 = vector.load %arg11[%c1_169, %c0_170, %c0_171] : memref<10x18x32xbf16, #tpu.memory_space<vmem>>, vector<8x16x32xbf16>
    %321 = vector.shape_cast %320 : vector<8x16x32xbf16> to vector<128x32xbf16>
    %c3_172 = arith.constant 3 : index
    %c0_173 = arith.constant 0 : index
    %c0_174 = arith.constant 0 : index
    %322 = vector.load %arg7[%c3_172, %c0_173, %c0_174] : memref<9x32x4xbf16, #tpu.memory_space<vmem>>, vector<1x32x4xbf16>
    %323 = vector.shape_cast %322 : vector<1x32x4xbf16> to vector<32x4xbf16>
    %cst_175 = arith.constant dense<0.000000e+00> : vector<128x4xf32>
    %324 = tpu.matmul %321, %323, %cst_175 {dimension_numbers = #tpu.dot_dimension_numbers<[1], [0], [0], [1], [0, 0, 1, 1], [], []>} : vector<128x32xbf16>, vector<32x4xbf16>, vector<128x4xf32> -> vector<128x4xf32>
    %325 = arith.addf %319, %324 : vector<128x4xf32>
    %c1_176 = arith.constant 1 : index
    %c1_177 = arith.constant 1 : index
    %c0_178 = arith.constant 0 : index
    %326 = vector.load %arg11[%c1_176, %c1_177, %c0_178] : memref<10x18x32xbf16, #tpu.memory_space<vmem>>, vector<8x16x32xbf16>
    %327 = vector.shape_cast %326 : vector<8x16x32xbf16> to vector<128x32xbf16>
    %c4_179 = arith.constant 4 : index
    %c0_180 = arith.constant 0 : index
    %c0_181 = arith.constant 0 : index
    %328 = vector.load %arg7[%c4_179, %c0_180, %c0_181] : memref<9x32x4xbf16, #tpu.memory_space<vmem>>, vector<1x32x4xbf16>
    %329 = vector.shape_cast %328 : vector<1x32x4xbf16> to vector<32x4xbf16>
    %cst_182 = arith.constant dense<0.000000e+00> : vector<128x4xf32>
    %330 = tpu.matmul %327, %329, %cst_182 {dimension_numbers = #tpu.dot_dimension_numbers<[1], [0], [0], [1], [0, 0, 1, 1], [], []>} : vector<128x32xbf16>, vector<32x4xbf16>, vector<128x4xf32> -> vector<128x4xf32>
    %331 = arith.addf %325, %330 : vector<128x4xf32>
    %c1_183 = arith.constant 1 : index
    %c2_184 = arith.constant 2 : index
    %c0_185 = arith.constant 0 : index
    %332 = vector.load %arg11[%c1_183, %c2_184, %c0_185] : memref<10x18x32xbf16, #tpu.memory_space<vmem>>, vector<8x16x32xbf16>
    %333 = vector.shape_cast %332 : vector<8x16x32xbf16> to vector<128x32xbf16>
    %c5_186 = arith.constant 5 : index
    %c0_187 = arith.constant 0 : index
    %c0_188 = arith.constant 0 : index
    %334 = vector.load %arg7[%c5_186, %c0_187, %c0_188] : memref<9x32x4xbf16, #tpu.memory_space<vmem>>, vector<1x32x4xbf16>
    %335 = vector.shape_cast %334 : vector<1x32x4xbf16> to vector<32x4xbf16>
    %cst_189 = arith.constant dense<0.000000e+00> : vector<128x4xf32>
    %336 = tpu.matmul %333, %335, %cst_189 {dimension_numbers = #tpu.dot_dimension_numbers<[1], [0], [0], [1], [0, 0, 1, 1], [], []>} : vector<128x32xbf16>, vector<32x4xbf16>, vector<128x4xf32> -> vector<128x4xf32>
    %337 = arith.addf %331, %336 : vector<128x4xf32>
    %c2_190 = arith.constant 2 : index
    %c0_191 = arith.constant 0 : index
    %c0_192 = arith.constant 0 : index
    %338 = vector.load %arg11[%c2_190, %c0_191, %c0_192] : memref<10x18x32xbf16, #tpu.memory_space<vmem>>, vector<8x16x32xbf16>
    %339 = vector.shape_cast %338 : vector<8x16x32xbf16> to vector<128x32xbf16>
    %c6_193 = arith.constant 6 : index
    %c0_194 = arith.constant 0 : index
    %c0_195 = arith.constant 0 : index
    %340 = vector.load %arg7[%c6_193, %c0_194, %c0_195] : memref<9x32x4xbf16, #tpu.memory_space<vmem>>, vector<1x32x4xbf16>
    %341 = vector.shape_cast %340 : vector<1x32x4xbf16> to vector<32x4xbf16>
    %cst_196 = arith.constant dense<0.000000e+00> : vector<128x4xf32>
    %342 = tpu.matmul %339, %341, %cst_196 {dimension_numbers = #tpu.dot_dimension_numbers<[1], [0], [0], [1], [0, 0, 1, 1], [], []>} : vector<128x32xbf16>, vector<32x4xbf16>, vector<128x4xf32> -> vector<128x4xf32>
    %343 = arith.addf %337, %342 : vector<128x4xf32>
    %c2_197 = arith.constant 2 : index
    %c1_198 = arith.constant 1 : index
    %c0_199 = arith.constant 0 : index
    %344 = vector.load %arg11[%c2_197, %c1_198, %c0_199] : memref<10x18x32xbf16, #tpu.memory_space<vmem>>, vector<8x16x32xbf16>
    %345 = vector.shape_cast %344 : vector<8x16x32xbf16> to vector<128x32xbf16>
    %c7_200 = arith.constant 7 : index
    %c0_201 = arith.constant 0 : index
    %c0_202 = arith.constant 0 : index
    %346 = vector.load %arg7[%c7_200, %c0_201, %c0_202] : memref<9x32x4xbf16, #tpu.memory_space<vmem>>, vector<1x32x4xbf16>
    %347 = vector.shape_cast %346 : vector<1x32x4xbf16> to vector<32x4xbf16>
    %cst_203 = arith.constant dense<0.000000e+00> : vector<128x4xf32>
    %348 = tpu.matmul %345, %347, %cst_203 {dimension_numbers = #tpu.dot_dimension_numbers<[1], [0], [0], [1], [0, 0, 1, 1], [], []>} : vector<128x32xbf16>, vector<32x4xbf16>, vector<128x4xf32> -> vector<128x4xf32>
    %349 = arith.addf %343, %348 : vector<128x4xf32>
    %c2_204 = arith.constant 2 : index
    %c2_205 = arith.constant 2 : index
    %c0_206 = arith.constant 0 : index
    %350 = vector.load %arg11[%c2_204, %c2_205, %c0_206] : memref<10x18x32xbf16, #tpu.memory_space<vmem>>, vector<8x16x32xbf16>
    %351 = vector.shape_cast %350 : vector<8x16x32xbf16> to vector<128x32xbf16>
    %c8_207 = arith.constant 8 : index
    %c0_208 = arith.constant 0 : index
    %c0_209 = arith.constant 0 : index
    %352 = vector.load %arg7[%c8_207, %c0_208, %c0_209] : memref<9x32x4xbf16, #tpu.memory_space<vmem>>, vector<1x32x4xbf16>
    %353 = vector.shape_cast %352 : vector<1x32x4xbf16> to vector<32x4xbf16>
    %cst_210 = arith.constant dense<0.000000e+00> : vector<128x4xf32>
    %354 = tpu.matmul %351, %353, %cst_210 {dimension_numbers = #tpu.dot_dimension_numbers<[1], [0], [0], [1], [0, 0, 1, 1], [], []>} : vector<128x32xbf16>, vector<32x4xbf16>, vector<128x4xf32> -> vector<128x4xf32>
    %355 = arith.addf %349, %354 : vector<128x4xf32>
    %c0_211 = arith.constant 0 : index
    %c0_212 = arith.constant 0 : index
    %356 = vector.load %arg8[%c0_211, %c0_212] : memref<1x4xf32, #tpu.memory_space<vmem>>, vector<1x4xf32>
    %357 = vector.broadcast %356 : vector<1x4xf32> to vector<128x4xf32>
    %358 = arith.addf %355, %357 : vector<128x4xf32>
    %359 = vector.shape_cast %358 : vector<128x4xf32> to vector<8x16x4xf32>
    %c0_213 = arith.constant 0 : index
    %c0_214 = arith.constant 0 : index
    %c0_215 = arith.constant 0 : index
    %c0_216 = arith.constant 0 : index
    %360 = vector.load %arg9[%c0_213, %c0_214, %c0_215, %c0_216] : memref<1x8x16x4xf32, #tpu.memory_space<vmem>>, vector<1x8x16x4xf32>
    %361 = vector.shape_cast %360 : vector<1x8x16x4xf32> to vector<8x16x4xf32>
    %362 = vector.shape_cast %359 : vector<8x16x4xf32> to vector<1x8x16x4xf32>
    tpu.vector_store %arg9[%c0_213, %c0_214, %c0_215, %c0_216], %362 {strides = array<i32>} : memref<1x8x16x4xf32, #tpu.memory_space<vmem>>, vector<1x8x16x4xf32>,
    return
  }
  func.func @transform_0(%arg0: i32, %arg1: i32) -> (i32, i32, i32, i32, i32) {
    %c0_i32 = arith.constant 0 : i32
    %c0_i32_0 = arith.constant 0 : i32
    %c0_i32_1 = arith.constant 0 : i32
    %c0_i32_2 = arith.constant 0 : i32
    return %arg0, %arg1, %c0_i32, %c0_i32_0, %c0_i32_1 : i32, i32, i32, i32, i32
  }
  func.func @transform_1(%arg0: i32, %arg1: i32) -> (i32, i32, i32) {
    %c0_i32 = arith.constant 0 : i32
    %c0_i32_0 = arith.constant 0 : i32
    %c0_i32_1 = arith.constant 0 : i32
    %c0_i32_2 = arith.constant 0 : i32
    return %c0_i32, %c0_i32_0, %c0_i32_1 : i32, i32, i32
  }
  func.func @transform_2(%arg0: i32, %arg1: i32) -> (i32, i32) {
    %c0_i32 = arith.constant 0 : i32
    %c0_i32_0 = arith.constant 0 : i32
    %c0_i32_1 = arith.constant 0 : i32
    return %c0_i32, %c0_i32_0 : i32, i32
  }
  func.func @transform_3(%arg0: i32, %arg1: i32) -> (i32, i32, i32) {
    %c0_i32 = arith.constant 0 : i32
    %c0_i32_0 = arith.constant 0 : i32
    %c0_i32_1 = arith.constant 0 : i32
    %c0_i32_2 = arith.constant 0 : i32
    return %c0_i32, %c0_i32_0, %c0_i32_1 : i32, i32, i32
  }
  func.func @transform_4(%arg0: i32, %arg1: i32) -> (i32, i32) {
    %c0_i32 = arith.constant 0 : i32
    %c0_i32_0 = arith.constant 0 : i32
    %c0_i32_1 = arith.constant 0 : i32
    return %c0_i32, %c0_i32_0 : i32, i32
  }
  func.func @transform_5(%arg0: i32, %arg1: i32) -> (i32, i32, i32) {
    %c0_i32 = arith.constant 0 : i32
    %c0_i32_0 = arith.constant 0 : i32
    %c0_i32_1 = arith.constant 0 : i32
    %c0_i32_2 = arith.constant 0 : i32
    return %c0_i32, %c0_i32_0, %c0_i32_1 : i32, i32, i32
  }
  func.func @transform_6(%arg0: i32, %arg1: i32) -> (i32, i32) {
    %c0_i32 = arith.constant 0 : i32
    %c0_i32_0 = arith.constant 0 : i32
    %c0_i32_1 = arith.constant 0 : i32
    return %c0_i32, %c0_i32_0 : i32, i32
  }
  func.func @transform_7(%arg0: i32, %arg1: i32) -> (i32, i32, i32, i32) {
    %c0_i32 = arith.constant 0 : i32
    %c0_i32_0 = arith.constant 0 : i32
    %c0_i32_1 = arith.constant 0 : i32
    return %arg0, %arg1, %c0_i32, %c0_i32_0 : i32, i32, i32, i32
  }
}

</mosaic_0001>

<llo_original>
// kernel: espcn_forward.1
$region0: #{espcn_forward.1}
  #allocation0 [shape = 'u32[]', space=smem, size = 0x4, offset = 0x4, fixed_abs, tag = 'smem constant byte address 0x4 - core index']
  #allocation1 [shape = 'u32[144,128]{1,0:T(1,128)}', space=vmem, size = 0x12000, scoped, tag = 'internal scratch']
  #allocation2 [shape = 'bf16[12,18,64]{2,1,0:T(8,128)(2,1)}', space=vmem, size = 0x12000, scoped, tag = 'scratch operand']
  #allocation3 [shape = 'bf16[10,18,32]{2,1,0:T(8,128)(2,1)}', space=vmem, size = 0xf000, scoped, tag = 'scratch operand']
  %s0 = inlined_call_operand.vmem [shape: f32[2,2,16,20,1], index: 0, kind: input, shape index: {}]
  %s1 = inlined_call_operand.vmem [shape: f32[25,1,64], index: 1, kind: input, shape index: {}]
  %s2 = inlined_call_operand.vmem [shape: f32[1,64], index: 2, kind: input, shape index: {}]
  %s3 = inlined_call_operand.vmem [shape: bf16[9,64,32], index: 3, kind: input, shape index: {}]
  %s4 = inlined_call_operand.vmem [shape: f32[1,32], index: 4, kind: input, shape index: {}]
  %s5 = inlined_call_operand.vmem [shape: bf16[9,32,4], index: 5, kind: input, shape index: {}]
  %s6 = inlined_call_operand.vmem [shape: f32[1,4], index: 6, kind: input, shape index: {}]
  %s7 = inlined_call_operand.vmem [shape: f32[2,16,16,4], index: 7, kind: output, shape index: {}]
  %s8 = sld [smem:[#allocation0]]
  $region61: #{espcn_forward.1} parent=0
    _
  %s10 = ssub.s32 1, %s8
  %s11 = scalar_select 0, %s10, %s8
  loop: start=0, step=1, limit=6
  $region2: #{espcn_forward.1} parent=0 // loop_pre_header
    _
  $region3: #{espcn_forward.1} parent=0 // loop_header
    %s13 = sphi 0, %s17
    %p14 = scmp.ge.s32.totalorder %s13, 6
    %s20 = sphi 0, %s32
    %s21 = sphi 0, %s28
    %s22 = sphi 0, %s20
    %s23 = sphi 0, %s21
    %s24 = sphi 0, %s22
    %s25 = sphi 0, %s23
    %s37 = sphi 0, %s39
    %s40 = sphi 0, %s37
    %s41 = sphi 0, %s40
    %s57 = sphi 0, %s41
    %s61 = sphi 0, %s61
    %s63 = sphi 0, %s61
    %s64 = sphi 0, %s63
    %s78 = sphi 0, %s64
    %s82 = sphi 0, %s82
    %s84 = sphi 0, %s82
    %s85 = sphi 0, %s84
    %s99 = sphi 0, %s85
    %s103 = sphi 0, %s103
    %s105 = sphi 0, %s103
    %s106 = sphi 0, %s105
    %s120 = sphi 0, %s106
    %s124 = sphi 0, %s124
    %s126 = sphi 0, %s124
    %s127 = sphi 0, %s126
    %s141 = sphi 0, %s127
    %s145 = sphi 0, %s145
    %s147 = sphi 0, %s145
    %s148 = sphi 0, %s147
    %s162 = sphi 0, %s148
    %s166 = sphi 0, %s166
    %s168 = sphi 0, %s166
    %s169 = sphi 0, %s168
    %s183 = sphi 0, %s169
    %s191 = sphi 0, %s193
    %s194 = sphi 0, %s191
    %s195 = sphi 0, %s194
    %s211 = sphi 0, %s195
  $region4: #{espcn_forward.1} parent=0 // loop_header_branch
    %16 = sbr.rel (%p14) target = $region8
  $region5: #{espcn_forward.1} parent=0 // loop_body
    %s18 = ssub.s32 %s13, 1
    %s19 = ssub.s32 %s13, 2
    %s26 = sadd.s32 1, %s21
    %p27 = scmp.ge.s32.totalorder %s26, 2
    %s28 = scalar_select %p27, 0, %s26
    %s29 = sadd.s32 1, %s20
    %s30 = scalar_select %p27, %s29, %s20
    %p31 = scmp.ge.s32.totalorder %s30, 2
    %s32 = scalar_select %p31, 0, %s30
    %s33 = ssub.s32 %s20, %s32
    %s34 = ssub.s32 %s21, %s28
    %s35 = sor.u32 %s33, %s34
    %p36 = scmp.eq.s32.totalorder %s35, 0
    %s38 = sadd.s32 %s37, 1
    %s39 = scalar_select %p36, %s37, %s38
    %p42 = pneg %p36
    %p43 = scmp.eq.s32.totalorder %s13, 3
    %p44 = por %p42, %p43
    %p45 = scmp.ne.s32.totalorder %s37, %s40
    %p46 = scmp.eq.s32.totalorder %s13, 0
    %p47 = por %p45, %p46
    %p48 = scmp.ne.s32.totalorder %s37, %s40
    %p49 = scmp.eq.s32.totalorder %s18, 3
    %p50 = por %p48, %p49
    %p51 = scmp.ne.s32.totalorder %s40, %s41
    %p52 = scmp.eq.s32.totalorder %s18, 0
    %p53 = por %p51, %p52
    %p54 = scmp.ne.s32.totalorder %s40, %s41
    %p55 = scmp.eq.s32.totalorder %s19, 3
    %p56 = por %p54, %p55
    %p58 = scmp.ne.s32.totalorder %s41, %s57
    %p59 = scmp.eq.s32.totalorder %s19, 0
    %p60 = por %p58, %p59
    %s62 = sadd.s32 %s61, 1
    %p65 = scmp.eq.s32.totalorder %s13, 3
    %p66 = scmp.ne.s32.totalorder %s61, %s63
    %p67 = scmp.eq.s32.totalorder %s13, 0
    %p68 = por %p66, %p67
    %p69 = scmp.ne.s32.totalorder %s61, %s63
    %p70 = scmp.eq.s32.totalorder %s18, 3
    %p71 = por %p69, %p70
    %p72 = scmp.ne.s32.totalorder %s63, %s64
    %p73 = scmp.eq.s32.totalorder %s18, 0
    %p74 = por %p72, %p73
    %p75 = scmp.ne.s32.totalorder %s63, %s64
    %p76 = scmp.eq.s32.totalorder %s19, 3
    %p77 = por %p75, %p76
    %p79 = scmp.ne.s32.totalorder %s64, %s78
    %p80 = scmp.eq.s32.totalorder %s19, 0
    %p81 = por %p79, %p80
    %s83 = sadd.s32 %s82, 1
    %p86 = scmp.eq.s32.totalorder %s13, 3
    %p87 = scmp.ne.s32.totalorder %s82, %s84
    %p88 = scmp.eq.s32.totalorder %s13, 0
    %p89 = por %p87, %p88
    %p90 = scmp.ne.s32.totalorder %s82, %s84
    %p91 = scmp.eq.s32.totalorder %s18, 3
    %p92 = por %p90, %p91
    %p93 = scmp.ne.s32.totalorder %s84, %s85
    %p94 = scmp.eq.s32.totalorder %s18, 0
    %p95 = por %p93, %p94
    %p96 = scmp.ne.s32.totalorder %s84, %s85
    %p97 = scmp.eq.s32.totalorder %s19, 3
    %p98 = por %p96, %p97
    %p100 = scmp.ne.s32.totalorder %s85, %s99
    %p101 = scmp.eq.s32.totalorder %s19, 0
    %p102 = por %p100, %p101
    %s104 = sadd.s32 %s103, 1
    %p107 = scmp.eq.s32.totalorder %s13, 3
    %p108 = scmp.ne.s32.totalorder %s103, %s105
    %p109 = scmp.eq.s32.totalorder %s13, 0
    %p110 = por %p108, %p109
    %p111 = scmp.ne.s32.totalorder %s103, %s105
    %p112 = scmp.eq.s32.totalorder %s18, 3
    %p113 = por %p111, %p112
    %p114 = scmp.ne.s32.totalorder %s105, %s106
    %p115 = scmp.eq.s32.totalorder %s18, 0
    %p116 = por %p114, %p115
    %p117 = scmp.ne.s32.totalorder %s105, %s106
    %p118 = scmp.eq.s32.totalorder %s19, 3
    %p119 = por %p117, %p118
    %p121 = scmp.ne.s32.totalorder %s106, %s120
    %p122 = scmp.eq.s32.totalorder %s19, 0
    %p123 = por %p121, %p122
    %s125 = sadd.s32 %s124, 1
    %p128 = scmp.eq.s32.totalorder %s13, 3
    %p129 = scmp.ne.s32.totalorder %s124, %s126
    %p130 = scmp.eq.s32.totalorder %s13, 0
    %p131 = por %p129, %p130
    %p132 = scmp.ne.s32.totalorder %s124, %s126
    %p133 = scmp.eq.s32.totalorder %s18, 3
    %p134 = por %p132, %p133
    %p135 = scmp.ne.s32.totalorder %s126, %s127
    %p136 = scmp.eq.s32.totalorder %s18, 0
    %p137 = por %p135, %p136
    %p138 = scmp.ne.s32.totalorder %s126, %s127
    %p139 = scmp.eq.s32.totalorder %s19, 3
    %p140 = por %p138, %p139
    %p142 = scmp.ne.s32.totalorder %s127, %s141
    %p143 = scmp.eq.s32.totalorder %s19, 0
    %p144 = por %p142, %p143
    %s146 = sadd.s32 %s145, 1
    %p149 = scmp.eq.s32.totalorder %s13, 3
    %p150 = scmp.ne.s32.totalorder %s145, %s147
    %p151 = scmp.eq.s32.totalorder %s13, 0
    %p152 = por %p150, %p151
    %p153 = scmp.ne.s32.totalorder %s145, %s147
    %p154 = scmp.eq.s32.totalorder %s18, 3
    %p155 = por %p153, %p154
    %p156 = scmp.ne.s32.totalorder %s147, %s148
    %p157 = scmp.eq.s32.totalorder %s18, 0
    %p158 = por %p156, %p157
    %p159 = scmp.ne.s32.totalorder %s147, %s148
    %p160 = scmp.eq.s32.totalorder %s19, 3
    %p161 = por %p159, %p160
    %p163 = scmp.ne.s32.totalorder %s148, %s162
    %p164 = scmp.eq.s32.totalorder %s19, 0
    %p165 = por %p163, %p164
    %s167 = sadd.s32 %s166, 1
    %p170 = scmp.eq.s32.totalorder %s13, 3
    %p171 = scmp.ne.s32.totalorder %s166, %s168
    %p172 = scmp.eq.s32.totalorder %s13, 0
    %p173 = por %p171, %p172
    %p174 = scmp.ne.s32.totalorder %s166, %s168
    %p175 = scmp.eq.s32.totalorder %s18, 3
    %p176 = por %p174, %p175
    %p177 = scmp.ne.s32.totalorder %s168, %s169
    %p178 = scmp.eq.s32.totalorder %s18, 0
    %p179 = por %p177, %p178
    %p180 = scmp.ne.s32.totalorder %s168, %s169
    %p181 = scmp.eq.s32.totalorder %s19, 3
    %p182 = por %p180, %p181
    %p184 = scmp.ne.s32.totalorder %s169, %s183
    %p185 = scmp.eq.s32.totalorder %s19, 0
    %p186 = por %p184, %p185
    %s187 = ssub.s32 %s20, %s32
    %s188 = ssub.s32 %s21, %s28
    %s189 = sor.u32 %s187, %s188
    %p190 = scmp.eq.s32.totalorder %s189, 0
    %s192 = sadd.s32 %s191, 1
    %s193 = scalar_select %p190, %s191, %s192
    %p196 = pneg %p190
    %p197 = scmp.eq.s32.totalorder %s13, 3
    %p198 = por %p196, %p197
    %p199 = scmp.ne.s32.totalorder %s191, %s194
    %p200 = scmp.eq.s32.totalorder %s13, 0
    %p201 = por %p199, %p200
    %p202 = scmp.ne.s32.totalorder %s191, %s194
    %p203 = scmp.eq.s32.totalorder %s18, 3
    %p204 = por %p202, %p203
    %p205 = scmp.ne.s32.totalorder %s194, %s195
    %p206 = scmp.eq.s32.totalorder %s18, 0
    %p207 = por %p205, %p206
    %p208 = scmp.ne.s32.totalorder %s194, %s195
    %p209 = scmp.eq.s32.totalorder %s19, 3
    %p210 = por %p208, %p209
    %p212 = scmp.ne.s32.totalorder %s195, %s211
    %p213 = scmp.eq.s32.totalorder %s19, 0
    %p214 = por %p212, %p213
    %p215 = scmp.le.s32.totalorder 1, %s13
    %p216 = scmp.lt.s32.totalorder %s13, 5
    %p217 = pnand %p215, %p216
    %p218 = pneg %p217
    // Predicated region
    $region9: #{espcn_forward.1} parent=5 // pred_check
      _
    $region10: #{espcn_forward.1} parent=5 // pred_check_branch
      %220 = sbr.rel (%p217) target = $region12
    $region11: #{espcn_forward.1} parent=5 // pred_region
      %s221 = ssub.s32 %s13, 1
      // Predicated region
      $region13: #{espcn_forward.1} parent=11 // pred_check
        %p222 = pneg %p74
      $region14: #{espcn_forward.1} parent=11 // pred_check_branch
        %224 = sbr.rel (%p222) target = $region16
      $region15: #{espcn_forward.1} parent=11 // pred_region
        _
      $region16: #{espcn_forward.1} parent=11 // pred_fallthru
        _
      // Predicated region
      $region17: #{espcn_forward.1} parent=11 // pred_check
        %p225 = pneg %p95
      $region18: #{espcn_forward.1} parent=11 // pred_check_branch
        %227 = sbr.rel (%p225) target = $region20
      $region19: #{espcn_forward.1} parent=11 // pred_region
        _
      $region20: #{espcn_forward.1} parent=11 // pred_fallthru
        _
      // Predicated region
      $region21: #{espcn_forward.1} parent=11 // pred_check
        %p228 = pneg %p116
      $region22: #{espcn_forward.1} parent=11 // pred_check_branch
        %230 = sbr.rel (%p228) target = $region24
      $region23: #{espcn_forward.1} parent=11 // pred_region
        _
      $region24: #{espcn_forward.1} parent=11 // pred_fallthru
        _
      // Predicated region
      $region25: #{espcn_forward.1} parent=11 // pred_check
        %p231 = pneg %p137
      $region26: #{espcn_forward.1} parent=11 // pred_check_branch
        %233 = sbr.rel (%p231) target = $region28
      $region27: #{espcn_forward.1} parent=11 // pred_region
        _
      $region28: #{espcn_forward.1} parent=11 // pred_fallthru
        _
      // Predicated region
      $region29: #{espcn_forward.1} parent=11 // pred_check
        %p234 = pneg %p158
      $region30: #{espcn_forward.1} parent=11 // pred_check_branch
        %236 = sbr.rel (%p234) target = $region32
      $region31: #{espcn_forward.1} parent=11 // pred_region
        _
      $region32: #{espcn_forward.1} parent=11 // pred_fallthru
        _
      // Predicated region
      $region33: #{espcn_forward.1} parent=11 // pred_check
        %p237 = pneg %p179
      $region34: #{espcn_forward.1} parent=11 // pred_check_branch
        %239 = sbr.rel (%p237) target = $region36
      $region35: #{espcn_forward.1} parent=11 // pred_region
        _
      $region36: #{espcn_forward.1} parent=11 // pred_fallthru
        _
    $region12: #{espcn_forward.1} parent=5 // pred_fallthru
      _
    %p240 = scmp.lt.s32.totalorder %s13, 4
    // Predicated region
    $region37: #{espcn_forward.1} parent=5 // pred_check
      %p241 = pneg %p240
    $region38: #{espcn_forward.1} parent=5 // pred_check_branch
      %243 = sbr.rel (%p241) target = $region40
    $region39: #{espcn_forward.1} parent=5 // pred_region
      // Predicated region
      $region41: #{espcn_forward.1} parent=39 // pred_check
        %p244 = pneg %p47
      $region42: #{espcn_forward.1} parent=39 // pred_check_branch
        %246 = sbr.rel (%p244) target = $region44
      $region43: #{espcn_forward.1} parent=39 // pred_region
        %p247 = scmp.lt.s32.totalorder %s20, 1
        %s248 = scalar_select %p247, %s20, 1
        %p249 = scmp.lt.s32.totalorder %s21, 1
        %s250 = scalar_select %p249, %s21, 1
        %s251 = smul.addr %s250, 48
        %s252 = smul.addr %s248, 96
        %s253 = sadd.s32 %s251, %s252
        %s254 = smul.addr %s253, 8
        %s255 = scalar_lea.vmem %s0, %s254
      $region44: #{espcn_forward.1} parent=39 // pred_fallthru
        _
    $region40: #{espcn_forward.1} parent=5 // pred_fallthru
      _
    %p256 = scmp.le.s32.totalorder 1, %s13
    %p257 = scmp.lt.s32.totalorder %s13, 5
    %p258 = pnand %p256, %p257
    %p259 = pneg %p258
    // Predicated region
    $region45: #{espcn_forward.1} parent=5 // pred_check
      _
    $region46: #{espcn_forward.1} parent=5 // pred_check_branch
      %261 = sbr.rel (%p258) target = $region48
    $region47: #{espcn_forward.1} parent=5 // pred_region
      %s262 = ssub.s32 %s13, 1
      %p263 = scmp.lt.s32.totalorder %s22, 1
      %s264 = scalar_select %p263, %s22, 1
      %p265 = scmp.lt.s32.totalorder %s23, 1
      %s266 = scalar_select %p265, %s23, 1
      %s267 = smul.addr %s266, 48
      %s268 = smul.addr %s264, 96
      %s269 = sadd.s32 %s267, %s268
      %s270 = smul.addr %s269, 8
      %s271 = scalar_lea.vmem %s0, %s270
      %p272 = pneg %p53
      %p273 = pneg %p50
      %p274 = pneg %p74
      %p275 = pneg %p71
      %p276 = pneg %p95
      %p277 = pneg %p92
      %p278 = pneg %p116
      %p279 = pneg %p113
      %p280 = pneg %p137
      %p281 = pneg %p134
      %p282 = pneg %p158
      %p283 = pneg %p155
      %p284 = pneg %p179
      %p285 = pneg %p176
      %p286 = pneg %p207
      %p287 = pneg %p204
      %s288 = smul.u32 8, %s23
      %p289 = scmp.lt.s32.totalorder %s22, 1
      %s290 = scalar_select %p289, %s22, 1
      %p291 = scmp.lt.s32.totalorder %s288, 15
      %s292 = scalar_select %p291, %s288, 15
      %s293 = smul.addr %s292, 2
      %s294 = smul.addr %s290, 32
      %s295 = sadd.s32 %s293, %s294
      %s296 = smul.addr %s295, 8
      %s297 = scalar_lea.vmem %s7, %s296
      %p298 = scmp.lt.s32.totalorder %s22, 1
      %s299 = scalar_select %p298, %s22, 1
      %p300 = scmp.lt.s32.totalorder %s23, 1
      %s301 = scalar_select %p300, %s23, 1
      %s302 = smul.addr %s301, 48
      %s303 = smul.addr %s299, 96
      %s304 = sadd.s32 %s302, %s303
      %s305 = smul.addr %s304, 8
      %s306 = scalar_lea.vmem %s0, %s305
      %s307 = smul.u32 8, %s23
      %p308 = scmp.lt.s32.totalorder %s22, 1
      %s309 = scalar_select %p308, %s22, 1
      %p310 = scmp.lt.s32.totalorder %s307, 15
      %s311 = scalar_select %p310, %s307, 15
      %s312 = smul.addr %s311, 2
      %s313 = smul.addr %s309, 32
      %s314 = sadd.s32 %s312, %s313
      %s315 = smul.addr %s314, 8
      %s316 = scalar_lea.vmem %s7, %s315
      %s317 = smul.u32 8, %s23
      %s319 = smul.u32 %s23, 8
      %v320 = vld [vmem:[%s306] sm:$0xff]
      %v321 = vld [vmem:[%s306 + $0x8] sm:$0xff]
      %v322 = vld [vmem:[%s306 + $0x10] sm:$0xf]
      %v323 = vld [vmem:[%s306 + $0x18] sm:$0xff]
      %v324 = vld [vmem:[%s306 + $0x20] sm:$0xff]
      %v325 = vld [vmem:[%s306 + $0x28] sm:$0xf]
      %v326 = vld [vmem:[%s306 + $0x30] sm:$0xff]
      %v327 = vld [vmem:[%s306 + $0x38] sm:$0xff]
      %v328 = vld [vmem:[%s306 + $0x40] sm:$0xf]
      %v329 = vld [vmem:[%s306 + $0x48] sm:$0xff]
      %v330 = vld [vmem:[%s306 + $0x50] sm:$0xff]
      %v331 = vld [vmem:[%s306 + $0x58] sm:$0xf]
      %v332 = vld [vmem:[%s306 + $0x60] sm:$0xff]
      %v333 = vld [vmem:[%s306 + $0x68] sm:$0xff]
      %v334 = vld [vmem:[%s306 + $0x70] sm:$0xf]
      %v335 = vld [vmem:[%s306 + $0x78] sm:$0xff]
      %v336 = vld [vmem:[%s306 + $0x80] sm:$0xff]
      %v337 = vld [vmem:[%s306 + $0x88] sm:$0xf]
      %v338 = vld [vmem:[%s306 + $0x90] sm:$0xff]
      %v339 = vld [vmem:[%s306 + $0x98] sm:$0xff]
      %v340 = vld [vmem:[%s306 + $0xa0] sm:$0xf]
      %v341 = vld [vmem:[%s306 + $0xa8] sm:$0xff]
      %v342 = vld [vmem:[%s306 + $0xb0] sm:$0xff]
      %v343 = vld [vmem:[%s306 + $0xb8] sm:$0xf]
      %v344 = vld [vmem:[%s306 + $0xc0] sm:$0xff]
      %v345 = vld [vmem:[%s306 + $0xc8] sm:$0xff]
      %v346 = vld [vmem:[%s306 + $0xd0] sm:$0xf]
      %v347 = vld [vmem:[%s306 + $0xd8] sm:$0xff]
      %v348 = vld [vmem:[%s306 + $0xe0] sm:$0xff]
      %v349 = vld [vmem:[%s306 + $0xe8] sm:$0xf]
      %v350 = vld [vmem:[%s306 + $0xf0] sm:$0xff]
      %v351 = vld [vmem:[%s306 + $0xf8] sm:$0xff]
      %v352 = vld [vmem:[%s306 + $0x100] sm:$0xf]
      %v353 = vld [vmem:[%s306 + $0x108] sm:$0xff]
      %v354 = vld [vmem:[%s306 + $0x110] sm:$0xff]
      %v355 = vld [vmem:[%s306 + $0x118] sm:$0xf]
      %v356 = vld [vmem:[%s306 + $0x120] sm:$0xff]
      %v357 = vld [vmem:[%s306 + $0x128] sm:$0xff]
      %v358 = vld [vmem:[%s306 + $0x130] sm:$0xf]
      %v359 = vld [vmem:[%s306 + $0x138] sm:$0xff]
      %v360 = vld [vmem:[%s306 + $0x140] sm:$0xff]
      %v361 = vld [vmem:[%s306 + $0x148] sm:$0xf]
      %v362 = vld [vmem:[%s306 + $0x150] sm:$0xff]
      %v363 = vld [vmem:[%s306 + $0x158] sm:$0xff]
      %v364 = vld [vmem:[%s306 + $0x160] sm:$0xf]
      %v365 = vld [vmem:[%s306 + $0x168] sm:$0xff]
      %v366 = vld [vmem:[%s306 + $0x170] sm:$0xff]
      %v367 = vld [vmem:[%s306 + $0x178] sm:$0xf]
      %v368 = vld [vmem:[%s1] sm:$0x1]
      %370 = vset.pattern.permute.xlu0 0
      %371 = vperm.xlu0 %370, %v320
      %v372 = vpop.permute.xlu0 %371
      %375 = vset.pattern.permute.xlu0 0
      %376 = vperm.xlu0 %375, %v321
      %v377 = vpop.permute.xlu0 %376
      %380 = vset.pattern.permute.xlu0 0
      %381 = vperm.xlu0 %380, %v323
      %v382 = vpop.permute.xlu0 %381
      %385 = vset.pattern.permute.xlu0 0
      %386 = vperm.xlu0 %385, %v324
      %v387 = vpop.permute.xlu0 %386
      %390 = vset.pattern.permute.xlu0 0
      %391 = vperm.xlu0 %390, %v326
      %v392 = vpop.permute.xlu0 %391
      %395 = vset.pattern.permute.xlu0 0
      %396 = vperm.xlu0 %395, %v327
      %v397 = vpop.permute.xlu0 %396
      %400 = vset.pattern.permute.xlu0 0
      %401 = vperm.xlu0 %400, %v329
      %v402 = vpop.permute.xlu0 %401
      %405 = vset.pattern.permute.xlu0 0
      %406 = vperm.xlu0 %405, %v330
      %v407 = vpop.permute.xlu0 %406
      %410 = vset.pattern.permute.xlu0 0
      %411 = vperm.xlu0 %410, %v332
      %v412 = vpop.permute.xlu0 %411
      %415 = vset.pattern.permute.xlu0 0
      %416 = vperm.xlu0 %415, %v333
      %v417 = vpop.permute.xlu0 %416
      %420 = vset.pattern.permute.xlu0 0
      %421 = vperm.xlu0 %420, %v335
      %v422 = vpop.permute.xlu0 %421
      %425 = vset.pattern.permute.xlu0 0
      %426 = vperm.xlu0 %425, %v336
      %v427 = vpop.permute.xlu0 %426
      %430 = vset.pattern.permute.xlu0 0
      %431 = vperm.xlu0 %430, %v338
      %v432 = vpop.permute.xlu0 %431
      %435 = vset.pattern.permute.xlu0 0
      %436 = vperm.xlu0 %435, %v339
      %v437 = vpop.permute.xlu0 %436
      %440 = vset.pattern.permute.xlu0 0
      %441 = vperm.xlu0 %440, %v341
      %v442 = vpop.permute.xlu0 %441
      %445 = vset.pattern.permute.xlu0 0
      %446 = vperm.xlu0 %445, %v342
      %v447 = vpop.permute.xlu0 %446
      %450 = vset.pattern.permute.xlu0 0
      %451 = vperm.xlu0 %450, %v344
      %v452 = vpop.permute.xlu0 %451
      %455 = vset.pattern.permute.xlu0 0
      %456 = vperm.xlu0 %455, %v345
      %v457 = vpop.permute.xlu0 %456
      %460 = vset.pattern.permute.xlu0 0
      %461 = vperm.xlu0 %460, %v347
      %v462 = vpop.permute.xlu0 %461
      %465 = vset.pattern.permute.xlu0 0
      %466 = vperm.xlu0 %465, %v348
      %v467 = vpop.permute.xlu0 %466
      %470 = vset.pattern.permute.xlu0 0
      %471 = vperm.xlu0 %470, %v350
      %v472 = vpop.permute.xlu0 %471
      %475 = vset.pattern.permute.xlu0 0
      %476 = vperm.xlu0 %475, %v351
      %v477 = vpop.permute.xlu0 %476
      %480 = vset.pattern.permute.xlu0 0
      %481 = vperm.xlu0 %480, %v353
      %v482 = vpop.permute.xlu0 %481
      %485 = vset.pattern.permute.xlu0 0
      %486 = vperm.xlu0 %485, %v354
      %v487 = vpop.permute.xlu0 %486
      %v490 = vlaneseq
      %v491 = vshrl.u32 %v490, 7
      %v492 = vsub.s32 0, %v491
      %v493 = vrot.slane %v368, %v492
      %v495 = vmul.f32 %v372, %v493
      %v496 = vmul.f32 %v377, %v493
      %v497 = vmul.f32 %v382, %v493
      %v498 = vmul.f32 %v387, %v493
      %v499 = vmul.f32 %v392, %v493
      %v500 = vmul.f32 %v397, %v493
      %v501 = vmul.f32 %v402, %v493
      %v502 = vmul.f32 %v407, %v493
      %v503 = vmul.f32 %v412, %v493
      %v504 = vmul.f32 %v417, %v493
      %v505 = vmul.f32 %v422, %v493
      %v506 = vmul.f32 %v427, %v493
      %v507 = vmul.f32 %v432, %v493
      %v508 = vmul.f32 %v437, %v493
      %v509 = vmul.f32 %v442, %v493
      %v510 = vmul.f32 %v447, %v493
      %v511 = vmul.f32 %v452, %v493
      %v512 = vmul.f32 %v457, %v493
      %v513 = vmul.f32 %v462, %v493
      %v514 = vmul.f32 %v467, %v493
      %v515 = vmul.f32 %v472, %v493
      %v516 = vmul.f32 %v477, %v493
      %v517 = vmul.f32 %v482, %v493
      %v518 = vmul.f32 %v487, %v493
      %v519 = vadd.f32 %v495, 0.0
      %v520 = vadd.f32 %v496, 0.0
      %v521 = vadd.f32 %v497, 0.0
      %v522 = vadd.f32 %v498, 0.0
      %v523 = vadd.f32 %v499, 0.0
      %v524 = vadd.f32 %v500, 0.0
      %v525 = vadd.f32 %v501, 0.0
      %v526 = vadd.f32 %v502, 0.0
      %v527 = vadd.f32 %v503, 0.0
      %v528 = vadd.f32 %v504, 0.0
      %v529 = vadd.f32 %v505, 0.0
      %v530 = vadd.f32 %v506, 0.0
      %v531 = vadd.f32 %v507, 0.0
      %v532 = vadd.f32 %v508, 0.0
      %v533 = vadd.f32 %v509, 0.0
      %v534 = vadd.f32 %v510, 0.0
      %v535 = vadd.f32 %v511, 0.0
      %v536 = vadd.f32 %v512, 0.0
      %v537 = vadd.f32 %v513, 0.0
      %v538 = vadd.f32 %v514, 0.0
      %v539 = vadd.f32 %v515, 0.0
      %v540 = vadd.f32 %v516, 0.0
      %v541 = vadd.f32 %v517, 0.0
      %v542 = vadd.f32 %v518, 0.0
      %vm555 = vcmask 1046528
      %v556 = vrot.slane %v320, 1
      %v557 = vrot.slane %v321, 1
      %v558 = vsel %vm555, %v556, %v557
      %v559 = vrot.slane %v322, 1
      %v560 = vsel %vm555, %v557, %v559
      %v561 = vrot.slane %v323, 1
      %v562 = vrot.slane %v324, 1
      %v563 = vsel %vm555, %v561, %v562
      %v564 = vrot.slane %v325, 1
      %v565 = vsel %vm555, %v562, %v564
      %v566 = vrot.slane %v326, 1
      %v567 = vrot.slane %v327, 1
      %v568 = vsel %vm555, %v566, %v567
      %v569 = vrot.slane %v328, 1
      %v570 = vsel %vm555, %v567, %v569
      %v571 = vrot.slane %v329, 1
      %v572 = vrot.slane %v330, 1
      %v573 = vsel %vm555, %v571, %v572
      %v574 = vrot.slane %v331, 1
      %v575 = vsel %vm555, %v572, %v574
      %v576 = vrot.slane %v332, 1
      %v577 = vrot.slane %v333, 1
      %v578 = vsel %vm555, %v576, %v577
      %v579 = vrot.slane %v334, 1
      %v580 = vsel %vm555, %v577, %v579
      %v581 = vrot.slane %v335, 1
      %v582 = vrot.slane %v336, 1
      %v583 = vsel %vm555, %v581, %v582
      %v584 = vrot.slane %v337, 1
      %v585 = vsel %vm555, %v582, %v584
      %v586 = vrot.slane %v338, 1
      %v587 = vrot.slane %v339, 1
      %v588 = vsel %vm555, %v586, %v587
      %v589 = vrot.slane %v340, 1
      %v590 = vsel %vm555, %v587, %v589
      %v591 = vrot.slane %v341, 1
      %v592 = vrot.slane %v342, 1
      %v593 = vsel %vm555, %v591, %v592
      %v594 = vrot.slane %v343, 1
      %v595 = vsel %vm555, %v592, %v594
      %v596 = vrot.slane %v344, 1
      %v597 = vrot.slane %v345, 1
      %v598 = vsel %vm555, %v596, %v597
      %v599 = vrot.slane %v346, 1
      %v600 = vsel %vm555, %v597, %v599
      %v601 = vrot.slane %v347, 1
      %v602 = vrot.slane %v348, 1
      %v603 = vsel %vm555, %v601, %v602
      %v604 = vrot.slane %v349, 1
      %v605 = vsel %vm555, %v602, %v604
      %v606 = vrot.slane %v350, 1
      %v607 = vrot.slane %v351, 1
      %v608 = vsel %vm555, %v606, %v607
      %v609 = vrot.slane %v352, 1
      %v610 = vsel %vm555, %v607, %v609
      %v611 = vrot.slane %v353, 1
      %v612 = vrot.slane %v354, 1
      %v613 = vsel %vm555, %v611, %v612
      %v614 = vrot.slane %v355, 1
      %v615 = vsel %vm555, %v612, %v614
      %s616 = scalar_lea.vmem %s1, 1
      %v617 = vld [vmem:[%s616] sm:$0x1]
      %618 = vset.pattern.permute.xlu0 0
      %619 = vperm.xlu0 %618, %v558
      %v620 = vpop.permute.xlu0 %619
      %622 = vset.pattern.permute.xlu0 0
      %623 = vperm.xlu0 %622, %v560
      %v624 = vpop.permute.xlu0 %623
      %626 = vset.pattern.permute.xlu0 0
      %627 = vperm.xlu0 %626, %v563
      %v628 = vpop.permute.xlu0 %627
      %630 = vset.pattern.permute.xlu0 0
      %631 = vperm.xlu0 %630, %v565
      %v632 = vpop.permute.xlu0 %631
      %634 = vset.pattern.permute.xlu0 0
      %635 = vperm.xlu0 %634, %v568
      %v636 = vpop.permute.xlu0 %635
      %638 = vset.pattern.permute.xlu0 0
      %639 = vperm.xlu0 %638, %v570
      %v640 = vpop.permute.xlu0 %639
      %642 = vset.pattern.permute.xlu0 0
      %643 = vperm.xlu0 %642, %v573
      %v644 = vpop.permute.xlu0 %643
      %646 = vset.pattern.permute.xlu0 0
      %647 = vperm.xlu0 %646, %v575
      %v648 = vpop.permute.xlu0 %647
      %650 = vset.pattern.permute.xlu0 0
      %651 = vperm.xlu0 %650, %v578
      %v652 = vpop.permute.xlu0 %651
      %654 = vset.pattern.permute.xlu0 0
      %655 = vperm.xlu0 %654, %v580
      %v656 = vpop.permute.xlu0 %655
      %658 = vset.pattern.permute.xlu0 0
      %659 = vperm.xlu0 %658, %v583
      %v660 = vpop.permute.xlu0 %659
      %662 = vset.pattern.permute.xlu0 0
      %663 = vperm.xlu0 %662, %v585
      %v664 = vpop.permute.xlu0 %663
      %666 = vset.pattern.permute.xlu0 0
      %667 = vperm.xlu0 %666, %v588
      %v668 = vpop.permute.xlu0 %667
      %670 = vset.pattern.permute.xlu0 0
      %671 = vperm.xlu0 %670, %v590
      %v672 = vpop.permute.xlu0 %671
      %674 = vset.pattern.permute.xlu0 0
      %675 = vperm.xlu0 %674, %v593
      %v676 = vpop.permute.xlu0 %675
      %678 = vset.pattern.permute.xlu0 0
      %679 = vperm.xlu0 %678, %v595
      %v680 = vpop.permute.xlu0 %679
      %682 = vset.pattern.permute.xlu0 0
      %683 = vperm.xlu0 %682, %v598
      %v684 = vpop.permute.xlu0 %683
      %686 = vset.pattern.permute.xlu0 0
      %687 = vperm.xlu0 %686, %v600
      %v688 = vpop.permute.xlu0 %687
      %690 = vset.pattern.permute.xlu0 0
      %691 = vperm.xlu0 %690, %v603
      %v692 = vpop.permute.xlu0 %691
      %694 = vset.pattern.permute.xlu0 0
      %695 = vperm.xlu0 %694, %v605
      %v696 = vpop.permute.xlu0 %695
      %698 = vset.pattern.permute.xlu0 0
      %699 = vperm.xlu0 %698, %v608
      %v700 = vpop.permute.xlu0 %699
      %702 = vset.pattern.permute.xlu0 0
      %703 = vperm.xlu0 %702, %v610
      %v704 = vpop.permute.xlu0 %703
      %706 = vset.pattern.permute.xlu0 0
      %707 = vperm.xlu0 %706, %v613
      %v708 = vpop.permute.xlu0 %707
      %710 = vset.pattern.permute.xlu0 0
      %711 = vperm.xlu0 %710, %v615
      %v712 = vpop.permute.xlu0 %711
      %v715 = vlaneseq
      %v716 = vshrl.u32 %v715, 7
      %v717 = vsub.s32 0, %v716
      %v718 = vrot.slane %v617, %v717
      %v720 = vmul.f32 %v620, %v718
      %v721 = vmul.f32 %v624, %v718
      %v722 = vmul.f32 %v628, %v718
      %v723 = vmul.f32 %v632, %v718
      %v724 = vmul.f32 %v636, %v718
      %v725 = vmul.f32 %v640, %v718
      %v726 = vmul.f32 %v644, %v718
      %v727 = vmul.f32 %v648, %v718
      %v728 = vmul.f32 %v652, %v718
      %v729 = vmul.f32 %v656, %v718
      %v730 = vmul.f32 %v660, %v718
      %v731 = vmul.f32 %v664, %v718
      %v732 = vmul.f32 %v668, %v718
      %v733 = vmul.f32 %v672, %v718
      %v734 = vmul.f32 %v676, %v718
      %v735 = vmul.f32 %v680, %v718
      %v736 = vmul.f32 %v684, %v718
      %v737 = vmul.f32 %v688, %v718
      %v738 = vmul.f32 %v692, %v718
      %v739 = vmul.f32 %v696, %v718
      %v740 = vmul.f32 %v700, %v718
      %v741 = vmul.f32 %v704, %v718
      %v742 = vmul.f32 %v708, %v718
      %v743 = vmul.f32 %v712, %v718
      %v744 = vadd.f32 %v519, %v720
      %v745 = vadd.f32 %v520, %v721
      %v746 = vadd.f32 %v521, %v722
      %v747 = vadd.f32 %v522, %v723
      %v748 = vadd.f32 %v523, %v724
      %v749 = vadd.f32 %v524, %v725
      %v750 = vadd.f32 %v525, %v726
      %v751 = vadd.f32 %v526, %v727
      %v752 = vadd.f32 %v527, %v728
      %v753 = vadd.f32 %v528, %v729
      %v754 = vadd.f32 %v529, %v730
      %v755 = vadd.f32 %v530, %v731
      %v756 = vadd.f32 %v531, %v732
      %v757 = vadd.f32 %v532, %v733
      %v758 = vadd.f32 %v533, %v734
      %v759 = vadd.f32 %v534, %v735
      %v760 = vadd.f32 %v535, %v736
      %v761 = vadd.f32 %v536, %v737
      %v762 = vadd.f32 %v537, %v738
      %v763 = vadd.f32 %v538, %v739
      %v764 = vadd.f32 %v539, %v740
      %v765 = vadd.f32 %v540, %v741
      %v766 = vadd.f32 %v541, %v742
      %v767 = vadd.f32 %v542, %v743
      %vm768 = vcmask 1045504
      %v769 = vrot.slane %v320, 2
      %v770 = vrot.slane %v321, 2
      %v771 = vsel %vm768, %v769, %v770
      %v772 = vrot.slane %v322, 2
      %v773 = vsel %vm768, %v770, %v772
      %v774 = vrot.slane %v323, 2
      %v775 = vrot.slane %v324, 2
      %v776 = vsel %vm768, %v774, %v775
      %v777 = vrot.slane %v325, 2
      %v778 = vsel %vm768, %v775, %v777
      %v779 = vrot.slane %v326, 2
      %v780 = vrot.slane %v327, 2
      %v781 = vsel %vm768, %v779, %v780
      %v782 = vrot.slane %v328, 2
      %v783 = vsel %vm768, %v780, %v782
      %v784 = vrot.slane %v329, 2
      %v785 = vrot.slane %v330, 2
      %v786 = vsel %vm768, %v784, %v785
      %v787 = vrot.slane %v331, 2
      %v788 = vsel %vm768, %v785, %v787
      %v789 = vrot.slane %v332, 2
      %v790 = vrot.slane %v333, 2
      %v791 = vsel %vm768, %v789, %v790
      %v792 = vrot.slane %v334, 2
      %v793 = vsel %vm768, %v790, %v792
      %v794 = vrot.slane %v335, 2
      %v795 = vrot.slane %v336, 2
      %v796 = vsel %vm768, %v794, %v795
      %v797 = vrot.slane %v337, 2
      %v798 = vsel %vm768, %v795, %v797
      %v799 = vrot.slane %v338, 2
      %v800 = vrot.slane %v339, 2
      %v801 = vsel %vm768, %v799, %v800
      %v802 = vrot.slane %v340, 2
      %v803 = vsel %vm768, %v800, %v802
      %v804 = vrot.slane %v341, 2
      %v805 = vrot.slane %v342, 2
      %v806 = vsel %vm768, %v804, %v805
      %v807 = vrot.slane %v343, 2
      %v808 = vsel %vm768, %v805, %v807
      %v809 = vrot.slane %v344, 2
      %v810 = vrot.slane %v345, 2
      %v811 = vsel %vm768, %v809, %v810
      %v812 = vrot.slane %v346, 2
      %v813 = vsel %vm768, %v810, %v812
      %v814 = vrot.slane %v347, 2
      %v815 = vrot.slane %v348, 2
      %v816 = vsel %vm768, %v814, %v815
      %v817 = vrot.slane %v349, 2
      %v818 = vsel %vm768, %v815, %v817
      %v819 = vrot.slane %v350, 2
      %v820 = vrot.slane %v351, 2
      %v821 = vsel %vm768, %v819, %v820
      %v822 = vrot.slane %v352, 2
      %v823 = vsel %vm768, %v820, %v822
      %v824 = vrot.slane %v353, 2
      %v825 = vrot.slane %v354, 2
      %v826 = vsel %vm768, %v824, %v825
      %v827 = vrot.slane %v355, 2
      %v828 = vsel %vm768, %v825, %v827
      %s829 = scalar_lea.vmem %s1, 2
      %v830 = vld [vmem:[%s829] sm:$0x1]
      %831 = vset.pattern.permute.xlu0 0
      %832 = vperm.xlu0 %831, %v771
      %v833 = vpop.permute.xlu0 %832
      %835 = vset.pattern.permute.xlu0 0
      %836 = vperm.xlu0 %835, %v773
      %v837 = vpop.permute.xlu0 %836
      %839 = vset.pattern.permute.xlu0 0
      %840 = vperm.xlu0 %839, %v776
      %v841 = vpop.permute.xlu0 %840
      %843 = vset.pattern.permute.xlu0 0
      %844 = vperm.xlu0 %843, %v778
      %v845 = vpop.permute.xlu0 %844
      %847 = vset.pattern.permute.xlu0 0
      %848 = vperm.xlu0 %847, %v781
      %v849 = vpop.permute.xlu0 %848
      %851 = vset.pattern.permute.xlu0 0
      %852 = vperm.xlu0 %851, %v783
      %v853 = vpop.permute.xlu0 %852
      %855 = vset.pattern.permute.xlu0 0
      %856 = vperm.xlu0 %855, %v786
      %v857 = vpop.permute.xlu0 %856
      %859 = vset.pattern.permute.xlu0 0
      %860 = vperm.xlu0 %859, %v788
      %v861 = vpop.permute.xlu0 %860
      %863 = vset.pattern.permute.xlu0 0
      %864 = vperm.xlu0 %863, %v791
      %v865 = vpop.permute.xlu0 %864
      %867 = vset.pattern.permute.xlu0 0
      %868 = vperm.xlu0 %867, %v793
      %v869 = vpop.permute.xlu0 %868
      %871 = vset.pattern.permute.xlu0 0
      %872 = vperm.xlu0 %871, %v796
      %v873 = vpop.permute.xlu0 %872
      %875 = vset.pattern.permute.xlu0 0
      %876 = vperm.xlu0 %875, %v798
      %v877 = vpop.permute.xlu0 %876
      %879 = vset.pattern.permute.xlu0 0
      %880 = vperm.xlu0 %879, %v801
      %v881 = vpop.permute.xlu0 %880
      %883 = vset.pattern.permute.xlu0 0
      %884 = vperm.xlu0 %883, %v803
      %v885 = vpop.permute.xlu0 %884
      %887 = vset.pattern.permute.xlu0 0
      %888 = vperm.xlu0 %887, %v806
      %v889 = vpop.permute.xlu0 %888
      %891 = vset.pattern.permute.xlu0 0
      %892 = vperm.xlu0 %891, %v808
      %v893 = vpop.permute.xlu0 %892
      %895 = vset.pattern.permute.xlu0 0
      %896 = vperm.xlu0 %895, %v811
      %v897 = vpop.permute.xlu0 %896
      %899 = vset.pattern.permute.xlu0 0
      %900 = vperm.xlu0 %899, %v813
      %v901 = vpop.permute.xlu0 %900
      %903 = vset.pattern.permute.xlu0 0
      %904 = vperm.xlu0 %903, %v816
      %v905 = vpop.permute.xlu0 %904
      %907 = vset.pattern.permute.xlu0 0
      %908 = vperm.xlu0 %907, %v818
      %v909 = vpop.permute.xlu0 %908
      %911 = vset.pattern.permute.xlu0 0
      %912 = vperm.xlu0 %911, %v821
      %v913 = vpop.permute.xlu0 %912
      %915 = vset.pattern.permute.xlu0 0
      %916 = vperm.xlu0 %915, %v823
      %v917 = vpop.permute.xlu0 %916
      %919 = vset.pattern.permute.xlu0 0
      %920 = vperm.xlu0 %919, %v826
      %v921 = vpop.permute.xlu0 %920
      %923 = vset.pattern.permute.xlu0 0
      %924 = vperm.xlu0 %923, %v828
      %v925 = vpop.permute.xlu0 %924
      %v928 = vlaneseq
      %v929 = vshrl.u32 %v928, 7
      %v930 = vsub.s32 0, %v929
      %v931 = vrot.slane %v830, %v930
      %v933 = vmul.f32 %v833, %v931
      %v934 = vmul.f32 %v837, %v931
      %v935 = vmul.f32 %v841, %v931
      %v936 = vmul.f32 %v845, %v931
      %v937 = vmul.f32 %v849, %v931
      %v938 = vmul.f32 %v853, %v931
      %v939 = vmul.f32 %v857, %v931
      %v940 = vmul.f32 %v861, %v931
      %v941 = vmul.f32 %v865, %v931
      %v942 = vmul.f32 %v869, %v931
      %v943 = vmul.f32 %v873, %v931
      %v944 = vmul.f32 %v877, %v931
      %v945 = vmul.f32 %v881, %v931
      %v946 = vmul.f32 %v885, %v931
      %v947 = vmul.f32 %v889, %v931
      %v948 = vmul.f32 %v893, %v931
      %v949 = vmul.f32 %v897, %v931
      %v950 = vmul.f32 %v901, %v931
      %v951 = vmul.f32 %v905, %v931
      %v952 = vmul.f32 %v909, %v931
      %v953 = vmul.f32 %v913, %v931
      %v954 = vmul.f32 %v917, %v931
      %v955 = vmul.f32 %v921, %v931
      %v956 = vmul.f32 %v925, %v931
      %v957 = vadd.f32 %v744, %v933
      %v958 = vadd.f32 %v745, %v934
      %v959 = vadd.f32 %v746, %v935
      %v960 = vadd.f32 %v747, %v936
      %v961 = vadd.f32 %v748, %v937
      %v962 = vadd.f32 %v749, %v938
      %v963 = vadd.f32 %v750, %v939
      %v964 = vadd.f32 %v751, %v940
      %v965 = vadd.f32 %v752, %v941
      %v966 = vadd.f32 %v753, %v942
      %v967 = vadd.f32 %v754, %v943
      %v968 = vadd.f32 %v755, %v944
      %v969 = vadd.f32 %v756, %v945
      %v970 = vadd.f32 %v757, %v946
      %v971 = vadd.f32 %v758, %v947
      %v972 = vadd.f32 %v759, %v948
      %v973 = vadd.f32 %v760, %v949
      %v974 = vadd.f32 %v761, %v950
      %v975 = vadd.f32 %v762, %v951
      %v976 = vadd.f32 %v763, %v952
      %v977 = vadd.f32 %v764, %v953
      %v978 = vadd.f32 %v765, %v954
      %v979 = vadd.f32 %v766, %v955
      %v980 = vadd.f32 %v767, %v956
      %vm981 = vcmask 1044480
      %v982 = vrot.slane %v320, 3
      %v983 = vrot.slane %v321, 3
      %v984 = vsel %vm981, %v982, %v983
      %v985 = vrot.slane %v322, 3
      %v986 = vsel %vm981, %v983, %v985
      %v987 = vrot.slane %v323, 3
      %v988 = vrot.slane %v324, 3
      %v989 = vsel %vm981, %v987, %v988
      %v990 = vrot.slane %v325, 3
      %v991 = vsel %vm981, %v988, %v990
      %v992 = vrot.slane %v326, 3
      %v993 = vrot.slane %v327, 3
      %v994 = vsel %vm981, %v992, %v993
      %v995 = vrot.slane %v328, 3
      %v996 = vsel %vm981, %v993, %v995
      %v997 = vrot.slane %v329, 3
      %v998 = vrot.slane %v330, 3
      %v999 = vsel %vm981, %v997, %v998
      %v1000 = vrot.slane %v331, 3
      %v1001 = vsel %vm981, %v998, %v1000
      %v1002 = vrot.slane %v332, 3
      %v1003 = vrot.slane %v333, 3
      %v1004 = vsel %vm981, %v1002, %v1003
      %v1005 = vrot.slane %v334, 3
      %v1006 = vsel %vm981, %v1003, %v1005
      %v1007 = vrot.slane %v335, 3
      %v1008 = vrot.slane %v336, 3
      %v1009 = vsel %vm981, %v1007, %v1008
      %v1010 = vrot.slane %v337, 3
      %v1011 = vsel %vm981, %v1008, %v1010
      %v1012 = vrot.slane %v338, 3
      %v1013 = vrot.slane %v339, 3
      %v1014 = vsel %vm981, %v1012, %v1013
      %v1015 = vrot.slane %v340, 3
      %v1016 = vsel %vm981, %v1013, %v1015
      %v1017 = vrot.slane %v341, 3
      %v1018 = vrot.slane %v342, 3
      %v1019 = vsel %vm981, %v1017, %v1018
      %v1020 = vrot.slane %v343, 3
      %v1021 = vsel %vm981, %v1018, %v1020
      %v1022 = vrot.slane %v344, 3
      %v1023 = vrot.slane %v345, 3
      %v1024 = vsel %vm981, %v1022, %v1023
      %v1025 = vrot.slane %v346, 3
      %v1026 = vsel %vm981, %v1023, %v1025
      %v1027 = vrot.slane %v347, 3
      %v1028 = vrot.slane %v348, 3
      %v1029 = vsel %vm981, %v1027, %v1028
      %v1030 = vrot.slane %v349, 3
      %v1031 = vsel %vm981, %v1028, %v1030
      %v1032 = vrot.slane %v350, 3
      %v1033 = vrot.slane %v351, 3
      %v1034 = vsel %vm981, %v1032, %v1033
      %v1035 = vrot.slane %v352, 3
      %v1036 = vsel %vm981, %v1033, %v1035
      %v1037 = vrot.slane %v353, 3
      %v1038 = vrot.slane %v354, 3
      %v1039 = vsel %vm981, %v1037, %v1038
      %v1040 = vrot.slane %v355, 3
      %v1041 = vsel %vm981, %v1038, %v1040
      %s1042 = scalar_lea.vmem %s1, 3
      %v1043 = vld [vmem:[%s1042] sm:$0x1]
      %1044 = vset.pattern.permute.xlu0 0
      %1045 = vperm.xlu0 %1044, %v984
      %v1046 = vpop.permute.xlu0 %1045
      %1048 = vset.pattern.permute.xlu0 0
      %1049 = vperm.xlu0 %1048, %v986
      %v1050 = vpop.permute.xlu0 %1049
      %1052 = vset.pattern.permute.xlu0 0
      %1053 = vperm.xlu0 %1052, %v989
      %v1054 = vpop.permute.xlu0 %1053
      %1056 = vset.pattern.permute.xlu0 0
      %1057 = vperm.xlu0 %1056, %v991
      %v1058 = vpop.permute.xlu0 %1057
      %1060 = vset.pattern.permute.xlu0 0
      %1061 = vperm.xlu0 %1060, %v994
      %v1062 = vpop.permute.xlu0 %1061
      %1064 = vset.pattern.permute.xlu0 0
      %1065 = vperm.xlu0 %1064, %v996
      %v1066 = vpop.permute.xlu0 %1065
      %1068 = vset.pattern.permute.xlu0 0
      %1069 = vperm.xlu0 %1068, %v999
      %v1070 = vpop.permute.xlu0 %1069
      %1072 = vset.pattern.permute.xlu0 0
      %1073 = vperm.xlu0 %1072, %v1001
      %v1074 = vpop.permute.xlu0 %1073
      %1076 = vset.pattern.permute.xlu0 0
      %1077 = vperm.xlu0 %1076, %v1004
      %v1078 = vpop.permute.xlu0 %1077
      %1080 = vset.pattern.permute.xlu0 0
      %1081 = vperm.xlu0 %1080, %v1006
      %v1082 = vpop.permute.xlu0 %1081
      %1084 = vset.pattern.permute.xlu0 0
      %1085 = vperm.xlu0 %1084, %v1009
      %v1086 = vpop.permute.xlu0 %1085
      %1088 = vset.pattern.permute.xlu0 0
      %1089 = vperm.xlu0 %1088, %v1011
      %v1090 = vpop.permute.xlu0 %1089
      %1092 = vset.pattern.permute.xlu0 0
      %1093 = vperm.xlu0 %1092, %v1014
      %v1094 = vpop.permute.xlu0 %1093
      %1096 = vset.pattern.permute.xlu0 0
      %1097 = vperm.xlu0 %1096, %v1016
      %v1098 = vpop.permute.xlu0 %1097
      %1100 = vset.pattern.permute.xlu0 0
      %1101 = vperm.xlu0 %1100, %v1019
      %v1102 = vpop.permute.xlu0 %1101
      %1104 = vset.pattern.permute.xlu0 0
      %1105 = vperm.xlu0 %1104, %v1021
      %v1106 = vpop.permute.xlu0 %1105
      %1108 = vset.pattern.permute.xlu0 0
      %1109 = vperm.xlu0 %1108, %v1024
      %v1110 = vpop.permute.xlu0 %1109
      %1112 = vset.pattern.permute.xlu0 0
      %1113 = vperm.xlu0 %1112, %v1026
      %v1114 = vpop.permute.xlu0 %1113
      %1116 = vset.pattern.permute.xlu0 0
      %1117 = vperm.xlu0 %1116, %v1029
      %v1118 = vpop.permute.xlu0 %1117
      %1120 = vset.pattern.permute.xlu0 0
      %1121 = vperm.xlu0 %1120, %v1031
      %v1122 = vpop.permute.xlu0 %1121
      %1124 = vset.pattern.permute.xlu0 0
      %1125 = vperm.xlu0 %1124, %v1034
      %v1126 = vpop.permute.xlu0 %1125
      %1128 = vset.pattern.permute.xlu0 0
      %1129 = vperm.xlu0 %1128, %v1036
      %v1130 = vpop.permute.xlu0 %1129
      %1132 = vset.pattern.permute.xlu0 0
      %1133 = vperm.xlu0 %1132, %v1039
      %v1134 = vpop.permute.xlu0 %1133
      %1136 = vset.pattern.permute.xlu0 0
      %1137 = vperm.xlu0 %1136, %v1041
      %v1138 = vpop.permute.xlu0 %1137
      %v1141 = vlaneseq
      %v1142 = vshrl.u32 %v1141, 7
      %v1143 = vsub.s32 0, %v1142
      %v1144 = vrot.slane %v1043, %v1143
      %v1146 = vmul.f32 %v1046, %v1144
      %v1147 = vmul.f32 %v1050, %v1144
      %v1148 = vmul.f32 %v1054, %v1144
      %v1149 = vmul.f32 %v1058, %v1144
      %v1150 = vmul.f32 %v1062, %v1144
      %v1151 = vmul.f32 %v1066, %v1144
      %v1152 = vmul.f32 %v1070, %v1144
      %v1153 = vmul.f32 %v1074, %v1144
      %v1154 = vmul.f32 %v1078, %v1144
      %v1155 = vmul.f32 %v1082, %v1144
      %v1156 = vmul.f32 %v1086, %v1144
      %v1157 = vmul.f32 %v1090, %v1144
      %v1158 = vmul.f32 %v1094, %v1144
      %v1159 = vmul.f32 %v1098, %v1144
      %v1160 = vmul.f32 %v1102, %v1144
      %v1161 = vmul.f32 %v1106, %v1144
      %v1162 = vmul.f32 %v1110, %v1144
      %v1163 = vmul.f32 %v1114, %v1144
      %v1164 = vmul.f32 %v1118, %v1144
      %v1165 = vmul.f32 %v1122, %v1144
      %v1166 = vmul.f32 %v1126, %v1144
      %v1167 = vmul.f32 %v1130, %v1144
      %v1168 = vmul.f32 %v1134, %v1144
      %v1169 = vmul.f32 %v1138, %v1144
      %v1170 = vadd.f32 %v957, %v1146
      %v1171 = vadd.f32 %v958, %v1147
      %v1172 = vadd.f32 %v959, %v1148
      %v1173 = vadd.f32 %v960, %v1149
      %v1174 = vadd.f32 %v961, %v1150
      %v1175 = vadd.f32 %v962, %v1151
      %v1176 = vadd.f32 %v963, %v1152
      %v1177 = vadd.f32 %v964, %v1153
      %v1178 = vadd.f32 %v965, %v1154
      %v1179 = vadd.f32 %v966, %v1155
      %v1180 = vadd.f32 %v967, %v1156
      %v1181 = vadd.f32 %v968, %v1157
      %v1182 = vadd.f32 %v969, %v1158
      %v1183 = vadd.f32 %v970, %v1159
      %v1184 = vadd.f32 %v971, %v1160
      %v1185 = vadd.f32 %v972, %v1161
      %v1186 = vadd.f32 %v973, %v1162
      %v1187 = vadd.f32 %v974, %v1163
      %v1188 = vadd.f32 %v975, %v1164
      %v1189 = vadd.f32 %v976, %v1165
      %v1190 = vadd.f32 %v977, %v1166
      %v1191 = vadd.f32 %v978, %v1167
      %v1192 = vadd.f32 %v979, %v1168
      %v1193 = vadd.f32 %v980, %v1169
      %vm1194 = vcmask 1043456
      %v1195 = vrot.slane %v320, 4
      %v1196 = vrot.slane %v321, 4
      %v1197 = vsel %vm1194, %v1195, %v1196
      %v1198 = vrot.slane %v322, 4
      %v1199 = vsel %vm1194, %v1196, %v1198
      %v1200 = vrot.slane %v323, 4
      %v1201 = vrot.slane %v324, 4
      %v1202 = vsel %vm1194, %v1200, %v1201
      %v1203 = vrot.slane %v325, 4
      %v1204 = vsel %vm1194, %v1201, %v1203
      %v1205 = vrot.slane %v326, 4
      %v1206 = vrot.slane %v327, 4
      %v1207 = vsel %vm1194, %v1205, %v1206
      %v1208 = vrot.slane %v328, 4
      %v1209 = vsel %vm1194, %v1206, %v1208
      %v1210 = vrot.slane %v329, 4
      %v1211 = vrot.slane %v330, 4
      %v1212 = vsel %vm1194, %v1210, %v1211
      %v1213 = vrot.slane %v331, 4
      %v1214 = vsel %vm1194, %v1211, %v1213
      %v1215 = vrot.slane %v332, 4
      %v1216 = vrot.slane %v333, 4
      %v1217 = vsel %vm1194, %v1215, %v1216
      %v1218 = vrot.slane %v334, 4
      %v1219 = vsel %vm1194, %v1216, %v1218
      %v1220 = vrot.slane %v335, 4
      %v1221 = vrot.slane %v336, 4
      %v1222 = vsel %vm1194, %v1220, %v1221
      %v1223 = vrot.slane %v337, 4
      %v1224 = vsel %vm1194, %v1221, %v1223
      %v1225 = vrot.slane %v338, 4
      %v1226 = vrot.slane %v339, 4
      %v1227 = vsel %vm1194, %v1225, %v1226
      %v1228 = vrot.slane %v340, 4
      %v1229 = vsel %vm1194, %v1226, %v1228
      %v1230 = vrot.slane %v341, 4
      %v1231 = vrot.slane %v342, 4
      %v1232 = vsel %vm1194, %v1230, %v1231
      %v1233 = vrot.slane %v343, 4
      %v1234 = vsel %vm1194, %v1231, %v1233
      %v1235 = vrot.slane %v344, 4
      %v1236 = vrot.slane %v345, 4
      %v1237 = vsel %vm1194, %v1235, %v1236
      %v1238 = vrot.slane %v346, 4
      %v1239 = vsel %vm1194, %v1236, %v1238
      %v1240 = vrot.slane %v347, 4
      %v1241 = vrot.slane %v348, 4
      %v1242 = vsel %vm1194, %v1240, %v1241
      %v1243 = vrot.slane %v349, 4
      %v1244 = vsel %vm1194, %v1241, %v1243
      %v1245 = vrot.slane %v350, 4
      %v1246 = vrot.slane %v351, 4
      %v1247 = vsel %vm1194, %v1245, %v1246
      %v1248 = vrot.slane %v352, 4
      %v1249 = vsel %vm1194, %v1246, %v1248
      %v1250 = vrot.slane %v353, 4
      %v1251 = vrot.slane %v354, 4
      %v1252 = vsel %vm1194, %v1250, %v1251
      %v1253 = vrot.slane %v355, 4
      %v1254 = vsel %vm1194, %v1251, %v1253
      %s1255 = scalar_lea.vmem %s1, 4
      %v1256 = vld [vmem:[%s1255] sm:$0x1]
      %1257 = vset.pattern.permute.xlu0 0
      %1258 = vperm.xlu0 %1257, %v1197
      %v1259 = vpop.permute.xlu0 %1258
      %1261 = vset.pattern.permute.xlu0 0
      %1262 = vperm.xlu0 %1261, %v1199
      %v1263 = vpop.permute.xlu0 %1262
      %1265 = vset.pattern.permute.xlu0 0
      %1266 = vperm.xlu0 %1265, %v1202
      %v1267 = vpop.permute.xlu0 %1266
      %1269 = vset.pattern.permute.xlu0 0
      %1270 = vperm.xlu0 %1269, %v1204
      %v1271 = vpop.permute.xlu0 %1270
      %1273 = vset.pattern.permute.xlu0 0
      %1274 = vperm.xlu0 %1273, %v1207
      %v1275 = vpop.permute.xlu0 %1274
      %1277 = vset.pattern.permute.xlu0 0
      %1278 = vperm.xlu0 %1277, %v1209
      %v1279 = vpop.permute.xlu0 %1278
      %1281 = vset.pattern.permute.xlu0 0
      %1282 = vperm.xlu0 %1281, %v1212
      %v1283 = vpop.permute.xlu0 %1282
      %1285 = vset.pattern.permute.xlu0 0
      %1286 = vperm.xlu0 %1285, %v1214
      %v1287 = vpop.permute.xlu0 %1286
      %1289 = vset.pattern.permute.xlu0 0
      %1290 = vperm.xlu0 %1289, %v1217
      %v1291 = vpop.permute.xlu0 %1290
      %1293 = vset.pattern.permute.xlu0 0
      %1294 = vperm.xlu0 %1293, %v1219
      %v1295 = vpop.permute.xlu0 %1294
      %1297 = vset.pattern.permute.xlu0 0
      %1298 = vperm.xlu0 %1297, %v1222
      %v1299 = vpop.permute.xlu0 %1298
      %1301 = vset.pattern.permute.xlu0 0
      %1302 = vperm.xlu0 %1301, %v1224
      %v1303 = vpop.permute.xlu0 %1302
      %1305 = vset.pattern.permute.xlu0 0
      %1306 = vperm.xlu0 %1305, %v1227
      %v1307 = vpop.permute.xlu0 %1306
      %1309 = vset.pattern.permute.xlu0 0
      %1310 = vperm.xlu0 %1309, %v1229
      %v1311 = vpop.permute.xlu0 %1310
      %1313 = vset.pattern.permute.xlu0 0
      %1314 = vperm.xlu0 %1313, %v1232
      %v1315 = vpop.permute.xlu0 %1314
      %1317 = vset.pattern.permute.xlu0 0
      %1318 = vperm.xlu0 %1317, %v1234
      %v1319 = vpop.permute.xlu0 %1318
      %1321 = vset.pattern.permute.xlu0 0
      %1322 = vperm.xlu0 %1321, %v1237
      %v1323 = vpop.permute.xlu0 %1322
      %1325 = vset.pattern.permute.xlu0 0
      %1326 = vperm.xlu0 %1325, %v1239
      %v1327 = vpop.permute.xlu0 %1326
      %1329 = vset.pattern.permute.xlu0 0
      %1330 = vperm.xlu0 %1329, %v1242
      %v1331 = vpop.permute.xlu0 %1330
      %1333 = vset.pattern.permute.xlu0 0
      %1334 = vperm.xlu0 %1333, %v1244
      %v1335 = vpop.permute.xlu0 %1334
      %1337 = vset.pattern.permute.xlu0 0
      %1338 = vperm.xlu0 %1337, %v1247
      %v1339 = vpop.permute.xlu0 %1338
      %1341 = vset.pattern.permute.xlu0 0
      %1342 = vperm.xlu0 %1341, %v1249
      %v1343 = vpop.permute.xlu0 %1342
      %1345 = vset.pattern.permute.xlu0 0
      %1346 = vperm.xlu0 %1345, %v1252
      %v1347 = vpop.permute.xlu0 %1346
      %1349 = vset.pattern.permute.xlu0 0
      %1350 = vperm.xlu0 %1349, %v1254
      %v1351 = vpop.permute.xlu0 %1350
      %v1354 = vlaneseq
      %v1355 = vshrl.u32 %v1354, 7
      %v1356 = vsub.s32 0, %v1355
      %v1357 = vrot.slane %v1256, %v1356
      %v1359 = vmul.f32 %v1259, %v1357
      %v1360 = vmul.f32 %v1263, %v1357
      %v1361 = vmul.f32 %v1267, %v1357
      %v1362 = vmul.f32 %v1271, %v1357
      %v1363 = vmul.f32 %v1275, %v1357
      %v1364 = vmul.f32 %v1279, %v1357
      %v1365 = vmul.f32 %v1283, %v1357
      %v1366 = vmul.f32 %v1287, %v1357
      %v1367 = vmul.f32 %v1291, %v1357
      %v1368 = vmul.f32 %v1295, %v1357
      %v1369 = vmul.f32 %v1299, %v1357
      %v1370 = vmul.f32 %v1303, %v1357
      %v1371 = vmul.f32 %v1307, %v1357
      %v1372 = vmul.f32 %v1311, %v1357
      %v1373 = vmul.f32 %v1315, %v1357
      %v1374 = vmul.f32 %v1319, %v1357
      %v1375 = vmul.f32 %v1323, %v1357
      %v1376 = vmul.f32 %v1327, %v1357
      %v1377 = vmul.f32 %v1331, %v1357
      %v1378 = vmul.f32 %v1335, %v1357
      %v1379 = vmul.f32 %v1339, %v1357
      %v1380 = vmul.f32 %v1343, %v1357
      %v1381 = vmul.f32 %v1347, %v1357
      %v1382 = vmul.f32 %v1351, %v1357
      %v1383 = vadd.f32 %v1170, %v1359
      %v1384 = vadd.f32 %v1171, %v1360
      %v1385 = vadd.f32 %v1172, %v1361
      %v1386 = vadd.f32 %v1173, %v1362
      %v1387 = vadd.f32 %v1174, %v1363
      %v1388 = vadd.f32 %v1175, %v1364
      %v1389 = vadd.f32 %v1176, %v1365
      %v1390 = vadd.f32 %v1177, %v1366
      %v1391 = vadd.f32 %v1178, %v1367
      %v1392 = vadd.f32 %v1179, %v1368
      %v1393 = vadd.f32 %v1180, %v1369
      %v1394 = vadd.f32 %v1181, %v1370
      %v1395 = vadd.f32 %v1182, %v1371
      %v1396 = vadd.f32 %v1183, %v1372
      %v1397 = vadd.f32 %v1184, %v1373
      %v1398 = vadd.f32 %v1185, %v1374
      %v1399 = vadd.f32 %v1186, %v1375
      %v1400 = vadd.f32 %v1187, %v1376
      %v1401 = vadd.f32 %v1188, %v1377
      %v1402 = vadd.f32 %v1189, %v1378
      %v1403 = vadd.f32 %v1190, %v1379
      %v1404 = vadd.f32 %v1191, %v1380
      %v1405 = vadd.f32 %v1192, %v1381
      %v1406 = vadd.f32 %v1193, %v1382
      %s1407 = scalar_lea.vmem %s1, 5
      %v1408 = vld [vmem:[%s1407] sm:$0x1]
      %1410 = vset.pattern.permute.xlu0 0
      %1411 = vperm.xlu0 %1410, %v356
      %v1412 = vpop.permute.xlu0 %1411
      %1415 = vset.pattern.permute.xlu0 0
      %1416 = vperm.xlu0 %1415, %v357
      %v1417 = vpop.permute.xlu0 %1416
      %v1420 = vlaneseq
      %v1421 = vshrl.u32 %v1420, 7
      %v1422 = vsub.s32 0, %v1421
      %v1423 = vrot.slane %v1408, %v1422
      %v1425 = vmul.f32 %v382, %v1423
      %v1426 = vmul.f32 %v387, %v1423
      %v1427 = vmul.f32 %v392, %v1423
      %v1428 = vmul.f32 %v397, %v1423
      %v1429 = vmul.f32 %v402, %v1423
      %v1430 = vmul.f32 %v407, %v1423
      %v1431 = vmul.f32 %v412, %v1423
      %v1432 = vmul.f32 %v417, %v1423
      %v1433 = vmul.f32 %v422, %v1423
      %v1434 = vmul.f32 %v427, %v1423
      %v1435 = vmul.f32 %v432, %v1423
      %v1436 = vmul.f32 %v437, %v1423
      %v1437 = vmul.f32 %v442, %v1423
      %v1438 = vmul.f32 %v447, %v1423
      %v1439 = vmul.f32 %v452, %v1423
      %v1440 = vmul.f32 %v457, %v1423
      %v1441 = vmul.f32 %v462, %v1423
      %v1442 = vmul.f32 %v467, %v1423
      %v1443 = vmul.f32 %v472, %v1423
      %v1444 = vmul.f32 %v477, %v1423
      %v1445 = vmul.f32 %v482, %v1423
      %v1446 = vmul.f32 %v487, %v1423
      %v1447 = vmul.f32 %v1412, %v1423
      %v1448 = vmul.f32 %v1417, %v1423
      %v1449 = vadd.f32 %v1383, %v1425
      %v1450 = vadd.f32 %v1384, %v1426
      %v1451 = vadd.f32 %v1385, %v1427
      %v1452 = vadd.f32 %v1386, %v1428
      %v1453 = vadd.f32 %v1387, %v1429
      %v1454 = vadd.f32 %v1388, %v1430
      %v1455 = vadd.f32 %v1389, %v1431
      %v1456 = vadd.f32 %v1390, %v1432
      %v1457 = vadd.f32 %v1391, %v1433
      %v1458 = vadd.f32 %v1392, %v1434
      %v1459 = vadd.f32 %v1393, %v1435
      %v1460 = vadd.f32 %v1394, %v1436
      %v1461 = vadd.f32 %v1395, %v1437
      %v1462 = vadd.f32 %v1396, %v1438
      %v1463 = vadd.f32 %v1397, %v1439
      %v1464 = vadd.f32 %v1398, %v1440
      %v1465 = vadd.f32 %v1399, %v1441
      %v1466 = vadd.f32 %v1400, %v1442
      %v1467 = vadd.f32 %v1401, %v1443
      %v1468 = vadd.f32 %v1402, %v1444
      %v1469 = vadd.f32 %v1403, %v1445
      %v1470 = vadd.f32 %v1404, %v1446
      %v1471 = vadd.f32 %v1405, %v1447
      %v1472 = vadd.f32 %v1406, %v1448
      %v1474 = vrot.slane %v356, 1
      %v1475 = vrot.slane %v357, 1
      %v1476 = vsel %vm555, %v1474, %v1475
      %v1477 = vrot.slane %v358, 1
      %v1478 = vsel %vm555, %v1475, %v1477
      %s1479 = scalar_lea.vmem %s1, 6
      %v1480 = vld [vmem:[%s1479] sm:$0x1]
      %1481 = vset.pattern.permute.xlu0 0
      %1482 = vperm.xlu0 %1481, %v1476
      %v1483 = vpop.permute.xlu0 %1482
      %1485 = vset.pattern.permute.xlu0 0
      %1486 = vperm.xlu0 %1485, %v1478
      %v1487 = vpop.permute.xlu0 %1486
      %v1490 = vlaneseq
      %v1491 = vshrl.u32 %v1490, 7
      %v1492 = vsub.s32 0, %v1491
      %v1493 = vrot.slane %v1480, %v1492
      %v1495 = vmul.f32 %v628, %v1493
      %v1496 = vmul.f32 %v632, %v1493
      %v1497 = vmul.f32 %v636, %v1493
      %v1498 = vmul.f32 %v640, %v1493
      %v1499 = vmul.f32 %v644, %v1493
      %v1500 = vmul.f32 %v648, %v1493
      %v1501 = vmul.f32 %v652, %v1493
      %v1502 = vmul.f32 %v656, %v1493
      %v1503 = vmul.f32 %v660, %v1493
      %v1504 = vmul.f32 %v664, %v1493
      %v1505 = vmul.f32 %v668, %v1493
      %v1506 = vmul.f32 %v672, %v1493
      %v1507 = vmul.f32 %v676, %v1493
      %v1508 = vmul.f32 %v680, %v1493
      %v1509 = vmul.f32 %v684, %v1493
      %v1510 = vmul.f32 %v688, %v1493
      %v1511 = vmul.f32 %v692, %v1493
      %v1512 = vmul.f32 %v696, %v1493
      %v1513 = vmul.f32 %v700, %v1493
      %v1514 = vmul.f32 %v704, %v1493
      %v1515 = vmul.f32 %v708, %v1493
      %v1516 = vmul.f32 %v712, %v1493
      %v1517 = vmul.f32 %v1483, %v1493
      %v1518 = vmul.f32 %v1487, %v1493
      %v1519 = vadd.f32 %v1449, %v1495
      %v1520 = vadd.f32 %v1450, %v1496
      %v1521 = vadd.f32 %v1451, %v1497
      %v1522 = vadd.f32 %v1452, %v1498
      %v1523 = vadd.f32 %v1453, %v1499
      %v1524 = vadd.f32 %v1454, %v1500
      %v1525 = vadd.f32 %v1455, %v1501
      %v1526 = vadd.f32 %v1456, %v1502
      %v1527 = vadd.f32 %v1457, %v1503
      %v1528 = vadd.f32 %v1458, %v1504
      %v1529 = vadd.f32 %v1459, %v1505
      %v1530 = vadd.f32 %v1460, %v1506
      %v1531 = vadd.f32 %v1461, %v1507
      %v1532 = vadd.f32 %v1462, %v1508
      %v1533 = vadd.f32 %v1463, %v1509
      %v1534 = vadd.f32 %v1464, %v1510
      %v1535 = vadd.f32 %v1465, %v1511
      %v1536 = vadd.f32 %v1466, %v1512
      %v1537 = vadd.f32 %v1467, %v1513
      %v1538 = vadd.f32 %v1468, %v1514
      %v1539 = vadd.f32 %v1469, %v1515
      %v1540 = vadd.f32 %v1470, %v1516
      %v1541 = vadd.f32 %v1471, %v1517
      %v1542 = vadd.f32 %v1472, %v1518
      %v1543 = vrot.slane %v356, 2
      %v1544 = vrot.slane %v357, 2
      %v1545 = vsel %vm768, %v1543, %v1544
      %v1546 = vrot.slane %v358, 2
      %v1547 = vsel %vm768, %v1544, %v1546
      %s1548 = scalar_lea.vmem %s1, 7
      %v1549 = vld [vmem:[%s1548] sm:$0x1]
      %1550 = vset.pattern.permute.xlu0 0
      %1551 = vperm.xlu0 %1550, %v1545
      %v1552 = vpop.permute.xlu0 %1551
      %1554 = vset.pattern.permute.xlu0 0
      %1555 = vperm.xlu0 %1554, %v1547
      %v1556 = vpop.permute.xlu0 %1555
      %v1559 = vlaneseq
      %v1560 = vshrl.u32 %v1559, 7
      %v1561 = vsub.s32 0, %v1560
      %v1562 = vrot.slane %v1549, %v1561
      %v1564 = vmul.f32 %v841, %v1562
      %v1565 = vmul.f32 %v845, %v1562
      %v1566 = vmul.f32 %v849, %v1562
      %v1567 = vmul.f32 %v853, %v1562
      %v1568 = vmul.f32 %v857, %v1562
      %v1569 = vmul.f32 %v861, %v1562
      %v1570 = vmul.f32 %v865, %v1562
      %v1571 = vmul.f32 %v869, %v1562
      %v1572 = vmul.f32 %v873, %v1562
      %v1573 = vmul.f32 %v877, %v1562
      %v1574 = vmul.f32 %v881, %v1562
      %v1575 = vmul.f32 %v885, %v1562
      %v1576 = vmul.f32 %v889, %v1562
      %v1577 = vmul.f32 %v893, %v1562
      %v1578 = vmul.f32 %v897, %v1562
      %v1579 = vmul.f32 %v901, %v1562
      %v1580 = vmul.f32 %v905, %v1562
      %v1581 = vmul.f32 %v909, %v1562
      %v1582 = vmul.f32 %v913, %v1562
      %v1583 = vmul.f32 %v917, %v1562
      %v1584 = vmul.f32 %v921, %v1562
      %v1585 = vmul.f32 %v925, %v1562
      %v1586 = vmul.f32 %v1552, %v1562
      %v1587 = vmul.f32 %v1556, %v1562
      %v1588 = vadd.f32 %v1519, %v1564
      %v1589 = vadd.f32 %v1520, %v1565
      %v1590 = vadd.f32 %v1521, %v1566
      %v1591 = vadd.f32 %v1522, %v1567
      %v1592 = vadd.f32 %v1523, %v1568
      %v1593 = vadd.f32 %v1524, %v1569
      %v1594 = vadd.f32 %v1525, %v1570
      %v1595 = vadd.f32 %v1526, %v1571
      %v1596 = vadd.f32 %v1527, %v1572
      %v1597 = vadd.f32 %v1528, %v1573
      %v1598 = vadd.f32 %v1529, %v1574
      %v1599 = vadd.f32 %v1530, %v1575
      %v1600 = vadd.f32 %v1531, %v1576
      %v1601 = vadd.f32 %v1532, %v1577
      %v1602 = vadd.f32 %v1533, %v1578
      %v1603 = vadd.f32 %v1534, %v1579
      %v1604 = vadd.f32 %v1535, %v1580
      %v1605 = vadd.f32 %v1536, %v1581
      %v1606 = vadd.f32 %v1537, %v1582
      %v1607 = vadd.f32 %v1538, %v1583
      %v1608 = vadd.f32 %v1539, %v1584
      %v1609 = vadd.f32 %v1540, %v1585
      %v1610 = vadd.f32 %v1541, %v1586
      %v1611 = vadd.f32 %v1542, %v1587
      %v1612 = vrot.slane %v356, 3
      %v1613 = vrot.slane %v357, 3
      %v1614 = vsel %vm981, %v1612, %v1613
      %v1615 = vrot.slane %v358, 3
      %v1616 = vsel %vm981, %v1613, %v1615
      %s1617 = scalar_lea.vmem %s1, 8
      %v1618 = vld [vmem:[%s1617] sm:$0x1]
      %1619 = vset.pattern.permute.xlu0 0
      %1620 = vperm.xlu0 %1619, %v1614
      %v1621 = vpop.permute.xlu0 %1620
      %1623 = vset.pattern.permute.xlu0 0
      %1624 = vperm.xlu0 %1623, %v1616
      %v1625 = vpop.permute.xlu0 %1624
      %v1628 = vlaneseq
      %v1629 = vshrl.u32 %v1628, 7
      %v1630 = vsub.s32 0, %v1629
      %v1631 = vrot.slane %v1618, %v1630
      %v1633 = vmul.f32 %v1054, %v1631
      %v1634 = vmul.f32 %v1058, %v1631
      %v1635 = vmul.f32 %v1062, %v1631
      %v1636 = vmul.f32 %v1066, %v1631
      %v1637 = vmul.f32 %v1070, %v1631
      %v1638 = vmul.f32 %v1074, %v1631
      %v1639 = vmul.f32 %v1078, %v1631
      %v1640 = vmul.f32 %v1082, %v1631
      %v1641 = vmul.f32 %v1086, %v1631
      %v1642 = vmul.f32 %v1090, %v1631
      %v1643 = vmul.f32 %v1094, %v1631
      %v1644 = vmul.f32 %v1098, %v1631
      %v1645 = vmul.f32 %v1102, %v1631
      %v1646 = vmul.f32 %v1106, %v1631
      %v1647 = vmul.f32 %v1110, %v1631
      %v1648 = vmul.f32 %v1114, %v1631
      %v1649 = vmul.f32 %v1118, %v1631
      %v1650 = vmul.f32 %v1122, %v1631
      %v1651 = vmul.f32 %v1126, %v1631
      %v1652 = vmul.f32 %v1130, %v1631
      %v1653 = vmul.f32 %v1134, %v1631
      %v1654 = vmul.f32 %v1138, %v1631
      %v1655 = vmul.f32 %v1621, %v1631
      %v1656 = vmul.f32 %v1625, %v1631
      %v1657 = vadd.f32 %v1588, %v1633
      %v1658 = vadd.f32 %v1589, %v1634
      %v1659 = vadd.f32 %v1590, %v1635
      %v1660 = vadd.f32 %v1591, %v1636
      %v1661 = vadd.f32 %v1592, %v1637
      %v1662 = vadd.f32 %v1593, %v1638
      %v1663 = vadd.f32 %v1594, %v1639
      %v1664 = vadd.f32 %v1595, %v1640
      %v1665 = vadd.f32 %v1596, %v1641
      %v1666 = vadd.f32 %v1597, %v1642
      %v1667 = vadd.f32 %v1598, %v1643
      %v1668 = vadd.f32 %v1599, %v1644
      %v1669 = vadd.f32 %v1600, %v1645
      %v1670 = vadd.f32 %v1601, %v1646
      %v1671 = vadd.f32 %v1602, %v1647
      %v1672 = vadd.f32 %v1603, %v1648
      %v1673 = vadd.f32 %v1604, %v1649
      %v1674 = vadd.f32 %v1605, %v1650
      %v1675 = vadd.f32 %v1606, %v1651
      %v1676 = vadd.f32 %v1607, %v1652
      %v1677 = vadd.f32 %v1608, %v1653
      %v1678 = vadd.f32 %v1609, %v1654
      %v1679 = vadd.f32 %v1610, %v1655
      %v1680 = vadd.f32 %v1611, %v1656
      %v1681 = vrot.slane %v356, 4
      %v1682 = vrot.slane %v357, 4
      %v1683 = vsel %vm1194, %v1681, %v1682
      %v1684 = vrot.slane %v358, 4
      %v1685 = vsel %vm1194, %v1682, %v1684
      %s1686 = scalar_lea.vmem %s1, 9
      %v1687 = vld [vmem:[%s1686] sm:$0x1]
      %1688 = vset.pattern.permute.xlu0 0
      %1689 = vperm.xlu0 %1688, %v1683
      %v1690 = vpop.permute.xlu0 %1689
      %1692 = vset.pattern.permute.xlu0 0
      %1693 = vperm.xlu0 %1692, %v1685
      %v1694 = vpop.permute.xlu0 %1693
      %v1697 = vlaneseq
      %v1698 = vshrl.u32 %v1697, 7
      %v1699 = vsub.s32 0, %v1698
      %v1700 = vrot.slane %v1687, %v1699
      %v1702 = vmul.f32 %v1267, %v1700
      %v1703 = vmul.f32 %v1271, %v1700
      %v1704 = vmul.f32 %v1275, %v1700
      %v1705 = vmul.f32 %v1279, %v1700
      %v1706 = vmul.f32 %v1283, %v1700
      %v1707 = vmul.f32 %v1287, %v1700
      %v1708 = vmul.f32 %v1291, %v1700
      %v1709 = vmul.f32 %v1295, %v1700
      %v1710 = vmul.f32 %v1299, %v1700
      %v1711 = vmul.f32 %v1303, %v1700
      %v1712 = vmul.f32 %v1307, %v1700
      %v1713 = vmul.f32 %v1311, %v1700
      %v1714 = vmul.f32 %v1315, %v1700
      %v1715 = vmul.f32 %v1319, %v1700
      %v1716 = vmul.f32 %v1323, %v1700
      %v1717 = vmul.f32 %v1327, %v1700
      %v1718 = vmul.f32 %v1331, %v1700
      %v1719 = vmul.f32 %v1335, %v1700
      %v1720 = vmul.f32 %v1339, %v1700
      %v1721 = vmul.f32 %v1343, %v1700
      %v1722 = vmul.f32 %v1347, %v1700
      %v1723 = vmul.f32 %v1351, %v1700
      %v1724 = vmul.f32 %v1690, %v1700
      %v1725 = vmul.f32 %v1694, %v1700
      %v1726 = vadd.f32 %v1657, %v1702
      %v1727 = vadd.f32 %v1658, %v1703
      %v1728 = vadd.f32 %v1659, %v1704
      %v1729 = vadd.f32 %v1660, %v1705
      %v1730 = vadd.f32 %v1661, %v1706
      %v1731 = vadd.f32 %v1662, %v1707
      %v1732 = vadd.f32 %v1663, %v1708
      %v1733 = vadd.f32 %v1664, %v1709
      %v1734 = vadd.f32 %v1665, %v1710
      %v1735 = vadd.f32 %v1666, %v1711
      %v1736 = vadd.f32 %v1667, %v1712
      %v1737 = vadd.f32 %v1668, %v1713
      %v1738 = vadd.f32 %v1669, %v1714
      %v1739 = vadd.f32 %v1670, %v1715
      %v1740 = vadd.f32 %v1671, %v1716
      %v1741 = vadd.f32 %v1672, %v1717
      %v1742 = vadd.f32 %v1673, %v1718
      %v1743 = vadd.f32 %v1674, %v1719
      %v1744 = vadd.f32 %v1675, %v1720
      %v1745 = vadd.f32 %v1676, %v1721
      %v1746 = vadd.f32 %v1677, %v1722
      %v1747 = vadd.f32 %v1678, %v1723
      %v1748 = vadd.f32 %v1679, %v1724
      %v1749 = vadd.f32 %v1680, %v1725
      %s1750 = scalar_lea.vmem %s1, 10
      %v1751 = vld [vmem:[%s1750] sm:$0x1]
      %1753 = vset.pattern.permute.xlu0 0
      %1754 = vperm.xlu0 %1753, %v359
      %v1755 = vpop.permute.xlu0 %1754
      %1758 = vset.pattern.permute.xlu0 0
      %1759 = vperm.xlu0 %1758, %v360
      %v1760 = vpop.permute.xlu0 %1759
      %v1763 = vlaneseq
      %v1764 = vshrl.u32 %v1763, 7
      %v1765 = vsub.s32 0, %v1764
      %v1766 = vrot.slane %v1751, %v1765
      %v1768 = vmul.f32 %v392, %v1766
      %v1769 = vmul.f32 %v397, %v1766
      %v1770 = vmul.f32 %v402, %v1766
      %v1771 = vmul.f32 %v407, %v1766
      %v1772 = vmul.f32 %v412, %v1766
      %v1773 = vmul.f32 %v417, %v1766
      %v1774 = vmul.f32 %v422, %v1766
      %v1775 = vmul.f32 %v427, %v1766
      %v1776 = vmul.f32 %v432, %v1766
      %v1777 = vmul.f32 %v437, %v1766
      %v1778 = vmul.f32 %v442, %v1766
      %v1779 = vmul.f32 %v447, %v1766
      %v1780 = vmul.f32 %v452, %v1766
      %v1781 = vmul.f32 %v457, %v1766
      %v1782 = vmul.f32 %v462, %v1766
      %v1783 = vmul.f32 %v467, %v1766
      %v1784 = vmul.f32 %v472, %v1766
      %v1785 = vmul.f32 %v477, %v1766
      %v1786 = vmul.f32 %v482, %v1766
      %v1787 = vmul.f32 %v487, %v1766
      %v1788 = vmul.f32 %v1412, %v1766
      %v1789 = vmul.f32 %v1417, %v1766
      %v1790 = vmul.f32 %v1755, %v1766
      %v1791 = vmul.f32 %v1760, %v1766
      %v1792 = vadd.f32 %v1726, %v1768
      %v1793 = vadd.f32 %v1727, %v1769
      %v1794 = vadd.f32 %v1728, %v1770
      %v1795 = vadd.f32 %v1729, %v1771
      %v1796 = vadd.f32 %v1730, %v1772
      %v1797 = vadd.f32 %v1731, %v1773
      %v1798 = vadd.f32 %v1732, %v1774
      %v1799 = vadd.f32 %v1733, %v1775
      %v1800 = vadd.f32 %v1734, %v1776
      %v1801 = vadd.f32 %v1735, %v1777
      %v1802 = vadd.f32 %v1736, %v1778
      %v1803 = vadd.f32 %v1737, %v1779
      %v1804 = vadd.f32 %v1738, %v1780
      %v1805 = vadd.f32 %v1739, %v1781
      %v1806 = vadd.f32 %v1740, %v1782
      %v1807 = vadd.f32 %v1741, %v1783
      %v1808 = vadd.f32 %v1742, %v1784
      %v1809 = vadd.f32 %v1743, %v1785
      %v1810 = vadd.f32 %v1744, %v1786
      %v1811 = vadd.f32 %v1745, %v1787
      %v1812 = vadd.f32 %v1746, %v1788
      %v1813 = vadd.f32 %v1747, %v1789
      %v1814 = vadd.f32 %v1748, %v1790
      %v1815 = vadd.f32 %v1749, %v1791
      %v1817 = vrot.slane %v359, 1
      %v1818 = vrot.slane %v360, 1
      %v1819 = vsel %vm555, %v1817, %v1818
      %v1820 = vrot.slane %v361, 1
      %v1821 = vsel %vm555, %v1818, %v1820
      %s1822 = scalar_lea.vmem %s1, 11
      %v1823 = vld [vmem:[%s1822] sm:$0x1]
      %1824 = vset.pattern.permute.xlu0 0
      %1825 = vperm.xlu0 %1824, %v1819
      %v1826 = vpop.permute.xlu0 %1825
      %1828 = vset.pattern.permute.xlu0 0
      %1829 = vperm.xlu0 %1828, %v1821
      %v1830 = vpop.permute.xlu0 %1829
      %v1833 = vlaneseq
      %v1834 = vshrl.u32 %v1833, 7
      %v1835 = vsub.s32 0, %v1834
      %v1836 = vrot.slane %v1823, %v1835
      %v1838 = vmul.f32 %v636, %v1836
      %v1839 = vmul.f32 %v640, %v1836
      %v1840 = vmul.f32 %v644, %v1836
      %v1841 = vmul.f32 %v648, %v1836
      %v1842 = vmul.f32 %v652, %v1836
      %v1843 = vmul.f32 %v656, %v1836
      %v1844 = vmul.f32 %v660, %v1836
      %v1845 = vmul.f32 %v664, %v1836
      %v1846 = vmul.f32 %v668, %v1836
      %v1847 = vmul.f32 %v672, %v1836
      %v1848 = vmul.f32 %v676, %v1836
      %v1849 = vmul.f32 %v680, %v1836
      %v1850 = vmul.f32 %v684, %v1836
      %v1851 = vmul.f32 %v688, %v1836
      %v1852 = vmul.f32 %v692, %v1836
      %v1853 = vmul.f32 %v696, %v1836
      %v1854 = vmul.f32 %v700, %v1836
      %v1855 = vmul.f32 %v704, %v1836
      %v1856 = vmul.f32 %v708, %v1836
      %v1857 = vmul.f32 %v712, %v1836
      %v1858 = vmul.f32 %v1483, %v1836
      %v1859 = vmul.f32 %v1487, %v1836
      %v1860 = vmul.f32 %v1826, %v1836
      %v1861 = vmul.f32 %v1830, %v1836
      %v1862 = vadd.f32 %v1792, %v1838
      %v1863 = vadd.f32 %v1793, %v1839
      %v1864 = vadd.f32 %v1794, %v1840
      %v1865 = vadd.f32 %v1795, %v1841
      %v1866 = vadd.f32 %v1796, %v1842
      %v1867 = vadd.f32 %v1797, %v1843
      %v1868 = vadd.f32 %v1798, %v1844
      %v1869 = vadd.f32 %v1799, %v1845
      %v1870 = vadd.f32 %v1800, %v1846
      %v1871 = vadd.f32 %v1801, %v1847
      %v1872 = vadd.f32 %v1802, %v1848
      %v1873 = vadd.f32 %v1803, %v1849
      %v1874 = vadd.f32 %v1804, %v1850
      %v1875 = vadd.f32 %v1805, %v1851
      %v1876 = vadd.f32 %v1806, %v1852
      %v1877 = vadd.f32 %v1807, %v1853
      %v1878 = vadd.f32 %v1808, %v1854
      %v1879 = vadd.f32 %v1809, %v1855
      %v1880 = vadd.f32 %v1810, %v1856
      %v1881 = vadd.f32 %v1811, %v1857
      %v1882 = vadd.f32 %v1812, %v1858
      %v1883 = vadd.f32 %v1813, %v1859
      %v1884 = vadd.f32 %v1814, %v1860
      %v1885 = vadd.f32 %v1815, %v1861
      %v1886 = vrot.slane %v359, 2
      %v1887 = vrot.slane %v360, 2
      %v1888 = vsel %vm768, %v1886, %v1887
      %v1889 = vrot.slane %v361, 2
      %v1890 = vsel %vm768, %v1887, %v1889
      %s1891 = scalar_lea.vmem %s1, 12
      %v1892 = vld [vmem:[%s1891] sm:$0x1]
      %1893 = vset.pattern.permute.xlu0 0
      %1894 = vperm.xlu0 %1893, %v1888
      %v1895 = vpop.permute.xlu0 %1894
      %1897 = vset.pattern.permute.xlu0 0
      %1898 = vperm.xlu0 %1897, %v1890
      %v1899 = vpop.permute.xlu0 %1898
      %v1902 = vlaneseq
      %v1903 = vshrl.u32 %v1902, 7
      %v1904 = vsub.s32 0, %v1903
      %v1905 = vrot.slane %v1892, %v1904
      %v1907 = vmul.f32 %v849, %v1905
      %v1908 = vmul.f32 %v853, %v1905
      %v1909 = vmul.f32 %v857, %v1905
      %v1910 = vmul.f32 %v861, %v1905
      %v1911 = vmul.f32 %v865, %v1905
      %v1912 = vmul.f32 %v869, %v1905
      %v1913 = vmul.f32 %v873, %v1905
      %v1914 = vmul.f32 %v877, %v1905
      %v1915 = vmul.f32 %v881, %v1905
      %v1916 = vmul.f32 %v885, %v1905
      %v1917 = vmul.f32 %v889, %v1905
      %v1918 = vmul.f32 %v893, %v1905
      %v1919 = vmul.f32 %v897, %v1905
      %v1920 = vmul.f32 %v901, %v1905
      %v1921 = vmul.f32 %v905, %v1905
      %v1922 = vmul.f32 %v909, %v1905
      %v1923 = vmul.f32 %v913, %v1905
      %v1924 = vmul.f32 %v917, %v1905
      %v1925 = vmul.f32 %v921, %v1905
      %v1926 = vmul.f32 %v925, %v1905
      %v1927 = vmul.f32 %v1552, %v1905
      %v1928 = vmul.f32 %v1556, %v1905
      %v1929 = vmul.f32 %v1895, %v1905
      %v1930 = vmul.f32 %v1899, %v1905
      %v1931 = vadd.f32 %v1862, %v1907
      %v1932 = vadd.f32 %v1863, %v1908
      %v1933 = vadd.f32 %v1864, %v1909
      %v1934 = vadd.f32 %v1865, %v1910
      %v1935 = vadd.f32 %v1866, %v1911
      %v1936 = vadd.f32 %v1867, %v1912
      %v1937 = vadd.f32 %v1868, %v1913
      %v1938 = vadd.f32 %v1869, %v1914
      %v1939 = vadd.f32 %v1870, %v1915
      %v1940 = vadd.f32 %v1871, %v1916
      %v1941 = vadd.f32 %v1872, %v1917
      %v1942 = vadd.f32 %v1873, %v1918
      %v1943 = vadd.f32 %v1874, %v1919
      %v1944 = vadd.f32 %v1875, %v1920
      %v1945 = vadd.f32 %v1876, %v1921
      %v1946 = vadd.f32 %v1877, %v1922
      %v1947 = vadd.f32 %v1878, %v1923
      %v1948 = vadd.f32 %v1879, %v1924
      %v1949 = vadd.f32 %v1880, %v1925
      %v1950 = vadd.f32 %v1881, %v1926
      %v1951 = vadd.f32 %v1882, %v1927
      %v1952 = vadd.f32 %v1883, %v1928
      %v1953 = vadd.f32 %v1884, %v1929
      %v1954 = vadd.f32 %v1885, %v1930
      %v1955 = vrot.slane %v359, 3
      %v1956 = vrot.slane %v360, 3
      %v1957 = vsel %vm981, %v1955, %v1956
      %v1958 = vrot.slane %v361, 3
      %v1959 = vsel %vm981, %v1956, %v1958
      %s1960 = scalar_lea.vmem %s1, 13
      %v1961 = vld [vmem:[%s1960] sm:$0x1]
      %1962 = vset.pattern.permute.xlu0 0
      %1963 = vperm.xlu0 %1962, %v1957
      %v1964 = vpop.permute.xlu0 %1963
      %1966 = vset.pattern.permute.xlu0 0
      %1967 = vperm.xlu0 %1966, %v1959
      %v1968 = vpop.permute.xlu0 %1967
      %v1971 = vlaneseq
      %v1972 = vshrl.u32 %v1971, 7
      %v1973 = vsub.s32 0, %v1972
      %v1974 = vrot.slane %v1961, %v1973
      %v1976 = vmul.f32 %v1062, %v1974
      %v1977 = vmul.f32 %v1066, %v1974
      %v1978 = vmul.f32 %v1070, %v1974
      %v1979 = vmul.f32 %v1074, %v1974
      %v1980 = vmul.f32 %v1078, %v1974
      %v1981 = vmul.f32 %v1082, %v1974
      %v1982 = vmul.f32 %v1086, %v1974
      %v1983 = vmul.f32 %v1090, %v1974
      %v1984 = vmul.f32 %v1094, %v1974
      %v1985 = vmul.f32 %v1098, %v1974
      %v1986 = vmul.f32 %v1102, %v1974
      %v1987 = vmul.f32 %v1106, %v1974
      %v1988 = vmul.f32 %v1110, %v1974
      %v1989 = vmul.f32 %v1114, %v1974
      %v1990 = vmul.f32 %v1118, %v1974
      %v1991 = vmul.f32 %v1122, %v1974
      %v1992 = vmul.f32 %v1126, %v1974
      %v1993 = vmul.f32 %v1130, %v1974
      %v1994 = vmul.f32 %v1134, %v1974
      %v1995 = vmul.f32 %v1138, %v1974
      %v1996 = vmul.f32 %v1621, %v1974
      %v1997 = vmul.f32 %v1625, %v1974
      %v1998 = vmul.f32 %v1964, %v1974
      %v1999 = vmul.f32 %v1968, %v1974
      %v2000 = vadd.f32 %v1931, %v1976
      %v2001 = vadd.f32 %v1932, %v1977
      %v2002 = vadd.f32 %v1933, %v1978
      %v2003 = vadd.f32 %v1934, %v1979
      %v2004 = vadd.f32 %v1935, %v1980
      %v2005 = vadd.f32 %v1936, %v1981
      %v2006 = vadd.f32 %v1937, %v1982
      %v2007 = vadd.f32 %v1938, %v1983
      %v2008 = vadd.f32 %v1939, %v1984
      %v2009 = vadd.f32 %v1940, %v1985
      %v2010 = vadd.f32 %v1941, %v1986
      %v2011 = vadd.f32 %v1942, %v1987
      %v2012 = vadd.f32 %v1943, %v1988
      %v2013 = vadd.f32 %v1944, %v1989
      %v2014 = vadd.f32 %v1945, %v1990
      %v2015 = vadd.f32 %v1946, %v1991
      %v2016 = vadd.f32 %v1947, %v1992
      %v2017 = vadd.f32 %v1948, %v1993
      %v2018 = vadd.f32 %v1949, %v1994
      %v2019 = vadd.f32 %v1950, %v1995
      %v2020 = vadd.f32 %v1951, %v1996
      %v2021 = vadd.f32 %v1952, %v1997
      %v2022 = vadd.f32 %v1953, %v1998
      %v2023 = vadd.f32 %v1954, %v1999
      %v2024 = vrot.slane %v359, 4
      %v2025 = vrot.slane %v360, 4
      %v2026 = vsel %vm1194, %v2024, %v2025
      %v2027 = vrot.slane %v361, 4
      %v2028 = vsel %vm1194, %v2025, %v2027
      %s2029 = scalar_lea.vmem %s1, 14
      %v2030 = vld [vmem:[%s2029] sm:$0x1]
      %2031 = vset.pattern.permute.xlu0 0
      %2032 = vperm.xlu0 %2031, %v2026
      %v2033 = vpop.permute.xlu0 %2032
      %2035 = vset.pattern.permute.xlu0 0
      %2036 = vperm.xlu0 %2035, %v2028
      %v2037 = vpop.permute.xlu0 %2036
      %v2040 = vlaneseq
      %v2041 = vshrl.u32 %v2040, 7
      %v2042 = vsub.s32 0, %v2041
      %v2043 = vrot.slane %v2030, %v2042
      %v2045 = vmul.f32 %v1275, %v2043
      %v2046 = vmul.f32 %v1279, %v2043
      %v2047 = vmul.f32 %v1283, %v2043
      %v2048 = vmul.f32 %v1287, %v2043
      %v2049 = vmul.f32 %v1291, %v2043
      %v2050 = vmul.f32 %v1295, %v2043
      %v2051 = vmul.f32 %v1299, %v2043
      %v2052 = vmul.f32 %v1303, %v2043
      %v2053 = vmul.f32 %v1307, %v2043
      %v2054 = vmul.f32 %v1311, %v2043
      %v2055 = vmul.f32 %v1315, %v2043
      %v2056 = vmul.f32 %v1319, %v2043
      %v2057 = vmul.f32 %v1323, %v2043
      %v2058 = vmul.f32 %v1327, %v2043
      %v2059 = vmul.f32 %v1331, %v2043
      %v2060 = vmul.f32 %v1335, %v2043
      %v2061 = vmul.f32 %v1339, %v2043
      %v2062 = vmul.f32 %v1343, %v2043
      %v2063 = vmul.f32 %v1347, %v2043
      %v2064 = vmul.f32 %v1351, %v2043
      %v2065 = vmul.f32 %v1690, %v2043
      %v2066 = vmul.f32 %v1694, %v2043
      %v2067 = vmul.f32 %v2033, %v2043
      %v2068 = vmul.f32 %v2037, %v2043
      %v2069 = vadd.f32 %v2000, %v2045
      %v2070 = vadd.f32 %v2001, %v2046
      %v2071 = vadd.f32 %v2002, %v2047
      %v2072 = vadd.f32 %v2003, %v2048
      %v2073 = vadd.f32 %v2004, %v2049
      %v2074 = vadd.f32 %v2005, %v2050
      %v2075 = vadd.f32 %v2006, %v2051
      %v2076 = vadd.f32 %v2007, %v2052
      %v2077 = vadd.f32 %v2008, %v2053
      %v2078 = vadd.f32 %v2009, %v2054
      %v2079 = vadd.f32 %v2010, %v2055
      %v2080 = vadd.f32 %v2011, %v2056
      %v2081 = vadd.f32 %v2012, %v2057
      %v2082 = vadd.f32 %v2013, %v2058
      %v2083 = vadd.f32 %v2014, %v2059
      %v2084 = vadd.f32 %v2015, %v2060
      %v2085 = vadd.f32 %v2016, %v2061
      %v2086 = vadd.f32 %v2017, %v2062
      %v2087 = vadd.f32 %v2018, %v2063
      %v2088 = vadd.f32 %v2019, %v2064
      %v2089 = vadd.f32 %v2020, %v2065
      %v2090 = vadd.f32 %v2021, %v2066
      %v2091 = vadd.f32 %v2022, %v2067
      %v2092 = vadd.f32 %v2023, %v2068
      %s2093 = scalar_lea.vmem %s1, 15
      %v2094 = vld [vmem:[%s2093] sm:$0x1]
      %2096 = vset.pattern.permute.xlu0 0
      %2097 = vperm.xlu0 %2096, %v362
      %v2098 = vpop.permute.xlu0 %2097
      %2101 = vset.pattern.permute.xlu0 0
      %2102 = vperm.xlu0 %2101, %v363
      %v2103 = vpop.permute.xlu0 %2102
      %v2106 = vlaneseq
      %v2107 = vshrl.u32 %v2106, 7
      %v2108 = vsub.s32 0, %v2107
      %v2109 = vrot.slane %v2094, %v2108
      %v2111 = vmul.f32 %v402, %v2109
      %v2112 = vmul.f32 %v407, %v2109
      %v2113 = vmul.f32 %v412, %v2109
      %v2114 = vmul.f32 %v417, %v2109
      %v2115 = vmul.f32 %v422, %v2109
      %v2116 = vmul.f32 %v427, %v2109
      %v2117 = vmul.f32 %v432, %v2109
      %v2118 = vmul.f32 %v437, %v2109
      %v2119 = vmul.f32 %v442, %v2109
      %v2120 = vmul.f32 %v447, %v2109
      %v2121 = vmul.f32 %v452, %v2109
      %v2122 = vmul.f32 %v457, %v2109
      %v2123 = vmul.f32 %v462, %v2109
      %v2124 = vmul.f32 %v467, %v2109
      %v2125 = vmul.f32 %v472, %v2109
      %v2126 = vmul.f32 %v477, %v2109
      %v2127 = vmul.f32 %v482, %v2109
      %v2128 = vmul.f32 %v487, %v2109
      %v2129 = vmul.f32 %v1412, %v2109
      %v2130 = vmul.f32 %v1417, %v2109
      %v2131 = vmul.f32 %v1755, %v2109
      %v2132 = vmul.f32 %v1760, %v2109
      %v2133 = vmul.f32 %v2098, %v2109
      %v2134 = vmul.f32 %v2103, %v2109
      %v2135 = vadd.f32 %v2069, %v2111
      %v2136 = vadd.f32 %v2070, %v2112
      %v2137 = vadd.f32 %v2071, %v2113
      %v2138 = vadd.f32 %v2072, %v2114
      %v2139 = vadd.f32 %v2073, %v2115
      %v2140 = vadd.f32 %v2074, %v2116
      %v2141 = vadd.f32 %v2075, %v2117
      %v2142 = vadd.f32 %v2076, %v2118
      %v2143 = vadd.f32 %v2077, %v2119
      %v2144 = vadd.f32 %v2078, %v2120
      %v2145 = vadd.f32 %v2079, %v2121
      %v2146 = vadd.f32 %v2080, %v2122
      %v2147 = vadd.f32 %v2081, %v2123
      %v2148 = vadd.f32 %v2082, %v2124
      %v2149 = vadd.f32 %v2083, %v2125
      %v2150 = vadd.f32 %v2084, %v2126
      %v2151 = vadd.f32 %v2085, %v2127
      %v2152 = vadd.f32 %v2086, %v2128
      %v2153 = vadd.f32 %v2087, %v2129
      %v2154 = vadd.f32 %v2088, %v2130
      %v2155 = vadd.f32 %v2089, %v2131
      %v2156 = vadd.f32 %v2090, %v2132
      %v2157 = vadd.f32 %v2091, %v2133
      %v2158 = vadd.f32 %v2092, %v2134
      %v2160 = vrot.slane %v362, 1
      %v2161 = vrot.slane %v363, 1
      %v2162 = vsel %vm555, %v2160, %v2161
      %v2163 = vrot.slane %v364, 1
      %v2164 = vsel %vm555, %v2161, %v2163
      %s2165 = scalar_lea.vmem %s1, 16
      %v2166 = vld [vmem:[%s2165] sm:$0x1]
      %2167 = vset.pattern.permute.xlu0 0
      %2168 = vperm.xlu0 %2167, %v2162
      %v2169 = vpop.permute.xlu0 %2168
      %2171 = vset.pattern.permute.xlu0 0
      %2172 = vperm.xlu0 %2171, %v2164
      %v2173 = vpop.permute.xlu0 %2172
      %v2176 = vlaneseq
      %v2177 = vshrl.u32 %v2176, 7
      %v2178 = vsub.s32 0, %v2177
      %v2179 = vrot.slane %v2166, %v2178
      %v2181 = vmul.f32 %v644, %v2179
      %v2182 = vmul.f32 %v648, %v2179
      %v2183 = vmul.f32 %v652, %v2179
      %v2184 = vmul.f32 %v656, %v2179
      %v2185 = vmul.f32 %v660, %v2179
      %v2186 = vmul.f32 %v664, %v2179
      %v2187 = vmul.f32 %v668, %v2179
      %v2188 = vmul.f32 %v672, %v2179
      %v2189 = vmul.f32 %v676, %v2179
      %v2190 = vmul.f32 %v680, %v2179
      %v2191 = vmul.f32 %v684, %v2179
      %v2192 = vmul.f32 %v688, %v2179
      %v2193 = vmul.f32 %v692, %v2179
      %v2194 = vmul.f32 %v696, %v2179
      %v2195 = vmul.f32 %v700, %v2179
      %v2196 = vmul.f32 %v704, %v2179
      %v2197 = vmul.f32 %v708, %v2179
      %v2198 = vmul.f32 %v712, %v2179
      %v2199 = vmul.f32 %v1483, %v2179
      %v2200 = vmul.f32 %v1487, %v2179
      %v2201 = vmul.f32 %v1826, %v2179
      %v2202 = vmul.f32 %v1830, %v2179
      %v2203 = vmul.f32 %v2169, %v2179
      %v2204 = vmul.f32 %v2173, %v2179
      %v2205 = vadd.f32 %v2135, %v2181
      %v2206 = vadd.f32 %v2136, %v2182
      %v2207 = vadd.f32 %v2137, %v2183
      %v2208 = vadd.f32 %v2138, %v2184
      %v2209 = vadd.f32 %v2139, %v2185
      %v2210 = vadd.f32 %v2140, %v2186
      %v2211 = vadd.f32 %v2141, %v2187
      %v2212 = vadd.f32 %v2142, %v2188
      %v2213 = vadd.f32 %v2143, %v2189
      %v2214 = vadd.f32 %v2144, %v2190
      %v2215 = vadd.f32 %v2145, %v2191
      %v2216 = vadd.f32 %v2146, %v2192
      %v2217 = vadd.f32 %v2147, %v2193
      %v2218 = vadd.f32 %v2148, %v2194
      %v2219 = vadd.f32 %v2149, %v2195
      %v2220 = vadd.f32 %v2150, %v2196
      %v2221 = vadd.f32 %v2151, %v2197
      %v2222 = vadd.f32 %v2152, %v2198
      %v2223 = vadd.f32 %v2153, %v2199
      %v2224 = vadd.f32 %v2154, %v2200
      %v2225 = vadd.f32 %v2155, %v2201
      %v2226 = vadd.f32 %v2156, %v2202
      %v2227 = vadd.f32 %v2157, %v2203
      %v2228 = vadd.f32 %v2158, %v2204
      %v2229 = vrot.slane %v362, 2
      %v2230 = vrot.slane %v363, 2
      %v2231 = vsel %vm768, %v2229, %v2230
      %v2232 = vrot.slane %v364, 2
      %v2233 = vsel %vm768, %v2230, %v2232
      %s2234 = scalar_lea.vmem %s1, 17
      %v2235 = vld [vmem:[%s2234] sm:$0x1]
      %2236 = vset.pattern.permute.xlu0 0
      %2237 = vperm.xlu0 %2236, %v2231
      %v2238 = vpop.permute.xlu0 %2237
      %2240 = vset.pattern.permute.xlu0 0
      %2241 = vperm.xlu0 %2240, %v2233
      %v2242 = vpop.permute.xlu0 %2241
      %v2245 = vlaneseq
      %v2246 = vshrl.u32 %v2245, 7
      %v2247 = vsub.s32 0, %v2246
      %v2248 = vrot.slane %v2235, %v2247
      %v2250 = vmul.f32 %v857, %v2248
      %v2251 = vmul.f32 %v861, %v2248
      %v2252 = vmul.f32 %v865, %v2248
      %v2253 = vmul.f32 %v869, %v2248
      %v2254 = vmul.f32 %v873, %v2248
      %v2255 = vmul.f32 %v877, %v2248
      %v2256 = vmul.f32 %v881, %v2248
      %v2257 = vmul.f32 %v885, %v2248
      %v2258 = vmul.f32 %v889, %v2248
      %v2259 = vmul.f32 %v893, %v2248
      %v2260 = vmul.f32 %v897, %v2248
      %v2261 = vmul.f32 %v901, %v2248
      %v2262 = vmul.f32 %v905, %v2248
      %v2263 = vmul.f32 %v909, %v2248
      %v2264 = vmul.f32 %v913, %v2248
      %v2265 = vmul.f32 %v917, %v2248
      %v2266 = vmul.f32 %v921, %v2248
      %v2267 = vmul.f32 %v925, %v2248
      %v2268 = vmul.f32 %v1552, %v2248
      %v2269 = vmul.f32 %v1556, %v2248
      %v2270 = vmul.f32 %v1895, %v2248
      %v2271 = vmul.f32 %v1899, %v2248
      %v2272 = vmul.f32 %v2238, %v2248
      %v2273 = vmul.f32 %v2242, %v2248
      %v2274 = vadd.f32 %v2205, %v2250
      %v2275 = vadd.f32 %v2206, %v2251
      %v2276 = vadd.f32 %v2207, %v2252
      %v2277 = vadd.f32 %v2208, %v2253
      %v2278 = vadd.f32 %v2209, %v2254
      %v2279 = vadd.f32 %v2210, %v2255
      %v2280 = vadd.f32 %v2211, %v2256
      %v2281 = vadd.f32 %v2212, %v2257
      %v2282 = vadd.f32 %v2213, %v2258
      %v2283 = vadd.f32 %v2214, %v2259
      %v2284 = vadd.f32 %v2215, %v2260
      %v2285 = vadd.f32 %v2216, %v2261
      %v2286 = vadd.f32 %v2217, %v2262
      %v2287 = vadd.f32 %v2218, %v2263
      %v2288 = vadd.f32 %v2219, %v2264
      %v2289 = vadd.f32 %v2220, %v2265
      %v2290 = vadd.f32 %v2221, %v2266
      %v2291 = vadd.f32 %v2222, %v2267
      %v2292 = vadd.f32 %v2223, %v2268
      %v2293 = vadd.f32 %v2224, %v2269
      %v2294 = vadd.f32 %v2225, %v2270
      %v2295 = vadd.f32 %v2226, %v2271
      %v2296 = vadd.f32 %v2227, %v2272
      %v2297 = vadd.f32 %v2228, %v2273
      %v2298 = vrot.slane %v362, 3
      %v2299 = vrot.slane %v363, 3
      %v2300 = vsel %vm981, %v2298, %v2299
      %v2301 = vrot.slane %v364, 3
      %v2302 = vsel %vm981, %v2299, %v2301
      %s2303 = scalar_lea.vmem %s1, 18
      %v2304 = vld [vmem:[%s2303] sm:$0x1]
      %2305 = vset.pattern.permute.xlu0 0
      %2306 = vperm.xlu0 %2305, %v2300
      %v2307 = vpop.permute.xlu0 %2306
      %2309 = vset.pattern.permute.xlu0 0
      %2310 = vperm.xlu0 %2309, %v2302
      %v2311 = vpop.permute.xlu0 %2310
      %v2314 = vlaneseq
      %v2315 = vshrl.u32 %v2314, 7
      %v2316 = vsub.s32 0, %v2315
      %v2317 = vrot.slane %v2304, %v2316
      %v2319 = vmul.f32 %v1070, %v2317
      %v2320 = vmul.f32 %v1074, %v2317
      %v2321 = vmul.f32 %v1078, %v2317
      %v2322 = vmul.f32 %v1082, %v2317
      %v2323 = vmul.f32 %v1086, %v2317
      %v2324 = vmul.f32 %v1090, %v2317
      %v2325 = vmul.f32 %v1094, %v2317
      %v2326 = vmul.f32 %v1098, %v2317
      %v2327 = vmul.f32 %v1102, %v2317
      %v2328 = vmul.f32 %v1106, %v2317
      %v2329 = vmul.f32 %v1110, %v2317
      %v2330 = vmul.f32 %v1114, %v2317
      %v2331 = vmul.f32 %v1118, %v2317
      %v2332 = vmul.f32 %v1122, %v2317
      %v2333 = vmul.f32 %v1126, %v2317
      %v2334 = vmul.f32 %v1130, %v2317
      %v2335 = vmul.f32 %v1134, %v2317
      %v2336 = vmul.f32 %v1138, %v2317
      %v2337 = vmul.f32 %v1621, %v2317
      %v2338 = vmul.f32 %v1625, %v2317
      %v2339 = vmul.f32 %v1964, %v2317
      %v2340 = vmul.f32 %v1968, %v2317
      %v2341 = vmul.f32 %v2307, %v2317
      %v2342 = vmul.f32 %v2311, %v2317
      %v2343 = vadd.f32 %v2274, %v2319
      %v2344 = vadd.f32 %v2275, %v2320
      %v2345 = vadd.f32 %v2276, %v2321
      %v2346 = vadd.f32 %v2277, %v2322
      %v2347 = vadd.f32 %v2278, %v2323
      %v2348 = vadd.f32 %v2279, %v2324
      %v2349 = vadd.f32 %v2280, %v2325
      %v2350 = vadd.f32 %v2281, %v2326
      %v2351 = vadd.f32 %v2282, %v2327
      %v2352 = vadd.f32 %v2283, %v2328
      %v2353 = vadd.f32 %v2284, %v2329
      %v2354 = vadd.f32 %v2285, %v2330
      %v2355 = vadd.f32 %v2286, %v2331
      %v2356 = vadd.f32 %v2287, %v2332
      %v2357 = vadd.f32 %v2288, %v2333
      %v2358 = vadd.f32 %v2289, %v2334
      %v2359 = vadd.f32 %v2290, %v2335
      %v2360 = vadd.f32 %v2291, %v2336
      %v2361 = vadd.f32 %v2292, %v2337
      %v2362 = vadd.f32 %v2293, %v2338
      %v2363 = vadd.f32 %v2294, %v2339
      %v2364 = vadd.f32 %v2295, %v2340
      %v2365 = vadd.f32 %v2296, %v2341
      %v2366 = vadd.f32 %v2297, %v2342
      %v2367 = vrot.slane %v362, 4
      %v2368 = vrot.slane %v363, 4
      %v2369 = vsel %vm1194, %v2367, %v2368
      %v2370 = vrot.slane %v364, 4
      %v2371 = vsel %vm1194, %v2368, %v2370
      %s2372 = scalar_lea.vmem %s1, 19
      %v2373 = vld [vmem:[%s2372] sm:$0x1]
      %2374 = vset.pattern.permute.xlu0 0
      %2375 = vperm.xlu0 %2374, %v2369
      %v2376 = vpop.permute.xlu0 %2375
      %2378 = vset.pattern.permute.xlu0 0
      %2379 = vperm.xlu0 %2378, %v2371
      %v2380 = vpop.permute.xlu0 %2379
      %v2383 = vlaneseq
      %v2384 = vshrl.u32 %v2383, 7
      %v2385 = vsub.s32 0, %v2384
      %v2386 = vrot.slane %v2373, %v2385
      %v2388 = vmul.f32 %v1283, %v2386
      %v2389 = vmul.f32 %v1287, %v2386
      %v2390 = vmul.f32 %v1291, %v2386
      %v2391 = vmul.f32 %v1295, %v2386
      %v2392 = vmul.f32 %v1299, %v2386
      %v2393 = vmul.f32 %v1303, %v2386
      %v2394 = vmul.f32 %v1307, %v2386
      %v2395 = vmul.f32 %v1311, %v2386
      %v2396 = vmul.f32 %v1315, %v2386
      %v2397 = vmul.f32 %v1319, %v2386
      %v2398 = vmul.f32 %v1323, %v2386
      %v2399 = vmul.f32 %v1327, %v2386
      %v2400 = vmul.f32 %v1331, %v2386
      %v2401 = vmul.f32 %v1335, %v2386
      %v2402 = vmul.f32 %v1339, %v2386
      %v2403 = vmul.f32 %v1343, %v2386
      %v2404 = vmul.f32 %v1347, %v2386
      %v2405 = vmul.f32 %v1351, %v2386
      %v2406 = vmul.f32 %v1690, %v2386
      %v2407 = vmul.f32 %v1694, %v2386
      %v2408 = vmul.f32 %v2033, %v2386
      %v2409 = vmul.f32 %v2037, %v2386
      %v2410 = vmul.f32 %v2376, %v2386
      %v2411 = vmul.f32 %v2380, %v2386
      %v2412 = vadd.f32 %v2343, %v2388
      %v2413 = vadd.f32 %v2344, %v2389
      %v2414 = vadd.f32 %v2345, %v2390
      %v2415 = vadd.f32 %v2346, %v2391
      %v2416 = vadd.f32 %v2347, %v2392
      %v2417 = vadd.f32 %v2348, %v2393
      %v2418 = vadd.f32 %v2349, %v2394
      %v2419 = vadd.f32 %v2350, %v2395
      %v2420 = vadd.f32 %v2351, %v2396
      %v2421 = vadd.f32 %v2352, %v2397
      %v2422 = vadd.f32 %v2353, %v2398
      %v2423 = vadd.f32 %v2354, %v2399
      %v2424 = vadd.f32 %v2355, %v2400
      %v2425 = vadd.f32 %v2356, %v2401
      %v2426 = vadd.f32 %v2357, %v2402
      %v2427 = vadd.f32 %v2358, %v2403
      %v2428 = vadd.f32 %v2359, %v2404
      %v2429 = vadd.f32 %v2360, %v2405
      %v2430 = vadd.f32 %v2361, %v2406
      %v2431 = vadd.f32 %v2362, %v2407
      %v2432 = vadd.f32 %v2363, %v2408
      %v2433 = vadd.f32 %v2364, %v2409
      %v2434 = vadd.f32 %v2365, %v2410
      %v2435 = vadd.f32 %v2366, %v2411
      %s2436 = scalar_lea.vmem %s1, 20
      %v2437 = vld [vmem:[%s2436] sm:$0x1]
      %2439 = vset.pattern.permute.xlu0 0
      %2440 = vperm.xlu0 %2439, %v365
      %v2441 = vpop.permute.xlu0 %2440
      %2444 = vset.pattern.permute.xlu0 0
      %2445 = vperm.xlu0 %2444, %v366
      %v2446 = vpop.permute.xlu0 %2445
      %v2449 = vlaneseq
      %v2450 = vshrl.u32 %v2449, 7
      %v2451 = vsub.s32 0, %v2450
      %v2452 = vrot.slane %v2437, %v2451
      %v2454 = vmul.f32 %v412, %v2452
      %v2455 = vmul.f32 %v417, %v2452
      %v2456 = vmul.f32 %v422, %v2452
      %v2457 = vmul.f32 %v427, %v2452
      %v2458 = vmul.f32 %v432, %v2452
      %v2459 = vmul.f32 %v437, %v2452
      %v2460 = vmul.f32 %v442, %v2452
      %v2461 = vmul.f32 %v447, %v2452
      %v2462 = vmul.f32 %v452, %v2452
      %v2463 = vmul.f32 %v457, %v2452
      %v2464 = vmul.f32 %v462, %v2452
      %v2465 = vmul.f32 %v467, %v2452
      %v2466 = vmul.f32 %v472, %v2452
      %v2467 = vmul.f32 %v477, %v2452
      %v2468 = vmul.f32 %v482, %v2452
      %v2469 = vmul.f32 %v487, %v2452
      %v2470 = vmul.f32 %v1412, %v2452
      %v2471 = vmul.f32 %v1417, %v2452
      %v2472 = vmul.f32 %v1755, %v2452
      %v2473 = vmul.f32 %v1760, %v2452
      %v2474 = vmul.f32 %v2098, %v2452
      %v2475 = vmul.f32 %v2103, %v2452
      %v2476 = vmul.f32 %v2441, %v2452
      %v2477 = vmul.f32 %v2446, %v2452
      %v2478 = vadd.f32 %v2412, %v2454
      %v2479 = vadd.f32 %v2413, %v2455
      %v2480 = vadd.f32 %v2414, %v2456
      %v2481 = vadd.f32 %v2415, %v2457
      %v2482 = vadd.f32 %v2416, %v2458
      %v2483 = vadd.f32 %v2417, %v2459
      %v2484 = vadd.f32 %v2418, %v2460
      %v2485 = vadd.f32 %v2419, %v2461
      %v2486 = vadd.f32 %v2420, %v2462
      %v2487 = vadd.f32 %v2421, %v2463
      %v2488 = vadd.f32 %v2422, %v2464
      %v2489 = vadd.f32 %v2423, %v2465
      %v2490 = vadd.f32 %v2424, %v2466
      %v2491 = vadd.f32 %v2425, %v2467
      %v2492 = vadd.f32 %v2426, %v2468
      %v2493 = vadd.f32 %v2427, %v2469
      %v2494 = vadd.f32 %v2428, %v2470
      %v2495 = vadd.f32 %v2429, %v2471
      %v2496 = vadd.f32 %v2430, %v2472
      %v2497 = vadd.f32 %v2431, %v2473
      %v2498 = vadd.f32 %v2432, %v2474
      %v2499 = vadd.f32 %v2433, %v2475
      %v2500 = vadd.f32 %v2434, %v2476
      %v2501 = vadd.f32 %v2435, %v2477
      %v2503 = vrot.slane %v365, 1
      %v2504 = vrot.slane %v366, 1
      %v2505 = vsel %vm555, %v2503, %v2504
      %v2506 = vrot.slane %v367, 1
      %v2507 = vsel %vm555, %v2504, %v2506
      %s2508 = scalar_lea.vmem %s1, 21
      %v2509 = vld [vmem:[%s2508] sm:$0x1]
      %2510 = vset.pattern.permute.xlu0 0
      %2511 = vperm.xlu0 %2510, %v2505
      %v2512 = vpop.permute.xlu0 %2511
      %2514 = vset.pattern.permute.xlu0 0
      %2515 = vperm.xlu0 %2514, %v2507
      %v2516 = vpop.permute.xlu0 %2515
      %v2519 = vlaneseq
      %v2520 = vshrl.u32 %v2519, 7
      %v2521 = vsub.s32 0, %v2520
      %v2522 = vrot.slane %v2509, %v2521
      %v2524 = vmul.f32 %v652, %v2522
      %v2525 = vmul.f32 %v656, %v2522
      %v2526 = vmul.f32 %v660, %v2522
      %v2527 = vmul.f32 %v664, %v2522
      %v2528 = vmul.f32 %v668, %v2522
      %v2529 = vmul.f32 %v672, %v2522
      %v2530 = vmul.f32 %v676, %v2522
      %v2531 = vmul.f32 %v680, %v2522
      %v2532 = vmul.f32 %v684, %v2522
      %v2533 = vmul.f32 %v688, %v2522
      %v2534 = vmul.f32 %v692, %v2522
      %v2535 = vmul.f32 %v696, %v2522
      %v2536 = vmul.f32 %v700, %v2522
      %v2537 = vmul.f32 %v704, %v2522
      %v2538 = vmul.f32 %v708, %v2522
      %v2539 = vmul.f32 %v712, %v2522
      %v2540 = vmul.f32 %v1483, %v2522
      %v2541 = vmul.f32 %v1487, %v2522
      %v2542 = vmul.f32 %v1826, %v2522
      %v2543 = vmul.f32 %v1830, %v2522
      %v2544 = vmul.f32 %v2169, %v2522
      %v2545 = vmul.f32 %v2173, %v2522
      %v2546 = vmul.f32 %v2512, %v2522
      %v2547 = vmul.f32 %v2516, %v2522
      %v2548 = vadd.f32 %v2478, %v2524
      %v2549 = vadd.f32 %v2479, %v2525
      %v2550 = vadd.f32 %v2480, %v2526
      %v2551 = vadd.f32 %v2481, %v2527
      %v2552 = vadd.f32 %v2482, %v2528
      %v2553 = vadd.f32 %v2483, %v2529
      %v2554 = vadd.f32 %v2484, %v2530
      %v2555 = vadd.f32 %v2485, %v2531
      %v2556 = vadd.f32 %v2486, %v2532
      %v2557 = vadd.f32 %v2487, %v2533
      %v2558 = vadd.f32 %v2488, %v2534
      %v2559 = vadd.f32 %v2489, %v2535
      %v2560 = vadd.f32 %v2490, %v2536
      %v2561 = vadd.f32 %v2491, %v2537
      %v2562 = vadd.f32 %v2492, %v2538
      %v2563 = vadd.f32 %v2493, %v2539
      %v2564 = vadd.f32 %v2494, %v2540
      %v2565 = vadd.f32 %v2495, %v2541
      %v2566 = vadd.f32 %v2496, %v2542
      %v2567 = vadd.f32 %v2497, %v2543
      %v2568 = vadd.f32 %v2498, %v2544
      %v2569 = vadd.f32 %v2499, %v2545
      %v2570 = vadd.f32 %v2500, %v2546
      %v2571 = vadd.f32 %v2501, %v2547
      %v2572 = vrot.slane %v365, 2
      %v2573 = vrot.slane %v366, 2
      %v2574 = vsel %vm768, %v2572, %v2573
      %v2575 = vrot.slane %v367, 2
      %v2576 = vsel %vm768, %v2573, %v2575
      %s2577 = scalar_lea.vmem %s1, 22
      %v2578 = vld [vmem:[%s2577] sm:$0x1]
      %2579 = vset.pattern.permute.xlu0 0
      %2580 = vperm.xlu0 %2579, %v2574
      %v2581 = vpop.permute.xlu0 %2580
      %2583 = vset.pattern.permute.xlu0 0
      %2584 = vperm.xlu0 %2583, %v2576
      %v2585 = vpop.permute.xlu0 %2584
      %v2588 = vlaneseq
      %v2589 = vshrl.u32 %v2588, 7
      %v2590 = vsub.s32 0, %v2589
      %v2591 = vrot.slane %v2578, %v2590
      %v2593 = vmul.f32 %v865, %v2591
      %v2594 = vmul.f32 %v869, %v2591
      %v2595 = vmul.f32 %v873, %v2591
      %v2596 = vmul.f32 %v877, %v2591
      %v2597 = vmul.f32 %v881, %v2591
      %v2598 = vmul.f32 %v885, %v2591
      %v2599 = vmul.f32 %v889, %v2591
      %v2600 = vmul.f32 %v893, %v2591
      %v2601 = vmul.f32 %v897, %v2591
      %v2602 = vmul.f32 %v901, %v2591
      %v2603 = vmul.f32 %v905, %v2591
      %v2604 = vmul.f32 %v909, %v2591
      %v2605 = vmul.f32 %v913, %v2591
      %v2606 = vmul.f32 %v917, %v2591
      %v2607 = vmul.f32 %v921, %v2591
      %v2608 = vmul.f32 %v925, %v2591
      %v2609 = vmul.f32 %v1552, %v2591
      %v2610 = vmul.f32 %v1556, %v2591
      %v2611 = vmul.f32 %v1895, %v2591
      %v2612 = vmul.f32 %v1899, %v2591
      %v2613 = vmul.f32 %v2238, %v2591
      %v2614 = vmul.f32 %v2242, %v2591
      %v2615 = vmul.f32 %v2581, %v2591
      %v2616 = vmul.f32 %v2585, %v2591
      %v2617 = vadd.f32 %v2548, %v2593
      %v2618 = vadd.f32 %v2549, %v2594
      %v2619 = vadd.f32 %v2550, %v2595
      %v2620 = vadd.f32 %v2551, %v2596
      %v2621 = vadd.f32 %v2552, %v2597
      %v2622 = vadd.f32 %v2553, %v2598
      %v2623 = vadd.f32 %v2554, %v2599
      %v2624 = vadd.f32 %v2555, %v2600
      %v2625 = vadd.f32 %v2556, %v2601
      %v2626 = vadd.f32 %v2557, %v2602
      %v2627 = vadd.f32 %v2558, %v2603
      %v2628 = vadd.f32 %v2559, %v2604
      %v2629 = vadd.f32 %v2560, %v2605
      %v2630 = vadd.f32 %v2561, %v2606
      %v2631 = vadd.f32 %v2562, %v2607
      %v2632 = vadd.f32 %v2563, %v2608
      %v2633 = vadd.f32 %v2564, %v2609
      %v2634 = vadd.f32 %v2565, %v2610
      %v2635 = vadd.f32 %v2566, %v2611
      %v2636 = vadd.f32 %v2567, %v2612
      %v2637 = vadd.f32 %v2568, %v2613
      %v2638 = vadd.f32 %v2569, %v2614
      %v2639 = vadd.f32 %v2570, %v2615
      %v2640 = vadd.f32 %v2571, %v2616
      %v2641 = vrot.slane %v365, 3
      %v2642 = vrot.slane %v366, 3
      %v2643 = vsel %vm981, %v2641, %v2642
      %v2644 = vrot.slane %v367, 3
      %v2645 = vsel %vm981, %v2642, %v2644
      %s2646 = scalar_lea.vmem %s1, 23
      %v2647 = vld [vmem:[%s2646] sm:$0x1]
      %2648 = vset.pattern.permute.xlu0 0
      %2649 = vperm.xlu0 %2648, %v2643
      %v2650 = vpop.permute.xlu0 %2649
      %2652 = vset.pattern.permute.xlu0 0
      %2653 = vperm.xlu0 %2652, %v2645
      %v2654 = vpop.permute.xlu0 %2653
      %v2657 = vlaneseq
      %v2658 = vshrl.u32 %v2657, 7
      %v2659 = vsub.s32 0, %v2658
      %v2660 = vrot.slane %v2647, %v2659
      %v2662 = vmul.f32 %v1078, %v2660
      %v2663 = vmul.f32 %v1082, %v2660
      %v2664 = vmul.f32 %v1086, %v2660
      %v2665 = vmul.f32 %v1090, %v2660
      %v2666 = vmul.f32 %v1094, %v2660
      %v2667 = vmul.f32 %v1098, %v2660
      %v2668 = vmul.f32 %v1102, %v2660
      %v2669 = vmul.f32 %v1106, %v2660
      %v2670 = vmul.f32 %v1110, %v2660
      %v2671 = vmul.f32 %v1114, %v2660
      %v2672 = vmul.f32 %v1118, %v2660
      %v2673 = vmul.f32 %v1122, %v2660
      %v2674 = vmul.f32 %v1126, %v2660
      %v2675 = vmul.f32 %v1130, %v2660
      %v2676 = vmul.f32 %v1134, %v2660
      %v2677 = vmul.f32 %v1138, %v2660
      %v2678 = vmul.f32 %v1621, %v2660
      %v2679 = vmul.f32 %v1625, %v2660
      %v2680 = vmul.f32 %v1964, %v2660
      %v2681 = vmul.f32 %v1968, %v2660
      %v2682 = vmul.f32 %v2307, %v2660
      %v2683 = vmul.f32 %v2311, %v2660
      %v2684 = vmul.f32 %v2650, %v2660
      %v2685 = vmul.f32 %v2654, %v2660
      %v2686 = vadd.f32 %v2617, %v2662
      %v2687 = vadd.f32 %v2618, %v2663
      %v2688 = vadd.f32 %v2619, %v2664
      %v2689 = vadd.f32 %v2620, %v2665
      %v2690 = vadd.f32 %v2621, %v2666
      %v2691 = vadd.f32 %v2622, %v2667
      %v2692 = vadd.f32 %v2623, %v2668
      %v2693 = vadd.f32 %v2624, %v2669
      %v2694 = vadd.f32 %v2625, %v2670
      %v2695 = vadd.f32 %v2626, %v2671
      %v2696 = vadd.f32 %v2627, %v2672
      %v2697 = vadd.f32 %v2628, %v2673
      %v2698 = vadd.f32 %v2629, %v2674
      %v2699 = vadd.f32 %v2630, %v2675
      %v2700 = vadd.f32 %v2631, %v2676
      %v2701 = vadd.f32 %v2632, %v2677
      %v2702 = vadd.f32 %v2633, %v2678
      %v2703 = vadd.f32 %v2634, %v2679
      %v2704 = vadd.f32 %v2635, %v2680
      %v2705 = vadd.f32 %v2636, %v2681
      %v2706 = vadd.f32 %v2637, %v2682
      %v2707 = vadd.f32 %v2638, %v2683
      %v2708 = vadd.f32 %v2639, %v2684
      %v2709 = vadd.f32 %v2640, %v2685
      %v2710 = vrot.slane %v365, 4
      %v2711 = vrot.slane %v366, 4
      %v2712 = vsel %vm1194, %v2710, %v2711
      %v2713 = vrot.slane %v367, 4
      %v2714 = vsel %vm1194, %v2711, %v2713
      %s2715 = scalar_lea.vmem %s1, 24
      %v2716 = vld [vmem:[%s2715] sm:$0x1]
      %2717 = vset.pattern.permute.xlu0 0
      %2718 = vperm.xlu0 %2717, %v2712
      %v2719 = vpop.permute.xlu0 %2718
      %2721 = vset.pattern.permute.xlu0 0
      %2722 = vperm.xlu0 %2721, %v2714
      %v2723 = vpop.permute.xlu0 %2722
      %v2726 = vlaneseq
      %v2727 = vshrl.u32 %v2726, 7
      %v2728 = vsub.s32 0, %v2727
      %v2729 = vrot.slane %v2716, %v2728
      %v2731 = vmul.f32 %v1291, %v2729
      %v2732 = vmul.f32 %v1295, %v2729
      %v2733 = vmul.f32 %v1299, %v2729
      %v2734 = vmul.f32 %v1303, %v2729
      %v2735 = vmul.f32 %v1307, %v2729
      %v2736 = vmul.f32 %v1311, %v2729
      %v2737 = vmul.f32 %v1315, %v2729
      %v2738 = vmul.f32 %v1319, %v2729
      %v2739 = vmul.f32 %v1323, %v2729
      %v2740 = vmul.f32 %v1327, %v2729
      %v2741 = vmul.f32 %v1331, %v2729
      %v2742 = vmul.f32 %v1335, %v2729
      %v2743 = vmul.f32 %v1339, %v2729
      %v2744 = vmul.f32 %v1343, %v2729
      %v2745 = vmul.f32 %v1347, %v2729
      %v2746 = vmul.f32 %v1351, %v2729
      %v2747 = vmul.f32 %v1690, %v2729
      %v2748 = vmul.f32 %v1694, %v2729
      %v2749 = vmul.f32 %v2033, %v2729
      %v2750 = vmul.f32 %v2037, %v2729
      %v2751 = vmul.f32 %v2376, %v2729
      %v2752 = vmul.f32 %v2380, %v2729
      %v2753 = vmul.f32 %v2719, %v2729
      %v2754 = vmul.f32 %v2723, %v2729
      %v2755 = vadd.f32 %v2686, %v2731
      %v2756 = vadd.f32 %v2687, %v2732
      %v2757 = vadd.f32 %v2688, %v2733
      %v2758 = vadd.f32 %v2689, %v2734
      %v2759 = vadd.f32 %v2690, %v2735
      %v2760 = vadd.f32 %v2691, %v2736
      %v2761 = vadd.f32 %v2692, %v2737
      %v2762 = vadd.f32 %v2693, %v2738
      %v2763 = vadd.f32 %v2694, %v2739
      %v2764 = vadd.f32 %v2695, %v2740
      %v2765 = vadd.f32 %v2696, %v2741
      %v2766 = vadd.f32 %v2697, %v2742
      %v2767 = vadd.f32 %v2698, %v2743
      %v2768 = vadd.f32 %v2699, %v2744
      %v2769 = vadd.f32 %v2700, %v2745
      %v2770 = vadd.f32 %v2701, %v2746
      %v2771 = vadd.f32 %v2702, %v2747
      %v2772 = vadd.f32 %v2703, %v2748
      %v2773 = vadd.f32 %v2704, %v2749
      %v2774 = vadd.f32 %v2705, %v2750
      %v2775 = vadd.f32 %v2706, %v2751
      %v2776 = vadd.f32 %v2707, %v2752
      %v2777 = vadd.f32 %v2708, %v2753
      %v2778 = vadd.f32 %v2709, %v2754
      %v2779 = vld [vmem:[%s2] sm:$0x1]
      %v2781 = vlaneseq
      %v2782 = vshrl.u32 %v2781, 7
      %v2783 = vsub.s32 0, %v2782
      %v2784 = vrot.slane %v2779, %v2783
      %v2786 = vadd.f32 %v2755, %v2784
      %v2787 = vadd.f32 %v2756, %v2784
      %v2788 = vadd.f32 %v2757, %v2784
      %v2789 = vadd.f32 %v2758, %v2784
      %v2790 = vadd.f32 %v2759, %v2784
      %v2791 = vadd.f32 %v2760, %v2784
      %v2792 = vadd.f32 %v2761, %v2784
      %v2793 = vadd.f32 %v2762, %v2784
      %v2794 = vadd.f32 %v2763, %v2784
      %v2795 = vadd.f32 %v2764, %v2784
      %v2796 = vadd.f32 %v2765, %v2784
      %v2797 = vadd.f32 %v2766, %v2784
      %v2798 = vadd.f32 %v2767, %v2784
      %v2799 = vadd.f32 %v2768, %v2784
      %v2800 = vadd.f32 %v2769, %v2784
      %v2801 = vadd.f32 %v2770, %v2784
      %v2802 = vadd.f32 %v2771, %v2784
      %v2803 = vadd.f32 %v2772, %v2784
      %v2804 = vadd.f32 %v2773, %v2784
      %v2805 = vadd.f32 %v2774, %v2784
      %v2806 = vadd.f32 %v2775, %v2784
      %v2807 = vadd.f32 %v2776, %v2784
      %v2808 = vadd.f32 %v2777, %v2784
      %v2809 = vadd.f32 %v2778, %v2784
      %v2810 = vtanh.pop %v2786
      %v2811 = vtanh.pop %v2787
      %v2812 = vtanh.pop %v2788
      %v2813 = vtanh.pop %v2789
      %v2814 = vtanh.pop %v2790
      %v2815 = vtanh.pop %v2791
      %v2816 = vtanh.pop %v2792
      %v2817 = vtanh.pop %v2793
      %v2818 = vtanh.pop %v2794
      %v2819 = vtanh.pop %v2795
      %v2820 = vtanh.pop %v2796
      %v2821 = vtanh.pop %v2797
      %v2822 = vtanh.pop %v2798
      %v2823 = vtanh.pop %v2799
      %v2824 = vtanh.pop %v2800
      %v2825 = vtanh.pop %v2801
      %v2826 = vtanh.pop %v2802
      %v2827 = vtanh.pop %v2803
      %v2828 = vtanh.pop %v2804
      %v2829 = vtanh.pop %v2805
      %v2830 = vtanh.pop %v2806
      %v2831 = vtanh.pop %v2807
      %v2832 = vtanh.pop %v2808
      %v2833 = vtanh.pop %v2809
      %s2834 = ssub.s32 %s319, 2
      %v2835 = vstv %s2834
      %v2836 = vadd.s32 %v2835, 1
      %v2837 = vadd.s32 %v2835, 2
      %v2838 = vadd.s32 %v2835, 3
      %v2839 = vadd.s32 %v2835, 4
      %v2840 = vadd.s32 %v2835, 5
      %v2841 = vadd.s32 %v2835, 6
      %v2842 = vadd.s32 %v2835, 7
      %v2843 = vadd.s32 %v2835, 8
      %v2844 = vadd.s32 %v2835, 9
      %v2845 = vadd.s32 %v2835, 10
      %v2846 = vadd.s32 %v2835, 11
      %vm2847 = vcmp.ge.s32.totalorder %v2835, 0
      %vm2848 = vcmp.ge.s32.totalorder %v2836, 0
      %vm2849 = vcmp.ge.s32.totalorder %v2837, 0
      %vm2850 = vcmp.ge.s32.totalorder %v2838, 0
      %vm2851 = vcmp.ge.s32.totalorder %v2839, 0
      %vm2852 = vcmp.ge.s32.totalorder %v2840, 0
      %vm2853 = vcmp.ge.s32.totalorder %v2841, 0
      %vm2854 = vcmp.ge.s32.totalorder %v2842, 0
      %vm2855 = vcmp.ge.s32.totalorder %v2843, 0
      %vm2856 = vcmp.ge.s32.totalorder %v2844, 0
      %vm2857 = vcmp.ge.s32.totalorder %v2845, 0
      %vm2858 = vcmp.ge.s32.totalorder %v2846, 0
      %vm2859 = vcmp.lt.s32.totalorder %v2835, 16
      %vm2860 = vcmp.lt.s32.totalorder %v2836, 16
      %vm2861 = vcmp.lt.s32.totalorder %v2837, 16
      %vm2862 = vcmp.lt.s32.totalorder %v2838, 16
      %vm2863 = vcmp.lt.s32.totalorder %v2839, 16
      %vm2864 = vcmp.lt.s32.totalorder %v2840, 16
      %vm2865 = vcmp.lt.s32.totalorder %v2841, 16
      %vm2866 = vcmp.lt.s32.totalorder %v2842, 16
      %vm2867 = vcmp.lt.s32.totalorder %v2843, 16
      %vm2868 = vcmp.lt.s32.totalorder %v2844, 16
      %vm2869 = vcmp.lt.s32.totalorder %v2845, 16
      %vm2870 = vcmp.lt.s32.totalorder %v2846, 16
      %vm2871 = vmand %vm2847, %vm2859
      %vm2872 = vmand %vm2848, %vm2860
      %vm2873 = vmand %vm2849, %vm2861
      %vm2874 = vmand %vm2850, %vm2862
      %vm2875 = vmand %vm2851, %vm2863
      %vm2876 = vmand %vm2852, %vm2864
      %vm2877 = vmand %vm2853, %vm2865
      %vm2878 = vmand %vm2854, %vm2866
      %vm2879 = vmand %vm2855, %vm2867
      %vm2880 = vmand %vm2856, %vm2868
      %vm2881 = vmand %vm2857, %vm2869
      %vm2882 = vmand %vm2858, %vm2870
      %v2883 = vsel %vm2871, %v2810, 0.0
      %v2884 = vsel %vm2871, %v2811, 0.0
      %v2885 = vsel %vm2872, %v2812, 0.0
      %v2886 = vsel %vm2872, %v2813, 0.0
      %v2887 = vsel %vm2873, %v2814, 0.0
      %v2888 = vsel %vm2873, %v2815, 0.0
      %v2889 = vsel %vm2874, %v2816, 0.0
      %v2890 = vsel %vm2874, %v2817, 0.0
      %v2891 = vsel %vm2875, %v2818, 0.0
      %v2892 = vsel %vm2875, %v2819, 0.0
      %v2893 = vsel %vm2876, %v2820, 0.0
      %v2894 = vsel %vm2876, %v2821, 0.0
      %v2895 = vsel %vm2877, %v2822, 0.0
      %v2896 = vsel %vm2877, %v2823, 0.0
      %v2897 = vsel %vm2878, %v2824, 0.0
      %v2898 = vsel %vm2878, %v2825, 0.0
      %v2899 = vsel %vm2879, %v2826, 0.0
      %v2900 = vsel %vm2879, %v2827, 0.0
      %v2901 = vsel %vm2880, %v2828, 0.0
      %v2902 = vsel %vm2880, %v2829, 0.0
      %v2903 = vsel %vm2881, %v2830, 0.0
      %v2904 = vsel %vm2881, %v2831, 0.0
      %v2905 = vsel %vm2882, %v2832, 0.0
      %v2906 = vsel %vm2882, %v2833, 0.0
      %v2907 = vpack.c.bf16 %v2884, %v2883
      %v2908 = vpack.c.bf16 %v2886, %v2885
      %v2909 = vpack.c.bf16 %v2888, %v2887
      %v2910 = vpack.c.bf16 %v2890, %v2889
      %v2911 = vpack.c.bf16 %v2892, %v2891
      %v2912 = vpack.c.bf16 %v2894, %v2893
      %v2913 = vpack.c.bf16 %v2896, %v2895
      %v2914 = vpack.c.bf16 %v2898, %v2897
      %v2915 = vpack.c.bf16 %v2900, %v2899
      %v2916 = vpack.c.bf16 %v2902, %v2901
      %v2917 = vpack.c.bf16 %v2904, %v2903
      %v2918 = vpack.c.bf16 %v2906, %v2905
      %v2931 = vunpack.c.l.b16 %v2907
      %v2932 = vunpack.c.h.b16 %v2907
      %v2933 = vunpack.c.l.b16 %v2908
      %v2934 = vunpack.c.h.b16 %v2908
      %v2935 = vunpack.c.l.b16 %v2909
      %v2936 = vunpack.c.h.b16 %v2909
      %v2937 = vunpack.c.l.b16 %v2910
      %v2938 = vunpack.c.h.b16 %v2910
      %v2939 = vunpack.c.l.b16 %v2911
      %v2940 = vunpack.c.h.b16 %v2911
      %v2941 = vunpack.c.l.b16 %v2912
      %v2942 = vunpack.c.h.b16 %v2912
      %v2943 = vunpack.c.l.b16 %v2913
      %v2944 = vunpack.c.h.b16 %v2913
      %v2945 = vunpack.c.l.b16 %v2914
      %v2946 = vunpack.c.h.b16 %v2914
      %v2947 = vunpack.c.l.b16 %v2915
      %v2948 = vunpack.c.h.b16 %v2915
      %v2949 = vunpack.c.l.b16 %v2916
      %v2950 = vunpack.c.h.b16 %v2916
      %v2951 = vunpack.c.l.b16 %v2917
      %v2952 = vunpack.c.h.b16 %v2917
      %v2953 = vunpack.c.l.b16 %v2918
      %v2954 = vunpack.c.h.b16 %v2918
      %v2955 = vpack.c.b16 %v2931, %v2931
      %v2956 = vpack.c.b16 %v2932, %v2932
      %v2957 = vpack.c.b16 %v2933, %v2933
      %v2958 = vpack.c.b16 %v2934, %v2934
      %v2959 = vpack.c.b16 %v2935, %v2935
      %v2960 = vpack.c.b16 %v2936, %v2936
      %v2961 = vpack.c.b16 %v2937, %v2937
      %v2962 = vpack.c.b16 %v2938, %v2938
      %v2963 = vpack.c.b16 %v2939, %v2939
      %v2964 = vpack.c.b16 %v2940, %v2940
      %v2965 = vpack.c.b16 %v2941, %v2941
      %v2966 = vpack.c.b16 %v2942, %v2942
      %v2967 = vpack.c.b16 %v2943, %v2943
      %v2968 = vpack.c.b16 %v2944, %v2944
      %v2969 = vpack.c.b16 %v2945, %v2945
      %v2970 = vpack.c.b16 %v2946, %v2946
      %v2971 = vpack.c.b16 %v2947, %v2947
      %v2972 = vpack.c.b16 %v2948, %v2948
      %v2973 = vpack.c.b16 %v2949, %v2949
      %v2974 = vpack.c.b16 %v2950, %v2950
      %v2975 = vpack.c.b16 %v2951, %v2951
      %v2976 = vpack.c.b16 %v2952, %v2952
      %v2977 = vpack.c.b16 %v2953, %v2953
      %v2978 = vpack.c.b16 %v2954, %v2954
      %vm2979 = vsmask.f32 256
      %vm2980 = vsmask.f32 4368
      %vm2981 = vmor %vm2979, %vm2980
      %v2983 = vshrl.u32 %v2955, 16
      %v2985 = vrot.slane %v2983, 7
      %v2986 = vshll.u32 %v2955, 16
      %v2988 = vor.u32 %v2985, %v2986
      %v2989 = vrot.slane %v2985, 4
      %v2991 = vshrl.u32 %v2956, 16
      %v2993 = vrot.slane %v2991, 7
      %v2994 = vshll.u32 %v2956, 16
      %v2996 = vor.u32 %v2993, %v2994
      %v2997 = vsel %vm2981, %v2989, %v2996
      %v2998 = vrot.slane %v2993, 4
      %v3000 = vshrl.u32 %v2957, 16
      %v3002 = vrot.slane %v3000, 7
      %v3003 = vshll.u32 %v2957, 16
      %v3005 = vor.u32 %v3002, %v3003
      %v3006 = vrot.slane %v3002, 4
      %v3008 = vshrl.u32 %v2958, 16
      %v3010 = vrot.slane %v3008, 7
      %v3011 = vshll.u32 %v2958, 16
      %v3013 = vor.u32 %v3010, %v3011
      %v3014 = vsel %vm2981, %v3006, %v3013
      %v3015 = vrot.slane %v3010, 4
      %v3017 = vshrl.u32 %v2959, 16
      %v3019 = vrot.slane %v3017, 7
      %v3020 = vshll.u32 %v2959, 16
      %v3022 = vor.u32 %v3019, %v3020
      %v3023 = vrot.slane %v3019, 4
      %v3025 = vshrl.u32 %v2960, 16
      %v3027 = vrot.slane %v3025, 7
      %v3028 = vshll.u32 %v2960, 16
      %v3030 = vor.u32 %v3027, %v3028
      %v3031 = vsel %vm2981, %v3023, %v3030
      %v3032 = vrot.slane %v3027, 4
      %v3034 = vshrl.u32 %v2961, 16
      %v3036 = vrot.slane %v3034, 7
      %v3037 = vshll.u32 %v2961, 16
      %v3039 = vor.u32 %v3036, %v3037
      %v3040 = vrot.slane %v3036, 4
      %v3042 = vshrl.u32 %v2962, 16
      %v3044 = vrot.slane %v3042, 7
      %v3045 = vshll.u32 %v2962, 16
      %v3047 = vor.u32 %v3044, %v3045
      %v3048 = vsel %vm2981, %v3040, %v3047
      %v3049 = vrot.slane %v3044, 4
      %v3051 = vshrl.u32 %v2963, 16
      %v3053 = vrot.slane %v3051, 7
      %v3054 = vshll.u32 %v2963, 16
      %v3056 = vor.u32 %v3053, %v3054
      %v3057 = vrot.slane %v3053, 4
      %v3059 = vshrl.u32 %v2964, 16
      %v3061 = vrot.slane %v3059, 7
      %v3062 = vshll.u32 %v2964, 16
      %v3064 = vor.u32 %v3061, %v3062
      %v3065 = vsel %vm2981, %v3057, %v3064
      %v3066 = vrot.slane %v3061, 4
      %v3068 = vshrl.u32 %v2965, 16
      %v3070 = vrot.slane %v3068, 7
      %v3071 = vshll.u32 %v2965, 16
      %v3073 = vor.u32 %v3070, %v3071
      %v3074 = vrot.slane %v3070, 4
      %v3076 = vshrl.u32 %v2966, 16
      %v3078 = vrot.slane %v3076, 7
      %v3079 = vshll.u32 %v2966, 16
      %v3081 = vor.u32 %v3078, %v3079
      %v3082 = vsel %vm2981, %v3074, %v3081
      %v3083 = vrot.slane %v3078, 4
      %v3085 = vshrl.u32 %v2967, 16
      %v3087 = vrot.slane %v3085, 7
      %v3088 = vshll.u32 %v2967, 16
      %v3090 = vor.u32 %v3087, %v3088
      %v3091 = vrot.slane %v3087, 4
      %v3093 = vshrl.u32 %v2968, 16
      %v3095 = vrot.slane %v3093, 7
      %v3096 = vshll.u32 %v2968, 16
      %v3098 = vor.u32 %v3095, %v3096
      %v3099 = vsel %vm2981, %v3091, %v3098
      %v3100 = vrot.slane %v3095, 4
      %v3102 = vshrl.u32 %v2969, 16
      %v3104 = vrot.slane %v3102, 7
      %v3105 = vshll.u32 %v2969, 16
      %v3107 = vor.u32 %v3104, %v3105
      %v3108 = vrot.slane %v3104, 4
      %v3110 = vshrl.u32 %v2970, 16
      %v3112 = vrot.slane %v3110, 7
      %v3113 = vshll.u32 %v2970, 16
      %v3115 = vor.u32 %v3112, %v3113
      %v3116 = vsel %vm2981, %v3108, %v3115
      %v3117 = vrot.slane %v3112, 4
      %v3119 = vshrl.u32 %v2971, 16
      %v3121 = vrot.slane %v3119, 7
      %v3122 = vshll.u32 %v2971, 16
      %v3124 = vor.u32 %v3121, %v3122
      %v3125 = vrot.slane %v3121, 4
      %v3127 = vshrl.u32 %v2972, 16
      %v3129 = vrot.slane %v3127, 7
      %v3130 = vshll.u32 %v2972, 16
      %v3132 = vor.u32 %v3129, %v3130
      %v3133 = vsel %vm2981, %v3125, %v3132
      %v3134 = vrot.slane %v3129, 4
      %v3136 = vshrl.u32 %v2973, 16
      %v3138 = vrot.slane %v3136, 7
      %v3139 = vshll.u32 %v2973, 16
      %v3141 = vor.u32 %v3138, %v3139
      %v3142 = vrot.slane %v3138, 4
      %v3144 = vshrl.u32 %v2974, 16
      %v3146 = vrot.slane %v3144, 7
      %v3147 = vshll.u32 %v2974, 16
      %v3149 = vor.u32 %v3146, %v3147
      %v3150 = vsel %vm2981, %v3142, %v3149
      %v3151 = vrot.slane %v3146, 4
      %v3153 = vshrl.u32 %v2975, 16
      %v3155 = vrot.slane %v3153, 7
      %v3156 = vshll.u32 %v2975, 16
      %v3158 = vor.u32 %v3155, %v3156
      %v3159 = vrot.slane %v3155, 4
      %v3161 = vshrl.u32 %v2976, 16
      %v3163 = vrot.slane %v3161, 7
      %v3164 = vshll.u32 %v2976, 16
      %v3166 = vor.u32 %v3163, %v3164
      %v3167 = vsel %vm2981, %v3159, %v3166
      %v3168 = vrot.slane %v3163, 4
      %v3170 = vshrl.u32 %v2977, 16
      %v3172 = vrot.slane %v3170, 7
      %v3173 = vshll.u32 %v2977, 16
      %v3175 = vor.u32 %v3172, %v3173
      %v3176 = vrot.slane %v3172, 4
      %v3178 = vshrl.u32 %v2978, 16
      %v3180 = vrot.slane %v3178, 7
      %v3181 = vshll.u32 %v2978, 16
      %v3183 = vor.u32 %v3180, %v3181
      %v3184 = vsel %vm2981, %v3176, %v3183
      %v3185 = vrot.slane %v3180, 4
      %vm3222 = vcmask 519168
      %vm3223 = vsmask.f32 7938
      %vm3224 = vmand %vm3222, %vm3223
      %v3225 = vld [vmem:[#allocation2] sm:$0xf]
      %v3226 = vsel %vm3224, %v2988, %v3225
      %3227 = vst [vmem:[#allocation2] sm:$0xf] %v3226
      %vm3228 = vcmask 519168
      %3229 = vst.msk [vmem:[#allocation2 + $0x4] sm:$0xf] %vm3228, %v2997
      %vm3230 = vcmask 516096
      %vm3231 = vmand %vm3230, %vm2979
      %v3232 = vld [vmem:[#allocation2 + $0x8] sm:$0x1]
      %v3233 = vsel %vm3231, %v2998, %v3232
      %3234 = vst [vmem:[#allocation2 + $0x8] sm:$0x1] %v3233
      %v3235 = vld [vmem:[#allocation2 + $0xc] sm:$0xf]
      %v3236 = vsel %vm3224, %v3005, %v3235
      %3237 = vst [vmem:[#allocation2 + $0xc] sm:$0xf] %v3236
      %3238 = vst.msk [vmem:[#allocation2 + $0x10] sm:$0xf] %vm3228, %v3014
      %v3239 = vld [vmem:[#allocation2 + $0x14] sm:$0x1]
      %v3240 = vsel %vm3231, %v3015, %v3239
      %3241 = vst [vmem:[#allocation2 + $0x14] sm:$0x1] %v3240
      %v3242 = vld [vmem:[#allocation2 + $0x18] sm:$0xf]
      %v3243 = vsel %vm3224, %v3022, %v3242
      %3244 = vst [vmem:[#allocation2 + $0x18] sm:$0xf] %v3243
      %3245 = vst.msk [vmem:[#allocation2 + $0x1c] sm:$0xf] %vm3228, %v3031
      %v3246 = vld [vmem:[#allocation2 + $0x20] sm:$0x1]
      %v3247 = vsel %vm3231, %v3032, %v3246
      %3248 = vst [vmem:[#allocation2 + $0x20] sm:$0x1] %v3247
      %v3249 = vld [vmem:[#allocation2 + $0x24] sm:$0xf]
      %v3250 = vsel %vm3224, %v3039, %v3249
      %3251 = vst [vmem:[#allocation2 + $0x24] sm:$0xf] %v3250
      %3252 = vst.msk [vmem:[#allocation2 + $0x28] sm:$0xf] %vm3228, %v3048
      %v3253 = vld [vmem:[#allocation2 + $0x2c] sm:$0x1]
      %v3254 = vsel %vm3231, %v3049, %v3253
      %3255 = vst [vmem:[#allocation2 + $0x2c] sm:$0x1] %v3254
      %v3256 = vld [vmem:[#allocation2 + $0x30] sm:$0xf]
      %v3257 = vsel %vm3224, %v3056, %v3256
      %3258 = vst [vmem:[#allocation2 + $0x30] sm:$0xf] %v3257
      %3259 = vst.msk [vmem:[#allocation2 + $0x34] sm:$0xf] %vm3228, %v3065
      %v3260 = vld [vmem:[#allocation2 + $0x38] sm:$0x1]
      %v3261 = vsel %vm3231, %v3066, %v3260
      %3262 = vst [vmem:[#allocation2 + $0x38] sm:$0x1] %v3261
      %v3263 = vld [vmem:[#allocation2 + $0x3c] sm:$0xf]
      %v3264 = vsel %vm3224, %v3073, %v3263
      %3265 = vst [vmem:[#allocation2 + $0x3c] sm:$0xf] %v3264
      %3266 = vst.msk [vmem:[#allocation2 + $0x40] sm:$0xf] %vm3228, %v3082
      %v3267 = vld [vmem:[#allocation2 + $0x44] sm:$0x1]
      %v3268 = vsel %vm3231, %v3083, %v3267
      %3269 = vst [vmem:[#allocation2 + $0x44] sm:$0x1] %v3268
      %v3270 = vld [vmem:[#allocation2 + $0x48] sm:$0xf]
      %v3271 = vsel %vm3224, %v3090, %v3270
      %3272 = vst [vmem:[#allocation2 + $0x48] sm:$0xf] %v3271
      %3273 = vst.msk [vmem:[#allocation2 + $0x4c] sm:$0xf] %vm3228, %v3099
      %v3274 = vld [vmem:[#allocation2 + $0x50] sm:$0x1]
      %v3275 = vsel %vm3231, %v3100, %v3274
      %3276 = vst [vmem:[#allocation2 + $0x50] sm:$0x1] %v3275
      %v3277 = vld [vmem:[#allocation2 + $0x54] sm:$0xf]
      %v3278 = vsel %vm3224, %v3107, %v3277
      %3279 = vst [vmem:[#allocation2 + $0x54] sm:$0xf] %v3278
      %3280 = vst.msk [vmem:[#allocation2 + $0x58] sm:$0xf] %vm3228, %v3116
      %v3281 = vld [vmem:[#allocation2 + $0x5c] sm:$0x1]
      %v3282 = vsel %vm3231, %v3117, %v3281
      %3283 = vst [vmem:[#allocation2 + $0x5c] sm:$0x1] %v3282
      %v3284 = vld [vmem:[#allocation2 + $0x60] sm:$0xf]
      %v3285 = vsel %vm3224, %v3124, %v3284
      %3286 = vst [vmem:[#allocation2 + $0x60] sm:$0xf] %v3285
      %3287 = vst.msk [vmem:[#allocation2 + $0x64] sm:$0xf] %vm3228, %v3133
      %v3288 = vld [vmem:[#allocation2 + $0x68] sm:$0x1]
      %v3289 = vsel %vm3231, %v3134, %v3288
      %3290 = vst [vmem:[#allocation2 + $0x68] sm:$0x1] %v3289
      %v3291 = vld [vmem:[#allocation2 + $0x6c] sm:$0xf]
      %v3292 = vsel %vm3224, %v3141, %v3291
      %3293 = vst [vmem:[#allocation2 + $0x6c] sm:$0xf] %v3292
      %3294 = vst.msk [vmem:[#allocation2 + $0x70] sm:$0xf] %vm3228, %v3150
      %v3295 = vld [vmem:[#allocation2 + $0x74] sm:$0x1]
      %v3296 = vsel %vm3231, %v3151, %v3295
      %3297 = vst [vmem:[#allocation2 + $0x74] sm:$0x1] %v3296
      %v3298 = vld [vmem:[#allocation2 + $0x78] sm:$0xf]
      %v3299 = vsel %vm3224, %v3158, %v3298
      %3300 = vst [vmem:[#allocation2 + $0x78] sm:$0xf] %v3299
      %3301 = vst.msk [vmem:[#allocation2 + $0x7c] sm:$0xf] %vm3228, %v3167
      %v3302 = vld [vmem:[#allocation2 + $0x80] sm:$0x1]
      %v3303 = vsel %vm3231, %v3168, %v3302
      %3304 = vst [vmem:[#allocation2 + $0x80] sm:$0x1] %v3303
      %v3305 = vld [vmem:[#allocation2 + $0x84] sm:$0xf]
      %v3306 = vsel %vm3224, %v3175, %v3305
      %3307 = vst [vmem:[#allocation2 + $0x84] sm:$0xf] %v3306
      %3308 = vst.msk [vmem:[#allocation2 + $0x88] sm:$0xf] %vm3228, %v3184
      %v3309 = vld [vmem:[#allocation2 + $0x8c] sm:$0x1]
      %v3310 = vsel %vm3231, %v3185, %v3309
      %3311 = vst [vmem:[#allocation2 + $0x8c] sm:$0x1] %v3310
      %v3312 = vld [vmem:[#allocation2] sm:$0x1]
      %v3313 = vsel %vm3231, 0, %v3312
      %3314 = vst [vmem:[#allocation2] sm:$0x1] %v3313
      %v3315 = vld [vmem:[#allocation2 + $0xc] sm:$0x1]
      %v3316 = vsel %vm3231, 0, %v3315
      %3317 = vst [vmem:[#allocation2 + $0xc] sm:$0x1] %v3316
      %v3318 = vld [vmem:[#allocation2 + $0x18] sm:$0x1]
      %v3319 = vsel %vm3231, 0, %v3318
      %3320 = vst [vmem:[#allocation2 + $0x18] sm:$0x1] %v3319
      %v3321 = vld [vmem:[#allocation2 + $0x24] sm:$0x1]
      %v3322 = vsel %vm3231, 0, %v3321
      %3323 = vst [vmem:[#allocation2 + $0x24] sm:$0x1] %v3322
      %v3324 = vld [vmem:[#allocation2 + $0x30] sm:$0x1]
      %v3325 = vsel %vm3231, 0, %v3324
      %3326 = vst [vmem:[#allocation2 + $0x30] sm:$0x1] %v3325
      %v3327 = vld [vmem:[#allocation2 + $0x3c] sm:$0x1]
      %v3328 = vsel %vm3231, 0, %v3327
      %3329 = vst [vmem:[#allocation2 + $0x3c] sm:$0x1] %v3328
      %v3330 = vld [vmem:[#allocation2 + $0x48] sm:$0x1]
      %v3331 = vsel %vm3231, 0, %v3330
      %3332 = vst [vmem:[#allocation2 + $0x48] sm:$0x1] %v3331
      %v3333 = vld [vmem:[#allocation2 + $0x54] sm:$0x1]
      %v3334 = vsel %vm3231, 0, %v3333
      %3335 = vst [vmem:[#allocation2 + $0x54] sm:$0x1] %v3334
      %v3336 = vld [vmem:[#allocation2 + $0x60] sm:$0x1]
      %v3337 = vsel %vm3231, 0, %v3336
      %3338 = vst [vmem:[#allocation2 + $0x60] sm:$0x1] %v3337
      %v3339 = vld [vmem:[#allocation2 + $0x6c] sm:$0x1]
      %v3340 = vsel %vm3231, 0, %v3339
      %3341 = vst [vmem:[#allocation2 + $0x6c] sm:$0x1] %v3340
      %v3342 = vld [vmem:[#allocation2 + $0x78] sm:$0x1]
      %v3343 = vsel %vm3231, 0, %v3342
      %3344 = vst [vmem:[#allocation2 + $0x78] sm:$0x1] %v3343
      %v3345 = vld [vmem:[#allocation2 + $0x84] sm:$0x1]
      %v3346 = vsel %vm3231, 0, %v3345
      %3347 = vst [vmem:[#allocation2 + $0x84] sm:$0x1] %v3346
      %vm3348 = vmand %vm3230, %vm3223
      %v3349 = vld [vmem:[#allocation2 + $0x8] sm:$0x1]
      %v3350 = vsel %vm3348, 0, %v3349
      %3351 = vst [vmem:[#allocation2 + $0x8] sm:$0x1] %v3350
      %v3352 = vld [vmem:[#allocation2 + $0x14] sm:$0x1]
      %v3353 = vsel %vm3348, 0, %v3352
      %3354 = vst [vmem:[#allocation2 + $0x14] sm:$0x1] %v3353
      %v3355 = vld [vmem:[#allocation2 + $0x20] sm:$0x1]
      %v3356 = vsel %vm3348, 0, %v3355
      %3357 = vst [vmem:[#allocation2 + $0x20] sm:$0x1] %v3356
      %v3358 = vld [vmem:[#allocation2 + $0x2c] sm:$0x1]
      %v3359 = vsel %vm3348, 0, %v3358
      %3360 = vst [vmem:[#allocation2 + $0x2c] sm:$0x1] %v3359
      %v3361 = vld [vmem:[#allocation2 + $0x38] sm:$0x1]
      %v3362 = vsel %vm3348, 0, %v3361
      %3363 = vst [vmem:[#allocation2 + $0x38] sm:$0x1] %v3362
      %v3364 = vld [vmem:[#allocation2 + $0x44] sm:$0x1]
      %v3365 = vsel %vm3348, 0, %v3364
      %3366 = vst [vmem:[#allocation2 + $0x44] sm:$0x1] %v3365
      %v3367 = vld [vmem:[#allocation2 + $0x50] sm:$0x1]
      %v3368 = vsel %vm3348, 0, %v3367
      %3369 = vst [vmem:[#allocation2 + $0x50] sm:$0x1] %v3368
      %v3370 = vld [vmem:[#allocation2 + $0x5c] sm:$0x1]
      %v3371 = vsel %vm3348, 0, %v3370
      %3372 = vst [vmem:[#allocation2 + $0x5c] sm:$0x1] %v3371
      %v3373 = vld [vmem:[#allocation2 + $0x68] sm:$0x1]
      %v3374 = vsel %vm3348, 0, %v3373
      %3375 = vst [vmem:[#allocation2 + $0x68] sm:$0x1] %v3374
      %v3376 = vld [vmem:[#allocation2 + $0x74] sm:$0x1]
      %v3377 = vsel %vm3348, 0, %v3376
      %3378 = vst [vmem:[#allocation2 + $0x74] sm:$0x1] %v3377
      %v3379 = vld [vmem:[#allocation2 + $0x80] sm:$0x1]
      %v3380 = vsel %vm3348, 0, %v3379
      %3381 = vst [vmem:[#allocation2 + $0x80] sm:$0x1] %v3380
      %v3382 = vld [vmem:[#allocation2 + $0x8c] sm:$0x1]
      %v3383 = vsel %vm3348, 0, %v3382
      %3384 = vst [vmem:[#allocation2 + $0x8c] sm:$0x1] %v3383
      %v3385 = vld [vmem:[#allocation2] sm:$0xf]
      %v3386 = vld [vmem:[#allocation2 + $0x4] sm:$0xf]
      %v3387 = vld [vmem:[#allocation2 + $0xc] sm:$0xf]
      %v3388 = vld [vmem:[#allocation2 + $0x10] sm:$0xf]
      %v3389 = vld [vmem:[#allocation2 + $0x18] sm:$0xf]
      %v3390 = vld [vmem:[#allocation2 + $0x1c] sm:$0xf]
      %v3391 = vld [vmem:[#allocation2 + $0x24] sm:$0xf]
      %v3392 = vld [vmem:[#allocation2 + $0x28] sm:$0xf]
      %v3393 = vld [vmem:[#allocation2 + $0x30] sm:$0xf]
      %v3394 = vld [vmem:[#allocation2 + $0x34] sm:$0xf]
      %v3395 = vld [vmem:[#allocation2 + $0x3c] sm:$0xf]
      %v3396 = vld [vmem:[#allocation2 + $0x40] sm:$0xf]
      %v3397 = vld [vmem:[#allocation2 + $0x48] sm:$0xf]
      %v3398 = vld [vmem:[#allocation2 + $0x4c] sm:$0xf]
      %v3399 = vld [vmem:[#allocation2 + $0x54] sm:$0xf]
      %v3400 = vld [vmem:[#allocation2 + $0x58] sm:$0xf]
      %v3401 = vld [vmem:[#allocation2 + $0x60] sm:$0xf]
      %v3402 = vld [vmem:[#allocation2 + $0x64] sm:$0xf]
      %v3403 = vld [vmem:[#allocation2 + $0x6c] sm:$0xf]
      %v3404 = vld [vmem:[#allocation2 + $0x70] sm:$0xf]
      %v3405 = vld [vmem:[%s3] sm:$0xf]
      %v3406 = vld [vmem:[%s3 + $0x4] sm:$0xf]
      %v3407 = vld [vmem:[%s3 + $0x8] sm:$0xf]
      %v3408 = vld [vmem:[%s3 + $0xc] sm:$0xf]
      %v3409 = vld [vmem:[%s3 + $0x10] sm:$0xf]
      %v3410 = vld [vmem:[%s3 + $0x14] sm:$0xf]
      %v3411 = vld [vmem:[%s3 + $0x18] sm:$0xf]
      %v3412 = vld [vmem:[%s3 + $0x1c] sm:$0xf]
      %v3413 = vld [vmem:[#allocation2 + $0x8] sm:$0x1]
      %v3414 = vld [vmem:[#allocation2 + $0x14] sm:$0x1]
      %v3415 = vld [vmem:[#allocation2 + $0x20] sm:$0x1]
      %v3416 = vld [vmem:[#allocation2 + $0x2c] sm:$0x1]
      %v3417 = vld [vmem:[#allocation2 + $0x38] sm:$0x1]
      %v3418 = vld [vmem:[#allocation2 + $0x44] sm:$0x1]
      %v3419 = vld [vmem:[#allocation2 + $0x50] sm:$0x1]
      %v3420 = vld [vmem:[#allocation2 + $0x5c] sm:$0x1]
      %v3421 = vld [vmem:[#allocation2 + $0x68] sm:$0x1]
      %v3422 = vld [vmem:[#allocation2 + $0x74] sm:$0x1]
      %vm3423 = vsmask.f32 3328
      %vm3424 = vsmask.f32 7440
      %vm3425 = vmor %vm3423, %vm3424
      %v3427 = vshrl.u32 %v3385, 16
      %v3429 = vrot.slane %v3427, 4
      %v3430 = vshll.u32 %v3385, 16
      %v3432 = vrot.slane %v3430, 5
      %v3433 = vor.u32 %v3429, %v3432
      %v3434 = vrot.slane %v3433, 4
      %v3436 = vshll.u32 %v3386, 16
      %v3438 = vrot.slane %v3436, 5
      %v3439 = vsel %vm3425, %v3434, %v3438
      %v3440 = vshrl.u32 %v3386, 16
      %v3442 = vrot.slane %v3440, 4
      %v3443 = vor.u32 %v3442, %v3438
      %v3444 = vrot.slane %v3443, 4
      %v3446 = vshll.u32 %v3413, 16
      %v3448 = vrot.slane %v3446, 5
      %v3449 = vsel %vm3425, %v3444, %v3448
      %v3451 = vshrl.u32 %v3387, 16
      %v3453 = vrot.slane %v3451, 4
      %v3454 = vshll.u32 %v3387, 16
      %v3456 = vrot.slane %v3454, 5
      %v3457 = vor.u32 %v3453, %v3456
      %v3458 = vrot.slane %v3457, 4
      %v3460 = vshll.u32 %v3388, 16
      %v3462 = vrot.slane %v3460, 5
      %v3463 = vsel %vm3425, %v3458, %v3462
      %v3464 = vshrl.u32 %v3388, 16
      %v3466 = vrot.slane %v3464, 4
      %v3467 = vor.u32 %v3466, %v3462
      %v3468 = vrot.slane %v3467, 4
      %v3470 = vshll.u32 %v3414, 16
      %v3472 = vrot.slane %v3470, 5
      %v3473 = vsel %vm3425, %v3468, %v3472
      %v3475 = vshrl.u32 %v3389, 16
      %v3477 = vrot.slane %v3475, 4
      %v3478 = vshll.u32 %v3389, 16
      %v3480 = vrot.slane %v3478, 5
      %v3481 = vor.u32 %v3477, %v3480
      %v3482 = vrot.slane %v3481, 4
      %v3484 = vshll.u32 %v3390, 16
      %v3486 = vrot.slane %v3484, 5
      %v3487 = vsel %vm3425, %v3482, %v3486
      %v3488 = vshrl.u32 %v3390, 16
      %v3490 = vrot.slane %v3488, 4
      %v3491 = vor.u32 %v3490, %v3486
      %v3492 = vrot.slane %v3491, 4
      %v3494 = vshll.u32 %v3415, 16
      %v3496 = vrot.slane %v3494, 5
      %v3497 = vsel %vm3425, %v3492, %v3496
      %v3499 = vshrl.u32 %v3391, 16
      %v3501 = vrot.slane %v3499, 4
      %v3502 = vshll.u32 %v3391, 16
      %v3504 = vrot.slane %v3502, 5
      %v3505 = vor.u32 %v3501, %v3504
      %v3506 = vrot.slane %v3505, 4
      %v3508 = vshll.u32 %v3392, 16
      %v3510 = vrot.slane %v3508, 5
      %v3511 = vsel %vm3425, %v3506, %v3510
      %v3512 = vshrl.u32 %v3392, 16
      %v3514 = vrot.slane %v3512, 4
      %v3515 = vor.u32 %v3514, %v3510
      %v3516 = vrot.slane %v3515, 4
      %v3518 = vshll.u32 %v3416, 16
      %v3520 = vrot.slane %v3518, 5
      %v3521 = vsel %vm3425, %v3516, %v3520
      %v3523 = vshrl.u32 %v3393, 16
      %v3525 = vrot.slane %v3523, 4
      %v3526 = vshll.u32 %v3393, 16
      %v3528 = vrot.slane %v3526, 5
      %v3529 = vor.u32 %v3525, %v3528
      %v3530 = vrot.slane %v3529, 4
      %v3532 = vshll.u32 %v3394, 16
      %v3534 = vrot.slane %v3532, 5
      %v3535 = vsel %vm3425, %v3530, %v3534
      %v3536 = vshrl.u32 %v3394, 16
      %v3538 = vrot.slane %v3536, 4
      %v3539 = vor.u32 %v3538, %v3534
      %v3540 = vrot.slane %v3539, 4
      %v3542 = vshll.u32 %v3417, 16
      %v3544 = vrot.slane %v3542, 5
      %v3545 = vsel %vm3425, %v3540, %v3544
      %v3547 = vshrl.u32 %v3395, 16
      %v3549 = vrot.slane %v3547, 4
      %v3550 = vshll.u32 %v3395, 16
      %v3552 = vrot.slane %v3550, 5
      %v3553 = vor.u32 %v3549, %v3552
      %v3554 = vrot.slane %v3553, 4
      %v3556 = vshll.u32 %v3396, 16
      %v3558 = vrot.slane %v3556, 5
      %v3559 = vsel %vm3425, %v3554, %v3558
      %v3560 = vshrl.u32 %v3396, 16
      %v3562 = vrot.slane %v3560, 4
      %v3563 = vor.u32 %v3562, %v3558
      %v3564 = vrot.slane %v3563, 4
      %v3566 = vshll.u32 %v3418, 16
      %v3568 = vrot.slane %v3566, 5
      %v3569 = vsel %vm3425, %v3564, %v3568
      %v3571 = vshrl.u32 %v3397, 16
      %v3573 = vrot.slane %v3571, 4
      %v3574 = vshll.u32 %v3397, 16
      %v3576 = vrot.slane %v3574, 5
      %v3577 = vor.u32 %v3573, %v3576
      %v3578 = vrot.slane %v3577, 4
      %v3580 = vshll.u32 %v3398, 16
      %v3582 = vrot.slane %v3580, 5
      %v3583 = vsel %vm3425, %v3578, %v3582
      %v3584 = vshrl.u32 %v3398, 16
      %v3586 = vrot.slane %v3584, 4
      %v3587 = vor.u32 %v3586, %v3582
      %v3588 = vrot.slane %v3587, 4
      %v3590 = vshll.u32 %v3419, 16
      %v3592 = vrot.slane %v3590, 5
      %v3593 = vsel %vm3425, %v3588, %v3592
      %v3595 = vshrl.u32 %v3399, 16
      %v3597 = vrot.slane %v3595, 4
      %v3598 = vshll.u32 %v3399, 16
      %v3600 = vrot.slane %v3598, 5
      %v3601 = vor.u32 %v3597, %v3600
      %v3602 = vrot.slane %v3601, 4
      %v3604 = vshll.u32 %v3400, 16
      %v3606 = vrot.slane %v3604, 5
      %v3607 = vsel %vm3425, %v3602, %v3606
      %v3608 = vshrl.u32 %v3400, 16
      %v3610 = vrot.slane %v3608, 4
      %v3611 = vor.u32 %v3610, %v3606
      %v3612 = vrot.slane %v3611, 4
      %v3614 = vshll.u32 %v3420, 16
      %v3616 = vrot.slane %v3614, 5
      %v3617 = vsel %vm3425, %v3612, %v3616
      %v3619 = vshrl.u32 %v3401, 16
      %v3621 = vrot.slane %v3619, 4
      %v3622 = vshll.u32 %v3401, 16
      %v3624 = vrot.slane %v3622, 5
      %v3625 = vor.u32 %v3621, %v3624
      %v3626 = vrot.slane %v3625, 4
      %v3628 = vshll.u32 %v3402, 16
      %v3630 = vrot.slane %v3628, 5
      %v3631 = vsel %vm3425, %v3626, %v3630
      %v3632 = vshrl.u32 %v3402, 16
      %v3634 = vrot.slane %v3632, 4
      %v3635 = vor.u32 %v3634, %v3630
      %v3636 = vrot.slane %v3635, 4
      %v3638 = vshll.u32 %v3421, 16
      %v3640 = vrot.slane %v3638, 5
      %v3641 = vsel %vm3425, %v3636, %v3640
      %v3643 = vshrl.u32 %v3403, 16
      %v3645 = vrot.slane %v3643, 4
      %v3646 = vshll.u32 %v3403, 16
      %v3648 = vrot.slane %v3646, 5
      %v3649 = vor.u32 %v3645, %v3648
      %v3650 = vrot.slane %v3649, 4
      %v3652 = vshll.u32 %v3404, 16
      %v3654 = vrot.slane %v3652, 5
      %v3655 = vsel %vm3425, %v3650, %v3654
      %v3656 = vshrl.u32 %v3404, 16
      %v3658 = vrot.slane %v3656, 4
      %v3659 = vor.u32 %v3658, %v3654
      %v3660 = vrot.slane %v3659, 4
      %v3662 = vshll.u32 %v3422, 16
      %v3664 = vrot.slane %v3662, 5
      %v3665 = vsel %vm3425, %v3660, %v3664
      %s3666 = scalar_lea.vmem %s3, 32
      %v3667 = vld [vmem:[%s3666] sm:$0xf]
      %v3668 = vld [vmem:[%s3666 + $0x4] sm:$0xf]
      %v3669 = vld [vmem:[%s3666 + $0x8] sm:$0xf]
      %v3670 = vld [vmem:[%s3666 + $0xc] sm:$0xf]
      %v3671 = vld [vmem:[%s3666 + $0x10] sm:$0xf]
      %v3672 = vld [vmem:[%s3666 + $0x14] sm:$0xf]
      %v3673 = vld [vmem:[%s3666 + $0x18] sm:$0xf]
      %v3674 = vld [vmem:[%s3666 + $0x1c] sm:$0xf]
      %v3675 = vunpack.c.l.b16 %v3439
      %v3676 = vunpack.c.l.b16 %v3449
      %v3677 = vunpack.c.l.b16 %v3463
      %v3678 = vunpack.c.l.b16 %v3473
      %v3679 = vunpack.c.l.b16 %v3487
      %v3680 = vunpack.c.l.b16 %v3497
      %v3681 = vunpack.c.l.b16 %v3511
      %v3682 = vunpack.c.l.b16 %v3521
      %v3683 = vunpack.c.l.b16 %v3535
      %v3684 = vunpack.c.l.b16 %v3545
      %v3685 = vunpack.c.l.b16 %v3559
      %v3686 = vunpack.c.l.b16 %v3569
      %v3687 = vunpack.c.l.b16 %v3583
      %v3688 = vunpack.c.l.b16 %v3593
      %v3689 = vunpack.c.l.b16 %v3607
      %v3690 = vunpack.c.l.b16 %v3617
      %v3691 = vunpack.c.l.b16 %v3631
      %v3692 = vunpack.c.l.b16 %v3641
      %v3693 = vunpack.c.l.b16 %v3655
      %v3694 = vunpack.c.l.b16 %v3665
      %v3695 = vpack.c.b16 %v3676, %v3675
      %v3696 = vpack.c.b16 %v3678, %v3677
      %v3697 = vpack.c.b16 %v3680, %v3679
      %v3698 = vpack.c.b16 %v3682, %v3681
      %v3699 = vpack.c.b16 %v3684, %v3683
      %v3700 = vpack.c.b16 %v3686, %v3685
      %v3701 = vpack.c.b16 %v3688, %v3687
      %v3702 = vpack.c.b16 %v3690, %v3689
      %v3703 = vpack.c.b16 %v3692, %v3691
      %v3704 = vpack.c.b16 %v3694, %v3693
      %v3713 = vunpack.c.l.b16 %v3667
      %v3714 = vunpack.c.l.b16 %v3668
      %v3715 = vunpack.c.l.b16 %v3669
      %v3716 = vunpack.c.l.b16 %v3670
      %v3717 = vunpack.c.l.b16 %v3671
      %v3718 = vunpack.c.l.b16 %v3672
      %v3719 = vunpack.c.l.b16 %v3673
      %v3720 = vunpack.c.l.b16 %v3674
      %v3721 = vpack.c.b16 %v3714, %v3713
      %v3722 = vpack.c.b16 %v3716, %v3715
      %v3723 = vpack.c.b16 %v3718, %v3717
      %v3724 = vpack.c.b16 %v3720, %v3719
      %vm3729 = vcmask 523264
      %v3731 = vsel %vm3729, %v3695, 0
      %v3734 = vsel %vm3729, %v3696, 0
      %v3737 = vsel %vm3729, %v3697, 0
      %v3740 = vsel %vm3729, %v3698, 0
      %v3743 = vsel %vm3729, %v3699, 0
      %v3746 = vsel %vm3729, %v3700, 0
      %v3749 = vsel %vm3729, %v3701, 0
      %v3752 = vsel %vm3729, %v3702, 0
      %v3755 = vsel %vm3729, %v3703, 0
      %v3758 = vsel %vm3729, %v3704, 0
      %3760 = vmatprep.subr.bf16.mxu0 0
      %3761 = vmatpush1.bf16.msra.mxu0 %v3721
      %3762 = vmatprep.subr.bf16.mxu0 0
      %3763 = vmatpush1.bf16.msra.mxu0 %v3722
      %3764 = vmatprep.subr.bf16.mxu0 0
      %3765 = vmatpush1.bf16.msra.mxu0 %v3723
      %3766 = vmatprep.subr.bf16.mxu0 0
      %3767 = vmatpush1.bf16.msra.mxu0 %v3724
      %3768 = vmatprep.subr.bf16.mxu0 0
      %3769 = vmatpush1.bf16.msra.mxu0 0
      %3770 = vmatprep.subr.bf16.mxu0 0
      %3771 = vmatpush1.bf16.msra.mxu0 0
      %3772 = vmatprep.subr.bf16.mxu0 0
      %3773 = vmatpush1.bf16.msra.mxu0 0
      %3774 = vmatprep.subr.bf16.mxu0 0
      %3775 = vmatpush1.bf16.msra.mxu0 0
      %3776 = vmatprep.subr.bf16.mxu0 0
      %3777 = vmatpush1.bf16.msra.mxu0 0
      %3778 = vmatprep.subr.bf16.mxu0 0
      %3779 = vmatpush1.bf16.msra.mxu0 0
      %3780 = vmatprep.subr.bf16.mxu0 0
      %3781 = vmatpush1.bf16.msra.mxu0 0
      %3782 = vmatprep.subr.bf16.mxu0 0
      %3783 = vmatpush1.bf16.msra.mxu0 0
      %3784 = vmatprep.subr.bf16.mxu0 0
      %3785 = vmatpush1.bf16.msra.mxu0 0
      %3786 = vmatprep.subr.bf16.mxu0 0
      %3787 = vmatpush1.bf16.msra.mxu0 0
      %3788 = vmatprep.subr.bf16.mxu0 0
      %3789 = vmatpush1.bf16.msra.mxu0 0
      %3790 = vmatprep.subr.bf16.mxu0 0
      %3791 = vmatpush1.bf16.msra.mxu0 0
      %3792 = vmatprep.mubr.bf16.mxu0 0
      %3793 = vmatmul.mubr.bf16.gmra.mrb[0].mxu0 %v3731
      %v3794 = vpop.f32.mrb[0].mxu0
      %v3795 = vadd.f32 0.0, %v3794
      %v3796 = vpop.f32.mrb[0].mxu0
      %v3797 = vpop.f32.mrb[0].mxu0
      %v3798 = vadd.f32 0.0, %v3797
      %v3799 = vpop.f32.mrb[0].mxu0
      %3800 = vmatprep.mubr.bf16.mxu0 0
      %3801 = vmatmul.mubr.bf16.gmra.mrb[0].mxu0 %v3734
      %v3802 = vpop.f32.mrb[0].mxu0
      %v3803 = vadd.f32 0.0, %v3802
      %v3804 = vpop.f32.mrb[0].mxu0
      %v3805 = vpop.f32.mrb[0].mxu0
      %v3806 = vadd.f32 0.0, %v3805
      %v3807 = vpop.f32.mrb[0].mxu0
      %3808 = vmatprep.mubr.bf16.mxu0 0
      %3809 = vmatmul.mubr.bf16.gmra.mrb[0].mxu0 %v3737
      %v3810 = vpop.f32.mrb[0].mxu0
      %v3811 = vadd.f32 0.0, %v3810
      %v3812 = vpop.f32.mrb[0].mxu0
      %v3813 = vpop.f32.mrb[0].mxu0
      %v3814 = vadd.f32 0.0, %v3813
      %v3815 = vpop.f32.mrb[0].mxu0
      %3816 = vmatprep.mubr.bf16.mxu0 0
      %3817 = vmatmul.mubr.bf16.gmra.mrb[0].mxu0 %v3740
      %v3818 = vpop.f32.mrb[0].mxu0
      %v3819 = vadd.f32 0.0, %v3818
      %v3820 = vpop.f32.mrb[0].mxu0
      %v3821 = vpop.f32.mrb[0].mxu0
      %v3822 = vadd.f32 0.0, %v3821
      %v3823 = vpop.f32.mrb[0].mxu0
      %3824 = vmatprep.mubr.bf16.mxu0 0
      %3825 = vmatmul.mubr.bf16.gmra.mrb[0].mxu0 %v3743
      %v3826 = vpop.f32.mrb[0].mxu0
      %v3827 = vadd.f32 0.0, %v3826
      %v3828 = vpop.f32.mrb[0].mxu0
      %v3829 = vpop.f32.mrb[0].mxu0
      %v3830 = vadd.f32 0.0, %v3829
      %v3831 = vpop.f32.mrb[0].mxu0
      %3832 = vmatprep.mubr.bf16.mxu0 0
      %3833 = vmatmul.mubr.bf16.gmra.mrb[0].mxu0 %v3746
      %v3834 = vpop.f32.mrb[0].mxu0
      %v3835 = vadd.f32 0.0, %v3834
      %v3836 = vpop.f32.mrb[0].mxu0
      %v3837 = vpop.f32.mrb[0].mxu0
      %v3838 = vadd.f32 0.0, %v3837
      %v3839 = vpop.f32.mrb[0].mxu0
      %3840 = vmatprep.mubr.bf16.mxu0 0
      %3841 = vmatmul.mubr.bf16.gmra.mrb[0].mxu0 %v3749
      %v3842 = vpop.f32.mrb[0].mxu0
      %v3843 = vadd.f32 0.0, %v3842
      %v3844 = vpop.f32.mrb[0].mxu0
      %v3845 = vpop.f32.mrb[0].mxu0
      %v3846 = vadd.f32 0.0, %v3845
      %v3847 = vpop.f32.mrb[0].mxu0
      %3848 = vmatprep.mubr.bf16.mxu0 0
      %3849 = vmatmul.mubr.bf16.gmra.mrb[0].mxu0 %v3752
      %v3850 = vpop.f32.mrb[0].mxu0
      %v3851 = vadd.f32 0.0, %v3850
      %v3852 = vpop.f32.mrb[0].mxu0
      %v3853 = vpop.f32.mrb[0].mxu0
      %v3854 = vadd.f32 0.0, %v3853
      %v3855 = vpop.f32.mrb[0].mxu0
      %3856 = vmatprep.mubr.bf16.mxu0 0
      %3857 = vmatmul.mubr.bf16.gmra.mrb[0].mxu0 %v3755
      %v3858 = vpop.f32.mrb[0].mxu0
      %v3859 = vadd.f32 0.0, %v3858
      %v3860 = vpop.f32.mrb[0].mxu0
      %v3861 = vpop.f32.mrb[0].mxu0
      %v3862 = vadd.f32 0.0, %v3861
      %v3863 = vpop.f32.mrb[0].mxu0
      %3864 = vmatprep.mubr.bf16.mxu0 0
      %3865 = vmatmul.mubr.bf16.gmra.mrb[0].mxu0 %v3758
      %v3866 = vpop.f32.mrb[0].mxu0
      %v3867 = vadd.f32 0.0, %v3866
      %v3868 = vpop.f32.mrb[0].mxu0
      %v3869 = vpop.f32.mrb[0].mxu0
      %v3870 = vadd.f32 0.0, %v3869
      %v3871 = vpop.f32.mrb[0].mxu0
      %3872 = vdwg.mxu0
      %v3893 = vunpack.c.l.b16 %v3385
      %v3894 = vunpack.c.l.b16 %v3386
      %v3895 = vunpack.c.l.b16 %v3387
      %v3896 = vunpack.c.l.b16 %v3388
      %v3897 = vunpack.c.l.b16 %v3389
      %v3898 = vunpack.c.l.b16 %v3390
      %v3899 = vunpack.c.l.b16 %v3391
      %v3900 = vunpack.c.l.b16 %v3392
      %v3901 = vunpack.c.l.b16 %v3393
      %v3902 = vunpack.c.l.b16 %v3394
      %v3903 = vunpack.c.l.b16 %v3395
      %v3904 = vunpack.c.l.b16 %v3396
      %v3905 = vunpack.c.l.b16 %v3397
      %v3906 = vunpack.c.l.b16 %v3398
      %v3907 = vunpack.c.l.b16 %v3399
      %v3908 = vunpack.c.l.b16 %v3400
      %v3909 = vunpack.c.l.b16 %v3401
      %v3910 = vunpack.c.l.b16 %v3402
      %v3911 = vunpack.c.l.b16 %v3403
      %v3912 = vunpack.c.l.b16 %v3404
      %v3913 = vpack.c.b16 %v3894, %v3893
      %v3914 = vpack.c.b16 %v3896, %v3895
      %v3915 = vpack.c.b16 %v3898, %v3897
      %v3916 = vpack.c.b16 %v3900, %v3899
      %v3917 = vpack.c.b16 %v3902, %v3901
      %v3918 = vpack.c.b16 %v3904, %v3903
      %v3919 = vpack.c.b16 %v3906, %v3905
      %v3920 = vpack.c.b16 %v3908, %v3907
      %v3921 = vpack.c.b16 %v3910, %v3909
      %v3922 = vpack.c.b16 %v3912, %v3911
      %v3931 = vunpack.c.l.b16 %v3405
      %v3932 = vunpack.c.l.b16 %v3406
      %v3933 = vunpack.c.l.b16 %v3407
      %v3934 = vunpack.c.l.b16 %v3408
      %v3935 = vunpack.c.l.b16 %v3409
      %v3936 = vunpack.c.l.b16 %v3410
      %v3937 = vunpack.c.l.b16 %v3411
      %v3938 = vunpack.c.l.b16 %v3412
      %v3939 = vpack.c.b16 %v3932, %v3931
      %v3940 = vpack.c.b16 %v3934, %v3933
      %v3941 = vpack.c.b16 %v3936, %v3935
      %v3942 = vpack.c.b16 %v3938, %v3937
      %v3948 = vsel %vm3729, %v3913, 0
      %v3951 = vsel %vm3729, %v3914, 0
      %v3954 = vsel %vm3729, %v3915, 0
      %v3957 = vsel %vm3729, %v3916, 0
      %v3960 = vsel %vm3729, %v3917, 0
      %v3963 = vsel %vm3729, %v3918, 0
      %v3966 = vsel %vm3729, %v3919, 0
      %v3969 = vsel %vm3729, %v3920, 0
      %v3972 = vsel %vm3729, %v3921, 0
      %v3975 = vsel %vm3729, %v3922, 0
      %3977 = vmatprep.subr.bf16.mxu0 0
      %3978 = vmatpush1.bf16.msra.mxu0 %v3939
      %3979 = vmatprep.subr.bf16.mxu0 0
      %3980 = vmatpush1.bf16.msra.mxu0 %v3940
      %3981 = vmatprep.subr.bf16.mxu0 0
      %3982 = vmatpush1.bf16.msra.mxu0 %v3941
      %3983 = vmatprep.subr.bf16.mxu0 0
      %3984 = vmatpush1.bf16.msra.mxu0 %v3942
      %3985 = vmatprep.subr.bf16.mxu0 0
      %3986 = vmatpush1.bf16.msra.mxu0 0
      %3987 = vmatprep.subr.bf16.mxu0 0
      %3988 = vmatpush1.bf16.msra.mxu0 0
      %3989 = vmatprep.subr.bf16.mxu0 0
      %3990 = vmatpush1.bf16.msra.mxu0 0
      %3991 = vmatprep.subr.bf16.mxu0 0
      %3992 = vmatpush1.bf16.msra.mxu0 0
      %3993 = vmatprep.subr.bf16.mxu0 0
      %3994 = vmatpush1.bf16.msra.mxu0 0
      %3995 = vmatprep.subr.bf16.mxu0 0
      %3996 = vmatpush1.bf16.msra.mxu0 0
      %3997 = vmatprep.subr.bf16.mxu0 0
      %3998 = vmatpush1.bf16.msra.mxu0 0
      %3999 = vmatprep.subr.bf16.mxu0 0
      %4000 = vmatpush1.bf16.msra.mxu0 0
      %4001 = vmatprep.subr.bf16.mxu0 0
      %4002 = vmatpush1.bf16.msra.mxu0 0
      %4003 = vmatprep.subr.bf16.mxu0 0
      %4004 = vmatpush1.bf16.msra.mxu0 0
      %4005 = vmatprep.subr.bf16.mxu0 0
      %4006 = vmatpush1.bf16.msra.mxu0 0
      %4007 = vmatprep.subr.bf16.mxu0 0
      %4008 = vmatpush1.bf16.msra.mxu0 0
      %4009 = vmatprep.mubr.bf16.mxu0 0
      %4010 = vmatmul.mubr.bf16.gmra.mrb[0].mxu0 %v3948
      %v4011 = vpop.f32.mrb[0].mxu0
      %v4012 = vadd.f32 %v3795, %v4011
      %v4013 = vpop.f32.mrb[0].mxu0
      %v4014 = vpop.f32.mrb[0].mxu0
      %v4015 = vadd.f32 %v3798, %v4014
      %v4016 = vpop.f32.mrb[0].mxu0
      %4017 = vmatprep.mubr.bf16.mxu0 0
      %4018 = vmatmul.mubr.bf16.gmra.mrb[0].mxu0 %v3951
      %v4019 = vpop.f32.mrb[0].mxu0
      %v4020 = vadd.f32 %v3803, %v4019
      %v4021 = vpop.f32.mrb[0].mxu0
      %v4022 = vpop.f32.mrb[0].mxu0
      %v4023 = vadd.f32 %v3806, %v4022
      %v4024 = vpop.f32.mrb[0].mxu0
      %4025 = vmatprep.mubr.bf16.mxu0 0
      %4026 = vmatmul.mubr.bf16.gmra.mrb[0].mxu0 %v3954
      %v4027 = vpop.f32.mrb[0].mxu0
      %v4028 = vadd.f32 %v3811, %v4027
      %v4029 = vpop.f32.mrb[0].mxu0
      %v4030 = vpop.f32.mrb[0].mxu0
      %v4031 = vadd.f32 %v3814, %v4030
      %v4032 = vpop.f32.mrb[0].mxu0
      %4033 = vmatprep.mubr.bf16.mxu0 0
      %4034 = vmatmul.mubr.bf16.gmra.mrb[0].mxu0 %v3957
      %v4035 = vpop.f32.mrb[0].mxu0
      %v4036 = vadd.f32 %v3819, %v4035
      %v4037 = vpop.f32.mrb[0].mxu0
      %v4038 = vpop.f32.mrb[0].mxu0
      %v4039 = vadd.f32 %v3822, %v4038
      %v4040 = vpop.f32.mrb[0].mxu0
      %4041 = vmatprep.mubr.bf16.mxu0 0
      %4042 = vmatmul.mubr.bf16.gmra.mrb[0].mxu0 %v3960
      %v4043 = vpop.f32.mrb[0].mxu0
      %v4044 = vadd.f32 %v3827, %v4043
      %v4045 = vpop.f32.mrb[0].mxu0
      %v4046 = vpop.f32.mrb[0].mxu0
      %v4047 = vadd.f32 %v3830, %v4046
      %v4048 = vpop.f32.mrb[0].mxu0
      %4049 = vmatprep.mubr.bf16.mxu0 0
      %4050 = vmatmul.mubr.bf16.gmra.mrb[0].mxu0 %v3963
      %v4051 = vpop.f32.mrb[0].mxu0
      %v4052 = vadd.f32 %v3835, %v4051
      %v4053 = vpop.f32.mrb[0].mxu0
      %v4054 = vpop.f32.mrb[0].mxu0
      %v4055 = vadd.f32 %v3838, %v4054
      %v4056 = vpop.f32.mrb[0].mxu0
      %4057 = vmatprep.mubr.bf16.mxu0 0
      %4058 = vmatmul.mubr.bf16.gmra.mrb[0].mxu0 %v3966
      %v4059 = vpop.f32.mrb[0].mxu0
      %v4060 = vadd.f32 %v3843, %v4059
      %v4061 = vpop.f32.mrb[0].mxu0
      %v4062 = vpop.f32.mrb[0].mxu0
      %v4063 = vadd.f32 %v3846, %v4062
      %v4064 = vpop.f32.mrb[0].mxu0
      %4065 = vmatprep.mubr.bf16.mxu0 0
      %4066 = vmatmul.mubr.bf16.gmra.mrb[0].mxu0 %v3969
      %v4067 = vpop.f32.mrb[0].mxu0
      %v4068 = vadd.f32 %v3851, %v4067
      %v4069 = vpop.f32.mrb[0].mxu0
      %v4070 = vpop.f32.mrb[0].mxu0
      %v4071 = vadd.f32 %v3854, %v4070
      %v4072 = vpop.f32.mrb[0].mxu0
      %4073 = vmatprep.mubr.bf16.mxu0 0
      %4074 = vmatmul.mubr.bf16.gmra.mrb[0].mxu0 %v3972
      %v4075 = vpop.f32.mrb[0].mxu0
      %v4076 = vadd.f32 %v3859, %v4075
      %v4077 = vpop.f32.mrb[0].mxu0
      %v4078 = vpop.f32.mrb[0].mxu0
      %v4079 = vadd.f32 %v3862, %v4078
      %v4080 = vpop.f32.mrb[0].mxu0
      %4081 = vmatprep.mubr.bf16.mxu0 0
      %4082 = vmatmul.mubr.bf16.gmra.mrb[0].mxu0 %v3975
      %v4083 = vpop.f32.mrb[0].mxu0
      %v4084 = vadd.f32 %v3867, %v4083
      %v4085 = vpop.f32.mrb[0].mxu0
      %v4086 = vpop.f32.mrb[0].mxu0
      %v4087 = vadd.f32 %v3870, %v4086
      %v4088 = vpop.f32.mrb[0].mxu0
      %4089 = vdwg.mxu0
      %v4090 = vld [vmem:[#allocation2] sm:$0xe]
      %v4091 = vld [vmem:[#allocation2 + $0xc] sm:$0xe]
      %v4092 = vld [vmem:[#allocation2 + $0x18] sm:$0xe]
      %v4093 = vld [vmem:[#allocation2 + $0x24] sm:$0xe]
      %v4094 = vld [vmem:[#allocation2 + $0x30] sm:$0xe]
      %v4095 = vld [vmem:[#allocation2 + $0x3c] sm:$0xe]
      %v4096 = vld [vmem:[#allocation2 + $0x48] sm:$0xe]
      %v4097 = vld [vmem:[#allocation2 + $0x54] sm:$0xe]
      %v4098 = vld [vmem:[#allocation2 + $0x60] sm:$0xe]
      %v4099 = vld [vmem:[#allocation2 + $0x6c] sm:$0xe]
      %vm4120 = vcmask 1042432
      %vm4121 = vcmask 1046532
      %vm4122 = vmor %vm4120, %vm4121
      %v4123 = vrot.slane %v4090, 5
      %v4124 = vrot.slane %v4123, 4
      %v4125 = vrot.slane %v3386, 5
      %v4126 = vsel %vm4122, %v4124, %v4125
      %v4127 = vrot.slane %v4125, 4
      %v4128 = vrot.slane %v3413, 5
      %v4129 = vsel %vm4122, %v4127, %v4128
      %v4130 = vrot.slane %v4091, 5
      %v4131 = vrot.slane %v4130, 4
      %v4132 = vrot.slane %v3388, 5
      %v4133 = vsel %vm4122, %v4131, %v4132
      %v4134 = vrot.slane %v4132, 4
      %v4135 = vrot.slane %v3414, 5
      %v4136 = vsel %vm4122, %v4134, %v4135
      %v4137 = vrot.slane %v4092, 5
      %v4138 = vrot.slane %v4137, 4
      %v4139 = vrot.slane %v3390, 5
      %v4140 = vsel %vm4122, %v4138, %v4139
      %v4141 = vrot.slane %v4139, 4
      %v4142 = vrot.slane %v3415, 5
      %v4143 = vsel %vm4122, %v4141, %v4142
      %v4144 = vrot.slane %v4093, 5
      %v4145 = vrot.slane %v4144, 4
      %v4146 = vrot.slane %v3392, 5
      %v4147 = vsel %vm4122, %v4145, %v4146
      %v4148 = vrot.slane %v4146, 4
      %v4149 = vrot.slane %v3416, 5
      %v4150 = vsel %vm4122, %v4148, %v4149
      %v4151 = vrot.slane %v4094, 5
      %v4152 = vrot.slane %v4151, 4
      %v4153 = vrot.slane %v3394, 5
      %v4154 = vsel %vm4122, %v4152, %v4153
      %v4155 = vrot.slane %v4153, 4
      %v4156 = vrot.slane %v3417, 5
      %v4157 = vsel %vm4122, %v4155, %v4156
      %v4158 = vrot.slane %v4095, 5
      %v4159 = vrot.slane %v4158, 4
      %v4160 = vrot.slane %v3396, 5
      %v4161 = vsel %vm4122, %v4159, %v4160
      %v4162 = vrot.slane %v4160, 4
      %v4163 = vrot.slane %v3418, 5
      %v4164 = vsel %vm4122, %v4162, %v4163
      %v4165 = vrot.slane %v4096, 5
      %v4166 = vrot.slane %v4165, 4
      %v4167 = vrot.slane %v3398, 5
      %v4168 = vsel %vm4122, %v4166, %v4167
      %v4169 = vrot.slane %v4167, 4
      %v4170 = vrot.slane %v3419, 5
      %v4171 = vsel %vm4122, %v4169, %v4170
      %v4172 = vrot.slane %v4097, 5
      %v4173 = vrot.slane %v4172, 4
      %v4174 = vrot.slane %v3400, 5
      %v4175 = vsel %vm4122, %v4173, %v4174
      %v4176 = vrot.slane %v4174, 4
      %v4177 = vrot.slane %v3420, 5
      %v4178 = vsel %vm4122, %v4176, %v4177
      %v4179 = vrot.slane %v4098, 5
      %v4180 = vrot.slane %v4179, 4
      %v4181 = vrot.slane %v3402, 5
      %v4182 = vsel %vm4122, %v4180, %v4181
      %v4183 = vrot.slane %v4181, 4
      %v4184 = vrot.slane %v3421, 5
      %v4185 = vsel %vm4122, %v4183, %v4184
      %v4186 = vrot.slane %v4099, 5
      %v4187 = vrot.slane %v4186, 4
      %v4188 = vrot.slane %v3404, 5
      %v4189 = vsel %vm4122, %v4187, %v4188
      %v4190 = vrot.slane %v4188, 4
      %v4191 = vrot.slane %v3422, 5
      %v4192 = vsel %vm4122, %v4190, %v4191
      %s4193 = scalar_lea.vmem %s3, 64
      %v4194 = vld [vmem:[%s4193] sm:$0xf]
      %v4195 = vld [vmem:[%s4193 + $0x4] sm:$0xf]
      %v4196 = vld [vmem:[%s4193 + $0x8] sm:$0xf]
      %v4197 = vld [vmem:[%s4193 + $0xc] sm:$0xf]
      %v4198 = vld [vmem:[%s4193 + $0x10] sm:$0xf]
      %v4199 = vld [vmem:[%s4193 + $0x14] sm:$0xf]
      %v4200 = vld [vmem:[%s4193 + $0x18] sm:$0xf]
      %v4201 = vld [vmem:[%s4193 + $0x1c] sm:$0xf]
      %v4202 = vunpack.c.l.b16 %v4126
      %v4203 = vunpack.c.l.b16 %v4129
      %v4204 = vunpack.c.l.b16 %v4133
      %v4205 = vunpack.c.l.b16 %v4136
      %v4206 = vunpack.c.l.b16 %v4140
      %v4207 = vunpack.c.l.b16 %v4143
      %v4208 = vunpack.c.l.b16 %v4147
      %v4209 = vunpack.c.l.b16 %v4150
      %v4210 = vunpack.c.l.b16 %v4154
      %v4211 = vunpack.c.l.b16 %v4157
      %v4212 = vunpack.c.l.b16 %v4161
      %v4213 = vunpack.c.l.b16 %v4164
      %v4214 = vunpack.c.l.b16 %v4168
      %v4215 = vunpack.c.l.b16 %v4171
      %v4216 = vunpack.c.l.b16 %v4175
      %v4217 = vunpack.c.l.b16 %v4178
      %v4218 = vunpack.c.l.b16 %v4182
      %v4219 = vunpack.c.l.b16 %v4185
      %v4220 = vunpack.c.l.b16 %v4189
      %v4221 = vunpack.c.l.b16 %v4192
      %v4222 = vpack.c.b16 %v4203, %v4202
      %v4223 = vpack.c.b16 %v4205, %v4204
      %v4224 = vpack.c.b16 %v4207, %v4206
      %v4225 = vpack.c.b16 %v4209, %v4208
      %v4226 = vpack.c.b16 %v4211, %v4210
      %v4227 = vpack.c.b16 %v4213, %v4212
      %v4228 = vpack.c.b16 %v4215, %v4214
      %v4229 = vpack.c.b16 %v4217, %v4216
      %v4230 = vpack.c.b16 %v4219, %v4218
      %v4231 = vpack.c.b16 %v4221, %v4220
      %v4240 = vunpack.c.l.b16 %v4194
      %v4241 = vunpack.c.l.b16 %v4195
      %v4242 = vunpack.c.l.b16 %v4196
      %v4243 = vunpack.c.l.b16 %v4197
      %v4244 = vunpack.c.l.b16 %v4198
      %v4245 = vunpack.c.l.b16 %v4199
      %v4246 = vunpack.c.l.b16 %v4200
      %v4247 = vunpack.c.l.b16 %v4201
      %v4248 = vpack.c.b16 %v4241, %v4240
      %v4249 = vpack.c.b16 %v4243, %v4242
      %v4250 = vpack.c.b16 %v4245, %v4244
      %v4251 = vpack.c.b16 %v4247, %v4246
      %v4257 = vsel %vm3729, %v4222, 0
      %v4260 = vsel %vm3729, %v4223, 0
      %v4263 = vsel %vm3729, %v4224, 0
      %v4266 = vsel %vm3729, %v4225, 0
      %v4269 = vsel %vm3729, %v4226, 0
      %v4272 = vsel %vm3729, %v4227, 0
      %v4275 = vsel %vm3729, %v4228, 0
      %v4278 = vsel %vm3729, %v4229, 0
      %v4281 = vsel %vm3729, %v4230, 0
      %v4284 = vsel %vm3729, %v4231, 0
      %4286 = vmatprep.subr.bf16.mxu0 0
      %4287 = vmatpush1.bf16.msra.mxu0 %v4248
      %4288 = vmatprep.subr.bf16.mxu0 0
      %4289 = vmatpush1.bf16.msra.mxu0 %v4249
      %4290 = vmatprep.subr.bf16.mxu0 0
      %4291 = vmatpush1.bf16.msra.mxu0 %v4250
      %4292 = vmatprep.subr.bf16.mxu0 0
      %4293 = vmatpush1.bf16.msra.mxu0 %v4251
      %4294 = vmatprep.subr.bf16.mxu0 0
      %4295 = vmatpush1.bf16.msra.mxu0 0
      %4296 = vmatprep.subr.bf16.mxu0 0
      %4297 = vmatpush1.bf16.msra.mxu0 0
      %4298 = vmatprep.subr.bf16.mxu0 0
      %4299 = vmatpush1.bf16.msra.mxu0 0
      %4300 = vmatprep.subr.bf16.mxu0 0
      %4301 = vmatpush1.bf16.msra.mxu0 0
      %4302 = vmatprep.subr.bf16.mxu0 0
      %4303 = vmatpush1.bf16.msra.mxu0 0
      %4304 = vmatprep.subr.bf16.mxu0 0
      %4305 = vmatpush1.bf16.msra.mxu0 0
      %4306 = vmatprep.subr.bf16.mxu0 0
      %4307 = vmatpush1.bf16.msra.mxu0 0
      %4308 = vmatprep.subr.bf16.mxu0 0
      %4309 = vmatpush1.bf16.msra.mxu0 0
      %4310 = vmatprep.subr.bf16.mxu0 0
      %4311 = vmatpush1.bf16.msra.mxu0 0
      %4312 = vmatprep.subr.bf16.mxu0 0
      %4313 = vmatpush1.bf16.msra.mxu0 0
      %4314 = vmatprep.subr.bf16.mxu0 0
      %4315 = vmatpush1.bf16.msra.mxu0 0
      %4316 = vmatprep.subr.bf16.mxu0 0
      %4317 = vmatpush1.bf16.msra.mxu0 0
      %4318 = vmatprep.mubr.bf16.mxu0 0
      %4319 = vmatmul.mubr.bf16.gmra.mrb[0].mxu0 %v4257
      %v4320 = vpop.f32.mrb[0].mxu0
      %v4321 = vadd.f32 0.0, %v4320
      %v4322 = vpop.f32.mrb[0].mxu0
      %v4323 = vpop.f32.mrb[0].mxu0
      %v4324 = vadd.f32 0.0, %v4323
      %v4325 = vpop.f32.mrb[0].mxu0
      %4326 = vmatprep.mubr.bf16.mxu0 0
      %4327 = vmatmul.mubr.bf16.gmra.mrb[0].mxu0 %v4260
      %v4328 = vpop.f32.mrb[0].mxu0
      %v4329 = vadd.f32 0.0, %v4328
      %v4330 = vpop.f32.mrb[0].mxu0
      %v4331 = vpop.f32.mrb[0].mxu0
      %v4332 = vadd.f32 0.0, %v4331
      %v4333 = vpop.f32.mrb[0].mxu0
      %4334 = vmatprep.mubr.bf16.mxu0 0
      %4335 = vmatmul.mubr.bf16.gmra.mrb[0].mxu0 %v4263
      %v4336 = vpop.f32.mrb[0].mxu0
      %v4337 = vadd.f32 0.0, %v4336
      %v4338 = vpop.f32.mrb[0].mxu0
      %v4339 = vpop.f32.mrb[0].mxu0
      %v4340 = vadd.f32 0.0, %v4339
      %v4341 = vpop.f32.mrb[0].mxu0
      %4342 = vmatprep.mubr.bf16.mxu0 0
      %4343 = vmatmul.mubr.bf16.gmra.mrb[0].mxu0 %v4266
      %v4344 = vpop.f32.mrb[0].mxu0
      %v4345 = vadd.f32 0.0, %v4344
      %v4346 = vpop.f32.mrb[0].mxu0
      %v4347 = vpop.f32.mrb[0].mxu0
      %v4348 = vadd.f32 0.0, %v4347
      %v4349 = vpop.f32.mrb[0].mxu0
      %4350 = vmatprep.mubr.bf16.mxu0 0
      %4351 = vmatmul.mubr.bf16.gmra.mrb[0].mxu0 %v4269
      %v4352 = vpop.f32.mrb[0].mxu0
      %v4353 = vadd.f32 0.0, %v4352
      %v4354 = vpop.f32.mrb[0].mxu0
      %v4355 = vpop.f32.mrb[0].mxu0
      %v4356 = vadd.f32 0.0, %v4355
      %v4357 = vpop.f32.mrb[0].mxu0
      %4358 = vmatprep.mubr.bf16.mxu0 0
      %4359 = vmatmul.mubr.bf16.gmra.mrb[0].mxu0 %v4272
      %v4360 = vpop.f32.mrb[0].mxu0
      %v4361 = vadd.f32 0.0, %v4360
      %v4362 = vpop.f32.mrb[0].mxu0
      %v4363 = vpop.f32.mrb[0].mxu0
      %v4364 = vadd.f32 0.0, %v4363
      %v4365 = vpop.f32.mrb[0].mxu0
      %4366 = vmatprep.mubr.bf16.mxu0 0
      %4367 = vmatmul.mubr.bf16.gmra.mrb[0].mxu0 %v4275
      %v4368 = vpop.f32.mrb[0].mxu0
      %v4369 = vadd.f32 0.0, %v4368
      %v4370 = vpop.f32.mrb[0].mxu0
      %v4371 = vpop.f32.mrb[0].mxu0
      %v4372 = vadd.f32 0.0, %v4371
      %v4373 = vpop.f32.mrb[0].mxu0
      %4374 = vmatprep.mubr.bf16.mxu0 0
      %4375 = vmatmul.mubr.bf16.gmra.mrb[0].mxu0 %v4278
      %v4376 = vpop.f32.mrb[0].mxu0
      %v4377 = vadd.f32 0.0, %v4376
      %v4378 = vpop.f32.mrb[0].mxu0
      %v4379 = vpop.f32.mrb[0].mxu0
      %v4380 = vadd.f32 0.0, %v4379
      %v4381 = vpop.f32.mrb[0].mxu0
      %4382 = vmatprep.mubr.bf16.mxu0 0
      %4383 = vmatmul.mubr.bf16.gmra.mrb[0].mxu0 %v4281
      %v4384 = vpop.f32.mrb[0].mxu0
      %v4385 = vadd.f32 0.0, %v4384
      %v4386 = vpop.f32.mrb[0].mxu0
      %v4387 = vpop.f32.mrb[0].mxu0
      %v4388 = vadd.f32 0.0, %v4387
      %v4389 = vpop.f32.mrb[0].mxu0
      %4390 = vmatprep.mubr.bf16.mxu0 0
      %4391 = vmatmul.mubr.bf16.gmra.mrb[0].mxu0 %v4284
      %v4392 = vpop.f32.mrb[0].mxu0
      %v4393 = vadd.f32 0.0, %v4392
      %v4394 = vpop.f32.mrb[0].mxu0
      %v4395 = vpop.f32.mrb[0].mxu0
      %v4396 = vadd.f32 0.0, %v4395
      %v4397 = vpop.f32.mrb[0].mxu0
      %4398 = vdwg.mxu0
      %v4399 = vadd.f32 %v4012, %v4321
      %v4400 = vadd.f32 %v4015, %v4324
      %v4401 = vadd.f32 %v4020, %v4329
      %v4402 = vadd.f32 %v4023, %v4332
      %v4403 = vadd.f32 %v4028, %v4337
      %v4404 = vadd.f32 %v4031, %v4340
      %v4405 = vadd.f32 %v4036, %v4345
      %v4406 = vadd.f32 %v4039, %v4348
      %v4407 = vadd.f32 %v4044, %v4353
      %v4408 = vadd.f32 %v4047, %v4356
      %v4409 = vadd.f32 %v4052, %v4361
      %v4410 = vadd.f32 %v4055, %v4364
      %v4411 = vadd.f32 %v4060, %v4369
      %v4412 = vadd.f32 %v4063, %v4372
      %v4413 = vadd.f32 %v4068, %v4377
      %v4414 = vadd.f32 %v4071, %v4380
      %v4415 = vadd.f32 %v4076, %v4385
      %v4416 = vadd.f32 %v4079, %v4388
      %v4417 = vadd.f32 %v4084, %v4393
      %v4418 = vadd.f32 %v4087, %v4396
      %s4419 = scalar_lea.vmem [#allocation2], 12
      %v4420 = vld [vmem:[%s4419] sm:$0xf]
      %v4421 = vld [vmem:[%s4419 + $0x4] sm:$0xf]
      %v4422 = vld [vmem:[%s4419 + $0xc] sm:$0xf]
      %v4423 = vld [vmem:[%s4419 + $0x10] sm:$0xf]
      %v4424 = vld [vmem:[%s4419 + $0x18] sm:$0xf]
      %v4425 = vld [vmem:[%s4419 + $0x1c] sm:$0xf]
      %v4426 = vld [vmem:[%s4419 + $0x24] sm:$0xf]
      %v4427 = vld [vmem:[%s4419 + $0x28] sm:$0xf]
      %v4428 = vld [vmem:[%s4419 + $0x30] sm:$0xf]
      %v4429 = vld [vmem:[%s4419 + $0x34] sm:$0xf]
      %v4430 = vld [vmem:[%s4419 + $0x3c] sm:$0xf]
      %v4431 = vld [vmem:[%s4419 + $0x40] sm:$0xf]
      %v4432 = vld [vmem:[%s4419 + $0x48] sm:$0xf]
      %v4433 = vld [vmem:[%s4419 + $0x4c] sm:$0xf]
      %v4434 = vld [vmem:[%s4419 + $0x54] sm:$0xf]
      %v4435 = vld [vmem:[%s4419 + $0x58] sm:$0xf]
      %v4436 = vld [vmem:[%s4419 + $0x60] sm:$0xf]
      %v4437 = vld [vmem:[%s4419 + $0x64] sm:$0xf]
      %v4438 = vld [vmem:[%s4419 + $0x6c] sm:$0xf]
      %v4439 = vld [vmem:[%s4419 + $0x70] sm:$0xf]
      %s4440 = scalar_lea.vmem %s3, 96
      %v4441 = vld [vmem:[%s4440] sm:$0xf]
      %v4442 = vld [vmem:[%s4440 + $0x4] sm:$0xf]
      %v4443 = vld [vmem:[%s4440 + $0x8] sm:$0xf]
      %v4444 = vld [vmem:[%s4440 + $0xc] sm:$0xf]
      %v4445 = vld [vmem:[%s4440 + $0x10] sm:$0xf]
      %v4446 = vld [vmem:[%s4440 + $0x14] sm:$0xf]
      %v4447 = vld [vmem:[%s4440 + $0x18] sm:$0xf]
      %v4448 = vld [vmem:[%s4440 + $0x1c] sm:$0xf]
      %v4469 = vunpack.c.l.b16 %v4420
      %v4470 = vunpack.c.l.b16 %v4421
      %v4471 = vunpack.c.l.b16 %v4422
      %v4472 = vunpack.c.l.b16 %v4423
      %v4473 = vunpack.c.l.b16 %v4424
      %v4474 = vunpack.c.l.b16 %v4425
      %v4475 = vunpack.c.l.b16 %v4426
      %v4476 = vunpack.c.l.b16 %v4427
      %v4477 = vunpack.c.l.b16 %v4428
      %v4478 = vunpack.c.l.b16 %v4429
      %v4479 = vunpack.c.l.b16 %v4430
      %v4480 = vunpack.c.l.b16 %v4431
      %v4481 = vunpack.c.l.b16 %v4432
      %v4482 = vunpack.c.l.b16 %v4433
      %v4483 = vunpack.c.l.b16 %v4434
      %v4484 = vunpack.c.l.b16 %v4435
      %v4485 = vunpack.c.l.b16 %v4436
      %v4486 = vunpack.c.l.b16 %v4437
      %v4487 = vunpack.c.l.b16 %v4438
      %v4488 = vunpack.c.l.b16 %v4439
      %v4489 = vpack.c.b16 %v4470, %v4469
      %v4490 = vpack.c.b16 %v4472, %v4471
      %v4491 = vpack.c.b16 %v4474, %v4473
      %v4492 = vpack.c.b16 %v4476, %v4475
      %v4493 = vpack.c.b16 %v4478, %v4477
      %v4494 = vpack.c.b16 %v4480, %v4479
      %v4495 = vpack.c.b16 %v4482, %v4481
      %v4496 = vpack.c.b16 %v4484, %v4483
      %v4497 = vpack.c.b16 %v4486, %v4485
      %v4498 = vpack.c.b16 %v4488, %v4487
      %v4507 = vunpack.c.l.b16 %v4441
      %v4508 = vunpack.c.l.b16 %v4442
      %v4509 = vunpack.c.l.b16 %v4443
      %v4510 = vunpack.c.l.b16 %v4444
      %v4511 = vunpack.c.l.b16 %v4445
      %v4512 = vunpack.c.l.b16 %v4446
      %v4513 = vunpack.c.l.b16 %v4447
      %v4514 = vunpack.c.l.b16 %v4448
      %v4515 = vpack.c.b16 %v4508, %v4507
      %v4516 = vpack.c.b16 %v4510, %v4509
      %v4517 = vpack.c.b16 %v4512, %v4511
      %v4518 = vpack.c.b16 %v4514, %v4513
      %v4524 = vsel %vm3729, %v4489, 0
      %v4527 = vsel %vm3729, %v4490, 0
      %v4530 = vsel %vm3729, %v4491, 0
      %v4533 = vsel %vm3729, %v4492, 0
      %v4536 = vsel %vm3729, %v4493, 0
      %v4539 = vsel %vm3729, %v4494, 0
      %v4542 = vsel %vm3729, %v4495, 0
      %v4545 = vsel %vm3729, %v4496, 0
      %v4548 = vsel %vm3729, %v4497, 0
      %v4551 = vsel %vm3729, %v4498, 0
      %4553 = vmatprep.subr.bf16.mxu0 0
      %4554 = vmatpush1.bf16.msra.mxu0 %v4515
      %4555 = vmatprep.subr.bf16.mxu0 0
      %4556 = vmatpush1.bf16.msra.mxu0 %v4516
      %4557 = vmatprep.subr.bf16.mxu0 0
      %4558 = vmatpush1.bf16.msra.mxu0 %v4517
      %4559 = vmatprep.subr.bf16.mxu0 0
      %4560 = vmatpush1.bf16.msra.mxu0 %v4518
      %4561 = vmatprep.subr.bf16.mxu0 0
      %4562 = vmatpush1.bf16.msra.mxu0 0
      %4563 = vmatprep.subr.bf16.mxu0 0
      %4564 = vmatpush1.bf16.msra.mxu0 0
      %4565 = vmatprep.subr.bf16.mxu0 0
      %4566 = vmatpush1.bf16.msra.mxu0 0
      %4567 = vmatprep.subr.bf16.mxu0 0
      %4568 = vmatpush1.bf16.msra.mxu0 0
      %4569 = vmatprep.subr.bf16.mxu0 0
      %4570 = vmatpush1.bf16.msra.mxu0 0
      %4571 = vmatprep.subr.bf16.mxu0 0
      %4572 = vmatpush1.bf16.msra.mxu0 0
      %4573 = vmatprep.subr.bf16.mxu0 0
      %4574 = vmatpush1.bf16.msra.mxu0 0
      %4575 = vmatprep.subr.bf16.mxu0 0
      %4576 = vmatpush1.bf16.msra.mxu0 0
      %4577 = vmatprep.subr.bf16.mxu0 0
      %4578 = vmatpush1.bf16.msra.mxu0 0
      %4579 = vmatprep.subr.bf16.mxu0 0
      %4580 = vmatpush1.bf16.msra.mxu0 0
      %4581 = vmatprep.subr.bf16.mxu0 0
      %4582 = vmatpush1.bf16.msra.mxu0 0
      %4583 = vmatprep.subr.bf16.mxu0 0
      %4584 = vmatpush1.bf16.msra.mxu0 0
      %4585 = vmatprep.mubr.bf16.mxu0 0
      %4586 = vmatmul.mubr.bf16.gmra.mrb[0].mxu0 %v4524
      %v4587 = vpop.f32.mrb[0].mxu0
      %v4588 = vadd.f32 0.0, %v4587
      %v4589 = vpop.f32.mrb[0].mxu0
      %v4590 = vpop.f32.mrb[0].mxu0
      %v4591 = vadd.f32 0.0, %v4590
      %v4592 = vpop.f32.mrb[0].mxu0
      %4593 = vmatprep.mubr.bf16.mxu0 0
      %4594 = vmatmul.mubr.bf16.gmra.mrb[0].mxu0 %v4527
      %v4595 = vpop.f32.mrb[0].mxu0
      %v4596 = vadd.f32 0.0, %v4595
      %v4597 = vpop.f32.mrb[0].mxu0
      %v4598 = vpop.f32.mrb[0].mxu0
      %v4599 = vadd.f32 0.0, %v4598
      %v4600 = vpop.f32.mrb[0].mxu0
      %4601 = vmatprep.mubr.bf16.mxu0 0
      %4602 = vmatmul.mubr.bf16.gmra.mrb[0].mxu0 %v4530
      %v4603 = vpop.f32.mrb[0].mxu0
      %v4604 = vadd.f32 0.0, %v4603
      %v4605 = vpop.f32.mrb[0].mxu0
      %v4606 = vpop.f32.mrb[0].mxu0
      %v4607 = vadd.f32 0.0, %v4606
      %v4608 = vpop.f32.mrb[0].mxu0
      %4609 = vmatprep.mubr.bf16.mxu0 0
      %4610 = vmatmul.mubr.bf16.gmra.mrb[0].mxu0 %v4533
      %v4611 = vpop.f32.mrb[0].mxu0
      %v4612 = vadd.f32 0.0, %v4611
      %v4613 = vpop.f32.mrb[0].mxu0
      %v4614 = vpop.f32.mrb[0].mxu0
      %v4615 = vadd.f32 0.0, %v4614
      %v4616 = vpop.f32.mrb[0].mxu0
      %4617 = vmatprep.mubr.bf16.mxu0 0
      %4618 = vmatmul.mubr.bf16.gmra.mrb[0].mxu0 %v4536
      %v4619 = vpop.f32.mrb[0].mxu0
      %v4620 = vadd.f32 0.0, %v4619
      %v4621 = vpop.f32.mrb[0].mxu0
      %v4622 = vpop.f32.mrb[0].mxu0
      %v4623 = vadd.f32 0.0, %v4622
      %v4624 = vpop.f32.mrb[0].mxu0
      %4625 = vmatprep.mubr.bf16.mxu0 0
      %4626 = vmatmul.mubr.bf16.gmra.mrb[0].mxu0 %v4539
      %v4627 = vpop.f32.mrb[0].mxu0
      %v4628 = vadd.f32 0.0, %v4627
      %v4629 = vpop.f32.mrb[0].mxu0
      %v4630 = vpop.f32.mrb[0].mxu0
      %v4631 = vadd.f32 0.0, %v4630
      %v4632 = vpop.f32.mrb[0].mxu0
      %4633 = vmatprep.mubr.bf16.mxu0 0
      %4634 = vmatmul.mubr.bf16.gmra.mrb[0].mxu0 %v4542
      %v4635 = vpop.f32.mrb[0].mxu0
      %v4636 = vadd.f32 0.0, %v4635
      %v4637 = vpop.f32.mrb[0].mxu0
      %v4638 = vpop.f32.mrb[0].mxu0
      %v4639 = vadd.f32 0.0, %v4638
      %v4640 = vpop.f32.mrb[0].mxu0
      %4641 = vmatprep.mubr.bf16.mxu0 0
      %4642 = vmatmul.mubr.bf16.gmra.mrb[0].mxu0 %v4545
      %v4643 = vpop.f32.mrb[0].mxu0
      %v4644 = vadd.f32 0.0, %v4643
      %v4645 = vpop.f32.mrb[0].mxu0
      %v4646 = vpop.f32.mrb[0].mxu0
      %v4647 = vadd.f32 0.0, %v4646
      %v4648 = vpop.f32.mrb[0].mxu0
      %4649 = vmatprep.mubr.bf16.mxu0 0
      %4650 = vmatmul.mubr.bf16.gmra.mrb[0].mxu0 %v4548
      %v4651 = vpop.f32.mrb[0].mxu0
      %v4652 = vadd.f32 0.0, %v4651
      %v4653 = vpop.f32.mrb[0].mxu0
      %v4654 = vpop.f32.mrb[0].mxu0
      %v4655 = vadd.f32 0.0, %v4654
      %v4656 = vpop.f32.mrb[0].mxu0
      %4657 = vmatprep.mubr.bf16.mxu0 0
      %4658 = vmatmul.mubr.bf16.gmra.mrb[0].mxu0 %v4551
      %v4659 = vpop.f32.mrb[0].mxu0
      %v4660 = vadd.f32 0.0, %v4659
      %v4661 = vpop.f32.mrb[0].mxu0
      %v4662 = vpop.f32.mrb[0].mxu0
      %v4663 = vadd.f32 0.0, %v4662
      %v4664 = vpop.f32.mrb[0].mxu0
      %4665 = vdwg.mxu0
      %v4666 = vadd.f32 %v4399, %v4588
      %v4667 = vadd.f32 %v4400, %v4591
      %v4668 = vadd.f32 %v4401, %v4596
      %v4669 = vadd.f32 %v4402, %v4599
      %v4670 = vadd.f32 %v4403, %v4604
      %v4671 = vadd.f32 %v4404, %v4607
      %v4672 = vadd.f32 %v4405, %v4612
      %v4673 = vadd.f32 %v4406, %v4615
      %v4674 = vadd.f32 %v4407, %v4620
      %v4675 = vadd.f32 %v4408, %v4623
      %v4676 = vadd.f32 %v4409, %v4628
      %v4677 = vadd.f32 %v4410, %v4631
      %v4678 = vadd.f32 %v4411, %v4636
      %v4679 = vadd.f32 %v4412, %v4639
      %v4680 = vadd.f32 %v4413, %v4644
      %v4681 = vadd.f32 %v4414, %v4647
      %v4682 = vadd.f32 %v4415, %v4652
      %v4683 = vadd.f32 %v4416, %v4655
      %v4684 = vadd.f32 %v4417, %v4660
      %v4685 = vadd.f32 %v4418, %v4663
      %v4686 = vld [vmem:[%s4419] sm:$0xf]
      %v4687 = vld [vmem:[%s4419 + $0x4] sm:$0xf]
      %v4688 = vld [vmem:[%s4419 + $0x8] sm:$0x1]
      %v4689 = vld [vmem:[%s4419 + $0xc] sm:$0xf]
      %v4690 = vld [vmem:[%s4419 + $0x10] sm:$0xf]
      %v4691 = vld [vmem:[%s4419 + $0x14] sm:$0x1]
      %v4692 = vld [vmem:[%s4419 + $0x18] sm:$0xf]
      %v4693 = vld [vmem:[%s4419 + $0x1c] sm:$0xf]
      %v4694 = vld [vmem:[%s4419 + $0x20] sm:$0x1]
      %v4695 = vld [vmem:[%s4419 + $0x24] sm:$0xf]
      %v4696 = vld [vmem:[%s4419 + $0x28] sm:$0xf]
      %v4697 = vld [vmem:[%s4419 + $0x2c] sm:$0x1]
      %v4698 = vld [vmem:[%s4419 + $0x30] sm:$0xf]
      %v4699 = vld [vmem:[%s4419 + $0x34] sm:$0xf]
      %v4700 = vld [vmem:[%s4419 + $0x38] sm:$0x1]
      %v4701 = vld [vmem:[%s4419 + $0x3c] sm:$0xf]
      %v4702 = vld [vmem:[%s4419 + $0x40] sm:$0xf]
      %v4703 = vld [vmem:[%s4419 + $0x44] sm:$0x1]
      %v4704 = vld [vmem:[%s4419 + $0x48] sm:$0xf]
      %v4705 = vld [vmem:[%s4419 + $0x4c] sm:$0xf]
      %v4706 = vld [vmem:[%s4419 + $0x50] sm:$0x1]
      %v4707 = vld [vmem:[%s4419 + $0x54] sm:$0xf]
      %v4708 = vld [vmem:[%s4419 + $0x58] sm:$0xf]
      %v4709 = vld [vmem:[%s4419 + $0x5c] sm:$0x1]
      %v4710 = vld [vmem:[%s4419 + $0x60] sm:$0xf]
      %v4711 = vld [vmem:[%s4419 + $0x64] sm:$0xf]
      %v4712 = vld [vmem:[%s4419 + $0x68] sm:$0x1]
      %v4713 = vld [vmem:[%s4419 + $0x6c] sm:$0xf]
      %v4714 = vld [vmem:[%s4419 + $0x70] sm:$0xf]
      %v4715 = vld [vmem:[%s4419 + $0x74] sm:$0x1]
      %v4717 = vshrl.u32 %v4686, 16
      %v4719 = vrot.slane %v4717, 4
      %v4720 = vshll.u32 %v4686, 16
      %v4722 = vrot.slane %v4720, 5
      %v4723 = vor.u32 %v4719, %v4722
      %v4724 = vrot.slane %v4723, 4
      %v4726 = vshll.u32 %v4687, 16
      %v4728 = vrot.slane %v4726, 5
      %v4729 = vsel %vm3425, %v4724, %v4728
      %v4730 = vshrl.u32 %v4687, 16
      %v4732 = vrot.slane %v4730, 4
      %v4733 = vor.u32 %v4732, %v4728
      %v4734 = vrot.slane %v4733, 4
      %v4736 = vshll.u32 %v4688, 16
      %v4738 = vrot.slane %v4736, 5
      %v4739 = vsel %vm3425, %v4734, %v4738
      %v4741 = vshrl.u32 %v4689, 16
      %v4743 = vrot.slane %v4741, 4
      %v4744 = vshll.u32 %v4689, 16
      %v4746 = vrot.slane %v4744, 5
      %v4747 = vor.u32 %v4743, %v4746
      %v4748 = vrot.slane %v4747, 4
      %v4750 = vshll.u32 %v4690, 16
      %v4752 = vrot.slane %v4750, 5
      %v4753 = vsel %vm3425, %v4748, %v4752
      %v4754 = vshrl.u32 %v4690, 16
      %v4756 = vrot.slane %v4754, 4
      %v4757 = vor.u32 %v4756, %v4752
      %v4758 = vrot.slane %v4757, 4
      %v4760 = vshll.u32 %v4691, 16
      %v4762 = vrot.slane %v4760, 5
      %v4763 = vsel %vm3425, %v4758, %v4762
      %v4765 = vshrl.u32 %v4692, 16
      %v4767 = vrot.slane %v4765, 4
      %v4768 = vshll.u32 %v4692, 16
      %v4770 = vrot.slane %v4768, 5
      %v4771 = vor.u32 %v4767, %v4770
      %v4772 = vrot.slane %v4771, 4
      %v4774 = vshll.u32 %v4693, 16
      %v4776 = vrot.slane %v4774, 5
      %v4777 = vsel %vm3425, %v4772, %v4776
      %v4778 = vshrl.u32 %v4693, 16
      %v4780 = vrot.slane %v4778, 4
      %v4781 = vor.u32 %v4780, %v4776
      %v4782 = vrot.slane %v4781, 4
      %v4784 = vshll.u32 %v4694, 16
      %v4786 = vrot.slane %v4784, 5
      %v4787 = vsel %vm3425, %v4782, %v4786
      %v4789 = vshrl.u32 %v4695, 16
      %v4791 = vrot.slane %v4789, 4
      %v4792 = vshll.u32 %v4695, 16
      %v4794 = vrot.slane %v4792, 5
      %v4795 = vor.u32 %v4791, %v4794
      %v4796 = vrot.slane %v4795, 4
      %v4798 = vshll.u32 %v4696, 16
      %v4800 = vrot.slane %v4798, 5
      %v4801 = vsel %vm3425, %v4796, %v4800
      %v4802 = vshrl.u32 %v4696, 16
      %v4804 = vrot.slane %v4802, 4
      %v4805 = vor.u32 %v4804, %v4800
      %v4806 = vrot.slane %v4805, 4
      %v4808 = vshll.u32 %v4697, 16
      %v4810 = vrot.slane %v4808, 5
      %v4811 = vsel %vm3425, %v4806, %v4810
      %v4813 = vshrl.u32 %v4698, 16
      %v4815 = vrot.slane %v4813, 4
      %v4816 = vshll.u32 %v4698, 16
      %v4818 = vrot.slane %v4816, 5
      %v4819 = vor.u32 %v4815, %v4818
      %v4820 = vrot.slane %v4819, 4
      %v4822 = vshll.u32 %v4699, 16
      %v4824 = vrot.slane %v4822, 5
      %v4825 = vsel %vm3425, %v4820, %v4824
      %v4826 = vshrl.u32 %v4699, 16
      %v4828 = vrot.slane %v4826, 4
      %v4829 = vor.u32 %v4828, %v4824
      %v4830 = vrot.slane %v4829, 4
      %v4832 = vshll.u32 %v4700, 16
      %v4834 = vrot.slane %v4832, 5
      %v4835 = vsel %vm3425, %v4830, %v4834
      %v4837 = vshrl.u32 %v4701, 16
      %v4839 = vrot.slane %v4837, 4
      %v4840 = vshll.u32 %v4701, 16
      %v4842 = vrot.slane %v4840, 5
      %v4843 = vor.u32 %v4839, %v4842
      %v4844 = vrot.slane %v4843, 4
      %v4846 = vshll.u32 %v4702, 16
      %v4848 = vrot.slane %v4846, 5
      %v4849 = vsel %vm3425, %v4844, %v4848
      %v4850 = vshrl.u32 %v4702, 16
      %v4852 = vrot.slane %v4850, 4
      %v4853 = vor.u32 %v4852, %v4848
      %v4854 = vrot.slane %v4853, 4
      %v4856 = vshll.u32 %v4703, 16
      %v4858 = vrot.slane %v4856, 5
      %v4859 = vsel %vm3425, %v4854, %v4858
      %v4861 = vshrl.u32 %v4704, 16
      %v4863 = vrot.slane %v4861, 4
      %v4864 = vshll.u32 %v4704, 16
      %v4866 = vrot.slane %v4864, 5
      %v4867 = vor.u32 %v4863, %v4866
      %v4868 = vrot.slane %v4867, 4
      %v4870 = vshll.u32 %v4705, 16
      %v4872 = vrot.slane %v4870, 5
      %v4873 = vsel %vm3425, %v4868, %v4872
      %v4874 = vshrl.u32 %v4705, 16
      %v4876 = vrot.slane %v4874, 4
      %v4877 = vor.u32 %v4876, %v4872
      %v4878 = vrot.slane %v4877, 4
      %v4880 = vshll.u32 %v4706, 16
      %v4882 = vrot.slane %v4880, 5
      %v4883 = vsel %vm3425, %v4878, %v4882
      %v4885 = vshrl.u32 %v4707, 16
      %v4887 = vrot.slane %v4885, 4
      %v4888 = vshll.u32 %v4707, 16
      %v4890 = vrot.slane %v4888, 5
      %v4891 = vor.u32 %v4887, %v4890
      %v4892 = vrot.slane %v4891, 4
      %v4894 = vshll.u32 %v4708, 16
      %v4896 = vrot.slane %v4894, 5
      %v4897 = vsel %vm3425, %v4892, %v4896
      %v4898 = vshrl.u32 %v4708, 16
      %v4900 = vrot.slane %v4898, 4
      %v4901 = vor.u32 %v4900, %v4896
      %v4902 = vrot.slane %v4901, 4
      %v4904 = vshll.u32 %v4709, 16
      %v4906 = vrot.slane %v4904, 5
      %v4907 = vsel %vm3425, %v4902, %v4906
      %v4909 = vshrl.u32 %v4710, 16
      %v4911 = vrot.slane %v4909, 4
      %v4912 = vshll.u32 %v4710, 16
      %v4914 = vrot.slane %v4912, 5
      %v4915 = vor.u32 %v4911, %v4914
      %v4916 = vrot.slane %v4915, 4
      %v4918 = vshll.u32 %v4711, 16
      %v4920 = vrot.slane %v4918, 5
      %v4921 = vsel %vm3425, %v4916, %v4920
      %v4922 = vshrl.u32 %v4711, 16
      %v4924 = vrot.slane %v4922, 4
      %v4925 = vor.u32 %v4924, %v4920
      %v4926 = vrot.slane %v4925, 4
      %v4928 = vshll.u32 %v4712, 16
      %v4930 = vrot.slane %v4928, 5
      %v4931 = vsel %vm3425, %v4926, %v4930
      %v4933 = vshrl.u32 %v4713, 16
      %v4935 = vrot.slane %v4933, 4
      %v4936 = vshll.u32 %v4713, 16
      %v4938 = vrot.slane %v4936, 5
      %v4939 = vor.u32 %v4935, %v4938
      %v4940 = vrot.slane %v4939, 4
      %v4942 = vshll.u32 %v4714, 16
      %v4944 = vrot.slane %v4942, 5
      %v4945 = vsel %vm3425, %v4940, %v4944
      %v4946 = vshrl.u32 %v4714, 16
      %v4948 = vrot.slane %v4946, 4
      %v4949 = vor.u32 %v4948, %v4944
      %v4950 = vrot.slane %v4949, 4
      %v4952 = vshll.u32 %v4715, 16
      %v4954 = vrot.slane %v4952, 5
      %v4955 = vsel %vm3425, %v4950, %v4954
      %s4956 = scalar_lea.vmem %s3, 128
      %v4957 = vld [vmem:[%s4956] sm:$0xf]
      %v4958 = vld [vmem:[%s4956 + $0x4] sm:$0xf]
      %v4959 = vld [vmem:[%s4956 + $0x8] sm:$0xf]
      %v4960 = vld [vmem:[%s4956 + $0xc] sm:$0xf]
      %v4961 = vld [vmem:[%s4956 + $0x10] sm:$0xf]
      %v4962 = vld [vmem:[%s4956 + $0x14] sm:$0xf]
      %v4963 = vld [vmem:[%s4956 + $0x18] sm:$0xf]
      %v4964 = vld [vmem:[%s4956 + $0x1c] sm:$0xf]
      %v4965 = vunpack.c.l.b16 %v4729
      %v4966 = vunpack.c.l.b16 %v4739
      %v4967 = vunpack.c.l.b16 %v4753
      %v4968 = vunpack.c.l.b16 %v4763
      %v4969 = vunpack.c.l.b16 %v4777
      %v4970 = vunpack.c.l.b16 %v4787
      %v4971 = vunpack.c.l.b16 %v4801
      %v4972 = vunpack.c.l.b16 %v4811
      %v4973 = vunpack.c.l.b16 %v4825
      %v4974 = vunpack.c.l.b16 %v4835
      %v4975 = vunpack.c.l.b16 %v4849
      %v4976 = vunpack.c.l.b16 %v4859
      %v4977 = vunpack.c.l.b16 %v4873
      %v4978 = vunpack.c.l.b16 %v4883
      %v4979 = vunpack.c.l.b16 %v4897
      %v4980 = vunpack.c.l.b16 %v4907
      %v4981 = vunpack.c.l.b16 %v4921
      %v4982 = vunpack.c.l.b16 %v4931
      %v4983 = vunpack.c.l.b16 %v4945
      %v4984 = vunpack.c.l.b16 %v4955
      %v4985 = vpack.c.b16 %v4966, %v4965
      %v4986 = vpack.c.b16 %v4968, %v4967
      %v4987 = vpack.c.b16 %v4970, %v4969
      %v4988 = vpack.c.b16 %v4972, %v4971
      %v4989 = vpack.c.b16 %v4974, %v4973
      %v4990 = vpack.c.b16 %v4976, %v4975
      %v4991 = vpack.c.b16 %v4978, %v4977
      %v4992 = vpack.c.b16 %v4980, %v4979
      %v4993 = vpack.c.b16 %v4982, %v4981
      %v4994 = vpack.c.b16 %v4984, %v4983
      %v5003 = vunpack.c.l.b16 %v4957
      %v5004 = vunpack.c.l.b16 %v4958
      %v5005 = vunpack.c.l.b16 %v4959
      %v5006 = vunpack.c.l.b16 %v4960
      %v5007 = vunpack.c.l.b16 %v4961
      %v5008 = vunpack.c.l.b16 %v4962
      %v5009 = vunpack.c.l.b16 %v4963
      %v5010 = vunpack.c.l.b16 %v4964
      %v5011 = vpack.c.b16 %v5004, %v5003
      %v5012 = vpack.c.b16 %v5006, %v5005
      %v5013 = vpack.c.b16 %v5008, %v5007
      %v5014 = vpack.c.b16 %v5010, %v5009
      %v5020 = vsel %vm3729, %v4985, 0
      %v5023 = vsel %vm3729, %v4986, 0
      %v5026 = vsel %vm3729, %v4987, 0
      %v5029 = vsel %vm3729, %v4988, 0
      %v5032 = vsel %vm3729, %v4989, 0
      %v5035 = vsel %vm3729, %v4990, 0
      %v5038 = vsel %vm3729, %v4991, 0
      %v5041 = vsel %vm3729, %v4992, 0
      %v5044 = vsel %vm3729, %v4993, 0
      %v5047 = vsel %vm3729, %v4994, 0
      %5049 = vmatprep.subr.bf16.mxu0 0
      %5050 = vmatpush1.bf16.msra.mxu0 %v5011
      %5051 = vmatprep.subr.bf16.mxu0 0
      %5052 = vmatpush1.bf16.msra.mxu0 %v5012
      %5053 = vmatprep.subr.bf16.mxu0 0
      %5054 = vmatpush1.bf16.msra.mxu0 %v5013
      %5055 = vmatprep.subr.bf16.mxu0 0
      %5056 = vmatpush1.bf16.msra.mxu0 %v5014
      %5057 = vmatprep.subr.bf16.mxu0 0
      %5058 = vmatpush1.bf16.msra.mxu0 0
      %5059 = vmatprep.subr.bf16.mxu0 0
      %5060 = vmatpush1.bf16.msra.mxu0 0
      %5061 = vmatprep.subr.bf16.mxu0 0
      %5062 = vmatpush1.bf16.msra.mxu0 0
      %5063 = vmatprep.subr.bf16.mxu0 0
      %5064 = vmatpush1.bf16.msra.mxu0 0
      %5065 = vmatprep.subr.bf16.mxu0 0
      %5066 = vmatpush1.bf16.msra.mxu0 0
      %5067 = vmatprep.subr.bf16.mxu0 0
      %5068 = vmatpush1.bf16.msra.mxu0 0
      %5069 = vmatprep.subr.bf16.mxu0 0
      %5070 = vmatpush1.bf16.msra.mxu0 0
      %5071 = vmatprep.subr.bf16.mxu0 0
      %5072 = vmatpush1.bf16.msra.mxu0 0
      %5073 = vmatprep.subr.bf16.mxu0 0
      %5074 = vmatpush1.bf16.msra.mxu0 0
      %5075 = vmatprep.subr.bf16.mxu0 0
      %5076 = vmatpush1.bf16.msra.mxu0 0
      %5077 = vmatprep.subr.bf16.mxu0 0
      %5078 = vmatpush1.bf16.msra.mxu0 0
      %5079 = vmatprep.subr.bf16.mxu0 0
      %5080 = vmatpush1.bf16.msra.mxu0 0
      %5081 = vmatprep.mubr.bf16.mxu0 0
      %5082 = vmatmul.mubr.bf16.gmra.mrb[0].mxu0 %v5020
      %v5083 = vpop.f32.mrb[0].mxu0
      %v5084 = vadd.f32 0.0, %v5083
      %v5085 = vpop.f32.mrb[0].mxu0
      %v5086 = vpop.f32.mrb[0].mxu0
      %v5087 = vadd.f32 0.0, %v5086
      %v5088 = vpop.f32.mrb[0].mxu0
      %5089 = vmatprep.mubr.bf16.mxu0 0
      %5090 = vmatmul.mubr.bf16.gmra.mrb[0].mxu0 %v5023
      %v5091 = vpop.f32.mrb[0].mxu0
      %v5092 = vadd.f32 0.0, %v5091
      %v5093 = vpop.f32.mrb[0].mxu0
      %v5094 = vpop.f32.mrb[0].mxu0
      %v5095 = vadd.f32 0.0, %v5094
      %v5096 = vpop.f32.mrb[0].mxu0
      %5097 = vmatprep.mubr.bf16.mxu0 0
      %5098 = vmatmul.mubr.bf16.gmra.mrb[0].mxu0 %v5026
      %v5099 = vpop.f32.mrb[0].mxu0
      %v5100 = vadd.f32 0.0, %v5099
      %v5101 = vpop.f32.mrb[0].mxu0
      %v5102 = vpop.f32.mrb[0].mxu0
      %v5103 = vadd.f32 0.0, %v5102
      %v5104 = vpop.f32.mrb[0].mxu0
      %5105 = vmatprep.mubr.bf16.mxu0 0
      %5106 = vmatmul.mubr.bf16.gmra.mrb[0].mxu0 %v5029
      %v5107 = vpop.f32.mrb[0].mxu0
      %v5108 = vadd.f32 0.0, %v5107
      %v5109 = vpop.f32.mrb[0].mxu0
      %v5110 = vpop.f32.mrb[0].mxu0
      %v5111 = vadd.f32 0.0, %v5110
      %v5112 = vpop.f32.mrb[0].mxu0
      %5113 = vmatprep.mubr.bf16.mxu0 0
      %5114 = vmatmul.mubr.bf16.gmra.mrb[0].mxu0 %v5032
      %v5115 = vpop.f32.mrb[0].mxu0
      %v5116 = vadd.f32 0.0, %v5115
      %v5117 = vpop.f32.mrb[0].mxu0
      %v5118 = vpop.f32.mrb[0].mxu0
      %v5119 = vadd.f32 0.0, %v5118
      %v5120 = vpop.f32.mrb[0].mxu0
      %5121 = vmatprep.mubr.bf16.mxu0 0
      %5122 = vmatmul.mubr.bf16.gmra.mrb[0].mxu0 %v5035
      %v5123 = vpop.f32.mrb[0].mxu0
      %v5124 = vadd.f32 0.0, %v5123
      %v5125 = vpop.f32.mrb[0].mxu0
      %v5126 = vpop.f32.mrb[0].mxu0
      %v5127 = vadd.f32 0.0, %v5126
      %v5128 = vpop.f32.mrb[0].mxu0
      %5129 = vmatprep.mubr.bf16.mxu0 0
      %5130 = vmatmul.mubr.bf16.gmra.mrb[0].mxu0 %v5038
      %v5131 = vpop.f32.mrb[0].mxu0
      %v5132 = vadd.f32 0.0, %v5131
      %v5133 = vpop.f32.mrb[0].mxu0
      %v5134 = vpop.f32.mrb[0].mxu0
      %v5135 = vadd.f32 0.0, %v5134
      %v5136 = vpop.f32.mrb[0].mxu0
      %5137 = vmatprep.mubr.bf16.mxu0 0
      %5138 = vmatmul.mubr.bf16.gmra.mrb[0].mxu0 %v5041
      %v5139 = vpop.f32.mrb[0].mxu0
      %v5140 = vadd.f32 0.0, %v5139
      %v5141 = vpop.f32.mrb[0].mxu0
      %v5142 = vpop.f32.mrb[0].mxu0
      %v5143 = vadd.f32 0.0, %v5142
      %v5144 = vpop.f32.mrb[0].mxu0
      %5145 = vmatprep.mubr.bf16.mxu0 0
      %5146 = vmatmul.mubr.bf16.gmra.mrb[0].mxu0 %v5044
      %v5147 = vpop.f32.mrb[0].mxu0
      %v5148 = vadd.f32 0.0, %v5147
      %v5149 = vpop.f32.mrb[0].mxu0
      %v5150 = vpop.f32.mrb[0].mxu0
      %v5151 = vadd.f32 0.0, %v5150
      %v5152 = vpop.f32.mrb[0].mxu0
      %5153 = vmatprep.mubr.bf16.mxu0 0
      %5154 = vmatmul.mubr.bf16.gmra.mrb[0].mxu0 %v5047
      %v5155 = vpop.f32.mrb[0].mxu0
      %v5156 = vadd.f32 0.0, %v5155
      %v5157 = vpop.f32.mrb[0].mxu0
      %v5158 = vpop.f32.mrb[0].mxu0
      %v5159 = vadd.f32 0.0, %v5158
      %v5160 = vpop.f32.mrb[0].mxu0
      %5161 = vdwg.mxu0
      %v5162 = vadd.f32 %v4666, %v5084
      %v5163 = vadd.f32 %v4667, %v5087
      %v5164 = vadd.f32 %v4668, %v5092
      %v5165 = vadd.f32 %v4669, %v5095
      %v5166 = vadd.f32 %v4670, %v5100
      %v5167 = vadd.f32 %v4671, %v5103
      %v5168 = vadd.f32 %v4672, %v5108
      %v5169 = vadd.f32 %v4673, %v5111
      %v5170 = vadd.f32 %v4674, %v5116
      %v5171 = vadd.f32 %v4675, %v5119
      %v5172 = vadd.f32 %v4676, %v5124
      %v5173 = vadd.f32 %v4677, %v5127
      %v5174 = vadd.f32 %v4678, %v5132
      %v5175 = vadd.f32 %v4679, %v5135
      %v5176 = vadd.f32 %v4680, %v5140
      %v5177 = vadd.f32 %v4681, %v5143
      %v5178 = vadd.f32 %v4682, %v5148
      %v5179 = vadd.f32 %v4683, %v5151
      %v5180 = vadd.f32 %v4684, %v5156
      %v5181 = vadd.f32 %v4685, %v5159
      %v5182 = vld [vmem:[%s4419] sm:$0xe]
      %v5183 = vld [vmem:[%s4419 + $0xc] sm:$0xe]
      %v5184 = vld [vmem:[%s4419 + $0x18] sm:$0xe]
      %v5185 = vld [vmem:[%s4419 + $0x24] sm:$0xe]
      %v5186 = vld [vmem:[%s4419 + $0x30] sm:$0xe]
      %v5187 = vld [vmem:[%s4419 + $0x3c] sm:$0xe]
      %v5188 = vld [vmem:[%s4419 + $0x48] sm:$0xe]
      %v5189 = vld [vmem:[%s4419 + $0x54] sm:$0xe]
      %v5190 = vld [vmem:[%s4419 + $0x60] sm:$0xe]
      %v5191 = vld [vmem:[%s4419 + $0x6c] sm:$0xe]
      %v5222 = vrot.slane %v5182, 5
      %v5223 = vrot.slane %v5222, 4
      %v5224 = vrot.slane %v4687, 5
      %v5225 = vsel %vm4122, %v5223, %v5224
      %v5226 = vrot.slane %v5224, 4
      %v5227 = vrot.slane %v4688, 5
      %v5228 = vsel %vm4122, %v5226, %v5227
      %v5229 = vrot.slane %v5183, 5
      %v5230 = vrot.slane %v5229, 4
      %v5231 = vrot.slane %v4690, 5
      %v5232 = vsel %vm4122, %v5230, %v5231
      %v5233 = vrot.slane %v5231, 4
      %v5234 = vrot.slane %v4691, 5
      %v5235 = vsel %vm4122, %v5233, %v5234
      %v5236 = vrot.slane %v5184, 5
      %v5237 = vrot.slane %v5236, 4
      %v5238 = vrot.slane %v4693, 5
      %v5239 = vsel %vm4122, %v5237, %v5238
      %v5240 = vrot.slane %v5238, 4
      %v5241 = vrot.slane %v4694, 5
      %v5242 = vsel %vm4122, %v5240, %v5241
      %v5243 = vrot.slane %v5185, 5
      %v5244 = vrot.slane %v5243, 4
      %v5245 = vrot.slane %v4696, 5
      %v5246 = vsel %vm4122, %v5244, %v5245
      %v5247 = vrot.slane %v5245, 4
      %v5248 = vrot.slane %v4697, 5
      %v5249 = vsel %vm4122, %v5247, %v5248
      %v5250 = vrot.slane %v5186, 5
      %v5251 = vrot.slane %v5250, 4
      %v5252 = vrot.slane %v4699, 5
      %v5253 = vsel %vm4122, %v5251, %v5252
      %v5254 = vrot.slane %v5252, 4
      %v5255 = vrot.slane %v4700, 5
      %v5256 = vsel %vm4122, %v5254, %v5255
      %v5257 = vrot.slane %v5187, 5
      %v5258 = vrot.slane %v5257, 4
      %v5259 = vrot.slane %v4702, 5
      %v5260 = vsel %vm4122, %v5258, %v5259
      %v5261 = vrot.slane %v5259, 4
      %v5262 = vrot.slane %v4703, 5
      %v5263 = vsel %vm4122, %v5261, %v5262
      %v5264 = vrot.slane %v5188, 5
      %v5265 = vrot.slane %v5264, 4
      %v5266 = vrot.slane %v4705, 5
      %v5267 = vsel %vm4122, %v5265, %v5266
      %v5268 = vrot.slane %v5266, 4
      %v5269 = vrot.slane %v4706, 5
      %v5270 = vsel %vm4122, %v5268, %v5269
      %v5271 = vrot.slane %v5189, 5
      %v5272 = vrot.slane %v5271, 4
      %v5273 = vrot.slane %v4708, 5
      %v5274 = vsel %vm4122, %v5272, %v5273
      %v5275 = vrot.slane %v5273, 4
      %v5276 = vrot.slane %v4709, 5
      %v5277 = vsel %vm4122, %v5275, %v5276
      %v5278 = vrot.slane %v5190, 5
      %v5279 = vrot.slane %v5278, 4
      %v5280 = vrot.slane %v4711, 5
      %v5281 = vsel %vm4122, %v5279, %v5280
      %v5282 = vrot.slane %v5280, 4
      %v5283 = vrot.slane %v4712, 5
      %v5284 = vsel %vm4122, %v5282, %v5283
      %v5285 = vrot.slane %v5191, 5
      %v5286 = vrot.slane %v5285, 4
      %v5287 = vrot.slane %v4714, 5
      %v5288 = vsel %vm4122, %v5286, %v5287
      %v5289 = vrot.slane %v5287, 4
      %v5290 = vrot.slane %v4715, 5
      %v5291 = vsel %vm4122, %v5289, %v5290
      %s5292 = scalar_lea.vmem %s3, 160
      %v5293 = vld [vmem:[%s5292] sm:$0xf]
      %v5294 = vld [vmem:[%s5292 + $0x4] sm:$0xf]
      %v5295 = vld [vmem:[%s5292 + $0x8] sm:$0xf]
      %v5296 = vld [vmem:[%s5292 + $0xc] sm:$0xf]
      %v5297 = vld [vmem:[%s5292 + $0x10] sm:$0xf]
      %v5298 = vld [vmem:[%s5292 + $0x14] sm:$0xf]
      %v5299 = vld [vmem:[%s5292 + $0x18] sm:$0xf]
      %v5300 = vld [vmem:[%s5292 + $0x1c] sm:$0xf]
      %v5301 = vunpack.c.l.b16 %v5225
      %v5302 = vunpack.c.l.b16 %v5228
      %v5303 = vunpack.c.l.b16 %v5232
      %v5304 = vunpack.c.l.b16 %v5235
      %v5305 = vunpack.c.l.b16 %v5239
      %v5306 = vunpack.c.l.b16 %v5242
      %v5307 = vunpack.c.l.b16 %v5246
      %v5308 = vunpack.c.l.b16 %v5249
      %v5309 = vunpack.c.l.b16 %v5253
      %v5310 = vunpack.c.l.b16 %v5256
      %v5311 = vunpack.c.l.b16 %v5260
      %v5312 = vunpack.c.l.b16 %v5263
      %v5313 = vunpack.c.l.b16 %v5267
      %v5314 = vunpack.c.l.b16 %v5270
      %v5315 = vunpack.c.l.b16 %v5274
      %v5316 = vunpack.c.l.b16 %v5277
      %v5317 = vunpack.c.l.b16 %v5281
      %v5318 = vunpack.c.l.b16 %v5284
      %v5319 = vunpack.c.l.b16 %v5288
      %v5320 = vunpack.c.l.b16 %v5291
      %v5321 = vpack.c.b16 %v5302, %v5301
      %v5322 = vpack.c.b16 %v5304, %v5303
      %v5323 = vpack.c.b16 %v5306, %v5305
      %v5324 = vpack.c.b16 %v5308, %v5307
      %v5325 = vpack.c.b16 %v5310, %v5309
      %v5326 = vpack.c.b16 %v5312, %v5311
      %v5327 = vpack.c.b16 %v5314, %v5313
      %v5328 = vpack.c.b16 %v5316, %v5315
      %v5329 = vpack.c.b16 %v5318, %v5317
      %v5330 = vpack.c.b16 %v5320, %v5319
      %v5339 = vunpack.c.l.b16 %v5293
      %v5340 = vunpack.c.l.b16 %v5294
      %v5341 = vunpack.c.l.b16 %v5295
      %v5342 = vunpack.c.l.b16 %v5296
      %v5343 = vunpack.c.l.b16 %v5297
      %v5344 = vunpack.c.l.b16 %v5298
      %v5345 = vunpack.c.l.b16 %v5299
      %v5346 = vunpack.c.l.b16 %v5300
      %v5347 = vpack.c.b16 %v5340, %v5339
      %v5348 = vpack.c.b16 %v5342, %v5341
      %v5349 = vpack.c.b16 %v5344, %v5343
      %v5350 = vpack.c.b16 %v5346, %v5345
      %v5356 = vsel %vm3729, %v5321, 0
      %v5359 = vsel %vm3729, %v5322, 0
      %v5362 = vsel %vm3729, %v5323, 0
      %v5365 = vsel %vm3729, %v5324, 0
      %v5368 = vsel %vm3729, %v5325, 0
      %v5371 = vsel %vm3729, %v5326, 0
      %v5374 = vsel %vm3729, %v5327, 0
      %v5377 = vsel %vm3729, %v5328, 0
      %v5380 = vsel %vm3729, %v5329, 0
      %v5383 = vsel %vm3729, %v5330, 0
      %5385 = vmatprep.subr.bf16.mxu0 0
      %5386 = vmatpush1.bf16.msra.mxu0 %v5347
      %5387 = vmatprep.subr.bf16.mxu0 0
      %5388 = vmatpush1.bf16.msra.mxu0 %v5348
      %5389 = vmatprep.subr.bf16.mxu0 0
      %5390 = vmatpush1.bf16.msra.mxu0 %v5349
      %5391 = vmatprep.subr.bf16.mxu0 0
      %5392 = vmatpush1.bf16.msra.mxu0 %v5350
      %5393 = vmatprep.subr.bf16.mxu0 0
      %5394 = vmatpush1.bf16.msra.mxu0 0
      %5395 = vmatprep.subr.bf16.mxu0 0
      %5396 = vmatpush1.bf16.msra.mxu0 0
      %5397 = vmatprep.subr.bf16.mxu0 0
      %5398 = vmatpush1.bf16.msra.mxu0 0
      %5399 = vmatprep.subr.bf16.mxu0 0
      %5400 = vmatpush1.bf16.msra.mxu0 0
      %5401 = vmatprep.subr.bf16.mxu0 0
      %5402 = vmatpush1.bf16.msra.mxu0 0
      %5403 = vmatprep.subr.bf16.mxu0 0
      %5404 = vmatpush1.bf16.msra.mxu0 0
      %5405 = vmatprep.subr.bf16.mxu0 0
      %5406 = vmatpush1.bf16.msra.mxu0 0
      %5407 = vmatprep.subr.bf16.mxu0 0
      %5408 = vmatpush1.bf16.msra.mxu0 0
      %5409 = vmatprep.subr.bf16.mxu0 0
      %5410 = vmatpush1.bf16.msra.mxu0 0
      %5411 = vmatprep.subr.bf16.mxu0 0
      %5412 = vmatpush1.bf16.msra.mxu0 0
      %5413 = vmatprep.subr.bf16.mxu0 0
      %5414 = vmatpush1.bf16.msra.mxu0 0
      %5415 = vmatprep.subr.bf16.mxu0 0
      %5416 = vmatpush1.bf16.msra.mxu0 0
      %5417 = vmatprep.mubr.bf16.mxu0 0
      %5418 = vmatmul.mubr.bf16.gmra.mrb[0].mxu0 %v5356
      %v5419 = vpop.f32.mrb[0].mxu0
      %v5420 = vadd.f32 0.0, %v5419
      %v5421 = vpop.f32.mrb[0].mxu0
      %v5422 = vpop.f32.mrb[0].mxu0
      %v5423 = vadd.f32 0.0, %v5422
      %v5424 = vpop.f32.mrb[0].mxu0
      %5425 = vmatprep.mubr.bf16.mxu0 0
      %5426 = vmatmul.mubr.bf16.gmra.mrb[0].mxu0 %v5359
      %v5427 = vpop.f32.mrb[0].mxu0
      %v5428 = vadd.f32 0.0, %v5427
      %v5429 = vpop.f32.mrb[0].mxu0
      %v5430 = vpop.f32.mrb[0].mxu0
      %v5431 = vadd.f32 0.0, %v5430
      %v5432 = vpop.f32.mrb[0].mxu0
      %5433 = vmatprep.mubr.bf16.mxu0 0
      %5434 = vmatmul.mubr.bf16.gmra.mrb[0].mxu0 %v5362
      %v5435 = vpop.f32.mrb[0].mxu0
      %v5436 = vadd.f32 0.0, %v5435
      %v5437 = vpop.f32.mrb[0].mxu0
      %v5438 = vpop.f32.mrb[0].mxu0
      %v5439 = vadd.f32 0.0, %v5438
      %v5440 = vpop.f32.mrb[0].mxu0
      %5441 = vmatprep.mubr.bf16.mxu0 0
      %5442 = vmatmul.mubr.bf16.gmra.mrb[0].mxu0 %v5365
      %v5443 = vpop.f32.mrb[0].mxu0
      %v5444 = vadd.f32 0.0, %v5443
      %v5445 = vpop.f32.mrb[0].mxu0
      %v5446 = vpop.f32.mrb[0].mxu0
      %v5447 = vadd.f32 0.0, %v5446
      %v5448 = vpop.f32.mrb[0].mxu0
      %5449 = vmatprep.mubr.bf16.mxu0 0
      %5450 = vmatmul.mubr.bf16.gmra.mrb[0].mxu0 %v5368
      %v5451 = vpop.f32.mrb[0].mxu0
      %v5452 = vadd.f32 0.0, %v5451
      %v5453 = vpop.f32.mrb[0].mxu0
      %v5454 = vpop.f32.mrb[0].mxu0
      %v5455 = vadd.f32 0.0, %v5454
      %v5456 = vpop.f32.mrb[0].mxu0
      %5457 = vmatprep.mubr.bf16.mxu0 0
      %5458 = vmatmul.mubr.bf16.gmra.mrb[0].mxu0 %v5371
      %v5459 = vpop.f32.mrb[0].mxu0
      %v5460 = vadd.f32 0.0, %v5459
      %v5461 = vpop.f32.mrb[0].mxu0
      %v5462 = vpop.f32.mrb[0].mxu0
      %v5463 = vadd.f32 0.0, %v5462
      %v5464 = vpop.f32.mrb[0].mxu0
      %5465 = vmatprep.mubr.bf16.mxu0 0
      %5466 = vmatmul.mubr.bf16.gmra.mrb[0].mxu0 %v5374
      %v5467 = vpop.f32.mrb[0].mxu0
      %v5468 = vadd.f32 0.0, %v5467
      %v5469 = vpop.f32.mrb[0].mxu0
      %v5470 = vpop.f32.mrb[0].mxu0
      %v5471 = vadd.f32 0.0, %v5470
      %v5472 = vpop.f32.mrb[0].mxu0
      %5473 = vmatprep.mubr.bf16.mxu0 0
      %5474 = vmatmul.mubr.bf16.gmra.mrb[0].mxu0 %v5377
      %v5475 = vpop.f32.mrb[0].mxu0
      %v5476 = vadd.f32 0.0, %v5475
      %v5477 = vpop.f32.mrb[0].mxu0
      %v5478 = vpop.f32.mrb[0].mxu0
      %v5479 = vadd.f32 0.0, %v5478
      %v5480 = vpop.f32.mrb[0].mxu0
      %5481 = vmatprep.mubr.bf16.mxu0 0
      %5482 = vmatmul.mubr.bf16.gmra.mrb[0].mxu0 %v5380
      %v5483 = vpop.f32.mrb[0].mxu0
      %v5484 = vadd.f32 0.0, %v5483
      %v5485 = vpop.f32.mrb[0].mxu0
      %v5486 = vpop.f32.mrb[0].mxu0
      %v5487 = vadd.f32 0.0, %v5486
      %v5488 = vpop.f32.mrb[0].mxu0
      %5489 = vmatprep.mubr.bf16.mxu0 0
      %5490 = vmatmul.mubr.bf16.gmra.mrb[0].mxu0 %v5383
      %v5491 = vpop.f32.mrb[0].mxu0
      %v5492 = vadd.f32 0.0, %v5491
      %v5493 = vpop.f32.mrb[0].mxu0
      %v5494 = vpop.f32.mrb[0].mxu0
      %v5495 = vadd.f32 0.0, %v5494
      %v5496 = vpop.f32.mrb[0].mxu0
      %5497 = vdwg.mxu0
      %v5498 = vadd.f32 %v5162, %v5420
      %v5499 = vadd.f32 %v5163, %v5423
      %v5500 = vadd.f32 %v5164, %v5428
      %v5501 = vadd.f32 %v5165, %v5431
      %v5502 = vadd.f32 %v5166, %v5436
      %v5503 = vadd.f32 %v5167, %v5439
      %v5504 = vadd.f32 %v5168, %v5444
      %v5505 = vadd.f32 %v5169, %v5447
      %v5506 = vadd.f32 %v5170, %v5452
      %v5507 = vadd.f32 %v5171, %v5455
      %v5508 = vadd.f32 %v5172, %v5460
      %v5509 = vadd.f32 %v5173, %v5463
      %v5510 = vadd.f32 %v5174, %v5468
      %v5511 = vadd.f32 %v5175, %v5471
      %v5512 = vadd.f32 %v5176, %v5476
      %v5513 = vadd.f32 %v5177, %v5479
      %v5514 = vadd.f32 %v5178, %v5484
      %v5515 = vadd.f32 %v5179, %v5487
      %v5516 = vadd.f32 %v5180, %v5492
      %v5517 = vadd.f32 %v5181, %v5495
      %s5518 = scalar_lea.vmem [#allocation2], 24
      %v5519 = vld [vmem:[%s5518] sm:$0xf]
      %v5520 = vld [vmem:[%s5518 + $0x4] sm:$0xf]
      %v5521 = vld [vmem:[%s5518 + $0xc] sm:$0xf]
      %v5522 = vld [vmem:[%s5518 + $0x10] sm:$0xf]
      %v5523 = vld [vmem:[%s5518 + $0x18] sm:$0xf]
      %v5524 = vld [vmem:[%s5518 + $0x1c] sm:$0xf]
      %v5525 = vld [vmem:[%s5518 + $0x24] sm:$0xf]
      %v5526 = vld [vmem:[%s5518 + $0x28] sm:$0xf]
      %v5527 = vld [vmem:[%s5518 + $0x30] sm:$0xf]
      %v5528 = vld [vmem:[%s5518 + $0x34] sm:$0xf]
      %v5529 = vld [vmem:[%s5518 + $0x3c] sm:$0xf]
      %v5530 = vld [vmem:[%s5518 + $0x40] sm:$0xf]
      %v5531 = vld [vmem:[%s5518 + $0x48] sm:$0xf]
      %v5532 = vld [vmem:[%s5518 + $0x4c] sm:$0xf]
      %v5533 = vld [vmem:[%s5518 + $0x54] sm:$0xf]
      %v5534 = vld [vmem:[%s5518 + $0x58] sm:$0xf]
      %v5535 = vld [vmem:[%s5518 + $0x60] sm:$0xf]
      %v5536 = vld [vmem:[%s5518 + $0x64] sm:$0xf]
      %v5537 = vld [vmem:[%s5518 + $0x6c] sm:$0xf]
      %v5538 = vld [vmem:[%s5518 + $0x70] sm:$0xf]
      %s5539 = scalar_lea.vmem %s3, 192
      %v5540 = vld [vmem:[%s5539] sm:$0xf]
      %v5541 = vld [vmem:[%s5539 + $0x4] sm:$0xf]
      %v5542 = vld [vmem:[%s5539 + $0x8] sm:$0xf]
      %v5543 = vld [vmem:[%s5539 + $0xc] sm:$0xf]
      %v5544 = vld [vmem:[%s5539 + $0x10] sm:$0xf]
      %v5545 = vld [vmem:[%s5539 + $0x14] sm:$0xf]
      %v5546 = vld [vmem:[%s5539 + $0x18] sm:$0xf]
      %v5547 = vld [vmem:[%s5539 + $0x1c] sm:$0xf]
      %v5568 = vunpack.c.l.b16 %v5519
      %v5569 = vunpack.c.l.b16 %v5520
      %v5570 = vunpack.c.l.b16 %v5521
      %v5571 = vunpack.c.l.b16 %v5522
      %v5572 = vunpack.c.l.b16 %v5523
      %v5573 = vunpack.c.l.b16 %v5524
      %v5574 = vunpack.c.l.b16 %v5525
      %v5575 = vunpack.c.l.b16 %v5526
      %v5576 = vunpack.c.l.b16 %v5527
      %v5577 = vunpack.c.l.b16 %v5528
      %v5578 = vunpack.c.l.b16 %v5529
      %v5579 = vunpack.c.l.b16 %v5530
      %v5580 = vunpack.c.l.b16 %v5531
      %v5581 = vunpack.c.l.b16 %v5532
      %v5582 = vunpack.c.l.b16 %v5533
      %v5583 = vunpack.c.l.b16 %v5534
      %v5584 = vunpack.c.l.b16 %v5535
      %v5585 = vunpack.c.l.b16 %v5536
      %v5586 = vunpack.c.l.b16 %v5537
      %v5587 = vunpack.c.l.b16 %v5538
      %v5588 = vpack.c.b16 %v5569, %v5568
      %v5589 = vpack.c.b16 %v5571, %v5570
      %v5590 = vpack.c.b16 %v5573, %v5572
      %v5591 = vpack.c.b16 %v5575, %v5574
      %v5592 = vpack.c.b16 %v5577, %v5576
      %v5593 = vpack.c.b16 %v5579, %v5578
      %v5594 = vpack.c.b16 %v5581, %v5580
      %v5595 = vpack.c.b16 %v5583, %v5582
      %v5596 = vpack.c.b16 %v5585, %v5584
      %v5597 = vpack.c.b16 %v5587, %v5586
      %v5606 = vunpack.c.l.b16 %v5540
      %v5607 = vunpack.c.l.b16 %v5541
      %v5608 = vunpack.c.l.b16 %v5542
      %v5609 = vunpack.c.l.b16 %v5543
      %v5610 = vunpack.c.l.b16 %v5544
      %v5611 = vunpack.c.l.b16 %v5545
      %v5612 = vunpack.c.l.b16 %v5546
      %v5613 = vunpack.c.l.b16 %v5547
      %v5614 = vpack.c.b16 %v5607, %v5606
      %v5615 = vpack.c.b16 %v5609, %v5608
      %v5616 = vpack.c.b16 %v5611, %v5610
      %v5617 = vpack.c.b16 %v5613, %v5612
      %v5623 = vsel %vm3729, %v5588, 0
      %v5626 = vsel %vm3729, %v5589, 0
      %v5629 = vsel %vm3729, %v5590, 0
      %v5632 = vsel %vm3729, %v5591, 0
      %v5635 = vsel %vm3729, %v5592, 0
      %v5638 = vsel %vm3729, %v5593, 0
      %v5641 = vsel %vm3729, %v5594, 0
      %v5644 = vsel %vm3729, %v5595, 0
      %v5647 = vsel %vm3729, %v5596, 0
      %v5650 = vsel %vm3729, %v5597, 0
      %5652 = vmatprep.subr.bf16.mxu0 0
      %5653 = vmatpush1.bf16.msra.mxu0 %v5614
      %5654 = vmatprep.subr.bf16.mxu0 0
      %5655 = vmatpush1.bf16.msra.mxu0 %v5615
      %5656 = vmatprep.subr.bf16.mxu0 0
      %5657 = vmatpush1.bf16.msra.mxu0 %v5616
      %5658 = vmatprep.subr.bf16.mxu0 0
      %5659 = vmatpush1.bf16.msra.mxu0 %v5617
      %5660 = vmatprep.subr.bf16.mxu0 0
      %5661 = vmatpush1.bf16.msra.mxu0 0
      %5662 = vmatprep.subr.bf16.mxu0 0
      %5663 = vmatpush1.bf16.msra.mxu0 0
      %5664 = vmatprep.subr.bf16.mxu0 0
      %5665 = vmatpush1.bf16.msra.mxu0 0
      %5666 = vmatprep.subr.bf16.mxu0 0
      %5667 = vmatpush1.bf16.msra.mxu0 0
      %5668 = vmatprep.subr.bf16.mxu0 0
      %5669 = vmatpush1.bf16.msra.mxu0 0
      %5670 = vmatprep.subr.bf16.mxu0 0
      %5671 = vmatpush1.bf16.msra.mxu0 0
      %5672 = vmatprep.subr.bf16.mxu0 0
      %5673 = vmatpush1.bf16.msra.mxu0 0
      %5674 = vmatprep.subr.bf16.mxu0 0
      %5675 = vmatpush1.bf16.msra.mxu0 0
      %5676 = vmatprep.subr.bf16.mxu0 0
      %5677 = vmatpush1.bf16.msra.mxu0 0
      %5678 = vmatprep.subr.bf16.mxu0 0
      %5679 = vmatpush1.bf16.msra.mxu0 0
      %5680 = vmatprep.subr.bf16.mxu0 0
      %5681 = vmatpush1.bf16.msra.mxu0 0
      %5682 = vmatprep.subr.bf16.mxu0 0
      %5683 = vmatpush1.bf16.msra.mxu0 0
      %5684 = vmatprep.mubr.bf16.mxu0 0
      %5685 = vmatmul.mubr.bf16.gmra.mrb[0].mxu0 %v5623
      %v5686 = vpop.f32.mrb[0].mxu0
      %v5687 = vadd.f32 0.0, %v5686
      %v5688 = vpop.f32.mrb[0].mxu0
      %v5689 = vpop.f32.mrb[0].mxu0
      %v5690 = vadd.f32 0.0, %v5689
      %v5691 = vpop.f32.mrb[0].mxu0
      %5692 = vmatprep.mubr.bf16.mxu0 0
      %5693 = vmatmul.mubr.bf16.gmra.mrb[0].mxu0 %v5626
      %v5694 = vpop.f32.mrb[0].mxu0
      %v5695 = vadd.f32 0.0, %v5694
      %v5696 = vpop.f32.mrb[0].mxu0
      %v5697 = vpop.f32.mrb[0].mxu0
      %v5698 = vadd.f32 0.0, %v5697
      %v5699 = vpop.f32.mrb[0].mxu0
      %5700 = vmatprep.mubr.bf16.mxu0 0
      %5701 = vmatmul.mubr.bf16.gmra.mrb[0].mxu0 %v5629
      %v5702 = vpop.f32.mrb[0].mxu0
      %v5703 = vadd.f32 0.0, %v5702
      %v5704 = vpop.f32.mrb[0].mxu0
      %v5705 = vpop.f32.mrb[0].mxu0
      %v5706 = vadd.f32 0.0, %v5705
      %v5707 = vpop.f32.mrb[0].mxu0
      %5708 = vmatprep.mubr.bf16.mxu0 0
      %5709 = vmatmul.mubr.bf16.gmra.mrb[0].mxu0 %v5632
      %v5710 = vpop.f32.mrb[0].mxu0
      %v5711 = vadd.f32 0.0, %v5710
      %v5712 = vpop.f32.mrb[0].mxu0
      %v5713 = vpop.f32.mrb[0].mxu0
      %v5714 = vadd.f32 0.0, %v5713
      %v5715 = vpop.f32.mrb[0].mxu0
      %5716 = vmatprep.mubr.bf16.mxu0 0
      %5717 = vmatmul.mubr.bf16.gmra.mrb[0].mxu0 %v5635
      %v5718 = vpop.f32.mrb[0].mxu0
      %v5719 = vadd.f32 0.0, %v5718
      %v5720 = vpop.f32.mrb[0].mxu0
      %v5721 = vpop.f32.mrb[0].mxu0
      %v5722 = vadd.f32 0.0, %v5721
      %v5723 = vpop.f32.mrb[0].mxu0
      %5724 = vmatprep.mubr.bf16.mxu0 0
      %5725 = vmatmul.mubr.bf16.gmra.mrb[0].mxu0 %v5638
      %v5726 = vpop.f32.mrb[0].mxu0
      %v5727 = vadd.f32 0.0, %v5726
      %v5728 = vpop.f32.mrb[0].mxu0
      %v5729 = vpop.f32.mrb[0].mxu0
      %v5730 = vadd.f32 0.0, %v5729
      %v5731 = vpop.f32.mrb[0].mxu0
      %5732 = vmatprep.mubr.bf16.mxu0 0
      %5733 = vmatmul.mubr.bf16.gmra.mrb[0].mxu0 %v5641
      %v5734 = vpop.f32.mrb[0].mxu0
      %v5735 = vadd.f32 0.0, %v5734
      %v5736 = vpop.f32.mrb[0].mxu0
      %v5737 = vpop.f32.mrb[0].mxu0
      %v5738 = vadd.f32 0.0, %v5737
      %v5739 = vpop.f32.mrb[0].mxu0
      %5740 = vmatprep.mubr.bf16.mxu0 0
      %5741 = vmatmul.mubr.bf16.gmra.mrb[0].mxu0 %v5644
      %v5742 = vpop.f32.mrb[0].mxu0
      %v5743 = vadd.f32 0.0, %v5742
      %v5744 = vpop.f32.mrb[0].mxu0
      %v5745 = vpop.f32.mrb[0].mxu0
      %v5746 = vadd.f32 0.0, %v5745
      %v5747 = vpop.f32.mrb[0].mxu0
      %5748 = vmatprep.mubr.bf16.mxu0 0
      %5749 = vmatmul.mubr.bf16.gmra.mrb[0].mxu0 %v5647
      %v5750 = vpop.f32.mrb[0].mxu0
      %v5751 = vadd.f32 0.0, %v5750
      %v5752 = vpop.f32.mrb[0].mxu0
      %v5753 = vpop.f32.mrb[0].mxu0
      %v5754 = vadd.f32 0.0, %v5753
      %v5755 = vpop.f32.mrb[0].mxu0
      %5756 = vmatprep.mubr.bf16.mxu0 0
      %5757 = vmatmul.mubr.bf16.gmra.mrb[0].mxu0 %v5650
      %v5758 = vpop.f32.mrb[0].mxu0
      %v5759 = vadd.f32 0.0, %v5758
      %v5760 = vpop.f32.mrb[0].mxu0
      %v5761 = vpop.f32.mrb[0].mxu0
      %v5762 = vadd.f32 0.0, %v5761
      %v5763 = vpop.f32.mrb[0].mxu0
      %5764 = vdwg.mxu0
      %v5765 = vadd.f32 %v5498, %v5687
      %v5766 = vadd.f32 %v5499, %v5690
      %v5767 = vadd.f32 %v5500, %v5695
      %v5768 = vadd.f32 %v5501, %v5698
      %v5769 = vadd.f32 %v5502, %v5703
      %v5770 = vadd.f32 %v5503, %v5706
      %v5771 = vadd.f32 %v5504, %v5711
      %v5772 = vadd.f32 %v5505, %v5714
      %v5773 = vadd.f32 %v5506, %v5719
      %v5774 = vadd.f32 %v5507, %v5722
      %v5775 = vadd.f32 %v5508, %v5727
      %v5776 = vadd.f32 %v5509, %v5730
      %v5777 = vadd.f32 %v5510, %v5735
      %v5778 = vadd.f32 %v5511, %v5738
      %v5779 = vadd.f32 %v5512, %v5743
      %v5780 = vadd.f32 %v5513, %v5746
      %v5781 = vadd.f32 %v5514, %v5751
      %v5782 = vadd.f32 %v5515, %v5754
      %v5783 = vadd.f32 %v5516, %v5759
      %v5784 = vadd.f32 %v5517, %v5762
      %v5785 = vld [vmem:[%s5518] sm:$0xf]
      %v5786 = vld [vmem:[%s5518 + $0x4] sm:$0xf]
      %v5787 = vld [vmem:[%s5518 + $0x8] sm:$0x1]
      %v5788 = vld [vmem:[%s5518 + $0xc] sm:$0xf]
      %v5789 = vld [vmem:[%s5518 + $0x10] sm:$0xf]
      %v5790 = vld [vmem:[%s5518 + $0x14] sm:$0x1]
      %v5791 = vld [vmem:[%s5518 + $0x18] sm:$0xf]
      %v5792 = vld [vmem:[%s5518 + $0x1c] sm:$0xf]
      %v5793 = vld [vmem:[%s5518 + $0x20] sm:$0x1]
      %v5794 = vld [vmem:[%s5518 + $0x24] sm:$0xf]
      %v5795 = vld [vmem:[%s5518 + $0x28] sm:$0xf]
      %v5796 = vld [vmem:[%s5518 + $0x2c] sm:$0x1]
      %v5797 = vld [vmem:[%s5518 + $0x30] sm:$0xf]
      %v5798 = vld [vmem:[%s5518 + $0x34] sm:$0xf]
      %v5799 = vld [vmem:[%s5518 + $0x38] sm:$0x1]
      %v5800 = vld [vmem:[%s5518 + $0x3c] sm:$0xf]
      %v5801 = vld [vmem:[%s5518 + $0x40] sm:$0xf]
      %v5802 = vld [vmem:[%s5518 + $0x44] sm:$0x1]
      %v5803 = vld [vmem:[%s5518 + $0x48] sm:$0xf]
      %v5804 = vld [vmem:[%s5518 + $0x4c] sm:$0xf]
      %v5805 = vld [vmem:[%s5518 + $0x50] sm:$0x1]
      %v5806 = vld [vmem:[%s5518 + $0x54] sm:$0xf]
      %v5807 = vld [vmem:[%s5518 + $0x58] sm:$0xf]
      %v5808 = vld [vmem:[%s5518 + $0x5c] sm:$0x1]
      %v5809 = vld [vmem:[%s5518 + $0x60] sm:$0xf]
      %v5810 = vld [vmem:[%s5518 + $0x64] sm:$0xf]
      %v5811 = vld [vmem:[%s5518 + $0x68] sm:$0x1]
      %v5812 = vld [vmem:[%s5518 + $0x6c] sm:$0xf]
      %v5813 = vld [vmem:[%s5518 + $0x70] sm:$0xf]
      %v5814 = vld [vmem:[%s5518 + $0x74] sm:$0x1]
      %v5816 = vshrl.u32 %v5785, 16
      %v5818 = vrot.slane %v5816, 4
      %v5819 = vshll.u32 %v5785, 16
      %v5821 = vrot.slane %v5819, 5
      %v5822 = vor.u32 %v5818, %v5821
      %v5823 = vrot.slane %v5822, 4
      %v5825 = vshll.u32 %v5786, 16
      %v5827 = vrot.slane %v5825, 5
      %v5828 = vsel %vm3425, %v5823, %v5827
      %v5829 = vshrl.u32 %v5786, 16
      %v5831 = vrot.slane %v5829, 4
      %v5832 = vor.u32 %v5831, %v5827
      %v5833 = vrot.slane %v5832, 4
      %v5835 = vshll.u32 %v5787, 16
      %v5837 = vrot.slane %v5835, 5
      %v5838 = vsel %vm3425, %v5833, %v5837
      %v5840 = vshrl.u32 %v5788, 16
      %v5842 = vrot.slane %v5840, 4
      %v5843 = vshll.u32 %v5788, 16
      %v5845 = vrot.slane %v5843, 5
      %v5846 = vor.u32 %v5842, %v5845
      %v5847 = vrot.slane %v5846, 4
      %v5849 = vshll.u32 %v5789, 16
      %v5851 = vrot.slane %v5849, 5
      %v5852 = vsel %vm3425, %v5847, %v5851
      %v5853 = vshrl.u32 %v5789, 16
      %v5855 = vrot.slane %v5853, 4
      %v5856 = vor.u32 %v5855, %v5851
      %v5857 = vrot.slane %v5856, 4
      %v5859 = vshll.u32 %v5790, 16
      %v5861 = vrot.slane %v5859, 5
      %v5862 = vsel %vm3425, %v5857, %v5861
      %v5864 = vshrl.u32 %v5791, 16
      %v5866 = vrot.slane %v5864, 4
      %v5867 = vshll.u32 %v5791, 16
      %v5869 = vrot.slane %v5867, 5
      %v5870 = vor.u32 %v5866, %v5869
      %v5871 = vrot.slane %v5870, 4
      %v5873 = vshll.u32 %v5792, 16
      %v5875 = vrot.slane %v5873, 5
      %v5876 = vsel %vm3425, %v5871, %v5875
      %v5877 = vshrl.u32 %v5792, 16
      %v5879 = vrot.slane %v5877, 4
      %v5880 = vor.u32 %v5879, %v5875
      %v5881 = vrot.slane %v5880, 4
      %v5883 = vshll.u32 %v5793, 16
      %v5885 = vrot.slane %v5883, 5
      %v5886 = vsel %vm3425, %v5881, %v5885
      %v5888 = vshrl.u32 %v5794, 16
      %v5890 = vrot.slane %v5888, 4
      %v5891 = vshll.u32 %v5794, 16
      %v5893 = vrot.slane %v5891, 5
      %v5894 = vor.u32 %v5890, %v5893
      %v5895 = vrot.slane %v5894, 4
      %v5897 = vshll.u32 %v5795, 16
      %v5899 = vrot.slane %v5897, 5
      %v5900 = vsel %vm3425, %v5895, %v5899
      %v5901 = vshrl.u32 %v5795, 16
      %v5903 = vrot.slane %v5901, 4
      %v5904 = vor.u32 %v5903, %v5899
      %v5905 = vrot.slane %v5904, 4
      %v5907 = vshll.u32 %v5796, 16
      %v5909 = vrot.slane %v5907, 5
      %v5910 = vsel %vm3425, %v5905, %v5909
      %v5912 = vshrl.u32 %v5797, 16
      %v5914 = vrot.slane %v5912, 4
      %v5915 = vshll.u32 %v5797, 16
      %v5917 = vrot.slane %v5915, 5
      %v5918 = vor.u32 %v5914, %v5917
      %v5919 = vrot.slane %v5918, 4
      %v5921 = vshll.u32 %v5798, 16
      %v5923 = vrot.slane %v5921, 5
      %v5924 = vsel %vm3425, %v5919, %v5923
      %v5925 = vshrl.u32 %v5798, 16
      %v5927 = vrot.slane %v5925, 4
      %v5928 = vor.u32 %v5927, %v5923
      %v5929 = vrot.slane %v5928, 4
      %v5931 = vshll.u32 %v5799, 16
      %v5933 = vrot.slane %v5931, 5
      %v5934 = vsel %vm3425, %v5929, %v5933
      %v5936 = vshrl.u32 %v5800, 16
      %v5938 = vrot.slane %v5936, 4
      %v5939 = vshll.u32 %v5800, 16
      %v5941 = vrot.slane %v5939, 5
      %v5942 = vor.u32 %v5938, %v5941
      %v5943 = vrot.slane %v5942, 4
      %v5945 = vshll.u32 %v5801, 16
      %v5947 = vrot.slane %v5945, 5
      %v5948 = vsel %vm3425, %v5943, %v5947
      %v5949 = vshrl.u32 %v5801, 16
      %v5951 = vrot.slane %v5949, 4
      %v5952 = vor.u32 %v5951, %v5947
      %v5953 = vrot.slane %v5952, 4
      %v5955 = vshll.u32 %v5802, 16
      %v5957 = vrot.slane %v5955, 5
      %v5958 = vsel %vm3425, %v5953, %v5957
      %v5960 = vshrl.u32 %v5803, 16
      %v5962 = vrot.slane %v5960, 4
      %v5963 = vshll.u32 %v5803, 16
      %v5965 = vrot.slane %v5963, 5
      %v5966 = vor.u32 %v5962, %v5965
      %v5967 = vrot.slane %v5966, 4
      %v5969 = vshll.u32 %v5804, 16
      %v5971 = vrot.slane %v5969, 5
      %v5972 = vsel %vm3425, %v5967, %v5971
      %v5973 = vshrl.u32 %v5804, 16
      %v5975 = vrot.slane %v5973, 4
      %v5976 = vor.u32 %v5975, %v5971
      %v5977 = vrot.slane %v5976, 4
      %v5979 = vshll.u32 %v5805, 16
      %v5981 = vrot.slane %v5979, 5
      %v5982 = vsel %vm3425, %v5977, %v5981
      %v5984 = vshrl.u32 %v5806, 16
      %v5986 = vrot.slane %v5984, 4
      %v5987 = vshll.u32 %v5806, 16
      %v5989 = vrot.slane %v5987, 5
      %v5990 = vor.u32 %v5986, %v5989
      %v5991 = vrot.slane %v5990, 4
      %v5993 = vshll.u32 %v5807, 16
      %v5995 = vrot.slane %v5993, 5
      %v5996 = vsel %vm3425, %v5991, %v5995
      %v5997 = vshrl.u32 %v5807, 16
      %v5999 = vrot.slane %v5997, 4
      %v6000 = vor.u32 %v5999, %v5995
      %v6001 = vrot.slane %v6000, 4
      %v6003 = vshll.u32 %v5808, 16
      %v6005 = vrot.slane %v6003, 5
      %v6006 = vsel %vm3425, %v6001, %v6005
      %v6008 = vshrl.u32 %v5809, 16
      %v6010 = vrot.slane %v6008, 4
      %v6011 = vshll.u32 %v5809, 16
      %v6013 = vrot.slane %v6011, 5
      %v6014 = vor.u32 %v6010, %v6013
      %v6015 = vrot.slane %v6014, 4
      %v6017 = vshll.u32 %v5810, 16
      %v6019 = vrot.slane %v6017, 5
      %v6020 = vsel %vm3425, %v6015, %v6019
      %v6021 = vshrl.u32 %v5810, 16
      %v6023 = vrot.slane %v6021, 4
      %v6024 = vor.u32 %v6023, %v6019
      %v6025 = vrot.slane %v6024, 4
      %v6027 = vshll.u32 %v5811, 16
      %v6029 = vrot.slane %v6027, 5
      %v6030 = vsel %vm3425, %v6025, %v6029
      %v6032 = vshrl.u32 %v5812, 16
      %v6034 = vrot.slane %v6032, 4
      %v6035 = vshll.u32 %v5812, 16
      %v6037 = vrot.slane %v6035, 5
      %v6038 = vor.u32 %v6034, %v6037
      %v6039 = vrot.slane %v6038, 4
      %v6041 = vshll.u32 %v5813, 16
      %v6043 = vrot.slane %v6041, 5
      %v6044 = vsel %vm3425, %v6039, %v6043
      %v6045 = vshrl.u32 %v5813, 16
      %v6047 = vrot.slane %v6045, 4
      %v6048 = vor.u32 %v6047, %v6043
      %v6049 = vrot.slane %v6048, 4
      %v6051 = vshll.u32 %v5814, 16
      %v6053 = vrot.slane %v6051, 5
      %v6054 = vsel %vm3425, %v6049, %v6053
      %s6055 = scalar_lea.vmem %s3, 224
      %v6056 = vld [vmem:[%s6055] sm:$0xf]
      %v6057 = vld [vmem:[%s6055 + $0x4] sm:$0xf]
      %v6058 = vld [vmem:[%s6055 + $0x8] sm:$0xf]
      %v6059 = vld [vmem:[%s6055 + $0xc] sm:$0xf]
      %v6060 = vld [vmem:[%s6055 + $0x10] sm:$0xf]
      %v6061 = vld [vmem:[%s6055 + $0x14] sm:$0xf]
      %v6062 = vld [vmem:[%s6055 + $0x18] sm:$0xf]
      %v6063 = vld [vmem:[%s6055 + $0x1c] sm:$0xf]
      %v6064 = vunpack.c.l.b16 %v5828
      %v6065 = vunpack.c.l.b16 %v5838
      %v6066 = vunpack.c.l.b16 %v5852
      %v6067 = vunpack.c.l.b16 %v5862
      %v6068 = vunpack.c.l.b16 %v5876
      %v6069 = vunpack.c.l.b16 %v5886
      %v6070 = vunpack.c.l.b16 %v5900
      %v6071 = vunpack.c.l.b16 %v5910
      %v6072 = vunpack.c.l.b16 %v5924
      %v6073 = vunpack.c.l.b16 %v5934
      %v6074 = vunpack.c.l.b16 %v5948
      %v6075 = vunpack.c.l.b16 %v5958
      %v6076 = vunpack.c.l.b16 %v5972
      %v6077 = vunpack.c.l.b16 %v5982
      %v6078 = vunpack.c.l.b16 %v5996
      %v6079 = vunpack.c.l.b16 %v6006
      %v6080 = vunpack.c.l.b16 %v6020
      %v6081 = vunpack.c.l.b16 %v6030
      %v6082 = vunpack.c.l.b16 %v6044
      %v6083 = vunpack.c.l.b16 %v6054
      %v6084 = vpack.c.b16 %v6065, %v6064
      %v6085 = vpack.c.b16 %v6067, %v6066
      %v6086 = vpack.c.b16 %v6069, %v6068
      %v6087 = vpack.c.b16 %v6071, %v6070
      %v6088 = vpack.c.b16 %v6073, %v6072
      %v6089 = vpack.c.b16 %v6075, %v6074
      %v6090 = vpack.c.b16 %v6077, %v6076
      %v6091 = vpack.c.b16 %v6079, %v6078
      %v6092 = vpack.c.b16 %v6081, %v6080
      %v6093 = vpack.c.b16 %v6083, %v6082
      %v6102 = vunpack.c.l.b16 %v6056
      %v6103 = vunpack.c.l.b16 %v6057
      %v6104 = vunpack.c.l.b16 %v6058
      %v6105 = vunpack.c.l.b16 %v6059
      %v6106 = vunpack.c.l.b16 %v6060
      %v6107 = vunpack.c.l.b16 %v6061
      %v6108 = vunpack.c.l.b16 %v6062
      %v6109 = vunpack.c.l.b16 %v6063
      %v6110 = vpack.c.b16 %v6103, %v6102
      %v6111 = vpack.c.b16 %v6105, %v6104
      %v6112 = vpack.c.b16 %v6107, %v6106
      %v6113 = vpack.c.b16 %v6109, %v6108
      %v6119 = vsel %vm3729, %v6084, 0
      %v6122 = vsel %vm3729, %v6085, 0
      %v6125 = vsel %vm3729, %v6086, 0
      %v6128 = vsel %vm3729, %v6087, 0
      %v6131 = vsel %vm3729, %v6088, 0
      %v6134 = vsel %vm3729, %v6089, 0
      %v6137 = vsel %vm3729, %v6090, 0
      %v6140 = vsel %vm3729, %v6091, 0
      %v6143 = vsel %vm3729, %v6092, 0
      %v6146 = vsel %vm3729, %v6093, 0
      %6148 = vmatprep.subr.bf16.mxu0 0
      %6149 = vmatpush1.bf16.msra.mxu0 %v6110
      %6150 = vmatprep.subr.bf16.mxu0 0
      %6151 = vmatpush1.bf16.msra.mxu0 %v6111
      %6152 = vmatprep.subr.bf16.mxu0 0
      %6153 = vmatpush1.bf16.msra.mxu0 %v6112
      %6154 = vmatprep.subr.bf16.mxu0 0
      %6155 = vmatpush1.bf16.msra.mxu0 %v6113
      %6156 = vmatprep.subr.bf16.mxu0 0
      %6157 = vmatpush1.bf16.msra.mxu0 0
      %6158 = vmatprep.subr.bf16.mxu0 0
      %6159 = vmatpush1.bf16.msra.mxu0 0
      %6160 = vmatprep.subr.bf16.mxu0 0
      %6161 = vmatpush1.bf16.msra.mxu0 0
      %6162 = vmatprep.subr.bf16.mxu0 0
      %6163 = vmatpush1.bf16.msra.mxu0 0
      %6164 = vmatprep.subr.bf16.mxu0 0
      %6165 = vmatpush1.bf16.msra.mxu0 0
      %6166 = vmatprep.subr.bf16.mxu0 0
      %6167 = vmatpush1.bf16.msra.mxu0 0
      %6168 = vmatprep.subr.bf16.mxu0 0
      %6169 = vmatpush1.bf16.msra.mxu0 0
      %6170 = vmatprep.subr.bf16.mxu0 0
      %6171 = vmatpush1.bf16.msra.mxu0 0
      %6172 = vmatprep.subr.bf16.mxu0 0
      %6173 = vmatpush1.bf16.msra.mxu0 0
      %6174 = vmatprep.subr.bf16.mxu0 0
      %6175 = vmatpush1.bf16.msra.mxu0 0
      %6176 = vmatprep.subr.bf16.mxu0 0
      %6177 = vmatpush1.bf16.msra.mxu0 0
      %6178 = vmatprep.subr.bf16.mxu0 0
      %6179 = vmatpush1.bf16.msra.mxu0 0
      %6180 = vmatprep.mubr.bf16.mxu0 0
      %6181 = vmatmul.mubr.bf16.gmra.mrb[0].mxu0 %v6119
      %v6182 = vpop.f32.mrb[0].mxu0
      %v6183 = vadd.f32 0.0, %v6182
      %v6184 = vpop.f32.mrb[0].mxu0
      %v6185 = vpop.f32.mrb[0].mxu0
      %v6186 = vadd.f32 0.0, %v6185
      %v6187 = vpop.f32.mrb[0].mxu0
      %6188 = vmatprep.mubr.bf16.mxu0 0
      %6189 = vmatmul.mubr.bf16.gmra.mrb[0].mxu0 %v6122
      %v6190 = vpop.f32.mrb[0].mxu0
      %v6191 = vadd.f32 0.0, %v6190
      %v6192 = vpop.f32.mrb[0].mxu0
      %v6193 = vpop.f32.mrb[0].mxu0
      %v6194 = vadd.f32 0.0, %v6193
      %v6195 = vpop.f32.mrb[0].mxu0
      %6196 = vmatprep.mubr.bf16.mxu0 0
      %6197 = vmatmul.mubr.bf16.gmra.mrb[0].mxu0 %v6125
      %v6198 = vpop.f32.mrb[0].mxu0
      %v6199 = vadd.f32 0.0, %v6198
      %v6200 = vpop.f32.mrb[0].mxu0
      %v6201 = vpop.f32.mrb[0].mxu0
      %v6202 = vadd.f32 0.0, %v6201
      %v6203 = vpop.f32.mrb[0].mxu0
      %6204 = vmatprep.mubr.bf16.mxu0 0
      %6205 = vmatmul.mubr.bf16.gmra.mrb[0].mxu0 %v6128
      %v6206 = vpop.f32.mrb[0].mxu0
      %v6207 = vadd.f32 0.0, %v6206
      %v6208 = vpop.f32.mrb[0].mxu0
      %v6209 = vpop.f32.mrb[0].mxu0
      %v6210 = vadd.f32 0.0, %v6209
      %v6211 = vpop.f32.mrb[0].mxu0
      %6212 = vmatprep.mubr.bf16.mxu0 0
      %6213 = vmatmul.mubr.bf16.gmra.mrb[0].mxu0 %v6131
      %v6214 = vpop.f32.mrb[0].mxu0
      %v6215 = vadd.f32 0.0, %v6214
      %v6216 = vpop.f32.mrb[0].mxu0
      %v6217 = vpop.f32.mrb[0].mxu0
      %v6218 = vadd.f32 0.0, %v6217
      %v6219 = vpop.f32.mrb[0].mxu0
      %6220 = vmatprep.mubr.bf16.mxu0 0
      %6221 = vmatmul.mubr.bf16.gmra.mrb[0].mxu0 %v6134
      %v6222 = vpop.f32.mrb[0].mxu0
      %v6223 = vadd.f32 0.0, %v6222
      %v6224 = vpop.f32.mrb[0].mxu0
      %v6225 = vpop.f32.mrb[0].mxu0
      %v6226 = vadd.f32 0.0, %v6225
      %v6227 = vpop.f32.mrb[0].mxu0
      %6228 = vmatprep.mubr.bf16.mxu0 0
      %6229 = vmatmul.mubr.bf16.gmra.mrb[0].mxu0 %v6137
      %v6230 = vpop.f32.mrb[0].mxu0
      %v6231 = vadd.f32 0.0, %v6230
      %v6232 = vpop.f32.mrb[0].mxu0
      %v6233 = vpop.f32.mrb[0].mxu0
      %v6234 = vadd.f32 0.0, %v6233
      %v6235 = vpop.f32.mrb[0].mxu0
      %6236 = vmatprep.mubr.bf16.mxu0 0
      %6237 = vmatmul.mubr.bf16.gmra.mrb[0].mxu0 %v6140
      %v6238 = vpop.f32.mrb[0].mxu0
      %v6239 = vadd.f32 0.0, %v6238
      %v6240 = vpop.f32.mrb[0].mxu0
      %v6241 = vpop.f32.mrb[0].mxu0
      %v6242 = vadd.f32 0.0, %v6241
      %v6243 = vpop.f32.mrb[0].mxu0
      %6244 = vmatprep.mubr.bf16.mxu0 0
      %6245 = vmatmul.mubr.bf16.gmra.mrb[0].mxu0 %v6143
      %v6246 = vpop.f32.mrb[0].mxu0
      %v6247 = vadd.f32 0.0, %v6246
      %v6248 = vpop.f32.mrb[0].mxu0
      %v6249 = vpop.f32.mrb[0].mxu0
      %v6250 = vadd.f32 0.0, %v6249
      %v6251 = vpop.f32.mrb[0].mxu0
      %6252 = vmatprep.mubr.bf16.mxu0 0
      %6253 = vmatmul.mubr.bf16.gmra.mrb[0].mxu0 %v6146
      %v6254 = vpop.f32.mrb[0].mxu0
      %v6255 = vadd.f32 0.0, %v6254
      %v6256 = vpop.f32.mrb[0].mxu0
      %v6257 = vpop.f32.mrb[0].mxu0
      %v6258 = vadd.f32 0.0, %v6257
      %v6259 = vpop.f32.mrb[0].mxu0
      %6260 = vdwg.mxu0
      %v6261 = vadd.f32 %v5765, %v6183
      %v6262 = vadd.f32 %v5766, %v6186
      %v6263 = vadd.f32 %v5767, %v6191
      %v6264 = vadd.f32 %v5768, %v6194
      %v6265 = vadd.f32 %v5769, %v6199
      %v6266 = vadd.f32 %v5770, %v6202
      %v6267 = vadd.f32 %v5771, %v6207
      %v6268 = vadd.f32 %v5772, %v6210
      %v6269 = vadd.f32 %v5773, %v6215
      %v6270 = vadd.f32 %v5774, %v6218
      %v6271 = vadd.f32 %v5775, %v6223
      %v6272 = vadd.f32 %v5776, %v6226
      %v6273 = vadd.f32 %v5777, %v6231
      %v6274 = vadd.f32 %v5778, %v6234
      %v6275 = vadd.f32 %v5779, %v6239
      %v6276 = vadd.f32 %v5780, %v6242
      %v6277 = vadd.f32 %v5781, %v6247
      %v6278 = vadd.f32 %v5782, %v6250
      %v6279 = vadd.f32 %v5783, %v6255
      %v6280 = vadd.f32 %v5784, %v6258
      %v6281 = vld [vmem:[%s5518] sm:$0xe]
      %v6282 = vld [vmem:[%s5518 + $0xc] sm:$0xe]
      %v6283 = vld [vmem:[%s5518 + $0x18] sm:$0xe]
      %v6284 = vld [vmem:[%s5518 + $0x24] sm:$0xe]
      %v6285 = vld [vmem:[%s5518 + $0x30] sm:$0xe]
      %v6286 = vld [vmem:[%s5518 + $0x3c] sm:$0xe]
      %v6287 = vld [vmem:[%s5518 + $0x48] sm:$0xe]
      %v6288 = vld [vmem:[%s5518 + $0x54] sm:$0xe]
      %v6289 = vld [vmem:[%s5518 + $0x60] sm:$0xe]
      %v6290 = vld [vmem:[%s5518 + $0x6c] sm:$0xe]
      %v6321 = vrot.slane %v6281, 5
      %v6322 = vrot.slane %v6321, 4
      %v6323 = vrot.slane %v5786, 5
      %v6324 = vsel %vm4122, %v6322, %v6323
      %v6325 = vrot.slane %v6323, 4
      %v6326 = vrot.slane %v5787, 5
      %v6327 = vsel %vm4122, %v6325, %v6326
      %v6328 = vrot.slane %v6282, 5
      %v6329 = vrot.slane %v6328, 4
      %v6330 = vrot.slane %v5789, 5
      %v6331 = vsel %vm4122, %v6329, %v6330
      %v6332 = vrot.slane %v6330, 4
      %v6333 = vrot.slane %v5790, 5
      %v6334 = vsel %vm4122, %v6332, %v6333
      %v6335 = vrot.slane %v6283, 5
      %v6336 = vrot.slane %v6335, 4
      %v6337 = vrot.slane %v5792, 5
      %v6338 = vsel %vm4122, %v6336, %v6337
      %v6339 = vrot.slane %v6337, 4
      %v6340 = vrot.slane %v5793, 5
      %v6341 = vsel %vm4122, %v6339, %v6340
      %v6342 = vrot.slane %v6284, 5
      %v6343 = vrot.slane %v6342, 4
      %v6344 = vrot.slane %v5795, 5
      %v6345 = vsel %vm4122, %v6343, %v6344
      %v6346 = vrot.slane %v6344, 4
      %v6347 = vrot.slane %v5796, 5
      %v6348 = vsel %vm4122, %v6346, %v6347
      %v6349 = vrot.slane %v6285, 5
      %v6350 = vrot.slane %v6349, 4
      %v6351 = vrot.slane %v5798, 5
      %v6352 = vsel %vm4122, %v6350, %v6351
      %v6353 = vrot.slane %v6351, 4
      %v6354 = vrot.slane %v5799, 5
      %v6355 = vsel %vm4122, %v6353, %v6354
      %v6356 = vrot.slane %v6286, 5
      %v6357 = vrot.slane %v6356, 4
      %v6358 = vrot.slane %v5801, 5
      %v6359 = vsel %vm4122, %v6357, %v6358
      %v6360 = vrot.slane %v6358, 4
      %v6361 = vrot.slane %v5802, 5
      %v6362 = vsel %vm4122, %v6360, %v6361
      %v6363 = vrot.slane %v6287, 5
      %v6364 = vrot.slane %v6363, 4
      %v6365 = vrot.slane %v5804, 5
      %v6366 = vsel %vm4122, %v6364, %v6365
      %v6367 = vrot.slane %v6365, 4
      %v6368 = vrot.slane %v5805, 5
      %v6369 = vsel %vm4122, %v6367, %v6368
      %v6370 = vrot.slane %v6288, 5
      %v6371 = vrot.slane %v6370, 4
      %v6372 = vrot.slane %v5807, 5
      %v6373 = vsel %vm4122, %v6371, %v6372
      %v6374 = vrot.slane %v6372, 4
      %v6375 = vrot.slane %v5808, 5
      %v6376 = vsel %vm4122, %v6374, %v6375
      %v6377 = vrot.slane %v6289, 5
      %v6378 = vrot.slane %v6377, 4
      %v6379 = vrot.slane %v5810, 5
      %v6380 = vsel %vm4122, %v6378, %v6379
      %v6381 = vrot.slane %v6379, 4
      %v6382 = vrot.slane %v5811, 5
      %v6383 = vsel %vm4122, %v6381, %v6382
      %v6384 = vrot.slane %v6290, 5
      %v6385 = vrot.slane %v6384, 4
      %v6386 = vrot.slane %v5813, 5
      %v6387 = vsel %vm4122, %v6385, %v6386
      %v6388 = vrot.slane %v6386, 4
      %v6389 = vrot.slane %v5814, 5
      %v6390 = vsel %vm4122, %v6388, %v6389
      %s6391 = scalar_lea.vmem %s3, 256
      %v6392 = vld [vmem:[%s6391] sm:$0xf]
      %v6393 = vld [vmem:[%s6391 + $0x4] sm:$0xf]
      %v6394 = vld [vmem:[%s6391 + $0x8] sm:$0xf]
      %v6395 = vld [vmem:[%s6391 + $0xc] sm:$0xf]
      %v6396 = vld [vmem:[%s6391 + $0x10] sm:$0xf]
      %v6397 = vld [vmem:[%s6391 + $0x14] sm:$0xf]
      %v6398 = vld [vmem:[%s6391 + $0x18] sm:$0xf]
      %v6399 = vld [vmem:[%s6391 + $0x1c] sm:$0xf]
      %v6400 = vunpack.c.l.b16 %v6324
      %v6401 = vunpack.c.l.b16 %v6327
      %v6402 = vunpack.c.l.b16 %v6331
      %v6403 = vunpack.c.l.b16 %v6334
      %v6404 = vunpack.c.l.b16 %v6338
      %v6405 = vunpack.c.l.b16 %v6341
      %v6406 = vunpack.c.l.b16 %v6345
      %v6407 = vunpack.c.l.b16 %v6348
      %v6408 = vunpack.c.l.b16 %v6352
      %v6409 = vunpack.c.l.b16 %v6355
      %v6410 = vunpack.c.l.b16 %v6359
      %v6411 = vunpack.c.l.b16 %v6362
      %v6412 = vunpack.c.l.b16 %v6366
      %v6413 = vunpack.c.l.b16 %v6369
      %v6414 = vunpack.c.l.b16 %v6373
      %v6415 = vunpack.c.l.b16 %v6376
      %v6416 = vunpack.c.l.b16 %v6380
      %v6417 = vunpack.c.l.b16 %v6383
      %v6418 = vunpack.c.l.b16 %v6387
      %v6419 = vunpack.c.l.b16 %v6390
      %v6420 = vpack.c.b16 %v6401, %v6400
      %v6421 = vpack.c.b16 %v6403, %v6402
      %v6422 = vpack.c.b16 %v6405, %v6404
      %v6423 = vpack.c.b16 %v6407, %v6406
      %v6424 = vpack.c.b16 %v6409, %v6408
      %v6425 = vpack.c.b16 %v6411, %v6410
      %v6426 = vpack.c.b16 %v6413, %v6412
      %v6427 = vpack.c.b16 %v6415, %v6414
      %v6428 = vpack.c.b16 %v6417, %v6416
      %v6429 = vpack.c.b16 %v6419, %v6418
      %v6438 = vunpack.c.l.b16 %v6392
      %v6439 = vunpack.c.l.b16 %v6393
      %v6440 = vunpack.c.l.b16 %v6394
      %v6441 = vunpack.c.l.b16 %v6395
      %v6442 = vunpack.c.l.b16 %v6396
      %v6443 = vunpack.c.l.b16 %v6397
      %v6444 = vunpack.c.l.b16 %v6398
      %v6445 = vunpack.c.l.b16 %v6399
      %v6446 = vpack.c.b16 %v6439, %v6438
      %v6447 = vpack.c.b16 %v6441, %v6440
      %v6448 = vpack.c.b16 %v6443, %v6442
      %v6449 = vpack.c.b16 %v6445, %v6444
      %v6455 = vsel %vm3729, %v6420, 0
      %v6458 = vsel %vm3729, %v6421, 0
      %v6461 = vsel %vm3729, %v6422, 0
      %v6464 = vsel %vm3729, %v6423, 0
      %v6467 = vsel %vm3729, %v6424, 0
      %v6470 = vsel %vm3729, %v6425, 0
      %v6473 = vsel %vm3729, %v6426, 0
      %v6476 = vsel %vm3729, %v6427, 0
      %v6479 = vsel %vm3729, %v6428, 0
      %v6482 = vsel %vm3729, %v6429, 0
      %6484 = vmatprep.subr.bf16.mxu0 0
      %6485 = vmatpush1.bf16.msra.mxu0 %v6446
      %6486 = vmatprep.subr.bf16.mxu0 0
      %6487 = vmatpush1.bf16.msra.mxu0 %v6447
      %6488 = vmatprep.subr.bf16.mxu0 0
      %6489 = vmatpush1.bf16.msra.mxu0 %v6448
      %6490 = vmatprep.subr.bf16.mxu0 0
      %6491 = vmatpush1.bf16.msra.mxu0 %v6449
      %6492 = vmatprep.subr.bf16.mxu0 0
      %6493 = vmatpush1.bf16.msra.mxu0 0
      %6494 = vmatprep.subr.bf16.mxu0 0
      %6495 = vmatpush1.bf16.msra.mxu0 0
      %6496 = vmatprep.subr.bf16.mxu0 0
      %6497 = vmatpush1.bf16.msra.mxu0 0
      %6498 = vmatprep.subr.bf16.mxu0 0
      %6499 = vmatpush1.bf16.msra.mxu0 0
      %6500 = vmatprep.subr.bf16.mxu0 0
      %6501 = vmatpush1.bf16.msra.mxu0 0
      %6502 = vmatprep.subr.bf16.mxu0 0
      %6503 = vmatpush1.bf16.msra.mxu0 0
      %6504 = vmatprep.subr.bf16.mxu0 0
      %6505 = vmatpush1.bf16.msra.mxu0 0
      %6506 = vmatprep.subr.bf16.mxu0 0
      %6507 = vmatpush1.bf16.msra.mxu0 0
      %6508 = vmatprep.subr.bf16.mxu0 0
      %6509 = vmatpush1.bf16.msra.mxu0 0
      %6510 = vmatprep.subr.bf16.mxu0 0
      %6511 = vmatpush1.bf16.msra.mxu0 0
      %6512 = vmatprep.subr.bf16.mxu0 0
      %6513 = vmatpush1.bf16.msra.mxu0 0
      %6514 = vmatprep.subr.bf16.mxu0 0
      %6515 = vmatpush1.bf16.msra.mxu0 0
      %6516 = vmatprep.mubr.bf16.mxu0 0
      %6517 = vmatmul.mubr.bf16.gmra.mrb[0].mxu0 %v6455
      %v6518 = vpop.f32.mrb[0].mxu0
      %v6519 = vadd.f32 0.0, %v6518
      %v6520 = vpop.f32.mrb[0].mxu0
      %v6521 = vpop.f32.mrb[0].mxu0
      %v6522 = vadd.f32 0.0, %v6521
      %v6523 = vpop.f32.mrb[0].mxu0
      %6524 = vmatprep.mubr.bf16.mxu0 0
      %6525 = vmatmul.mubr.bf16.gmra.mrb[0].mxu0 %v6458
      %v6526 = vpop.f32.mrb[0].mxu0
      %v6527 = vadd.f32 0.0, %v6526
      %v6528 = vpop.f32.mrb[0].mxu0
      %v6529 = vpop.f32.mrb[0].mxu0
      %v6530 = vadd.f32 0.0, %v6529
      %v6531 = vpop.f32.mrb[0].mxu0
      %6532 = vmatprep.mubr.bf16.mxu0 0
      %6533 = vmatmul.mubr.bf16.gmra.mrb[0].mxu0 %v6461
      %v6534 = vpop.f32.mrb[0].mxu0
      %v6535 = vadd.f32 0.0, %v6534
      %v6536 = vpop.f32.mrb[0].mxu0
      %v6537 = vpop.f32.mrb[0].mxu0
      %v6538 = vadd.f32 0.0, %v6537
      %v6539 = vpop.f32.mrb[0].mxu0
      %6540 = vmatprep.mubr.bf16.mxu0 0
      %6541 = vmatmul.mubr.bf16.gmra.mrb[0].mxu0 %v6464
      %v6542 = vpop.f32.mrb[0].mxu0
      %v6543 = vadd.f32 0.0, %v6542
      %v6544 = vpop.f32.mrb[0].mxu0
      %v6545 = vpop.f32.mrb[0].mxu0
      %v6546 = vadd.f32 0.0, %v6545
      %v6547 = vpop.f32.mrb[0].mxu0
      %6548 = vmatprep.mubr.bf16.mxu0 0
      %6549 = vmatmul.mubr.bf16.gmra.mrb[0].mxu0 %v6467
      %v6550 = vpop.f32.mrb[0].mxu0
      %v6551 = vadd.f32 0.0, %v6550
      %v6552 = vpop.f32.mrb[0].mxu0
      %v6553 = vpop.f32.mrb[0].mxu0
      %v6554 = vadd.f32 0.0, %v6553
      %v6555 = vpop.f32.mrb[0].mxu0
      %6556 = vmatprep.mubr.bf16.mxu0 0
      %6557 = vmatmul.mubr.bf16.gmra.mrb[0].mxu0 %v6470
      %v6558 = vpop.f32.mrb[0].mxu0
      %v6559 = vadd.f32 0.0, %v6558
      %v6560 = vpop.f32.mrb[0].mxu0
      %v6561 = vpop.f32.mrb[0].mxu0
      %v6562 = vadd.f32 0.0, %v6561
      %v6563 = vpop.f32.mrb[0].mxu0
      %6564 = vmatprep.mubr.bf16.mxu0 0
      %6565 = vmatmul.mubr.bf16.gmra.mrb[0].mxu0 %v6473
      %v6566 = vpop.f32.mrb[0].mxu0
      %v6567 = vadd.f32 0.0, %v6566
      %v6568 = vpop.f32.mrb[0].mxu0
      %v6569 = vpop.f32.mrb[0].mxu0
      %v6570 = vadd.f32 0.0, %v6569
      %v6571 = vpop.f32.mrb[0].mxu0
      %6572 = vmatprep.mubr.bf16.mxu0 0
      %6573 = vmatmul.mubr.bf16.gmra.mrb[0].mxu0 %v6476
      %v6574 = vpop.f32.mrb[0].mxu0
      %v6575 = vadd.f32 0.0, %v6574
      %v6576 = vpop.f32.mrb[0].mxu0
      %v6577 = vpop.f32.mrb[0].mxu0
      %v6578 = vadd.f32 0.0, %v6577
      %v6579 = vpop.f32.mrb[0].mxu0
      %6580 = vmatprep.mubr.bf16.mxu0 0
      %6581 = vmatmul.mubr.bf16.gmra.mrb[0].mxu0 %v6479
      %v6582 = vpop.f32.mrb[0].mxu0
      %v6583 = vadd.f32 0.0, %v6582
      %v6584 = vpop.f32.mrb[0].mxu0
      %v6585 = vpop.f32.mrb[0].mxu0
      %v6586 = vadd.f32 0.0, %v6585
      %v6587 = vpop.f32.mrb[0].mxu0
      %6588 = vmatprep.mubr.bf16.mxu0 0
      %6589 = vmatmul.mubr.bf16.gmra.mrb[0].mxu0 %v6482
      %v6590 = vpop.f32.mrb[0].mxu0
      %v6591 = vadd.f32 0.0, %v6590
      %v6592 = vpop.f32.mrb[0].mxu0
      %v6593 = vpop.f32.mrb[0].mxu0
      %v6594 = vadd.f32 0.0, %v6593
      %v6595 = vpop.f32.mrb[0].mxu0
      %6596 = vdwg.mxu0
      %v6597 = vadd.f32 %v6261, %v6519
      %v6598 = vadd.f32 %v6262, %v6522
      %v6599 = vadd.f32 %v6263, %v6527
      %v6600 = vadd.f32 %v6264, %v6530
      %v6601 = vadd.f32 %v6265, %v6535
      %v6602 = vadd.f32 %v6266, %v6538
      %v6603 = vadd.f32 %v6267, %v6543
      %v6604 = vadd.f32 %v6268, %v6546
      %v6605 = vadd.f32 %v6269, %v6551
      %v6606 = vadd.f32 %v6270, %v6554
      %v6607 = vadd.f32 %v6271, %v6559
      %v6608 = vadd.f32 %v6272, %v6562
      %v6609 = vadd.f32 %v6273, %v6567
      %v6610 = vadd.f32 %v6274, %v6570
      %v6611 = vadd.f32 %v6275, %v6575
      %v6612 = vadd.f32 %v6276, %v6578
      %v6613 = vadd.f32 %v6277, %v6583
      %v6614 = vadd.f32 %v6278, %v6586
      %v6615 = vadd.f32 %v6279, %v6591
      %v6616 = vadd.f32 %v6280, %v6594
      %v6617 = vld [vmem:[%s4] sm:$0x1]
      %v6619 = vlaneseq
      %v6620 = vshrl.u32 %v6619, 7
      %v6621 = vsub.s32 0, %v6620
      %v6622 = vrot.slane %v6617, %v6621
      %v6624 = vadd.f32 %v6597, %v6622
      %v6625 = vadd.f32 %v6598, %v6622
      %v6626 = vadd.f32 %v6599, %v6622
      %v6627 = vadd.f32 %v6600, %v6622
      %v6628 = vadd.f32 %v6601, %v6622
      %v6629 = vadd.f32 %v6602, %v6622
      %v6630 = vadd.f32 %v6603, %v6622
      %v6631 = vadd.f32 %v6604, %v6622
      %v6632 = vadd.f32 %v6605, %v6622
      %v6633 = vadd.f32 %v6606, %v6622
      %v6634 = vadd.f32 %v6607, %v6622
      %v6635 = vadd.f32 %v6608, %v6622
      %v6636 = vadd.f32 %v6609, %v6622
      %v6637 = vadd.f32 %v6610, %v6622
      %v6638 = vadd.f32 %v6611, %v6622
      %v6639 = vadd.f32 %v6612, %v6622
      %v6640 = vadd.f32 %v6613, %v6622
      %v6641 = vadd.f32 %v6614, %v6622
      %v6642 = vadd.f32 %v6615, %v6622
      %v6643 = vadd.f32 %v6616, %v6622
      %v6644 = vtanh.pop %v6624
      %v6645 = vtanh.pop %v6625
      %v6646 = vtanh.pop %v6626
      %v6647 = vtanh.pop %v6627
      %v6648 = vtanh.pop %v6628
      %v6649 = vtanh.pop %v6629
      %v6650 = vtanh.pop %v6630
      %v6651 = vtanh.pop %v6631
      %v6652 = vtanh.pop %v6632
      %v6653 = vtanh.pop %v6633
      %v6654 = vtanh.pop %v6634
      %v6655 = vtanh.pop %v6635
      %v6656 = vtanh.pop %v6636
      %v6657 = vtanh.pop %v6637
      %v6658 = vtanh.pop %v6638
      %v6659 = vtanh.pop %v6639
      %v6660 = vtanh.pop %v6640
      %v6661 = vtanh.pop %v6641
      %v6662 = vtanh.pop %v6642
      %v6663 = vtanh.pop %v6643
      %s6664 = ssub.s32 %s319, 1
      %v6665 = vstv %s6664
      %v6666 = vadd.s32 %v6665, 1
      %v6667 = vadd.s32 %v6665, 2
      %v6668 = vadd.s32 %v6665, 3
      %v6669 = vadd.s32 %v6665, 4
      %v6670 = vadd.s32 %v6665, 5
      %v6671 = vadd.s32 %v6665, 6
      %v6672 = vadd.s32 %v6665, 7
      %v6673 = vadd.s32 %v6665, 8
      %v6674 = vadd.s32 %v6665, 9
      %vm6675 = vcmp.ge.s32.totalorder %v6665, 0
      %vm6676 = vcmp.ge.s32.totalorder %v6666, 0
      %vm6677 = vcmp.ge.s32.totalorder %v6667, 0
      %vm6678 = vcmp.ge.s32.totalorder %v6668, 0
      %vm6679 = vcmp.ge.s32.totalorder %v6669, 0
      %vm6680 = vcmp.ge.s32.totalorder %v6670, 0
      %vm6681 = vcmp.ge.s32.totalorder %v6671, 0
      %vm6682 = vcmp.ge.s32.totalorder %v6672, 0
      %vm6683 = vcmp.ge.s32.totalorder %v6673, 0
      %vm6684 = vcmp.ge.s32.totalorder %v6674, 0
      %vm6685 = vcmp.lt.s32.totalorder %v6665, 16
      %vm6686 = vcmp.lt.s32.totalorder %v6666, 16
      %vm6687 = vcmp.lt.s32.totalorder %v6667, 16
      %vm6688 = vcmp.lt.s32.totalorder %v6668, 16
      %vm6689 = vcmp.lt.s32.totalorder %v6669, 16
      %vm6690 = vcmp.lt.s32.totalorder %v6670, 16
      %vm6691 = vcmp.lt.s32.totalorder %v6671, 16
      %vm6692 = vcmp.lt.s32.totalorder %v6672, 16
      %vm6693 = vcmp.lt.s32.totalorder %v6673, 16
      %vm6694 = vcmp.lt.s32.totalorder %v6674, 16
      %vm6695 = vmand %vm6675, %vm6685
      %vm6696 = vmand %vm6676, %vm6686
      %vm6697 = vmand %vm6677, %vm6687
      %vm6698 = vmand %vm6678, %vm6688
      %vm6699 = vmand %vm6679, %vm6689
      %vm6700 = vmand %vm6680, %vm6690
      %vm6701 = vmand %vm6681, %vm6691
      %vm6702 = vmand %vm6682, %vm6692
      %vm6703 = vmand %vm6683, %vm6693
      %vm6704 = vmand %vm6684, %vm6694
      %v6705 = vsel %vm6695, %v6644, 0.0
      %v6706 = vsel %vm6695, %v6645, 0.0
      %v6707 = vsel %vm6696, %v6646, 0.0
      %v6708 = vsel %vm6696, %v6647, 0.0
      %v6709 = vsel %vm6697, %v6648, 0.0
      %v6710 = vsel %vm6697, %v6649, 0.0
      %v6711 = vsel %vm6698, %v6650, 0.0
      %v6712 = vsel %vm6698, %v6651, 0.0
      %v6713 = vsel %vm6699, %v6652, 0.0
      %v6714 = vsel %vm6699, %v6653, 0.0
      %v6715 = vsel %vm6700, %v6654, 0.0
      %v6716 = vsel %vm6700, %v6655, 0.0
      %v6717 = vsel %vm6701, %v6656, 0.0
      %v6718 = vsel %vm6701, %v6657, 0.0
      %v6719 = vsel %vm6702, %v6658, 0.0
      %v6720 = vsel %vm6702, %v6659, 0.0
      %v6721 = vsel %vm6703, %v6660, 0.0
      %v6722 = vsel %vm6703, %v6661, 0.0
      %v6723 = vsel %vm6704, %v6662, 0.0
      %v6724 = vsel %vm6704, %v6663, 0.0
      %v6725 = vpack.c.bf16 %v6706, %v6705
      %v6726 = vpack.c.bf16 %v6708, %v6707
      %v6727 = vpack.c.bf16 %v6710, %v6709
      %v6728 = vpack.c.bf16 %v6712, %v6711
      %v6729 = vpack.c.bf16 %v6714, %v6713
      %v6730 = vpack.c.bf16 %v6716, %v6715
      %v6731 = vpack.c.bf16 %v6718, %v6717
      %v6732 = vpack.c.bf16 %v6720, %v6719
      %v6733 = vpack.c.bf16 %v6722, %v6721
      %v6734 = vpack.c.bf16 %v6724, %v6723
      %v6745 = vunpack.c.l.b16 %v6725
      %v6746 = vunpack.c.h.b16 %v6725
      %v6747 = vunpack.c.l.b16 %v6726
      %v6748 = vunpack.c.h.b16 %v6726
      %v6749 = vunpack.c.l.b16 %v6727
      %v6750 = vunpack.c.h.b16 %v6727
      %v6751 = vunpack.c.l.b16 %v6728
      %v6752 = vunpack.c.h.b16 %v6728
      %v6753 = vunpack.c.l.b16 %v6729
      %v6754 = vunpack.c.h.b16 %v6729
      %v6755 = vunpack.c.l.b16 %v6730
      %v6756 = vunpack.c.h.b16 %v6730
      %v6757 = vunpack.c.l.b16 %v6731
      %v6758 = vunpack.c.h.b16 %v6731
      %v6759 = vunpack.c.l.b16 %v6732
      %v6760 = vunpack.c.h.b16 %v6732
      %v6761 = vunpack.c.l.b16 %v6733
      %v6762 = vunpack.c.h.b16 %v6733
      %v6763 = vunpack.c.l.b16 %v6734
      %v6764 = vunpack.c.h.b16 %v6734
      %v6765 = vpack.c.b16 %v6745, %v6745
      %v6766 = vpack.c.b16 %v6746, %v6746
      %v6767 = vpack.c.b16 %v6747, %v6747
      %v6768 = vpack.c.b16 %v6748, %v6748
      %v6769 = vpack.c.b16 %v6749, %v6749
      %v6770 = vpack.c.b16 %v6750, %v6750
      %v6771 = vpack.c.b16 %v6751, %v6751
      %v6772 = vpack.c.b16 %v6752, %v6752
      %v6773 = vpack.c.b16 %v6753, %v6753
      %v6774 = vpack.c.b16 %v6754, %v6754
      %v6775 = vpack.c.b16 %v6755, %v6755
      %v6776 = vpack.c.b16 %v6756, %v6756
      %v6777 = vpack.c.b16 %v6757, %v6757
      %v6778 = vpack.c.b16 %v6758, %v6758
      %v6779 = vpack.c.b16 %v6759, %v6759
      %v6780 = vpack.c.b16 %v6760, %v6760
      %v6781 = vpack.c.b16 %v6761, %v6761
      %v6782 = vpack.c.b16 %v6762, %v6762
      %v6783 = vpack.c.b16 %v6763, %v6763
      %v6784 = vpack.c.b16 %v6764, %v6764
      %v6786 = vshrl.u32 %v6765, 16
      %v6788 = vrot.slane %v6786, 7
      %v6789 = vshll.u32 %v6765, 16
      %v6791 = vor.u32 %v6788, %v6789
      %v6792 = vrot.slane %v6788, 4
      %v6794 = vshrl.u32 %v6766, 16
      %v6796 = vrot.slane %v6794, 7
      %v6797 = vshll.u32 %v6766, 16
      %v6799 = vor.u32 %v6796, %v6797
      %v6800 = vsel %vm2981, %v6792, %v6799
      %v6801 = vrot.slane %v6796, 4
      %v6803 = vshrl.u32 %v6767, 16
      %v6805 = vrot.slane %v6803, 7
      %v6806 = vshll.u32 %v6767, 16
      %v6808 = vor.u32 %v6805, %v6806
      %v6809 = vrot.slane %v6805, 4
      %v6811 = vshrl.u32 %v6768, 16
      %v6813 = vrot.slane %v6811, 7
      %v6814 = vshll.u32 %v6768, 16
      %v6816 = vor.u32 %v6813, %v6814
      %v6817 = vsel %vm2981, %v6809, %v6816
      %v6818 = vrot.slane %v6813, 4
      %v6820 = vshrl.u32 %v6769, 16
      %v6822 = vrot.slane %v6820, 7
      %v6823 = vshll.u32 %v6769, 16
      %v6825 = vor.u32 %v6822, %v6823
      %v6826 = vrot.slane %v6822, 4
      %v6828 = vshrl.u32 %v6770, 16
      %v6830 = vrot.slane %v6828, 7
      %v6831 = vshll.u32 %v6770, 16
      %v6833 = vor.u32 %v6830, %v6831
      %v6834 = vsel %vm2981, %v6826, %v6833
      %v6835 = vrot.slane %v6830, 4
      %v6837 = vshrl.u32 %v6771, 16
      %v6839 = vrot.slane %v6837, 7
      %v6840 = vshll.u32 %v6771, 16
      %v6842 = vor.u32 %v6839, %v6840
      %v6843 = vrot.slane %v6839, 4
      %v6845 = vshrl.u32 %v6772, 16
      %v6847 = vrot.slane %v6845, 7
      %v6848 = vshll.u32 %v6772, 16
      %v6850 = vor.u32 %v6847, %v6848
      %v6851 = vsel %vm2981, %v6843, %v6850
      %v6852 = vrot.slane %v6847, 4
      %v6854 = vshrl.u32 %v6773, 16
      %v6856 = vrot.slane %v6854, 7
      %v6857 = vshll.u32 %v6773, 16
      %v6859 = vor.u32 %v6856, %v6857
      %v6860 = vrot.slane %v6856, 4
      %v6862 = vshrl.u32 %v6774, 16
      %v6864 = vrot.slane %v6862, 7
      %v6865 = vshll.u32 %v6774, 16
      %v6867 = vor.u32 %v6864, %v6865
      %v6868 = vsel %vm2981, %v6860, %v6867
      %v6869 = vrot.slane %v6864, 4
      %v6871 = vshrl.u32 %v6775, 16
      %v6873 = vrot.slane %v6871, 7
      %v6874 = vshll.u32 %v6775, 16
      %v6876 = vor.u32 %v6873, %v6874
      %v6877 = vrot.slane %v6873, 4
      %v6879 = vshrl.u32 %v6776, 16
      %v6881 = vrot.slane %v6879, 7
      %v6882 = vshll.u32 %v6776, 16
      %v6884 = vor.u32 %v6881, %v6882
      %v6885 = vsel %vm2981, %v6877, %v6884
      %v6886 = vrot.slane %v6881, 4
      %v6888 = vshrl.u32 %v6777, 16
      %v6890 = vrot.slane %v6888, 7
      %v6891 = vshll.u32 %v6777, 16
      %v6893 = vor.u32 %v6890, %v6891
      %v6894 = vrot.slane %v6890, 4
      %v6896 = vshrl.u32 %v6778, 16
      %v6898 = vrot.slane %v6896, 7
      %v6899 = vshll.u32 %v6778, 16
      %v6901 = vor.u32 %v6898, %v6899
      %v6902 = vsel %vm2981, %v6894, %v6901
      %v6903 = vrot.slane %v6898, 4
      %v6905 = vshrl.u32 %v6779, 16
      %v6907 = vrot.slane %v6905, 7
      %v6908 = vshll.u32 %v6779, 16
      %v6910 = vor.u32 %v6907, %v6908
      %v6911 = vrot.slane %v6907, 4
      %v6913 = vshrl.u32 %v6780, 16
      %v6915 = vrot.slane %v6913, 7
      %v6916 = vshll.u32 %v6780, 16
      %v6918 = vor.u32 %v6915, %v6916
      %v6919 = vsel %vm2981, %v6911, %v6918
      %v6920 = vrot.slane %v6915, 4
      %v6922 = vshrl.u32 %v6781, 16
      %v6924 = vrot.slane %v6922, 7
      %v6925 = vshll.u32 %v6781, 16
      %v6927 = vor.u32 %v6924, %v6925
      %v6928 = vrot.slane %v6924, 4
      %v6930 = vshrl.u32 %v6782, 16
      %v6932 = vrot.slane %v6930, 7
      %v6933 = vshll.u32 %v6782, 16
      %v6935 = vor.u32 %v6932, %v6933
      %v6936 = vsel %vm2981, %v6928, %v6935
      %v6937 = vrot.slane %v6932, 4
      %v6939 = vshrl.u32 %v6783, 16
      %v6941 = vrot.slane %v6939, 7
      %v6942 = vshll.u32 %v6783, 16
      %v6944 = vor.u32 %v6941, %v6942
      %v6945 = vrot.slane %v6941, 4
      %v6947 = vshrl.u32 %v6784, 16
      %v6949 = vrot.slane %v6947, 7
      %v6950 = vshll.u32 %v6784, 16
      %v6952 = vor.u32 %v6949, %v6950
      %v6953 = vsel %vm2981, %v6945, %v6952
      %v6954 = vrot.slane %v6949, 4
      %vm6985 = vcmask 257024
      %vm6986 = vmand %vm6985, %vm3223
      %v6987 = vld [vmem:[#allocation3] sm:$0xf]
      %v6988 = vsel %vm6986, %v6791, %v6987
      %6989 = vst [vmem:[#allocation3] sm:$0xf] %v6988
      %vm6990 = vcmask 257024
      %6991 = vst.msk [vmem:[#allocation3 + $0x4] sm:$0xf] %vm6990, %v6800
      %vm6992 = vcmask 253952
      %vm6993 = vmand %vm6992, %vm2979
      %v6994 = vld [vmem:[#allocation3 + $0x8] sm:$0x1]
      %v6995 = vsel %vm6993, %v6801, %v6994
      %6996 = vst [vmem:[#allocation3 + $0x8] sm:$0x1] %v6995
      %v6997 = vld [vmem:[#allocation3 + $0xc] sm:$0xf]
      %v6998 = vsel %vm6986, %v6808, %v6997
      %6999 = vst [vmem:[#allocation3 + $0xc] sm:$0xf] %v6998
      %7000 = vst.msk [vmem:[#allocation3 + $0x10] sm:$0xf] %vm6990, %v6817
      %v7001 = vld [vmem:[#allocation3 + $0x14] sm:$0x1]
      %v7002 = vsel %vm6993, %v6818, %v7001
      %7003 = vst [vmem:[#allocation3 + $0x14] sm:$0x1] %v7002
      %v7004 = vld [vmem:[#allocation3 + $0x18] sm:$0xf]
      %v7005 = vsel %vm6986, %v6825, %v7004
      %7006 = vst [vmem:[#allocation3 + $0x18] sm:$0xf] %v7005
      %7007 = vst.msk [vmem:[#allocation3 + $0x1c] sm:$0xf] %vm6990, %v6834
      %v7008 = vld [vmem:[#allocation3 + $0x20] sm:$0x1]
      %v7009 = vsel %vm6993, %v6835, %v7008
      %7010 = vst [vmem:[#allocation3 + $0x20] sm:$0x1] %v7009
      %v7011 = vld [vmem:[#allocation3 + $0x24] sm:$0xf]
      %v7012 = vsel %vm6986, %v6842, %v7011
      %7013 = vst [vmem:[#allocation3 + $0x24] sm:$0xf] %v7012
      %7014 = vst.msk [vmem:[#allocation3 + $0x28] sm:$0xf] %vm6990, %v6851
      %v7015 = vld [vmem:[#allocation3 + $0x2c] sm:$0x1]
      %v7016 = vsel %vm6993, %v6852, %v7015
      %7017 = vst [vmem:[#allocation3 + $0x2c] sm:$0x1] %v7016
      %v7018 = vld [vmem:[#allocation3 + $0x30] sm:$0xf]
      %v7019 = vsel %vm6986, %v6859, %v7018
      %7020 = vst [vmem:[#allocation3 + $0x30] sm:$0xf] %v7019
      %7021 = vst.msk [vmem:[#allocation3 + $0x34] sm:$0xf] %vm6990, %v6868
      %v7022 = vld [vmem:[#allocation3 + $0x38] sm:$0x1]
      %v7023 = vsel %vm6993, %v6869, %v7022
      %7024 = vst [vmem:[#allocation3 + $0x38] sm:$0x1] %v7023
      %v7025 = vld [vmem:[#allocation3 + $0x3c] sm:$0xf]
      %v7026 = vsel %vm6986, %v6876, %v7025
      %7027 = vst [vmem:[#allocation3 + $0x3c] sm:$0xf] %v7026
      %7028 = vst.msk [vmem:[#allocation3 + $0x40] sm:$0xf] %vm6990, %v6885
      %v7029 = vld [vmem:[#allocation3 + $0x44] sm:$0x1]
      %v7030 = vsel %vm6993, %v6886, %v7029
      %7031 = vst [vmem:[#allocation3 + $0x44] sm:$0x1] %v7030
      %v7032 = vld [vmem:[#allocation3 + $0x48] sm:$0xf]
      %v7033 = vsel %vm6986, %v6893, %v7032
      %7034 = vst [vmem:[#allocation3 + $0x48] sm:$0xf] %v7033
      %7035 = vst.msk [vmem:[#allocation3 + $0x4c] sm:$0xf] %vm6990, %v6902
      %v7036 = vld [vmem:[#allocation3 + $0x50] sm:$0x1]
      %v7037 = vsel %vm6993, %v6903, %v7036
      %7038 = vst [vmem:[#allocation3 + $0x50] sm:$0x1] %v7037
      %v7039 = vld [vmem:[#allocation3 + $0x54] sm:$0xf]
      %v7040 = vsel %vm6986, %v6910, %v7039
      %7041 = vst [vmem:[#allocation3 + $0x54] sm:$0xf] %v7040
      %7042 = vst.msk [vmem:[#allocation3 + $0x58] sm:$0xf] %vm6990, %v6919
      %v7043 = vld [vmem:[#allocation3 + $0x5c] sm:$0x1]
      %v7044 = vsel %vm6993, %v6920, %v7043
      %7045 = vst [vmem:[#allocation3 + $0x5c] sm:$0x1] %v7044
      %v7046 = vld [vmem:[#allocation3 + $0x60] sm:$0xf]
      %v7047 = vsel %vm6986, %v6927, %v7046
      %7048 = vst [vmem:[#allocation3 + $0x60] sm:$0xf] %v7047
      %7049 = vst.msk [vmem:[#allocation3 + $0x64] sm:$0xf] %vm6990, %v6936
      %v7050 = vld [vmem:[#allocation3 + $0x68] sm:$0x1]
      %v7051 = vsel %vm6993, %v6937, %v7050
      %7052 = vst [vmem:[#allocation3 + $0x68] sm:$0x1] %v7051
      %v7053 = vld [vmem:[#allocation3 + $0x6c] sm:$0xf]
      %v7054 = vsel %vm6986, %v6944, %v7053
      %7055 = vst [vmem:[#allocation3 + $0x6c] sm:$0xf] %v7054
      %7056 = vst.msk [vmem:[#allocation3 + $0x70] sm:$0xf] %vm6990, %v6953
      %v7057 = vld [vmem:[#allocation3 + $0x74] sm:$0x1]
      %v7058 = vsel %vm6993, %v6954, %v7057
      %7059 = vst [vmem:[#allocation3 + $0x74] sm:$0x1] %v7058
      %v7060 = vld [vmem:[#allocation3] sm:$0x1]
      %v7061 = vsel %vm6993, 0, %v7060
      %7062 = vst [vmem:[#allocation3] sm:$0x1] %v7061
      %v7063 = vld [vmem:[#allocation3 + $0xc] sm:$0x1]
      %v7064 = vsel %vm6993, 0, %v7063
      %7065 = vst [vmem:[#allocation3 + $0xc] sm:$0x1] %v7064
      %v7066 = vld [vmem:[#allocation3 + $0x18] sm:$0x1]
      %v7067 = vsel %vm6993, 0, %v7066
      %7068 = vst [vmem:[#allocation3 + $0x18] sm:$0x1] %v7067
      %v7069 = vld [vmem:[#allocation3 + $0x24] sm:$0x1]
      %v7070 = vsel %vm6993, 0, %v7069
      %7071 = vst [vmem:[#allocation3 + $0x24] sm:$0x1] %v7070
      %v7072 = vld [vmem:[#allocation3 + $0x30] sm:$0x1]
      %v7073 = vsel %vm6993, 0, %v7072
      %7074 = vst [vmem:[#allocation3 + $0x30] sm:$0x1] %v7073
      %v7075 = vld [vmem:[#allocation3 + $0x3c] sm:$0x1]
      %v7076 = vsel %vm6993, 0, %v7075
      %7077 = vst [vmem:[#allocation3 + $0x3c] sm:$0x1] %v7076
      %v7078 = vld [vmem:[#allocation3 + $0x48] sm:$0x1]
      %v7079 = vsel %vm6993, 0, %v7078
      %7080 = vst [vmem:[#allocation3 + $0x48] sm:$0x1] %v7079
      %v7081 = vld [vmem:[#allocation3 + $0x54] sm:$0x1]
      %v7082 = vsel %vm6993, 0, %v7081
      %7083 = vst [vmem:[#allocation3 + $0x54] sm:$0x1] %v7082
      %v7084 = vld [vmem:[#allocation3 + $0x60] sm:$0x1]
      %v7085 = vsel %vm6993, 0, %v7084
      %7086 = vst [vmem:[#allocation3 + $0x60] sm:$0x1] %v7085
      %v7087 = vld [vmem:[#allocation3 + $0x6c] sm:$0x1]
      %v7088 = vsel %vm6993, 0, %v7087
      %7089 = vst [vmem:[#allocation3 + $0x6c] sm:$0x1] %v7088
      %vm7090 = vmand %vm6992, %vm3223
      %v7091 = vld [vmem:[#allocation3 + $0x8] sm:$0x1]
      %v7092 = vsel %vm7090, 0, %v7091
      %7093 = vst [vmem:[#allocation3 + $0x8] sm:$0x1] %v7092
      %v7094 = vld [vmem:[#allocation3 + $0x14] sm:$0x1]
      %v7095 = vsel %vm7090, 0, %v7094
      %7096 = vst [vmem:[#allocation3 + $0x14] sm:$0x1] %v7095
      %v7097 = vld [vmem:[#allocation3 + $0x20] sm:$0x1]
      %v7098 = vsel %vm7090, 0, %v7097
      %7099 = vst [vmem:[#allocation3 + $0x20] sm:$0x1] %v7098
      %v7100 = vld [vmem:[#allocation3 + $0x2c] sm:$0x1]
      %v7101 = vsel %vm7090, 0, %v7100
      %7102 = vst [vmem:[#allocation3 + $0x2c] sm:$0x1] %v7101
      %v7103 = vld [vmem:[#allocation3 + $0x38] sm:$0x1]
      %v7104 = vsel %vm7090, 0, %v7103
      %7105 = vst [vmem:[#allocation3 + $0x38] sm:$0x1] %v7104
      %v7106 = vld [vmem:[#allocation3 + $0x44] sm:$0x1]
      %v7107 = vsel %vm7090, 0, %v7106
      %7108 = vst [vmem:[#allocation3 + $0x44] sm:$0x1] %v7107
      %v7109 = vld [vmem:[#allocation3 + $0x50] sm:$0x1]
      %v7110 = vsel %vm7090, 0, %v7109
      %7111 = vst [vmem:[#allocation3 + $0x50] sm:$0x1] %v7110
      %v7112 = vld [vmem:[#allocation3 + $0x5c] sm:$0x1]
      %v7113 = vsel %vm7090, 0, %v7112
      %7114 = vst [vmem:[#allocation3 + $0x5c] sm:$0x1] %v7113
      %v7115 = vld [vmem:[#allocation3 + $0x68] sm:$0x1]
      %v7116 = vsel %vm7090, 0, %v7115
      %7117 = vst [vmem:[#allocation3 + $0x68] sm:$0x1] %v7116
      %v7118 = vld [vmem:[#allocation3 + $0x74] sm:$0x1]
      %v7119 = vsel %vm7090, 0, %v7118
      %7120 = vst [vmem:[#allocation3 + $0x74] sm:$0x1] %v7119
      %v7121 = vld [vmem:[#allocation3] sm:$0xf]
      %v7122 = vld [vmem:[#allocation3 + $0x4] sm:$0xf]
      %v7123 = vld [vmem:[#allocation3 + $0xc] sm:$0xf]
      %v7124 = vld [vmem:[#allocation3 + $0x10] sm:$0xf]
      %v7125 = vld [vmem:[#allocation3 + $0x18] sm:$0xf]
      %v7126 = vld [vmem:[#allocation3 + $0x1c] sm:$0xf]
      %v7127 = vld [vmem:[#allocation3 + $0x24] sm:$0xf]
      %v7128 = vld [vmem:[#allocation3 + $0x28] sm:$0xf]
      %v7129 = vld [vmem:[#allocation3 + $0x30] sm:$0xf]
      %v7130 = vld [vmem:[#allocation3 + $0x34] sm:$0xf]
      %v7131 = vld [vmem:[#allocation3 + $0x3c] sm:$0xf]
      %v7132 = vld [vmem:[#allocation3 + $0x40] sm:$0xf]
      %v7133 = vld [vmem:[#allocation3 + $0x48] sm:$0xf]
      %v7134 = vld [vmem:[#allocation3 + $0x4c] sm:$0xf]
      %v7135 = vld [vmem:[#allocation3 + $0x54] sm:$0xf]
      %v7136 = vld [vmem:[#allocation3 + $0x58] sm:$0xf]
      %v7137 = vld [vmem:[%s5] sm:$0xf]
      %v7138 = vld [vmem:[%s5 + $0x4] sm:$0xf]
      %v7139 = vld [vmem:[%s5 + $0x8] sm:$0xf]
      %v7140 = vld [vmem:[%s5 + $0xc] sm:$0xf]
      %v7141 = vld [vmem:[#allocation3 + $0x8] sm:$0x1]
      %v7142 = vld [vmem:[#allocation3 + $0x14] sm:$0x1]
      %v7143 = vld [vmem:[#allocation3 + $0x20] sm:$0x1]
      %v7144 = vld [vmem:[#allocation3 + $0x2c] sm:$0x1]
      %v7145 = vld [vmem:[#allocation3 + $0x38] sm:$0x1]
      %v7146 = vld [vmem:[#allocation3 + $0x44] sm:$0x1]
      %v7147 = vld [vmem:[#allocation3 + $0x50] sm:$0x1]
      %v7148 = vld [vmem:[#allocation3 + $0x5c] sm:$0x1]
      %v7150 = vshrl.u32 %v7121, 16
      %v7152 = vrot.slane %v7150, 4
      %v7153 = vshll.u32 %v7121, 16
      %v7155 = vrot.slane %v7153, 5
      %v7156 = vor.u32 %v7152, %v7155
      %v7157 = vrot.slane %v7156, 4
      %v7159 = vshll.u32 %v7122, 16
      %v7161 = vrot.slane %v7159, 5
      %v7162 = vsel %vm3425, %v7157, %v7161
      %v7163 = vshrl.u32 %v7122, 16
      %v7165 = vrot.slane %v7163, 4
      %v7166 = vor.u32 %v7165, %v7161
      %v7167 = vrot.slane %v7166, 4
      %v7169 = vshll.u32 %v7141, 16
      %v7171 = vrot.slane %v7169, 5
      %v7172 = vsel %vm3425, %v7167, %v7171
      %v7174 = vshrl.u32 %v7123, 16
      %v7176 = vrot.slane %v7174, 4
      %v7177 = vshll.u32 %v7123, 16
      %v7179 = vrot.slane %v7177, 5
      %v7180 = vor.u32 %v7176, %v7179
      %v7181 = vrot.slane %v7180, 4
      %v7183 = vshll.u32 %v7124, 16
      %v7185 = vrot.slane %v7183, 5
      %v7186 = vsel %vm3425, %v7181, %v7185
      %v7187 = vshrl.u32 %v7124, 16
      %v7189 = vrot.slane %v7187, 4
      %v7190 = vor.u32 %v7189, %v7185
      %v7191 = vrot.slane %v7190, 4
      %v7193 = vshll.u32 %v7142, 16
      %v7195 = vrot.slane %v7193, 5
      %v7196 = vsel %vm3425, %v7191, %v7195
      %v7198 = vshrl.u32 %v7125, 16
      %v7200 = vrot.slane %v7198, 4
      %v7201 = vshll.u32 %v7125, 16
      %v7203 = vrot.slane %v7201, 5
      %v7204 = vor.u32 %v7200, %v7203
      %v7205 = vrot.slane %v7204, 4
      %v7207 = vshll.u32 %v7126, 16
      %v7209 = vrot.slane %v7207, 5
      %v7210 = vsel %vm3425, %v7205, %v7209
      %v7211 = vshrl.u32 %v7126, 16
      %v7213 = vrot.slane %v7211, 4
      %v7214 = vor.u32 %v7213, %v7209
      %v7215 = vrot.slane %v7214, 4
      %v7217 = vshll.u32 %v7143, 16
      %v7219 = vrot.slane %v7217, 5
      %v7220 = vsel %vm3425, %v7215, %v7219
      %v7222 = vshrl.u32 %v7127, 16
      %v7224 = vrot.slane %v7222, 4
      %v7225 = vshll.u32 %v7127, 16
      %v7227 = vrot.slane %v7225, 5
      %v7228 = vor.u32 %v7224, %v7227
      %v7229 = vrot.slane %v7228, 4
      %v7231 = vshll.u32 %v7128, 16
      %v7233 = vrot.slane %v7231, 5
      %v7234 = vsel %vm3425, %v7229, %v7233
      %v7235 = vshrl.u32 %v7128, 16
      %v7237 = vrot.slane %v7235, 4
      %v7238 = vor.u32 %v7237, %v7233
      %v7239 = vrot.slane %v7238, 4
      %v7241 = vshll.u32 %v7144, 16
      %v7243 = vrot.slane %v7241, 5
      %v7244 = vsel %vm3425, %v7239, %v7243
      %v7246 = vshrl.u32 %v7129, 16
      %v7248 = vrot.slane %v7246, 4
      %v7249 = vshll.u32 %v7129, 16
      %v7251 = vrot.slane %v7249, 5
      %v7252 = vor.u32 %v7248, %v7251
      %v7253 = vrot.slane %v7252, 4
      %v7255 = vshll.u32 %v7130, 16
      %v7257 = vrot.slane %v7255, 5
      %v7258 = vsel %vm3425, %v7253, %v7257
      %v7259 = vshrl.u32 %v7130, 16
      %v7261 = vrot.slane %v7259, 4
      %v7262 = vor.u32 %v7261, %v7257
      %v7263 = vrot.slane %v7262, 4
      %v7265 = vshll.u32 %v7145, 16
      %v7267 = vrot.slane %v7265, 5
      %v7268 = vsel %vm3425, %v7263, %v7267
      %v7270 = vshrl.u32 %v7131, 16
      %v7272 = vrot.slane %v7270, 4
      %v7273 = vshll.u32 %v7131, 16
      %v7275 = vrot.slane %v7273, 5
      %v7276 = vor.u32 %v7272, %v7275
      %v7277 = vrot.slane %v7276, 4
      %v7279 = vshll.u32 %v7132, 16
      %v7281 = vrot.slane %v7279, 5
      %v7282 = vsel %vm3425, %v7277, %v7281
      %v7283 = vshrl.u32 %v7132, 16
      %v7285 = vrot.slane %v7283, 4
      %v7286 = vor.u32 %v7285, %v7281
      %v7287 = vrot.slane %v7286, 4
      %v7289 = vshll.u32 %v7146, 16
      %v7291 = vrot.slane %v7289, 5
      %v7292 = vsel %vm3425, %v7287, %v7291
      %v7294 = vshrl.u32 %v7133, 16
      %v7296 = vrot.slane %v7294, 4
      %v7297 = vshll.u32 %v7133, 16
      %v7299 = vrot.slane %v7297, 5
      %v7300 = vor.u32 %v7296, %v7299
      %v7301 = vrot.slane %v7300, 4
      %v7303 = vshll.u32 %v7134, 16
      %v7305 = vrot.slane %v7303, 5
      %v7306 = vsel %vm3425, %v7301, %v7305
      %v7307 = vshrl.u32 %v7134, 16
      %v7309 = vrot.slane %v7307, 4
      %v7310 = vor.u32 %v7309, %v7305
      %v7311 = vrot.slane %v7310, 4
      %v7313 = vshll.u32 %v7147, 16
      %v7315 = vrot.slane %v7313, 5
      %v7316 = vsel %vm3425, %v7311, %v7315
      %v7318 = vshrl.u32 %v7135, 16
      %v7320 = vrot.slane %v7318, 4
      %v7321 = vshll.u32 %v7135, 16
      %v7323 = vrot.slane %v7321, 5
      %v7324 = vor.u32 %v7320, %v7323
      %v7325 = vrot.slane %v7324, 4
      %v7327 = vshll.u32 %v7136, 16
      %v7329 = vrot.slane %v7327, 5
      %v7330 = vsel %vm3425, %v7325, %v7329
      %v7331 = vshrl.u32 %v7136, 16
      %v7333 = vrot.slane %v7331, 4
      %v7334 = vor.u32 %v7333, %v7329
      %v7335 = vrot.slane %v7334, 4
      %v7337 = vshll.u32 %v7148, 16
      %v7339 = vrot.slane %v7337, 5
      %v7340 = vsel %vm3425, %v7335, %v7339
      %s7341 = scalar_lea.vmem %s5, 16
      %v7342 = vld [vmem:[%s7341] sm:$0xf]
      %v7343 = vld [vmem:[%s7341 + $0x4] sm:$0xf]
      %v7344 = vld [vmem:[%s7341 + $0x8] sm:$0xf]
      %v7345 = vld [vmem:[%s7341 + $0xc] sm:$0xf]
      %v7346 = vunpack.c.l.b16 %v7162
      %v7347 = vunpack.c.l.b16 %v7172
      %v7348 = vunpack.c.l.b16 %v7186
      %v7349 = vunpack.c.l.b16 %v7196
      %v7350 = vunpack.c.l.b16 %v7210
      %v7351 = vunpack.c.l.b16 %v7220
      %v7352 = vunpack.c.l.b16 %v7234
      %v7353 = vunpack.c.l.b16 %v7244
      %v7354 = vunpack.c.l.b16 %v7258
      %v7355 = vunpack.c.l.b16 %v7268
      %v7356 = vunpack.c.l.b16 %v7282
      %v7357 = vunpack.c.l.b16 %v7292
      %v7358 = vunpack.c.l.b16 %v7306
      %v7359 = vunpack.c.l.b16 %v7316
      %v7360 = vunpack.c.l.b16 %v7330
      %v7361 = vunpack.c.l.b16 %v7340
      %v7362 = vpack.c.b16 %v7347, %v7346
      %v7363 = vpack.c.b16 %v7349, %v7348
      %v7364 = vpack.c.b16 %v7351, %v7350
      %v7365 = vpack.c.b16 %v7353, %v7352
      %v7366 = vpack.c.b16 %v7355, %v7354
      %v7367 = vpack.c.b16 %v7357, %v7356
      %v7368 = vpack.c.b16 %v7359, %v7358
      %v7369 = vpack.c.b16 %v7361, %v7360
      %v7374 = vunpack.c.l.b16 %v7342
      %v7375 = vunpack.c.l.b16 %v7343
      %v7376 = vunpack.c.l.b16 %v7344
      %v7377 = vunpack.c.l.b16 %v7345
      %v7378 = vpack.c.b16 %v7375, %v7374
      %v7379 = vpack.c.b16 %v7377, %v7376
      %vm7382 = vcmask 261120
      %v7384 = vsel %vm7382, %v7362, 0
      %v7387 = vsel %vm7382, %v7363, 0
      %v7390 = vsel %vm7382, %v7364, 0
      %v7393 = vsel %vm7382, %v7365, 0
      %v7396 = vsel %vm7382, %v7366, 0
      %v7399 = vsel %vm7382, %v7367, 0
      %v7402 = vsel %vm7382, %v7368, 0
      %v7405 = vsel %vm7382, %v7369, 0
      %7407 = vmatprep.subr.bf16.mxu0 0
      %7408 = vmatpush1.bf16.msra.mxu0 %v7378
      %7409 = vmatprep.subr.bf16.mxu0 0
      %7410 = vmatpush1.bf16.msra.mxu0 %v7379
      %7411 = vmatprep.subr.bf16.mxu0 0
      %7412 = vmatpush1.bf16.msra.mxu0 0
      %7413 = vmatprep.subr.bf16.mxu0 0
      %7414 = vmatpush1.bf16.msra.mxu0 0
      %7415 = vmatprep.subr.bf16.mxu0 0
      %7416 = vmatpush1.bf16.msra.mxu0 0
      %7417 = vmatprep.subr.bf16.mxu0 0
      %7418 = vmatpush1.bf16.msra.mxu0 0
      %7419 = vmatprep.subr.bf16.mxu0 0
      %7420 = vmatpush1.bf16.msra.mxu0 0
      %7421 = vmatprep.subr.bf16.mxu0 0
      %7422 = vmatpush1.bf16.msra.mxu0 0
      %7423 = vmatprep.subr.bf16.mxu0 0
      %7424 = vmatpush1.bf16.msra.mxu0 0
      %7425 = vmatprep.subr.bf16.mxu0 0
      %7426 = vmatpush1.bf16.msra.mxu0 0
      %7427 = vmatprep.subr.bf16.mxu0 0
      %7428 = vmatpush1.bf16.msra.mxu0 0
      %7429 = vmatprep.subr.bf16.mxu0 0
      %7430 = vmatpush1.bf16.msra.mxu0 0
      %7431 = vmatprep.subr.bf16.mxu0 0
      %7432 = vmatpush1.bf16.msra.mxu0 0
      %7433 = vmatprep.subr.bf16.mxu0 0
      %7434 = vmatpush1.bf16.msra.mxu0 0
      %7435 = vmatprep.subr.bf16.mxu0 0
      %7436 = vmatpush1.bf16.msra.mxu0 0
      %7437 = vmatprep.subr.bf16.mxu0 0
      %7438 = vmatpush1.bf16.msra.mxu0 0
      %7439 = vmatprep.mubr.bf16.mxu0 0
      %7440 = vmatmul.mubr.bf16.gmra.mrb[0].mxu0 %v7384
      %v7441 = vpop.f32.mrb[0].mxu0
      %v7442 = vadd.f32 0.0, %v7441
      %v7443 = vpop.f32.mrb[0].mxu0
      %v7444 = vpop.f32.mrb[0].mxu0
      %v7445 = vadd.f32 0.0, %v7444
      %v7446 = vpop.f32.mrb[0].mxu0
      %7447 = vmatprep.mubr.bf16.mxu0 0
      %7448 = vmatmul.mubr.bf16.gmra.mrb[0].mxu0 %v7387
      %v7449 = vpop.f32.mrb[0].mxu0
      %v7450 = vadd.f32 0.0, %v7449
      %v7451 = vpop.f32.mrb[0].mxu0
      %v7452 = vpop.f32.mrb[0].mxu0
      %v7453 = vadd.f32 0.0, %v7452
      %v7454 = vpop.f32.mrb[0].mxu0
      %7455 = vmatprep.mubr.bf16.mxu0 0
      %7456 = vmatmul.mubr.bf16.gmra.mrb[0].mxu0 %v7390
      %v7457 = vpop.f32.mrb[0].mxu0
      %v7458 = vadd.f32 0.0, %v7457
      %v7459 = vpop.f32.mrb[0].mxu0
      %v7460 = vpop.f32.mrb[0].mxu0
      %v7461 = vadd.f32 0.0, %v7460
      %v7462 = vpop.f32.mrb[0].mxu0
      %7463 = vmatprep.mubr.bf16.mxu0 0
      %7464 = vmatmul.mubr.bf16.gmra.mrb[0].mxu0 %v7393
      %v7465 = vpop.f32.mrb[0].mxu0
      %v7466 = vadd.f32 0.0, %v7465
      %v7467 = vpop.f32.mrb[0].mxu0
      %v7468 = vpop.f32.mrb[0].mxu0
      %v7469 = vadd.f32 0.0, %v7468
      %v7470 = vpop.f32.mrb[0].mxu0
      %7471 = vmatprep.mubr.bf16.mxu0 0
      %7472 = vmatmul.mubr.bf16.gmra.mrb[0].mxu0 %v7396
      %v7473 = vpop.f32.mrb[0].mxu0
      %v7474 = vadd.f32 0.0, %v7473
      %v7475 = vpop.f32.mrb[0].mxu0
      %v7476 = vpop.f32.mrb[0].mxu0
      %v7477 = vadd.f32 0.0, %v7476
      %v7478 = vpop.f32.mrb[0].mxu0
      %7479 = vmatprep.mubr.bf16.mxu0 0
      %7480 = vmatmul.mubr.bf16.gmra.mrb[0].mxu0 %v7399
      %v7481 = vpop.f32.mrb[0].mxu0
      %v7482 = vadd.f32 0.0, %v7481
      %v7483 = vpop.f32.mrb[0].mxu0
      %v7484 = vpop.f32.mrb[0].mxu0
      %v7485 = vadd.f32 0.0, %v7484
      %v7486 = vpop.f32.mrb[0].mxu0
      %7487 = vmatprep.mubr.bf16.mxu0 0
      %7488 = vmatmul.mubr.bf16.gmra.mrb[0].mxu0 %v7402
      %v7489 = vpop.f32.mrb[0].mxu0
      %v7490 = vadd.f32 0.0, %v7489
      %v7491 = vpop.f32.mrb[0].mxu0
      %v7492 = vpop.f32.mrb[0].mxu0
      %v7493 = vadd.f32 0.0, %v7492
      %v7494 = vpop.f32.mrb[0].mxu0
      %7495 = vmatprep.mubr.bf16.mxu0 0
      %7496 = vmatmul.mubr.bf16.gmra.mrb[0].mxu0 %v7405
      %v7497 = vpop.f32.mrb[0].mxu0
      %v7498 = vadd.f32 0.0, %v7497
      %v7499 = vpop.f32.mrb[0].mxu0
      %v7500 = vpop.f32.mrb[0].mxu0
      %v7501 = vadd.f32 0.0, %v7500
      %v7502 = vpop.f32.mrb[0].mxu0
      %7503 = vdwg.mxu0
      %v7520 = vunpack.c.l.b16 %v7121
      %v7521 = vunpack.c.l.b16 %v7122
      %v7522 = vunpack.c.l.b16 %v7123
      %v7523 = vunpack.c.l.b16 %v7124
      %v7524 = vunpack.c.l.b16 %v7125
      %v7525 = vunpack.c.l.b16 %v7126
      %v7526 = vunpack.c.l.b16 %v7127
      %v7527 = vunpack.c.l.b16 %v7128
      %v7528 = vunpack.c.l.b16 %v7129
      %v7529 = vunpack.c.l.b16 %v7130
      %v7530 = vunpack.c.l.b16 %v7131
      %v7531 = vunpack.c.l.b16 %v7132
      %v7532 = vunpack.c.l.b16 %v7133
      %v7533 = vunpack.c.l.b16 %v7134
      %v7534 = vunpack.c.l.b16 %v7135
      %v7535 = vunpack.c.l.b16 %v7136
      %v7536 = vpack.c.b16 %v7521, %v7520
      %v7537 = vpack.c.b16 %v7523, %v7522
      %v7538 = vpack.c.b16 %v7525, %v7524
      %v7539 = vpack.c.b16 %v7527, %v7526
      %v7540 = vpack.c.b16 %v7529, %v7528
      %v7541 = vpack.c.b16 %v7531, %v7530
      %v7542 = vpack.c.b16 %v7533, %v7532
      %v7543 = vpack.c.b16 %v7535, %v7534
      %v7548 = vunpack.c.l.b16 %v7137
      %v7549 = vunpack.c.l.b16 %v7138
      %v7550 = vunpack.c.l.b16 %v7139
      %v7551 = vunpack.c.l.b16 %v7140
      %v7552 = vpack.c.b16 %v7549, %v7548
      %v7553 = vpack.c.b16 %v7551, %v7550
      %v7557 = vsel %vm7382, %v7536, 0
      %v7560 = vsel %vm7382, %v7537, 0
      %v7563 = vsel %vm7382, %v7538, 0
      %v7566 = vsel %vm7382, %v7539, 0
      %v7569 = vsel %vm7382, %v7540, 0
      %v7572 = vsel %vm7382, %v7541, 0
      %v7575 = vsel %vm7382, %v7542, 0
      %v7578 = vsel %vm7382, %v7543, 0
      %7580 = vmatprep.subr.bf16.mxu0 0
      %7581 = vmatpush1.bf16.msra.mxu0 %v7552
      %7582 = vmatprep.subr.bf16.mxu0 0
      %7583 = vmatpush1.bf16.msra.mxu0 %v7553
      %7584 = vmatprep.subr.bf16.mxu0 0
      %7585 = vmatpush1.bf16.msra.mxu0 0
      %7586 = vmatprep.subr.bf16.mxu0 0
      %7587 = vmatpush1.bf16.msra.mxu0 0
      %7588 = vmatprep.subr.bf16.mxu0 0
      %7589 = vmatpush1.bf16.msra.mxu0 0
      %7590 = vmatprep.subr.bf16.mxu0 0
      %7591 = vmatpush1.bf16.msra.mxu0 0
      %7592 = vmatprep.subr.bf16.mxu0 0
      %7593 = vmatpush1.bf16.msra.mxu0 0
      %7594 = vmatprep.subr.bf16.mxu0 0
      %7595 = vmatpush1.bf16.msra.mxu0 0
      %7596 = vmatprep.subr.bf16.mxu0 0
      %7597 = vmatpush1.bf16.msra.mxu0 0
      %7598 = vmatprep.subr.bf16.mxu0 0
      %7599 = vmatpush1.bf16.msra.mxu0 0
      %7600 = vmatprep.subr.bf16.mxu0 0
      %7601 = vmatpush1.bf16.msra.mxu0 0
      %7602 = vmatprep.subr.bf16.mxu0 0
      %7603 = vmatpush1.bf16.msra.mxu0 0
      %7604 = vmatprep.subr.bf16.mxu0 0
      %7605 = vmatpush1.bf16.msra.mxu0 0
      %7606 = vmatprep.subr.bf16.mxu0 0
      %7607 = vmatpush1.bf16.msra.mxu0 0
      %7608 = vmatprep.subr.bf16.mxu0 0
      %7609 = vmatpush1.bf16.msra.mxu0 0
      %7610 = vmatprep.subr.bf16.mxu0 0
      %7611 = vmatpush1.bf16.msra.mxu0 0
      %7612 = vmatprep.mubr.bf16.mxu0 0
      %7613 = vmatmul.mubr.bf16.gmra.mrb[0].mxu0 %v7557
      %v7614 = vpop.f32.mrb[0].mxu0
      %v7615 = vadd.f32 %v7442, %v7614
      %v7616 = vpop.f32.mrb[0].mxu0
      %v7617 = vpop.f32.mrb[0].mxu0
      %v7618 = vadd.f32 %v7445, %v7617
      %v7619 = vpop.f32.mrb[0].mxu0
      %7620 = vmatprep.mubr.bf16.mxu0 0
      %7621 = vmatmul.mubr.bf16.gmra.mrb[0].mxu0 %v7560
      %v7622 = vpop.f32.mrb[0].mxu0
      %v7623 = vadd.f32 %v7450, %v7622
      %v7624 = vpop.f32.mrb[0].mxu0
      %v7625 = vpop.f32.mrb[0].mxu0
      %v7626 = vadd.f32 %v7453, %v7625
      %v7627 = vpop.f32.mrb[0].mxu0
      %7628 = vmatprep.mubr.bf16.mxu0 0
      %7629 = vmatmul.mubr.bf16.gmra.mrb[0].mxu0 %v7563
      %v7630 = vpop.f32.mrb[0].mxu0
      %v7631 = vadd.f32 %v7458, %v7630
      %v7632 = vpop.f32.mrb[0].mxu0
      %v7633 = vpop.f32.mrb[0].mxu0
      %v7634 = vadd.f32 %v7461, %v7633
      %v7635 = vpop.f32.mrb[0].mxu0
      %7636 = vmatprep.mubr.bf16.mxu0 0
      %7637 = vmatmul.mubr.bf16.gmra.mrb[0].mxu0 %v7566
      %v7638 = vpop.f32.mrb[0].mxu0
      %v7639 = vadd.f32 %v7466, %v7638
      %v7640 = vpop.f32.mrb[0].mxu0
      %v7641 = vpop.f32.mrb[0].mxu0
      %v7642 = vadd.f32 %v7469, %v7641
      %v7643 = vpop.f32.mrb[0].mxu0
      %7644 = vmatprep.mubr.bf16.mxu0 0
      %7645 = vmatmul.mubr.bf16.gmra.mrb[0].mxu0 %v7569
      %v7646 = vpop.f32.mrb[0].mxu0
      %v7647 = vadd.f32 %v7474, %v7646
      %v7648 = vpop.f32.mrb[0].mxu0
      %v7649 = vpop.f32.mrb[0].mxu0
      %v7650 = vadd.f32 %v7477, %v7649
      %v7651 = vpop.f32.mrb[0].mxu0
      %7652 = vmatprep.mubr.bf16.mxu0 0
      %7653 = vmatmul.mubr.bf16.gmra.mrb[0].mxu0 %v7572
      %v7654 = vpop.f32.mrb[0].mxu0
      %v7655 = vadd.f32 %v7482, %v7654
      %v7656 = vpop.f32.mrb[0].mxu0
      %v7657 = vpop.f32.mrb[0].mxu0
      %v7658 = vadd.f32 %v7485, %v7657
      %v7659 = vpop.f32.mrb[0].mxu0
      %7660 = vmatprep.mubr.bf16.mxu0 0
      %7661 = vmatmul.mubr.bf16.gmra.mrb[0].mxu0 %v7575
      %v7662 = vpop.f32.mrb[0].mxu0
      %v7663 = vadd.f32 %v7490, %v7662
      %v7664 = vpop.f32.mrb[0].mxu0
      %v7665 = vpop.f32.mrb[0].mxu0
      %v7666 = vadd.f32 %v7493, %v7665
      %v7667 = vpop.f32.mrb[0].mxu0
      %7668 = vmatprep.mubr.bf16.mxu0 0
      %7669 = vmatmul.mubr.bf16.gmra.mrb[0].mxu0 %v7578
      %v7670 = vpop.f32.mrb[0].mxu0
      %v7671 = vadd.f32 %v7498, %v7670
      %v7672 = vpop.f32.mrb[0].mxu0
      %v7673 = vpop.f32.mrb[0].mxu0
      %v7674 = vadd.f32 %v7501, %v7673
      %v7675 = vpop.f32.mrb[0].mxu0
      %7676 = vdwg.mxu0
      %v7677 = vld [vmem:[#allocation3] sm:$0xe]
      %v7678 = vld [vmem:[#allocation3 + $0xc] sm:$0xe]
      %v7679 = vld [vmem:[#allocation3 + $0x18] sm:$0xe]
      %v7680 = vld [vmem:[#allocation3 + $0x24] sm:$0xe]
      %v7681 = vld [vmem:[#allocation3 + $0x30] sm:$0xe]
      %v7682 = vld [vmem:[#allocation3 + $0x3c] sm:$0xe]
      %v7683 = vld [vmem:[#allocation3 + $0x48] sm:$0xe]
      %v7684 = vld [vmem:[#allocation3 + $0x54] sm:$0xe]
      %v7701 = vrot.slane %v7677, 5
      %v7702 = vrot.slane %v7701, 4
      %v7703 = vrot.slane %v7122, 5
      %v7704 = vsel %vm4122, %v7702, %v7703
      %v7705 = vrot.slane %v7703, 4
      %v7706 = vrot.slane %v7141, 5
      %v7707 = vsel %vm4122, %v7705, %v7706
      %v7708 = vrot.slane %v7678, 5
      %v7709 = vrot.slane %v7708, 4
      %v7710 = vrot.slane %v7124, 5
      %v7711 = vsel %vm4122, %v7709, %v7710
      %v7712 = vrot.slane %v7710, 4
      %v7713 = vrot.slane %v7142, 5
      %v7714 = vsel %vm4122, %v7712, %v7713
      %v7715 = vrot.slane %v7679, 5
      %v7716 = vrot.slane %v7715, 4
      %v7717 = vrot.slane %v7126, 5
      %v7718 = vsel %vm4122, %v7716, %v7717
      %v7719 = vrot.slane %v7717, 4
      %v7720 = vrot.slane %v7143, 5
      %v7721 = vsel %vm4122, %v7719, %v7720
      %v7722 = vrot.slane %v7680, 5
      %v7723 = vrot.slane %v7722, 4
      %v7724 = vrot.slane %v7128, 5
      %v7725 = vsel %vm4122, %v7723, %v7724
      %v7726 = vrot.slane %v7724, 4
      %v7727 = vrot.slane %v7144, 5
      %v7728 = vsel %vm4122, %v7726, %v7727
      %v7729 = vrot.slane %v7681, 5
      %v7730 = vrot.slane %v7729, 4
      %v7731 = vrot.slane %v7130, 5
      %v7732 = vsel %vm4122, %v7730, %v7731
      %v7733 = vrot.slane %v7731, 4
      %v7734 = vrot.slane %v7145, 5
      %v7735 = vsel %vm4122, %v7733, %v7734
      %v7736 = vrot.slane %v7682, 5
      %v7737 = vrot.slane %v7736, 4
      %v7738 = vrot.slane %v7132, 5
      %v7739 = vsel %vm4122, %v7737, %v7738
      %v7740 = vrot.slane %v7738, 4
      %v7741 = vrot.slane %v7146, 5
      %v7742 = vsel %vm4122, %v7740, %v7741
      %v7743 = vrot.slane %v7683, 5
      %v7744 = vrot.slane %v7743, 4
      %v7745 = vrot.slane %v7134, 5
      %v7746 = vsel %vm4122, %v7744, %v7745
      %v7747 = vrot.slane %v7745, 4
      %v7748 = vrot.slane %v7147, 5
      %v7749 = vsel %vm4122, %v7747, %v7748
      %v7750 = vrot.slane %v7684, 5
      %v7751 = vrot.slane %v7750, 4
      %v7752 = vrot.slane %v7136, 5
      %v7753 = vsel %vm4122, %v7751, %v7752
      %v7754 = vrot.slane %v7752, 4
      %v7755 = vrot.slane %v7148, 5
      %v7756 = vsel %vm4122, %v7754, %v7755
      %s7757 = scalar_lea.vmem %s5, 32
      %v7758 = vld [vmem:[%s7757] sm:$0xf]
      %v7759 = vld [vmem:[%s7757 + $0x4] sm:$0xf]
      %v7760 = vld [vmem:[%s7757 + $0x8] sm:$0xf]
      %v7761 = vld [vmem:[%s7757 + $0xc] sm:$0xf]
      %v7762 = vunpack.c.l.b16 %v7704
      %v7763 = vunpack.c.l.b16 %v7707
      %v7764 = vunpack.c.l.b16 %v7711
      %v7765 = vunpack.c.l.b16 %v7714
      %v7766 = vunpack.c.l.b16 %v7718
      %v7767 = vunpack.c.l.b16 %v7721
      %v7768 = vunpack.c.l.b16 %v7725
      %v7769 = vunpack.c.l.b16 %v7728
      %v7770 = vunpack.c.l.b16 %v7732
      %v7771 = vunpack.c.l.b16 %v7735
      %v7772 = vunpack.c.l.b16 %v7739
      %v7773 = vunpack.c.l.b16 %v7742
      %v7774 = vunpack.c.l.b16 %v7746
      %v7775 = vunpack.c.l.b16 %v7749
      %v7776 = vunpack.c.l.b16 %v7753
      %v7777 = vunpack.c.l.b16 %v7756
      %v7778 = vpack.c.b16 %v7763, %v7762
      %v7779 = vpack.c.b16 %v7765, %v7764
      %v7780 = vpack.c.b16 %v7767, %v7766
      %v7781 = vpack.c.b16 %v7769, %v7768
      %v7782 = vpack.c.b16 %v7771, %v7770
      %v7783 = vpack.c.b16 %v7773, %v7772
      %v7784 = vpack.c.b16 %v7775, %v7774
      %v7785 = vpack.c.b16 %v7777, %v7776
      %v7790 = vunpack.c.l.b16 %v7758
      %v7791 = vunpack.c.l.b16 %v7759
      %v7792 = vunpack.c.l.b16 %v7760
      %v7793 = vunpack.c.l.b16 %v7761
      %v7794 = vpack.c.b16 %v7791, %v7790
      %v7795 = vpack.c.b16 %v7793, %v7792
      %v7799 = vsel %vm7382, %v7778, 0
      %v7802 = vsel %vm7382, %v7779, 0
      %v7805 = vsel %vm7382, %v7780, 0
      %v7808 = vsel %vm7382, %v7781, 0
      %v7811 = vsel %vm7382, %v7782, 0
      %v7814 = vsel %vm7382, %v7783, 0
      %v7817 = vsel %vm7382, %v7784, 0
      %v7820 = vsel %vm7382, %v7785, 0
      %7822 = vmatprep.subr.bf16.mxu0 0
      %7823 = vmatpush1.bf16.msra.mxu0 %v7794
      %7824 = vmatprep.subr.bf16.mxu0 0
      %7825 = vmatpush1.bf16.msra.mxu0 %v7795
      %7826 = vmatprep.subr.bf16.mxu0 0
      %7827 = vmatpush1.bf16.msra.mxu0 0
      %7828 = vmatprep.subr.bf16.mxu0 0
      %7829 = vmatpush1.bf16.msra.mxu0 0
      %7830 = vmatprep.subr.bf16.mxu0 0
      %7831 = vmatpush1.bf16.msra.mxu0 0
      %7832 = vmatprep.subr.bf16.mxu0 0
      %7833 = vmatpush1.bf16.msra.mxu0 0
      %7834 = vmatprep.subr.bf16.mxu0 0
      %7835 = vmatpush1.bf16.msra.mxu0 0
      %7836 = vmatprep.subr.bf16.mxu0 0
      %7837 = vmatpush1.bf16.msra.mxu0 0
      %7838 = vmatprep.subr.bf16.mxu0 0
      %7839 = vmatpush1.bf16.msra.mxu0 0
      %7840 = vmatprep.subr.bf16.mxu0 0
      %7841 = vmatpush1.bf16.msra.mxu0 0
      %7842 = vmatprep.subr.bf16.mxu0 0
      %7843 = vmatpush1.bf16.msra.mxu0 0
      %7844 = vmatprep.subr.bf16.mxu0 0
      %7845 = vmatpush1.bf16.msra.mxu0 0
      %7846 = vmatprep.subr.bf16.mxu0 0
      %7847 = vmatpush1.bf16.msra.mxu0 0
      %7848 = vmatprep.subr.bf16.mxu0 0
      %7849 = vmatpush1.bf16.msra.mxu0 0
      %7850 = vmatprep.subr.bf16.mxu0 0
      %7851 = vmatpush1.bf16.msra.mxu0 0
      %7852 = vmatprep.subr.bf16.mxu0 0
      %7853 = vmatpush1.bf16.msra.mxu0 0
      %7854 = vmatprep.mubr.bf16.mxu0 0
      %7855 = vmatmul.mubr.bf16.gmra.mrb[0].mxu0 %v7799
      %v7856 = vpop.f32.mrb[0].mxu0
      %v7857 = vadd.f32 0.0, %v7856
      %v7858 = vpop.f32.mrb[0].mxu0
      %v7859 = vpop.f32.mrb[0].mxu0
      %v7860 = vadd.f32 0.0, %v7859
      %v7861 = vpop.f32.mrb[0].mxu0
      %7862 = vmatprep.mubr.bf16.mxu0 0
      %7863 = vmatmul.mubr.bf16.gmra.mrb[0].mxu0 %v7802
      %v7864 = vpop.f32.mrb[0].mxu0
      %v7865 = vadd.f32 0.0, %v7864
      %v7866 = vpop.f32.mrb[0].mxu0
      %v7867 = vpop.f32.mrb[0].mxu0
      %v7868 = vadd.f32 0.0, %v7867
      %v7869 = vpop.f32.mrb[0].mxu0
      %7870 = vmatprep.mubr.bf16.mxu0 0
      %7871 = vmatmul.mubr.bf16.gmra.mrb[0].mxu0 %v7805
      %v7872 = vpop.f32.mrb[0].mxu0
      %v7873 = vadd.f32 0.0, %v7872
      %v7874 = vpop.f32.mrb[0].mxu0
      %v7875 = vpop.f32.mrb[0].mxu0
      %v7876 = vadd.f32 0.0, %v7875
      %v7877 = vpop.f32.mrb[0].mxu0
      %7878 = vmatprep.mubr.bf16.mxu0 0
      %7879 = vmatmul.mubr.bf16.gmra.mrb[0].mxu0 %v7808
      %v7880 = vpop.f32.mrb[0].mxu0
      %v7881 = vadd.f32 0.0, %v7880
      %v7882 = vpop.f32.mrb[0].mxu0
      %v7883 = vpop.f32.mrb[0].mxu0
      %v7884 = vadd.f32 0.0, %v7883
      %v7885 = vpop.f32.mrb[0].mxu0
      %7886 = vmatprep.mubr.bf16.mxu0 0
      %7887 = vmatmul.mubr.bf16.gmra.mrb[0].mxu0 %v7811
      %v7888 = vpop.f32.mrb[0].mxu0
      %v7889 = vadd.f32 0.0, %v7888
      %v7890 = vpop.f32.mrb[0].mxu0
      %v7891 = vpop.f32.mrb[0].mxu0
      %v7892 = vadd.f32 0.0, %v7891
      %v7893 = vpop.f32.mrb[0].mxu0
      %7894 = vmatprep.mubr.bf16.mxu0 0
      %7895 = vmatmul.mubr.bf16.gmra.mrb[0].mxu0 %v7814
      %v7896 = vpop.f32.mrb[0].mxu0
      %v7897 = vadd.f32 0.0, %v7896
      %v7898 = vpop.f32.mrb[0].mxu0
      %v7899 = vpop.f32.mrb[0].mxu0
      %v7900 = vadd.f32 0.0, %v7899
      %v7901 = vpop.f32.mrb[0].mxu0
      %7902 = vmatprep.mubr.bf16.mxu0 0
      %7903 = vmatmul.mubr.bf16.gmra.mrb[0].mxu0 %v7817
      %v7904 = vpop.f32.mrb[0].mxu0
      %v7905 = vadd.f32 0.0, %v7904
      %v7906 = vpop.f32.mrb[0].mxu0
      %v7907 = vpop.f32.mrb[0].mxu0
      %v7908 = vadd.f32 0.0, %v7907
      %v7909 = vpop.f32.mrb[0].mxu0
      %7910 = vmatprep.mubr.bf16.mxu0 0
      %7911 = vmatmul.mubr.bf16.gmra.mrb[0].mxu0 %v7820
      %v7912 = vpop.f32.mrb[0].mxu0
      %v7913 = vadd.f32 0.0, %v7912
      %v7914 = vpop.f32.mrb[0].mxu0
      %v7915 = vpop.f32.mrb[0].mxu0
      %v7916 = vadd.f32 0.0, %v7915
      %v7917 = vpop.f32.mrb[0].mxu0
      %7918 = vdwg.mxu0
      %v7919 = vadd.f32 %v7615, %v7857
      %v7920 = vadd.f32 %v7618, %v7860
      %v7921 = vadd.f32 %v7623, %v7865
      %v7922 = vadd.f32 %v7626, %v7868
      %v7923 = vadd.f32 %v7631, %v7873
      %v7924 = vadd.f32 %v7634, %v7876
      %v7925 = vadd.f32 %v7639, %v7881
      %v7926 = vadd.f32 %v7642, %v7884
      %v7927 = vadd.f32 %v7647, %v7889
      %v7928 = vadd.f32 %v7650, %v7892
      %v7929 = vadd.f32 %v7655, %v7897
      %v7930 = vadd.f32 %v7658, %v7900
      %v7931 = vadd.f32 %v7663, %v7905
      %v7932 = vadd.f32 %v7666, %v7908
      %v7933 = vadd.f32 %v7671, %v7913
      %v7934 = vadd.f32 %v7674, %v7916
      %s7935 = scalar_lea.vmem [#allocation3], 12
      %v7936 = vld [vmem:[%s7935] sm:$0xf]
      %v7937 = vld [vmem:[%s7935 + $0x4] sm:$0xf]
      %v7938 = vld [vmem:[%s7935 + $0xc] sm:$0xf]
      %v7939 = vld [vmem:[%s7935 + $0x10] sm:$0xf]
      %v7940 = vld [vmem:[%s7935 + $0x18] sm:$0xf]
      %v7941 = vld [vmem:[%s7935 + $0x1c] sm:$0xf]
      %v7942 = vld [vmem:[%s7935 + $0x24] sm:$0xf]
      %v7943 = vld [vmem:[%s7935 + $0x28] sm:$0xf]
      %v7944 = vld [vmem:[%s7935 + $0x30] sm:$0xf]
      %v7945 = vld [vmem:[%s7935 + $0x34] sm:$0xf]
      %v7946 = vld [vmem:[%s7935 + $0x3c] sm:$0xf]
      %v7947 = vld [vmem:[%s7935 + $0x40] sm:$0xf]
      %v7948 = vld [vmem:[%s7935 + $0x48] sm:$0xf]
      %v7949 = vld [vmem:[%s7935 + $0x4c] sm:$0xf]
      %v7950 = vld [vmem:[%s7935 + $0x54] sm:$0xf]
      %v7951 = vld [vmem:[%s7935 + $0x58] sm:$0xf]
      %s7952 = scalar_lea.vmem %s5, 48
      %v7953 = vld [vmem:[%s7952] sm:$0xf]
      %v7954 = vld [vmem:[%s7952 + $0x4] sm:$0xf]
      %v7955 = vld [vmem:[%s7952 + $0x8] sm:$0xf]
      %v7956 = vld [vmem:[%s7952 + $0xc] sm:$0xf]
      %v7973 = vunpack.c.l.b16 %v7936
      %v7974 = vunpack.c.l.b16 %v7937
      %v7975 = vunpack.c.l.b16 %v7938
      %v7976 = vunpack.c.l.b16 %v7939
      %v7977 = vunpack.c.l.b16 %v7940
      %v7978 = vunpack.c.l.b16 %v7941
      %v7979 = vunpack.c.l.b16 %v7942
      %v7980 = vunpack.c.l.b16 %v7943
      %v7981 = vunpack.c.l.b16 %v7944
      %v7982 = vunpack.c.l.b16 %v7945
      %v7983 = vunpack.c.l.b16 %v7946
      %v7984 = vunpack.c.l.b16 %v7947
      %v7985 = vunpack.c.l.b16 %v7948
      %v7986 = vunpack.c.l.b16 %v7949
      %v7987 = vunpack.c.l.b16 %v7950
      %v7988 = vunpack.c.l.b16 %v7951
      %v7989 = vpack.c.b16 %v7974, %v7973
      %v7990 = vpack.c.b16 %v7976, %v7975
      %v7991 = vpack.c.b16 %v7978, %v7977
      %v7992 = vpack.c.b16 %v7980, %v7979
      %v7993 = vpack.c.b16 %v7982, %v7981
      %v7994 = vpack.c.b16 %v7984, %v7983
      %v7995 = vpack.c.b16 %v7986, %v7985
      %v7996 = vpack.c.b16 %v7988, %v7987
      %v8001 = vunpack.c.l.b16 %v7953
      %v8002 = vunpack.c.l.b16 %v7954
      %v8003 = vunpack.c.l.b16 %v7955
      %v8004 = vunpack.c.l.b16 %v7956
      %v8005 = vpack.c.b16 %v8002, %v8001
      %v8006 = vpack.c.b16 %v8004, %v8003
      %v8010 = vsel %vm7382, %v7989, 0
      %v8013 = vsel %vm7382, %v7990, 0
      %v8016 = vsel %vm7382, %v7991, 0
      %v8019 = vsel %vm7382, %v7992, 0
      %v8022 = vsel %vm7382, %v7993, 0
      %v8025 = vsel %vm7382, %v7994, 0
      %v8028 = vsel %vm7382, %v7995, 0
      %v8031 = vsel %vm7382, %v7996, 0
      %8033 = vmatprep.subr.bf16.mxu0 0
      %8034 = vmatpush1.bf16.msra.mxu0 %v8005
      %8035 = vmatprep.subr.bf16.mxu0 0
      %8036 = vmatpush1.bf16.msra.mxu0 %v8006
      %8037 = vmatprep.subr.bf16.mxu0 0
      %8038 = vmatpush1.bf16.msra.mxu0 0
      %8039 = vmatprep.subr.bf16.mxu0 0
      %8040 = vmatpush1.bf16.msra.mxu0 0
      %8041 = vmatprep.subr.bf16.mxu0 0
      %8042 = vmatpush1.bf16.msra.mxu0 0
      %8043 = vmatprep.subr.bf16.mxu0 0
      %8044 = vmatpush1.bf16.msra.mxu0 0
      %8045 = vmatprep.subr.bf16.mxu0 0
      %8046 = vmatpush1.bf16.msra.mxu0 0
      %8047 = vmatprep.subr.bf16.mxu0 0
      %8048 = vmatpush1.bf16.msra.mxu0 0
      %8049 = vmatprep.subr.bf16.mxu0 0
      %8050 = vmatpush1.bf16.msra.mxu0 0
      %8051 = vmatprep.subr.bf16.mxu0 0
      %8052 = vmatpush1.bf16.msra.mxu0 0
      %8053 = vmatprep.subr.bf16.mxu0 0
      %8054 = vmatpush1.bf16.msra.mxu0 0
      %8055 = vmatprep.subr.bf16.mxu0 0
      %8056 = vmatpush1.bf16.msra.mxu0 0
      %8057 = vmatprep.subr.bf16.mxu0 0
      %8058 = vmatpush1.bf16.msra.mxu0 0
      %8059 = vmatprep.subr.bf16.mxu0 0
      %8060 = vmatpush1.bf16.msra.mxu0 0
      %8061 = vmatprep.subr.bf16.mxu0 0
      %8062 = vmatpush1.bf16.msra.mxu0 0
      %8063 = vmatprep.subr.bf16.mxu0 0
      %8064 = vmatpush1.bf16.msra.mxu0 0
      %8065 = vmatprep.mubr.bf16.mxu0 0
      %8066 = vmatmul.mubr.bf16.gmra.mrb[0].mxu0 %v8010
      %v8067 = vpop.f32.mrb[0].mxu0
      %v8068 = vadd.f32 0.0, %v8067
      %v8069 = vpop.f32.mrb[0].mxu0
      %v8070 = vpop.f32.mrb[0].mxu0
      %v8071 = vadd.f32 0.0, %v8070
      %v8072 = vpop.f32.mrb[0].mxu0
      %8073 = vmatprep.mubr.bf16.mxu0 0
      %8074 = vmatmul.mubr.bf16.gmra.mrb[0].mxu0 %v8013
      %v8075 = vpop.f32.mrb[0].mxu0
      %v8076 = vadd.f32 0.0, %v8075
      %v8077 = vpop.f32.mrb[0].mxu0
      %v8078 = vpop.f32.mrb[0].mxu0
      %v8079 = vadd.f32 0.0, %v8078
      %v8080 = vpop.f32.mrb[0].mxu0
      %8081 = vmatprep.mubr.bf16.mxu0 0
      %8082 = vmatmul.mubr.bf16.gmra.mrb[0].mxu0 %v8016
      %v8083 = vpop.f32.mrb[0].mxu0
      %v8084 = vadd.f32 0.0, %v8083
      %v8085 = vpop.f32.mrb[0].mxu0
      %v8086 = vpop.f32.mrb[0].mxu0
      %v8087 = vadd.f32 0.0, %v8086
      %v8088 = vpop.f32.mrb[0].mxu0
      %8089 = vmatprep.mubr.bf16.mxu0 0
      %8090 = vmatmul.mubr.bf16.gmra.mrb[0].mxu0 %v8019
      %v8091 = vpop.f32.mrb[0].mxu0
      %v8092 = vadd.f32 0.0, %v8091
      %v8093 = vpop.f32.mrb[0].mxu0
      %v8094 = vpop.f32.mrb[0].mxu0
      %v8095 = vadd.f32 0.0, %v8094
      %v8096 = vpop.f32.mrb[0].mxu0
      %8097 = vmatprep.mubr.bf16.mxu0 0
      %8098 = vmatmul.mubr.bf16.gmra.mrb[0].mxu0 %v8022
      %v8099 = vpop.f32.mrb[0].mxu0
      %v8100 = vadd.f32 0.0, %v8099
      %v8101 = vpop.f32.mrb[0].mxu0
      %v8102 = vpop.f32.mrb[0].mxu0
      %v8103 = vadd.f32 0.0, %v8102
      %v8104 = vpop.f32.mrb[0].mxu0
      %8105 = vmatprep.mubr.bf16.mxu0 0
      %8106 = vmatmul.mubr.bf16.gmra.mrb[0].mxu0 %v8025
      %v8107 = vpop.f32.mrb[0].mxu0
      %v8108 = vadd.f32 0.0, %v8107
      %v8109 = vpop.f32.mrb[0].mxu0
      %v8110 = vpop.f32.mrb[0].mxu0
      %v8111 = vadd.f32 0.0, %v8110
      %v8112 = vpop.f32.mrb[0].mxu0
      %8113 = vmatprep.mubr.bf16.mxu0 0
      %8114 = vmatmul.mubr.bf16.gmra.mrb[0].mxu0 %v8028
      %v8115 = vpop.f32.mrb[0].mxu0
      %v8116 = vadd.f32 0.0, %v8115
      %v8117 = vpop.f32.mrb[0].mxu0
      %v8118 = vpop.f32.mrb[0].mxu0
      %v8119 = vadd.f32 0.0, %v8118
      %v8120 = vpop.f32.mrb[0].mxu0
      %8121 = vmatprep.mubr.bf16.mxu0 0
      %8122 = vmatmul.mubr.bf16.gmra.mrb[0].mxu0 %v8031
      %v8123 = vpop.f32.mrb[0].mxu0
      %v8124 = vadd.f32 0.0, %v8123
      %v8125 = vpop.f32.mrb[0].mxu0
      %v8126 = vpop.f32.mrb[0].mxu0
      %v8127 = vadd.f32 0.0, %v8126
      %v8128 = vpop.f32.mrb[0].mxu0
      %8129 = vdwg.mxu0
      %v8130 = vadd.f32 %v7919, %v8068
      %v8131 = vadd.f32 %v7920, %v8071
      %v8132 = vadd.f32 %v7921, %v8076
      %v8133 = vadd.f32 %v7922, %v8079
      %v8134 = vadd.f32 %v7923, %v8084
      %v8135 = vadd.f32 %v7924, %v8087
      %v8136 = vadd.f32 %v7925, %v8092
      %v8137 = vadd.f32 %v7926, %v8095
      %v8138 = vadd.f32 %v7927, %v8100
      %v8139 = vadd.f32 %v7928, %v8103
      %v8140 = vadd.f32 %v7929, %v8108
      %v8141 = vadd.f32 %v7930, %v8111
      %v8142 = vadd.f32 %v7931, %v8116
      %v8143 = vadd.f32 %v7932, %v8119
      %v8144 = vadd.f32 %v7933, %v8124
      %v8145 = vadd.f32 %v7934, %v8127
      %v8146 = vld [vmem:[%s7935] sm:$0xf]
      %v8147 = vld [vmem:[%s7935 + $0x4] sm:$0xf]
      %v8148 = vld [vmem:[%s7935 + $0x8] sm:$0x1]
      %v8149 = vld [vmem:[%s7935 + $0xc] sm:$0xf]
      %v8150 = vld [vmem:[%s7935 + $0x10] sm:$0xf]
      %v8151 = vld [vmem:[%s7935 + $0x14] sm:$0x1]
      %v8152 = vld [vmem:[%s7935 + $0x18] sm:$0xf]
      %v8153 = vld [vmem:[%s7935 + $0x1c] sm:$0xf]
      %v8154 = vld [vmem:[%s7935 + $0x20] sm:$0x1]
      %v8155 = vld [vmem:[%s7935 + $0x24] sm:$0xf]
      %v8156 = vld [vmem:[%s7935 + $0x28] sm:$0xf]
      %v8157 = vld [vmem:[%s7935 + $0x2c] sm:$0x1]
      %v8158 = vld [vmem:[%s7935 + $0x30] sm:$0xf]
      %v8159 = vld [vmem:[%s7935 + $0x34] sm:$0xf]
      %v8160 = vld [vmem:[%s7935 + $0x38] sm:$0x1]
      %v8161 = vld [vmem:[%s7935 + $0x3c] sm:$0xf]
      %v8162 = vld [vmem:[%s7935 + $0x40] sm:$0xf]
      %v8163 = vld [vmem:[%s7935 + $0x44] sm:$0x1]
      %v8164 = vld [vmem:[%s7935 + $0x48] sm:$0xf]
      %v8165 = vld [vmem:[%s7935 + $0x4c] sm:$0xf]
      %v8166 = vld [vmem:[%s7935 + $0x50] sm:$0x1]
      %v8167 = vld [vmem:[%s7935 + $0x54] sm:$0xf]
      %v8168 = vld [vmem:[%s7935 + $0x58] sm:$0xf]
      %v8169 = vld [vmem:[%s7935 + $0x5c] sm:$0x1]
      %v8171 = vshrl.u32 %v8146, 16
      %v8173 = vrot.slane %v8171, 4
      %v8174 = vshll.u32 %v8146, 16
      %v8176 = vrot.slane %v8174, 5
      %v8177 = vor.u32 %v8173, %v8176
      %v8178 = vrot.slane %v8177, 4
      %v8180 = vshll.u32 %v8147, 16
      %v8182 = vrot.slane %v8180, 5
      %v8183 = vsel %vm3425, %v8178, %v8182
      %v8184 = vshrl.u32 %v8147, 16
      %v8186 = vrot.slane %v8184, 4
      %v8187 = vor.u32 %v8186, %v8182
      %v8188 = vrot.slane %v8187, 4
      %v8190 = vshll.u32 %v8148, 16
      %v8192 = vrot.slane %v8190, 5
      %v8193 = vsel %vm3425, %v8188, %v8192
      %v8195 = vshrl.u32 %v8149, 16
      %v8197 = vrot.slane %v8195, 4
      %v8198 = vshll.u32 %v8149, 16
      %v8200 = vrot.slane %v8198, 5
      %v8201 = vor.u32 %v8197, %v8200
      %v8202 = vrot.slane %v8201, 4
      %v8204 = vshll.u32 %v8150, 16
      %v8206 = vrot.slane %v8204, 5
      %v8207 = vsel %vm3425, %v8202, %v8206
      %v8208 = vshrl.u32 %v8150, 16
      %v8210 = vrot.slane %v8208, 4
      %v8211 = vor.u32 %v8210, %v8206
      %v8212 = vrot.slane %v8211, 4
      %v8214 = vshll.u32 %v8151, 16
      %v8216 = vrot.slane %v8214, 5
      %v8217 = vsel %vm3425, %v8212, %v8216
      %v8219 = vshrl.u32 %v8152, 16
      %v8221 = vrot.slane %v8219, 4
      %v8222 = vshll.u32 %v8152, 16
      %v8224 = vrot.slane %v8222, 5
      %v8225 = vor.u32 %v8221, %v8224
      %v8226 = vrot.slane %v8225, 4
      %v8228 = vshll.u32 %v8153, 16
      %v8230 = vrot.slane %v8228, 5
      %v8231 = vsel %vm3425, %v8226, %v8230
      %v8232 = vshrl.u32 %v8153, 16
      %v8234 = vrot.slane %v8232, 4
      %v8235 = vor.u32 %v8234, %v8230
      %v8236 = vrot.slane %v8235, 4
      %v8238 = vshll.u32 %v8154, 16
      %v8240 = vrot.slane %v8238, 5
      %v8241 = vsel %vm3425, %v8236, %v8240
      %v8243 = vshrl.u32 %v8155, 16
      %v8245 = vrot.slane %v8243, 4
      %v8246 = vshll.u32 %v8155, 16
      %v8248 = vrot.slane %v8246, 5
      %v8249 = vor.u32 %v8245, %v8248
      %v8250 = vrot.slane %v8249, 4
      %v8252 = vshll.u32 %v8156, 16
      %v8254 = vrot.slane %v8252, 5
      %v8255 = vsel %vm3425, %v8250, %v8254
      %v8256 = vshrl.u32 %v8156, 16
      %v8258 = vrot.slane %v8256, 4
      %v8259 = vor.u32 %v8258, %v8254
      %v8260 = vrot.slane %v8259, 4
      %v8262 = vshll.u32 %v8157, 16
      %v8264 = vrot.slane %v8262, 5
      %v8265 = vsel %vm3425, %v8260, %v8264
      %v8267 = vshrl.u32 %v8158, 16
      %v8269 = vrot.slane %v8267, 4
      %v8270 = vshll.u32 %v8158, 16
      %v8272 = vrot.slane %v8270, 5
      %v8273 = vor.u32 %v8269, %v8272
      %v8274 = vrot.slane %v8273, 4
      %v8276 = vshll.u32 %v8159, 16
      %v8278 = vrot.slane %v8276, 5
      %v8279 = vsel %vm3425, %v8274, %v8278
      %v8280 = vshrl.u32 %v8159, 16
      %v8282 = vrot.slane %v8280, 4
      %v8283 = vor.u32 %v8282, %v8278
      %v8284 = vrot.slane %v8283, 4
      %v8286 = vshll.u32 %v8160, 16
      %v8288 = vrot.slane %v8286, 5
      %v8289 = vsel %vm3425, %v8284, %v8288
      %v8291 = vshrl.u32 %v8161, 16
      %v8293 = vrot.slane %v8291, 4
      %v8294 = vshll.u32 %v8161, 16
      %v8296 = vrot.slane %v8294, 5
      %v8297 = vor.u32 %v8293, %v8296
      %v8298 = vrot.slane %v8297, 4
      %v8300 = vshll.u32 %v8162, 16
      %v8302 = vrot.slane %v8300, 5
      %v8303 = vsel %vm3425, %v8298, %v8302
      %v8304 = vshrl.u32 %v8162, 16
      %v8306 = vrot.slane %v8304, 4
      %v8307 = vor.u32 %v8306, %v8302
      %v8308 = vrot.slane %v8307, 4
      %v8310 = vshll.u32 %v8163, 16
      %v8312 = vrot.slane %v8310, 5
      %v8313 = vsel %vm3425, %v8308, %v8312
      %v8315 = vshrl.u32 %v8164, 16
      %v8317 = vrot.slane %v8315, 4
      %v8318 = vshll.u32 %v8164, 16
      %v8320 = vrot.slane %v8318, 5
      %v8321 = vor.u32 %v8317, %v8320
      %v8322 = vrot.slane %v8321, 4
      %v8324 = vshll.u32 %v8165, 16
      %v8326 = vrot.slane %v8324, 5
      %v8327 = vsel %vm3425, %v8322, %v8326
      %v8328 = vshrl.u32 %v8165, 16
      %v8330 = vrot.slane %v8328, 4
      %v8331 = vor.u32 %v8330, %v8326
      %v8332 = vrot.slane %v8331, 4
      %v8334 = vshll.u32 %v8166, 16
      %v8336 = vrot.slane %v8334, 5
      %v8337 = vsel %vm3425, %v8332, %v8336
      %v8339 = vshrl.u32 %v8167, 16
      %v8341 = vrot.slane %v8339, 4
      %v8342 = vshll.u32 %v8167, 16
      %v8344 = vrot.slane %v8342, 5
      %v8345 = vor.u32 %v8341, %v8344
      %v8346 = vrot.slane %v8345, 4
      %v8348 = vshll.u32 %v8168, 16
      %v8350 = vrot.slane %v8348, 5
      %v8351 = vsel %vm3425, %v8346, %v8350
      %v8352 = vshrl.u32 %v8168, 16
      %v8354 = vrot.slane %v8352, 4
      %v8355 = vor.u32 %v8354, %v8350
      %v8356 = vrot.slane %v8355, 4
      %v8358 = vshll.u32 %v8169, 16
      %v8360 = vrot.slane %v8358, 5
      %v8361 = vsel %vm3425, %v8356, %v8360
      %s8362 = scalar_lea.vmem %s5, 64
      %v8363 = vld [vmem:[%s8362] sm:$0xf]
      %v8364 = vld [vmem:[%s8362 + $0x4] sm:$0xf]
      %v8365 = vld [vmem:[%s8362 + $0x8] sm:$0xf]
      %v8366 = vld [vmem:[%s8362 + $0xc] sm:$0xf]
      %v8367 = vunpack.c.l.b16 %v8183
      %v8368 = vunpack.c.l.b16 %v8193
      %v8369 = vunpack.c.l.b16 %v8207
      %v8370 = vunpack.c.l.b16 %v8217
      %v8371 = vunpack.c.l.b16 %v8231
      %v8372 = vunpack.c.l.b16 %v8241
      %v8373 = vunpack.c.l.b16 %v8255
      %v8374 = vunpack.c.l.b16 %v8265
      %v8375 = vunpack.c.l.b16 %v8279
      %v8376 = vunpack.c.l.b16 %v8289
      %v8377 = vunpack.c.l.b16 %v8303
      %v8378 = vunpack.c.l.b16 %v8313
      %v8379 = vunpack.c.l.b16 %v8327
      %v8380 = vunpack.c.l.b16 %v8337
      %v8381 = vunpack.c.l.b16 %v8351
      %v8382 = vunpack.c.l.b16 %v8361
      %v8383 = vpack.c.b16 %v8368, %v8367
      %v8384 = vpack.c.b16 %v8370, %v8369
      %v8385 = vpack.c.b16 %v8372, %v8371
      %v8386 = vpack.c.b16 %v8374, %v8373
      %v8387 = vpack.c.b16 %v8376, %v8375
      %v8388 = vpack.c.b16 %v8378, %v8377
      %v8389 = vpack.c.b16 %v8380, %v8379
      %v8390 = vpack.c.b16 %v8382, %v8381
      %v8395 = vunpack.c.l.b16 %v8363
      %v8396 = vunpack.c.l.b16 %v8364
      %v8397 = vunpack.c.l.b16 %v8365
      %v8398 = vunpack.c.l.b16 %v8366
      %v8399 = vpack.c.b16 %v8396, %v8395
      %v8400 = vpack.c.b16 %v8398, %v8397
      %v8404 = vsel %vm7382, %v8383, 0
      %v8407 = vsel %vm7382, %v8384, 0
      %v8410 = vsel %vm7382, %v8385, 0
      %v8413 = vsel %vm7382, %v8386, 0
      %v8416 = vsel %vm7382, %v8387, 0
      %v8419 = vsel %vm7382, %v8388, 0
      %v8422 = vsel %vm7382, %v8389, 0
      %v8425 = vsel %vm7382, %v8390, 0
      %8427 = vmatprep.subr.bf16.mxu0 0
      %8428 = vmatpush1.bf16.msra.mxu0 %v8399
      %8429 = vmatprep.subr.bf16.mxu0 0
      %8430 = vmatpush1.bf16.msra.mxu0 %v8400
      %8431 = vmatprep.subr.bf16.mxu0 0
      %8432 = vmatpush1.bf16.msra.mxu0 0
      %8433 = vmatprep.subr.bf16.mxu0 0
      %8434 = vmatpush1.bf16.msra.mxu0 0
      %8435 = vmatprep.subr.bf16.mxu0 0
      %8436 = vmatpush1.bf16.msra.mxu0 0
      %8437 = vmatprep.subr.bf16.mxu0 0
      %8438 = vmatpush1.bf16.msra.mxu0 0
      %8439 = vmatprep.subr.bf16.mxu0 0
      %8440 = vmatpush1.bf16.msra.mxu0 0
      %8441 = vmatprep.subr.bf16.mxu0 0
      %8442 = vmatpush1.bf16.msra.mxu0 0
      %8443 = vmatprep.subr.bf16.mxu0 0
      %8444 = vmatpush1.bf16.msra.mxu0 0
      %8445 = vmatprep.subr.bf16.mxu0 0
      %8446 = vmatpush1.bf16.msra.mxu0 0
      %8447 = vmatprep.subr.bf16.mxu0 0
      %8448 = vmatpush1.bf16.msra.mxu0 0
      %8449 = vmatprep.subr.bf16.mxu0 0
      %8450 = vmatpush1.bf16.msra.mxu0 0
      %8451 = vmatprep.subr.bf16.mxu0 0
      %8452 = vmatpush1.bf16.msra.mxu0 0
      %8453 = vmatprep.subr.bf16.mxu0 0
      %8454 = vmatpush1.bf16.msra.mxu0 0
      %8455 = vmatprep.subr.bf16.mxu0 0
      %8456 = vmatpush1.bf16.msra.mxu0 0
      %8457 = vmatprep.subr.bf16.mxu0 0
      %8458 = vmatpush1.bf16.msra.mxu0 0
      %8459 = vmatprep.mubr.bf16.mxu0 0
      %8460 = vmatmul.mubr.bf16.gmra.mrb[0].mxu0 %v8404
      %v8461 = vpop.f32.mrb[0].mxu0
      %v8462 = vadd.f32 0.0, %v8461
      %v8463 = vpop.f32.mrb[0].mxu0
      %v8464 = vpop.f32.mrb[0].mxu0
      %v8465 = vadd.f32 0.0, %v8464
      %v8466 = vpop.f32.mrb[0].mxu0
      %8467 = vmatprep.mubr.bf16.mxu0 0
      %8468 = vmatmul.mubr.bf16.gmra.mrb[0].mxu0 %v8407
      %v8469 = vpop.f32.mrb[0].mxu0
      %v8470 = vadd.f32 0.0, %v8469
      %v8471 = vpop.f32.mrb[0].mxu0
      %v8472 = vpop.f32.mrb[0].mxu0
      %v8473 = vadd.f32 0.0, %v8472
      %v8474 = vpop.f32.mrb[0].mxu0
      %8475 = vmatprep.mubr.bf16.mxu0 0
      %8476 = vmatmul.mubr.bf16.gmra.mrb[0].mxu0 %v8410
      %v8477 = vpop.f32.mrb[0].mxu0
      %v8478 = vadd.f32 0.0, %v8477
      %v8479 = vpop.f32.mrb[0].mxu0
      %v8480 = vpop.f32.mrb[0].mxu0
      %v8481 = vadd.f32 0.0, %v8480
      %v8482 = vpop.f32.mrb[0].mxu0
      %8483 = vmatprep.mubr.bf16.mxu0 0
      %8484 = vmatmul.mubr.bf16.gmra.mrb[0].mxu0 %v8413
      %v8485 = vpop.f32.mrb[0].mxu0
      %v8486 = vadd.f32 0.0, %v8485
      %v8487 = vpop.f32.mrb[0].mxu0
      %v8488 = vpop.f32.mrb[0].mxu0
      %v8489 = vadd.f32 0.0, %v8488
      %v8490 = vpop.f32.mrb[0].mxu0
      %8491 = vmatprep.mubr.bf16.mxu0 0
      %8492 = vmatmul.mubr.bf16.gmra.mrb[0].mxu0 %v8416
      %v8493 = vpop.f32.mrb[0].mxu0
      %v8494 = vadd.f32 0.0, %v8493
      %v8495 = vpop.f32.mrb[0].mxu0
      %v8496 = vpop.f32.mrb[0].mxu0
      %v8497 = vadd.f32 0.0, %v8496
      %v8498 = vpop.f32.mrb[0].mxu0
      %8499 = vmatprep.mubr.bf16.mxu0 0
      %8500 = vmatmul.mubr.bf16.gmra.mrb[0].mxu0 %v8419
      %v8501 = vpop.f32.mrb[0].mxu0
      %v8502 = vadd.f32 0.0, %v8501
      %v8503 = vpop.f32.mrb[0].mxu0
      %v8504 = vpop.f32.mrb[0].mxu0
      %v8505 = vadd.f32 0.0, %v8504
      %v8506 = vpop.f32.mrb[0].mxu0
      %8507 = vmatprep.mubr.bf16.mxu0 0
      %8508 = vmatmul.mubr.bf16.gmra.mrb[0].mxu0 %v8422
      %v8509 = vpop.f32.mrb[0].mxu0
      %v8510 = vadd.f32 0.0, %v8509
      %v8511 = vpop.f32.mrb[0].mxu0
      %v8512 = vpop.f32.mrb[0].mxu0
      %v8513 = vadd.f32 0.0, %v8512
      %v8514 = vpop.f32.mrb[0].mxu0
      %8515 = vmatprep.mubr.bf16.mxu0 0
      %8516 = vmatmul.mubr.bf16.gmra.mrb[0].mxu0 %v8425
      %v8517 = vpop.f32.mrb[0].mxu0
      %v8518 = vadd.f32 0.0, %v8517
      %v8519 = vpop.f32.mrb[0].mxu0
      %v8520 = vpop.f32.mrb[0].mxu0
      %v8521 = vadd.f32 0.0, %v8520
      %v8522 = vpop.f32.mrb[0].mxu0
      %8523 = vdwg.mxu0
      %v8524 = vadd.f32 %v8130, %v8462
      %v8525 = vadd.f32 %v8131, %v8465
      %v8526 = vadd.f32 %v8132, %v8470
      %v8527 = vadd.f32 %v8133, %v8473
      %v8528 = vadd.f32 %v8134, %v8478
      %v8529 = vadd.f32 %v8135, %v8481
      %v8530 = vadd.f32 %v8136, %v8486
      %v8531 = vadd.f32 %v8137, %v8489
      %v8532 = vadd.f32 %v8138, %v8494
      %v8533 = vadd.f32 %v8139, %v8497
      %v8534 = vadd.f32 %v8140, %v8502
      %v8535 = vadd.f32 %v8141, %v8505
      %v8536 = vadd.f32 %v8142, %v8510
      %v8537 = vadd.f32 %v8143, %v8513
      %v8538 = vadd.f32 %v8144, %v8518
      %v8539 = vadd.f32 %v8145, %v8521
      %v8540 = vld [vmem:[%s7935] sm:$0xe]
      %v8541 = vld [vmem:[%s7935 + $0xc] sm:$0xe]
      %v8542 = vld [vmem:[%s7935 + $0x18] sm:$0xe]
      %v8543 = vld [vmem:[%s7935 + $0x24] sm:$0xe]
      %v8544 = vld [vmem:[%s7935 + $0x30] sm:$0xe]
      %v8545 = vld [vmem:[%s7935 + $0x3c] sm:$0xe]
      %v8546 = vld [vmem:[%s7935 + $0x48] sm:$0xe]
      %v8547 = vld [vmem:[%s7935 + $0x54] sm:$0xe]
      %v8572 = vrot.slane %v8540, 5
      %v8573 = vrot.slane %v8572, 4
      %v8574 = vrot.slane %v8147, 5
      %v8575 = vsel %vm4122, %v8573, %v8574
      %v8576 = vrot.slane %v8574, 4
      %v8577 = vrot.slane %v8148, 5
      %v8578 = vsel %vm4122, %v8576, %v8577
      %v8579 = vrot.slane %v8541, 5
      %v8580 = vrot.slane %v8579, 4
      %v8581 = vrot.slane %v8150, 5
      %v8582 = vsel %vm4122, %v8580, %v8581
      %v8583 = vrot.slane %v8581, 4
      %v8584 = vrot.slane %v8151, 5
      %v8585 = vsel %vm4122, %v8583, %v8584
      %v8586 = vrot.slane %v8542, 5
      %v8587 = vrot.slane %v8586, 4
      %v8588 = vrot.slane %v8153, 5
      %v8589 = vsel %vm4122, %v8587, %v8588
      %v8590 = vrot.slane %v8588, 4
      %v8591 = vrot.slane %v8154, 5
      %v8592 = vsel %vm4122, %v8590, %v8591
      %v8593 = vrot.slane %v8543, 5
      %v8594 = vrot.slane %v8593, 4
      %v8595 = vrot.slane %v8156, 5
      %v8596 = vsel %vm4122, %v8594, %v8595
      %v8597 = vrot.slane %v8595, 4
      %v8598 = vrot.slane %v8157, 5
      %v8599 = vsel %vm4122, %v8597, %v8598
      %v8600 = vrot.slane %v8544, 5
      %v8601 = vrot.slane %v8600, 4
      %v8602 = vrot.slane %v8159, 5
      %v8603 = vsel %vm4122, %v8601, %v8602
      %v8604 = vrot.slane %v8602, 4
      %v8605 = vrot.slane %v8160, 5
      %v8606 = vsel %vm4122, %v8604, %v8605
      %v8607 = vrot.slane %v8545, 5
      %v8608 = vrot.slane %v8607, 4
      %v8609 = vrot.slane %v8162, 5
      %v8610 = vsel %vm4122, %v8608, %v8609
      %v8611 = vrot.slane %v8609, 4
      %v8612 = vrot.slane %v8163, 5
      %v8613 = vsel %vm4122, %v8611, %v8612
      %v8614 = vrot.slane %v8546, 5
      %v8615 = vrot.slane %v8614, 4
      %v8616 = vrot.slane %v8165, 5
      %v8617 = vsel %vm4122, %v8615, %v8616
      %v8618 = vrot.slane %v8616, 4
      %v8619 = vrot.slane %v8166, 5
      %v8620 = vsel %vm4122, %v8618, %v8619
      %v8621 = vrot.slane %v8547, 5
      %v8622 = vrot.slane %v8621, 4
      %v8623 = vrot.slane %v8168, 5
      %v8624 = vsel %vm4122, %v8622, %v8623
      %v8625 = vrot.slane %v8623, 4
      %v8626 = vrot.slane %v8169, 5
      %v8627 = vsel %vm4122, %v8625, %v8626
      %s8628 = scalar_lea.vmem %s5, 80
      %v8629 = vld [vmem:[%s8628] sm:$0xf]
      %v8630 = vld [vmem:[%s8628 + $0x4] sm:$0xf]
      %v8631 = vld [vmem:[%s8628 + $0x8] sm:$0xf]
      %v8632 = vld [vmem:[%s8628 + $0xc] sm:$0xf]
      %v8633 = vunpack.c.l.b16 %v8575
      %v8634 = vunpack.c.l.b16 %v8578
      %v8635 = vunpack.c.l.b16 %v8582
      %v8636 = vunpack.c.l.b16 %v8585
      %v8637 = vunpack.c.l.b16 %v8589
      %v8638 = vunpack.c.l.b16 %v8592
      %v8639 = vunpack.c.l.b16 %v8596
      %v8640 = vunpack.c.l.b16 %v8599
      %v8641 = vunpack.c.l.b16 %v8603
      %v8642 = vunpack.c.l.b16 %v8606
      %v8643 = vunpack.c.l.b16 %v8610
      %v8644 = vunpack.c.l.b16 %v8613
      %v8645 = vunpack.c.l.b16 %v8617
      %v8646 = vunpack.c.l.b16 %v8620
      %v8647 = vunpack.c.l.b16 %v8624
      %v8648 = vunpack.c.l.b16 %v8627
      %v8649 = vpack.c.b16 %v8634, %v8633
      %v8650 = vpack.c.b16 %v8636, %v8635
      %v8651 = vpack.c.b16 %v8638, %v8637
      %v8652 = vpack.c.b16 %v8640, %v8639
      %v8653 = vpack.c.b16 %v8642, %v8641
      %v8654 = vpack.c.b16 %v8644, %v8643
      %v8655 = vpack.c.b16 %v8646, %v8645
      %v8656 = vpack.c.b16 %v8648, %v8647
      %v8661 = vunpack.c.l.b16 %v8629
      %v8662 = vunpack.c.l.b16 %v8630
      %v8663 = vunpack.c.l.b16 %v8631
      %v8664 = vunpack.c.l.b16 %v8632
      %v8665 = vpack.c.b16 %v8662, %v8661
      %v8666 = vpack.c.b16 %v8664, %v8663
      %v8670 = vsel %vm7382, %v8649, 0
      %v8673 = vsel %vm7382, %v8650, 0
      %v8676 = vsel %vm7382, %v8651, 0
      %v8679 = vsel %vm7382, %v8652, 0
      %v8682 = vsel %vm7382, %v8653, 0
      %v8685 = vsel %vm7382, %v8654, 0
      %v8688 = vsel %vm7382, %v8655, 0
      %v8691 = vsel %vm7382, %v8656, 0
      %8693 = vmatprep.subr.bf16.mxu0 0
      %8694 = vmatpush1.bf16.msra.mxu0 %v8665
      %8695 = vmatprep.subr.bf16.mxu0 0
      %8696 = vmatpush1.bf16.msra.mxu0 %v8666
      %8697 = vmatprep.subr.bf16.mxu0 0
      %8698 = vmatpush1.bf16.msra.mxu0 0
      %8699 = vmatprep.subr.bf16.mxu0 0
      %8700 = vmatpush1.bf16.msra.mxu0 0
      %8701 = vmatprep.subr.bf16.mxu0 0
      %8702 = vmatpush1.bf16.msra.mxu0 0
      %8703 = vmatprep.subr.bf16.mxu0 0
      %8704 = vmatpush1.bf16.msra.mxu0 0
      %8705 = vmatprep.subr.bf16.mxu0 0
      %8706 = vmatpush1.bf16.msra.mxu0 0
      %8707 = vmatprep.subr.bf16.mxu0 0
      %8708 = vmatpush1.bf16.msra.mxu0 0
      %8709 = vmatprep.subr.bf16.mxu0 0
      %8710 = vmatpush1.bf16.msra.mxu0 0
      %8711 = vmatprep.subr.bf16.mxu0 0
      %8712 = vmatpush1.bf16.msra.mxu0 0
      %8713 = vmatprep.subr.bf16.mxu0 0
      %8714 = vmatpush1.bf16.msra.mxu0 0
      %8715 = vmatprep.subr.bf16.mxu0 0
      %8716 = vmatpush1.bf16.msra.mxu0 0
      %8717 = vmatprep.subr.bf16.mxu0 0
      %8718 = vmatpush1.bf16.msra.mxu0 0
      %8719 = vmatprep.subr.bf16.mxu0 0
      %8720 = vmatpush1.bf16.msra.mxu0 0
      %8721 = vmatprep.subr.bf16.mxu0 0
      %8722 = vmatpush1.bf16.msra.mxu0 0
      %8723 = vmatprep.subr.bf16.mxu0 0
      %8724 = vmatpush1.bf16.msra.mxu0 0
      %8725 = vmatprep.mubr.bf16.mxu0 0
      %8726 = vmatmul.mubr.bf16.gmra.mrb[0].mxu0 %v8670
      %v8727 = vpop.f32.mrb[0].mxu0
      %v8728 = vadd.f32 0.0, %v8727
      %v8729 = vpop.f32.mrb[0].mxu0
      %v8730 = vpop.f32.mrb[0].mxu0
      %v8731 = vadd.f32 0.0, %v8730
      %v8732 = vpop.f32.mrb[0].mxu0
      %8733 = vmatprep.mubr.bf16.mxu0 0
      %8734 = vmatmul.mubr.bf16.gmra.mrb[0].mxu0 %v8673
      %v8735 = vpop.f32.mrb[0].mxu0
      %v8736 = vadd.f32 0.0, %v8735
      %v8737 = vpop.f32.mrb[0].mxu0
      %v8738 = vpop.f32.mrb[0].mxu0
      %v8739 = vadd.f32 0.0, %v8738
      %v8740 = vpop.f32.mrb[0].mxu0
      %8741 = vmatprep.mubr.bf16.mxu0 0
      %8742 = vmatmul.mubr.bf16.gmra.mrb[0].mxu0 %v8676
      %v8743 = vpop.f32.mrb[0].mxu0
      %v8744 = vadd.f32 0.0, %v8743
      %v8745 = vpop.f32.mrb[0].mxu0
      %v8746 = vpop.f32.mrb[0].mxu0
      %v8747 = vadd.f32 0.0, %v8746
      %v8748 = vpop.f32.mrb[0].mxu0
      %8749 = vmatprep.mubr.bf16.mxu0 0
      %8750 = vmatmul.mubr.bf16.gmra.mrb[0].mxu0 %v8679
      %v8751 = vpop.f32.mrb[0].mxu0
      %v8752 = vadd.f32 0.0, %v8751
      %v8753 = vpop.f32.mrb[0].mxu0
      %v8754 = vpop.f32.mrb[0].mxu0
      %v8755 = vadd.f32 0.0, %v8754
      %v8756 = vpop.f32.mrb[0].mxu0
      %8757 = vmatprep.mubr.bf16.mxu0 0
      %8758 = vmatmul.mubr.bf16.gmra.mrb[0].mxu0 %v8682
      %v8759 = vpop.f32.mrb[0].mxu0
      %v8760 = vadd.f32 0.0, %v8759
      %v8761 = vpop.f32.mrb[0].mxu0
      %v8762 = vpop.f32.mrb[0].mxu0
      %v8763 = vadd.f32 0.0, %v8762
      %v8764 = vpop.f32.mrb[0].mxu0
      %8765 = vmatprep.mubr.bf16.mxu0 0
      %8766 = vmatmul.mubr.bf16.gmra.mrb[0].mxu0 %v8685
      %v8767 = vpop.f32.mrb[0].mxu0
      %v8768 = vadd.f32 0.0, %v8767
      %v8769 = vpop.f32.mrb[0].mxu0
      %v8770 = vpop.f32.mrb[0].mxu0
      %v8771 = vadd.f32 0.0, %v8770
      %v8772 = vpop.f32.mrb[0].mxu0
      %8773 = vmatprep.mubr.bf16.mxu0 0
      %8774 = vmatmul.mubr.bf16.gmra.mrb[0].mxu0 %v8688
      %v8775 = vpop.f32.mrb[0].mxu0
      %v8776 = vadd.f32 0.0, %v8775
      %v8777 = vpop.f32.mrb[0].mxu0
      %v8778 = vpop.f32.mrb[0].mxu0
      %v8779 = vadd.f32 0.0, %v8778
      %v8780 = vpop.f32.mrb[0].mxu0
      %8781 = vmatprep.mubr.bf16.mxu0 0
      %8782 = vmatmul.mubr.bf16.gmra.mrb[0].mxu0 %v8691
      %v8783 = vpop.f32.mrb[0].mxu0
      %v8784 = vadd.f32 0.0, %v8783
      %v8785 = vpop.f32.mrb[0].mxu0
      %v8786 = vpop.f32.mrb[0].mxu0
      %v8787 = vadd.f32 0.0, %v8786
      %v8788 = vpop.f32.mrb[0].mxu0
      %8789 = vdwg.mxu0
      %v8790 = vadd.f32 %v8524, %v8728
      %v8791 = vadd.f32 %v8525, %v8731
      %v8792 = vadd.f32 %v8526, %v8736
      %v8793 = vadd.f32 %v8527, %v8739
      %v8794 = vadd.f32 %v8528, %v8744
      %v8795 = vadd.f32 %v8529, %v8747
      %v8796 = vadd.f32 %v8530, %v8752
      %v8797 = vadd.f32 %v8531, %v8755
      %v8798 = vadd.f32 %v8532, %v8760
      %v8799 = vadd.f32 %v8533, %v8763
      %v8800 = vadd.f32 %v8534, %v8768
      %v8801 = vadd.f32 %v8535, %v8771
      %v8802 = vadd.f32 %v8536, %v8776
      %v8803 = vadd.f32 %v8537, %v8779
      %v8804 = vadd.f32 %v8538, %v8784
      %v8805 = vadd.f32 %v8539, %v8787
      %s8806 = scalar_lea.vmem [#allocation3], 24
      %v8807 = vld [vmem:[%s8806] sm:$0xf]
      %v8808 = vld [vmem:[%s8806 + $0x4] sm:$0xf]
      %v8809 = vld [vmem:[%s8806 + $0xc] sm:$0xf]
      %v8810 = vld [vmem:[%s8806 + $0x10] sm:$0xf]
      %v8811 = vld [vmem:[%s8806 + $0x18] sm:$0xf]
      %v8812 = vld [vmem:[%s8806 + $0x1c] sm:$0xf]
      %v8813 = vld [vmem:[%s8806 + $0x24] sm:$0xf]
      %v8814 = vld [vmem:[%s8806 + $0x28] sm:$0xf]
      %v8815 = vld [vmem:[%s8806 + $0x30] sm:$0xf]
      %v8816 = vld [vmem:[%s8806 + $0x34] sm:$0xf]
      %v8817 = vld [vmem:[%s8806 + $0x3c] sm:$0xf]
      %v8818 = vld [vmem:[%s8806 + $0x40] sm:$0xf]
      %v8819 = vld [vmem:[%s8806 + $0x48] sm:$0xf]
      %v8820 = vld [vmem:[%s8806 + $0x4c] sm:$0xf]
      %v8821 = vld [vmem:[%s8806 + $0x54] sm:$0xf]
      %v8822 = vld [vmem:[%s8806 + $0x58] sm:$0xf]
      %s8823 = scalar_lea.vmem %s5, 96
      %v8824 = vld [vmem:[%s8823] sm:$0xf]
      %v8825 = vld [vmem:[%s8823 + $0x4] sm:$0xf]
      %v8826 = vld [vmem:[%s8823 + $0x8] sm:$0xf]
      %v8827 = vld [vmem:[%s8823 + $0xc] sm:$0xf]
      %v8844 = vunpack.c.l.b16 %v8807
      %v8845 = vunpack.c.l.b16 %v8808
      %v8846 = vunpack.c.l.b16 %v8809
      %v8847 = vunpack.c.l.b16 %v8810
      %v8848 = vunpack.c.l.b16 %v8811
      %v8849 = vunpack.c.l.b16 %v8812
      %v8850 = vunpack.c.l.b16 %v8813
      %v8851 = vunpack.c.l.b16 %v8814
      %v8852 = vunpack.c.l.b16 %v8815
      %v8853 = vunpack.c.l.b16 %v8816
      %v8854 = vunpack.c.l.b16 %v8817
      %v8855 = vunpack.c.l.b16 %v8818
      %v8856 = vunpack.c.l.b16 %v8819
      %v8857 = vunpack.c.l.b16 %v8820
      %v8858 = vunpack.c.l.b16 %v8821
      %v8859 = vunpack.c.l.b16 %v8822
      %v8860 = vpack.c.b16 %v8845, %v8844
      %v8861 = vpack.c.b16 %v8847, %v8846
      %v8862 = vpack.c.b16 %v8849, %v8848
      %v8863 = vpack.c.b16 %v8851, %v8850
      %v8864 = vpack.c.b16 %v8853, %v8852
      %v8865 = vpack.c.b16 %v8855, %v8854
      %v8866 = vpack.c.b16 %v8857, %v8856
      %v8867 = vpack.c.b16 %v8859, %v8858
      %v8872 = vunpack.c.l.b16 %v8824
      %v8873 = vunpack.c.l.b16 %v8825
      %v8874 = vunpack.c.l.b16 %v8826
      %v8875 = vunpack.c.l.b16 %v8827
      %v8876 = vpack.c.b16 %v8873, %v8872
      %v8877 = vpack.c.b16 %v8875, %v8874
      %v8881 = vsel %vm7382, %v8860, 0
      %v8884 = vsel %vm7382, %v8861, 0
      %v8887 = vsel %vm7382, %v8862, 0
      %v8890 = vsel %vm7382, %v8863, 0
      %v8893 = vsel %vm7382, %v8864, 0
      %v8896 = vsel %vm7382, %v8865, 0
      %v8899 = vsel %vm7382, %v8866, 0
      %v8902 = vsel %vm7382, %v8867, 0
      %8904 = vmatprep.subr.bf16.mxu0 0
      %8905 = vmatpush1.bf16.msra.mxu0 %v8876
      %8906 = vmatprep.subr.bf16.mxu0 0
      %8907 = vmatpush1.bf16.msra.mxu0 %v8877
      %8908 = vmatprep.subr.bf16.mxu0 0
      %8909 = vmatpush1.bf16.msra.mxu0 0
      %8910 = vmatprep.subr.bf16.mxu0 0
      %8911 = vmatpush1.bf16.msra.mxu0 0
      %8912 = vmatprep.subr.bf16.mxu0 0
      %8913 = vmatpush1.bf16.msra.mxu0 0
      %8914 = vmatprep.subr.bf16.mxu0 0
      %8915 = vmatpush1.bf16.msra.mxu0 0
      %8916 = vmatprep.subr.bf16.mxu0 0
      %8917 = vmatpush1.bf16.msra.mxu0 0
      %8918 = vmatprep.subr.bf16.mxu0 0
      %8919 = vmatpush1.bf16.msra.mxu0 0
      %8920 = vmatprep.subr.bf16.mxu0 0
      %8921 = vmatpush1.bf16.msra.mxu0 0
      %8922 = vmatprep.subr.bf16.mxu0 0
      %8923 = vmatpush1.bf16.msra.mxu0 0
      %8924 = vmatprep.subr.bf16.mxu0 0
      %8925 = vmatpush1.bf16.msra.mxu0 0
      %8926 = vmatprep.subr.bf16.mxu0 0
      %8927 = vmatpush1.bf16.msra.mxu0 0
      %8928 = vmatprep.subr.bf16.mxu0 0
      %8929 = vmatpush1.bf16.msra.mxu0 0
      %8930 = vmatprep.subr.bf16.mxu0 0
      %8931 = vmatpush1.bf16.msra.mxu0 0
      %8932 = vmatprep.subr.bf16.mxu0 0
      %8933 = vmatpush1.bf16.msra.mxu0 0
      %8934 = vmatprep.subr.bf16.mxu0 0
      %8935 = vmatpush1.bf16.msra.mxu0 0
      %8936 = vmatprep.mubr.bf16.mxu0 0
      %8937 = vmatmul.mubr.bf16.gmra.mrb[0].mxu0 %v8881
      %v8938 = vpop.f32.mrb[0].mxu0
      %v8939 = vadd.f32 0.0, %v8938
      %v8940 = vpop.f32.mrb[0].mxu0
      %v8941 = vpop.f32.mrb[0].mxu0
      %v8942 = vadd.f32 0.0, %v8941
      %v8943 = vpop.f32.mrb[0].mxu0
      %8944 = vmatprep.mubr.bf16.mxu0 0
      %8945 = vmatmul.mubr.bf16.gmra.mrb[0].mxu0 %v8884
      %v8946 = vpop.f32.mrb[0].mxu0
      %v8947 = vadd.f32 0.0, %v8946
      %v8948 = vpop.f32.mrb[0].mxu0
      %v8949 = vpop.f32.mrb[0].mxu0
      %v8950 = vadd.f32 0.0, %v8949
      %v8951 = vpop.f32.mrb[0].mxu0
      %8952 = vmatprep.mubr.bf16.mxu0 0
      %8953 = vmatmul.mubr.bf16.gmra.mrb[0].mxu0 %v8887
      %v8954 = vpop.f32.mrb[0].mxu0
      %v8955 = vadd.f32 0.0, %v8954
      %v8956 = vpop.f32.mrb[0].mxu0
      %v8957 = vpop.f32.mrb[0].mxu0
      %v8958 = vadd.f32 0.0, %v8957
      %v8959 = vpop.f32.mrb[0].mxu0
      %8960 = vmatprep.mubr.bf16.mxu0 0
      %8961 = vmatmul.mubr.bf16.gmra.mrb[0].mxu0 %v8890
      %v8962 = vpop.f32.mrb[0].mxu0
      %v8963 = vadd.f32 0.0, %v8962
      %v8964 = vpop.f32.mrb[0].mxu0
      %v8965 = vpop.f32.mrb[0].mxu0
      %v8966 = vadd.f32 0.0, %v8965
      %v8967 = vpop.f32.mrb[0].mxu0
      %8968 = vmatprep.mubr.bf16.mxu0 0
      %8969 = vmatmul.mubr.bf16.gmra.mrb[0].mxu0 %v8893
      %v8970 = vpop.f32.mrb[0].mxu0
      %v8971 = vadd.f32 0.0, %v8970
      %v8972 = vpop.f32.mrb[0].mxu0
      %v8973 = vpop.f32.mrb[0].mxu0
      %v8974 = vadd.f32 0.0, %v8973
      %v8975 = vpop.f32.mrb[0].mxu0
      %8976 = vmatprep.mubr.bf16.mxu0 0
      %8977 = vmatmul.mubr.bf16.gmra.mrb[0].mxu0 %v8896
      %v8978 = vpop.f32.mrb[0].mxu0
      %v8979 = vadd.f32 0.0, %v8978
      %v8980 = vpop.f32.mrb[0].mxu0
      %v8981 = vpop.f32.mrb[0].mxu0
      %v8982 = vadd.f32 0.0, %v8981
      %v8983 = vpop.f32.mrb[0].mxu0
      %8984 = vmatprep.mubr.bf16.mxu0 0
      %8985 = vmatmul.mubr.bf16.gmra.mrb[0].mxu0 %v8899
      %v8986 = vpop.f32.mrb[0].mxu0
      %v8987 = vadd.f32 0.0, %v8986
      %v8988 = vpop.f32.mrb[0].mxu0
      %v8989 = vpop.f32.mrb[0].mxu0
      %v8990 = vadd.f32 0.0, %v8989
      %v8991 = vpop.f32.mrb[0].mxu0
      %8992 = vmatprep.mubr.bf16.mxu0 0
      %8993 = vmatmul.mubr.bf16.gmra.mrb[0].mxu0 %v8902
      %v8994 = vpop.f32.mrb[0].mxu0
      %v8995 = vadd.f32 0.0, %v8994
      %v8996 = vpop.f32.mrb[0].mxu0
      %v8997 = vpop.f32.mrb[0].mxu0
      %v8998 = vadd.f32 0.0, %v8997
      %v8999 = vpop.f32.mrb[0].mxu0
      %9000 = vdwg.mxu0
      %v9001 = vadd.f32 %v8790, %v8939
      %v9002 = vadd.f32 %v8791, %v8942
      %v9003 = vadd.f32 %v8792, %v8947
      %v9004 = vadd.f32 %v8793, %v8950
      %v9005 = vadd.f32 %v8794, %v8955
      %v9006 = vadd.f32 %v8795, %v8958
      %v9007 = vadd.f32 %v8796, %v8963
      %v9008 = vadd.f32 %v8797, %v8966
      %v9009 = vadd.f32 %v8798, %v8971
      %v9010 = vadd.f32 %v8799, %v8974
      %v9011 = vadd.f32 %v8800, %v8979
      %v9012 = vadd.f32 %v8801, %v8982
      %v9013 = vadd.f32 %v8802, %v8987
      %v9014 = vadd.f32 %v8803, %v8990
      %v9015 = vadd.f32 %v8804, %v8995
      %v9016 = vadd.f32 %v8805, %v8998
      %v9017 = vld [vmem:[%s8806] sm:$0xf]
      %v9018 = vld [vmem:[%s8806 + $0x4] sm:$0xf]
      %v9019 = vld [vmem:[%s8806 + $0x8] sm:$0x1]
      %v9020 = vld [vmem:[%s8806 + $0xc] sm:$0xf]
      %v9021 = vld [vmem:[%s8806 + $0x10] sm:$0xf]
      %v9022 = vld [vmem:[%s8806 + $0x14] sm:$0x1]
      %v9023 = vld [vmem:[%s8806 + $0x18] sm:$0xf]
      %v9024 = vld [vmem:[%s8806 + $0x1c] sm:$0xf]
      %v9025 = vld [vmem:[%s8806 + $0x20] sm:$0x1]
      %v9026 = vld [vmem:[%s8806 + $0x24] sm:$0xf]
      %v9027 = vld [vmem:[%s8806 + $0x28] sm:$0xf]
      %v9028 = vld [vmem:[%s8806 + $0x2c] sm:$0x1]
      %v9029 = vld [vmem:[%s8806 + $0x30] sm:$0xf]
      %v9030 = vld [vmem:[%s8806 + $0x34] sm:$0xf]
      %v9031 = vld [vmem:[%s8806 + $0x38] sm:$0x1]
      %v9032 = vld [vmem:[%s8806 + $0x3c] sm:$0xf]
      %v9033 = vld [vmem:[%s8806 + $0x40] sm:$0xf]
      %v9034 = vld [vmem:[%s8806 + $0x44] sm:$0x1]
      %v9035 = vld [vmem:[%s8806 + $0x48] sm:$0xf]
      %v9036 = vld [vmem:[%s8806 + $0x4c] sm:$0xf]
      %v9037 = vld [vmem:[%s8806 + $0x50] sm:$0x1]
      %v9038 = vld [vmem:[%s8806 + $0x54] sm:$0xf]
      %v9039 = vld [vmem:[%s8806 + $0x58] sm:$0xf]
      %v9040 = vld [vmem:[%s8806 + $0x5c] sm:$0x1]
      %v9042 = vshrl.u32 %v9017, 16
      %v9044 = vrot.slane %v9042, 4
      %v9045 = vshll.u32 %v9017, 16
      %v9047 = vrot.slane %v9045, 5
      %v9048 = vor.u32 %v9044, %v9047
      %v9049 = vrot.slane %v9048, 4
      %v9051 = vshll.u32 %v9018, 16
      %v9053 = vrot.slane %v9051, 5
      %v9054 = vsel %vm3425, %v9049, %v9053
      %v9055 = vshrl.u32 %v9018, 16
      %v9057 = vrot.slane %v9055, 4
      %v9058 = vor.u32 %v9057, %v9053
      %v9059 = vrot.slane %v9058, 4
      %v9061 = vshll.u32 %v9019, 16
      %v9063 = vrot.slane %v9061, 5
      %v9064 = vsel %vm3425, %v9059, %v9063
      %v9066 = vshrl.u32 %v9020, 16
      %v9068 = vrot.slane %v9066, 4
      %v9069 = vshll.u32 %v9020, 16
      %v9071 = vrot.slane %v9069, 5
      %v9072 = vor.u32 %v9068, %v9071
      %v9073 = vrot.slane %v9072, 4
      %v9075 = vshll.u32 %v9021, 16
      %v9077 = vrot.slane %v9075, 5
      %v9078 = vsel %vm3425, %v9073, %v9077
      %v9079 = vshrl.u32 %v9021, 16
      %v9081 = vrot.slane %v9079, 4
      %v9082 = vor.u32 %v9081, %v9077
      %v9083 = vrot.slane %v9082, 4
      %v9085 = vshll.u32 %v9022, 16
      %v9087 = vrot.slane %v9085, 5
      %v9088 = vsel %vm3425, %v9083, %v9087
      %v9090 = vshrl.u32 %v9023, 16
      %v9092 = vrot.slane %v9090, 4
      %v9093 = vshll.u32 %v9023, 16
      %v9095 = vrot.slane %v9093, 5
      %v9096 = vor.u32 %v9092, %v9095
      %v9097 = vrot.slane %v9096, 4
      %v9099 = vshll.u32 %v9024, 16
      %v9101 = vrot.slane %v9099, 5
      %v9102 = vsel %vm3425, %v9097, %v9101
      %v9103 = vshrl.u32 %v9024, 16
      %v9105 = vrot.slane %v9103, 4
      %v9106 = vor.u32 %v9105, %v9101
      %v9107 = vrot.slane %v9106, 4
      %v9109 = vshll.u32 %v9025, 16
      %v9111 = vrot.slane %v9109, 5
      %v9112 = vsel %vm3425, %v9107, %v9111
      %v9114 = vshrl.u32 %v9026, 16
      %v9116 = vrot.slane %v9114, 4
      %v9117 = vshll.u32 %v9026, 16
      %v9119 = vrot.slane %v9117, 5
      %v9120 = vor.u32 %v9116, %v9119
      %v9121 = vrot.slane %v9120, 4
      %v9123 = vshll.u32 %v9027, 16
      %v9125 = vrot.slane %v9123, 5
      %v9126 = vsel %vm3425, %v9121, %v9125
      %v9127 = vshrl.u32 %v9027, 16
      %v9129 = vrot.slane %v9127, 4
      %v9130 = vor.u32 %v9129, %v9125
      %v9131 = vrot.slane %v9130, 4
      %v9133 = vshll.u32 %v9028, 16
      %v9135 = vrot.slane %v9133, 5
      %v9136 = vsel %vm3425, %v9131, %v9135
      %v9138 = vshrl.u32 %v9029, 16
      %v9140 = vrot.slane %v9138, 4
      %v9141 = vshll.u32 %v9029, 16
      %v9143 = vrot.slane %v9141, 5
      %v9144 = vor.u32 %v9140, %v9143
      %v9145 = vrot.slane %v9144, 4
      %v9147 = vshll.u32 %v9030, 16
      %v9149 = vrot.slane %v9147, 5
      %v9150 = vsel %vm3425, %v9145, %v9149
      %v9151 = vshrl.u32 %v9030, 16
      %v9153 = vrot.slane %v9151, 4
      %v9154 = vor.u32 %v9153, %v9149
      %v9155 = vrot.slane %v9154, 4
      %v9157 = vshll.u32 %v9031, 16
      %v9159 = vrot.slane %v9157, 5
      %v9160 = vsel %vm3425, %v9155, %v9159
      %v9162 = vshrl.u32 %v9032, 16
      %v9164 = vrot.slane %v9162, 4
      %v9165 = vshll.u32 %v9032, 16
      %v9167 = vrot.slane %v9165, 5
      %v9168 = vor.u32 %v9164, %v9167
      %v9169 = vrot.slane %v9168, 4
      %v9171 = vshll.u32 %v9033, 16
      %v9173 = vrot.slane %v9171, 5
      %v9174 = vsel %vm3425, %v9169, %v9173
      %v9175 = vshrl.u32 %v9033, 16
      %v9177 = vrot.slane %v9175, 4
      %v9178 = vor.u32 %v9177, %v9173
      %v9179 = vrot.slane %v9178, 4
      %v9181 = vshll.u32 %v9034, 16
      %v9183 = vrot.slane %v9181, 5
      %v9184 = vsel %vm3425, %v9179, %v9183
      %v9186 = vshrl.u32 %v9035, 16
      %v9188 = vrot.slane %v9186, 4
      %v9189 = vshll.u32 %v9035, 16
      %v9191 = vrot.slane %v9189, 5
      %v9192 = vor.u32 %v9188, %v9191
      %v9193 = vrot.slane %v9192, 4
      %v9195 = vshll.u32 %v9036, 16
      %v9197 = vrot.slane %v9195, 5
      %v9198 = vsel %vm3425, %v9193, %v9197
      %v9199 = vshrl.u32 %v9036, 16
      %v9201 = vrot.slane %v9199, 4
      %v9202 = vor.u32 %v9201, %v9197
      %v9203 = vrot.slane %v9202, 4
      %v9205 = vshll.u32 %v9037, 16
      %v9207 = vrot.slane %v9205, 5
      %v9208 = vsel %vm3425, %v9203, %v9207
      %v9210 = vshrl.u32 %v9038, 16
      %v9212 = vrot.slane %v9210, 4
      %v9213 = vshll.u32 %v9038, 16
      %v9215 = vrot.slane %v9213, 5
      %v9216 = vor.u32 %v9212, %v9215
      %v9217 = vrot.slane %v9216, 4
      %v9219 = vshll.u32 %v9039, 16
      %v9221 = vrot.slane %v9219, 5
      %v9222 = vsel %vm3425, %v9217, %v9221
      %v9223 = vshrl.u32 %v9039, 16
      %v9225 = vrot.slane %v9223, 4
      %v9226 = vor.u32 %v9225, %v9221
      %v9227 = vrot.slane %v9226, 4
      %v9229 = vshll.u32 %v9040, 16
      %v9231 = vrot.slane %v9229, 5
      %v9232 = vsel %vm3425, %v9227, %v9231
      %s9233 = scalar_lea.vmem %s5, 112
      %v9234 = vld [vmem:[%s9233] sm:$0xf]
      %v9235 = vld [vmem:[%s9233 + $0x4] sm:$0xf]
      %v9236 = vld [vmem:[%s9233 + $0x8] sm:$0xf]
      %v9237 = vld [vmem:[%s9233 + $0xc] sm:$0xf]
      %v9238 = vunpack.c.l.b16 %v9054
      %v9239 = vunpack.c.l.b16 %v9064
      %v9240 = vunpack.c.l.b16 %v9078
      %v9241 = vunpack.c.l.b16 %v9088
      %v9242 = vunpack.c.l.b16 %v9102
      %v9243 = vunpack.c.l.b16 %v9112
      %v9244 = vunpack.c.l.b16 %v9126
      %v9245 = vunpack.c.l.b16 %v9136
      %v9246 = vunpack.c.l.b16 %v9150
      %v9247 = vunpack.c.l.b16 %v9160
      %v9248 = vunpack.c.l.b16 %v9174
      %v9249 = vunpack.c.l.b16 %v9184
      %v9250 = vunpack.c.l.b16 %v9198
      %v9251 = vunpack.c.l.b16 %v9208
      %v9252 = vunpack.c.l.b16 %v9222
      %v9253 = vunpack.c.l.b16 %v9232
      %v9254 = vpack.c.b16 %v9239, %v9238
      %v9255 = vpack.c.b16 %v9241, %v9240
      %v9256 = vpack.c.b16 %v9243, %v9242
      %v9257 = vpack.c.b16 %v9245, %v9244
      %v9258 = vpack.c.b16 %v9247, %v9246
      %v9259 = vpack.c.b16 %v9249, %v9248
      %v9260 = vpack.c.b16 %v9251, %v9250
      %v9261 = vpack.c.b16 %v9253, %v9252
      %v9266 = vunpack.c.l.b16 %v9234
      %v9267 = vunpack.c.l.b16 %v9235
      %v9268 = vunpack.c.l.b16 %v9236
      %v9269 = vunpack.c.l.b16 %v9237
      %v9270 = vpack.c.b16 %v9267, %v9266
      %v9271 = vpack.c.b16 %v9269, %v9268
      %v9275 = vsel %vm7382, %v9254, 0
      %v9278 = vsel %vm7382, %v9255, 0
      %v9281 = vsel %vm7382, %v9256, 0
      %v9284 = vsel %vm7382, %v9257, 0
      %v9287 = vsel %vm7382, %v9258, 0
      %v9290 = vsel %vm7382, %v9259, 0
      %v9293 = vsel %vm7382, %v9260, 0
      %v9296 = vsel %vm7382, %v9261, 0
      %9298 = vmatprep.subr.bf16.mxu0 0
      %9299 = vmatpush1.bf16.msra.mxu0 %v9270
      %9300 = vmatprep.subr.bf16.mxu0 0
      %9301 = vmatpush1.bf16.msra.mxu0 %v9271
      %9302 = vmatprep.subr.bf16.mxu0 0
      %9303 = vmatpush1.bf16.msra.mxu0 0
      %9304 = vmatprep.subr.bf16.mxu0 0
      %9305 = vmatpush1.bf16.msra.mxu0 0
      %9306 = vmatprep.subr.bf16.mxu0 0
      %9307 = vmatpush1.bf16.msra.mxu0 0
      %9308 = vmatprep.subr.bf16.mxu0 0
      %9309 = vmatpush1.bf16.msra.mxu0 0
      %9310 = vmatprep.subr.bf16.mxu0 0
      %9311 = vmatpush1.bf16.msra.mxu0 0
      %9312 = vmatprep.subr.bf16.mxu0 0
      %9313 = vmatpush1.bf16.msra.mxu0 0
      %9314 = vmatprep.subr.bf16.mxu0 0
      %9315 = vmatpush1.bf16.msra.mxu0 0
      %9316 = vmatprep.subr.bf16.mxu0 0
      %9317 = vmatpush1.bf16.msra.mxu0 0
      %9318 = vmatprep.subr.bf16.mxu0 0
      %9319 = vmatpush1.bf16.msra.mxu0 0
      %9320 = vmatprep.subr.bf16.mxu0 0
      %9321 = vmatpush1.bf16.msra.mxu0 0
      %9322 = vmatprep.subr.bf16.mxu0 0
      %9323 = vmatpush1.bf16.msra.mxu0 0
      %9324 = vmatprep.subr.bf16.mxu0 0
      %9325 = vmatpush1.bf16.msra.mxu0 0
      %9326 = vmatprep.subr.bf16.mxu0 0
      %9327 = vmatpush1.bf16.msra.mxu0 0
      %9328 = vmatprep.subr.bf16.mxu0 0
      %9329 = vmatpush1.bf16.msra.mxu0 0
      %9330 = vmatprep.mubr.bf16.mxu0 0
      %9331 = vmatmul.mubr.bf16.gmra.mrb[0].mxu0 %v9275
      %v9332 = vpop.f32.mrb[0].mxu0
      %v9333 = vadd.f32 0.0, %v9332
      %v9334 = vpop.f32.mrb[0].mxu0
      %v9335 = vpop.f32.mrb[0].mxu0
      %v9336 = vadd.f32 0.0, %v9335
      %v9337 = vpop.f32.mrb[0].mxu0
      %9338 = vmatprep.mubr.bf16.mxu0 0
      %9339 = vmatmul.mubr.bf16.gmra.mrb[0].mxu0 %v9278
      %v9340 = vpop.f32.mrb[0].mxu0
      %v9341 = vadd.f32 0.0, %v9340
      %v9342 = vpop.f32.mrb[0].mxu0
      %v9343 = vpop.f32.mrb[0].mxu0
      %v9344 = vadd.f32 0.0, %v9343
      %v9345 = vpop.f32.mrb[0].mxu0
      %9346 = vmatprep.mubr.bf16.mxu0 0
      %9347 = vmatmul.mubr.bf16.gmra.mrb[0].mxu0 %v9281
      %v9348 = vpop.f32.mrb[0].mxu0
      %v9349 = vadd.f32 0.0, %v9348
      %v9350 = vpop.f32.mrb[0].mxu0
      %v9351 = vpop.f32.mrb[0].mxu0
      %v9352 = vadd.f32 0.0, %v9351
      %v9353 = vpop.f32.mrb[0].mxu0
      %9354 = vmatprep.mubr.bf16.mxu0 0
      %9355 = vmatmul.mubr.bf16.gmra.mrb[0].mxu0 %v9284
      %v9356 = vpop.f32.mrb[0].mxu0
      %v9357 = vadd.f32 0.0, %v9356
      %v9358 = vpop.f32.mrb[0].mxu0
      %v9359 = vpop.f32.mrb[0].mxu0
      %v9360 = vadd.f32 0.0, %v9359
      %v9361 = vpop.f32.mrb[0].mxu0
      %9362 = vmatprep.mubr.bf16.mxu0 0
      %9363 = vmatmul.mubr.bf16.gmra.mrb[0].mxu0 %v9287
      %v9364 = vpop.f32.mrb[0].mxu0
      %v9365 = vadd.f32 0.0, %v9364
      %v9366 = vpop.f32.mrb[0].mxu0
      %v9367 = vpop.f32.mrb[0].mxu0
      %v9368 = vadd.f32 0.0, %v9367
      %v9369 = vpop.f32.mrb[0].mxu0
      %9370 = vmatprep.mubr.bf16.mxu0 0
      %9371 = vmatmul.mubr.bf16.gmra.mrb[0].mxu0 %v9290
      %v9372 = vpop.f32.mrb[0].mxu0
      %v9373 = vadd.f32 0.0, %v9372
      %v9374 = vpop.f32.mrb[0].mxu0
      %v9375 = vpop.f32.mrb[0].mxu0
      %v9376 = vadd.f32 0.0, %v9375
      %v9377 = vpop.f32.mrb[0].mxu0
      %9378 = vmatprep.mubr.bf16.mxu0 0
      %9379 = vmatmul.mubr.bf16.gmra.mrb[0].mxu0 %v9293
      %v9380 = vpop.f32.mrb[0].mxu0
      %v9381 = vadd.f32 0.0, %v9380
      %v9382 = vpop.f32.mrb[0].mxu0
      %v9383 = vpop.f32.mrb[0].mxu0
      %v9384 = vadd.f32 0.0, %v9383
      %v9385 = vpop.f32.mrb[0].mxu0
      %9386 = vmatprep.mubr.bf16.mxu0 0
      %9387 = vmatmul.mubr.bf16.gmra.mrb[0].mxu0 %v9296
      %v9388 = vpop.f32.mrb[0].mxu0
      %v9389 = vadd.f32 0.0, %v9388
      %v9390 = vpop.f32.mrb[0].mxu0
      %v9391 = vpop.f32.mrb[0].mxu0
      %v9392 = vadd.f32 0.0, %v9391
      %v9393 = vpop.f32.mrb[0].mxu0
      %9394 = vdwg.mxu0
      %v9395 = vadd.f32 %v9001, %v9333
      %v9396 = vadd.f32 %v9002, %v9336
      %v9397 = vadd.f32 %v9003, %v9341
      %v9398 = vadd.f32 %v9004, %v9344
      %v9399 = vadd.f32 %v9005, %v9349
      %v9400 = vadd.f32 %v9006, %v9352
      %v9401 = vadd.f32 %v9007, %v9357
      %v9402 = vadd.f32 %v9008, %v9360
      %v9403 = vadd.f32 %v9009, %v9365
      %v9404 = vadd.f32 %v9010, %v9368
      %v9405 = vadd.f32 %v9011, %v9373
      %v9406 = vadd.f32 %v9012, %v9376
      %v9407 = vadd.f32 %v9013, %v9381
      %v9408 = vadd.f32 %v9014, %v9384
      %v9409 = vadd.f32 %v9015, %v9389
      %v9410 = vadd.f32 %v9016, %v9392
      %v9411 = vld [vmem:[%s8806] sm:$0xe]
      %v9412 = vld [vmem:[%s8806 + $0xc] sm:$0xe]
      %v9413 = vld [vmem:[%s8806 + $0x18] sm:$0xe]
      %v9414 = vld [vmem:[%s8806 + $0x24] sm:$0xe]
      %v9415 = vld [vmem:[%s8806 + $0x30] sm:$0xe]
      %v9416 = vld [vmem:[%s8806 + $0x3c] sm:$0xe]
      %v9417 = vld [vmem:[%s8806 + $0x48] sm:$0xe]
      %v9418 = vld [vmem:[%s8806 + $0x54] sm:$0xe]
      %v9443 = vrot.slane %v9411, 5
      %v9444 = vrot.slane %v9443, 4
      %v9445 = vrot.slane %v9018, 5
      %v9446 = vsel %vm4122, %v9444, %v9445
      %v9447 = vrot.slane %v9445, 4
      %v9448 = vrot.slane %v9019, 5
      %v9449 = vsel %vm4122, %v9447, %v9448
      %v9450 = vrot.slane %v9412, 5
      %v9451 = vrot.slane %v9450, 4
      %v9452 = vrot.slane %v9021, 5
      %v9453 = vsel %vm4122, %v9451, %v9452
      %v9454 = vrot.slane %v9452, 4
      %v9455 = vrot.slane %v9022, 5
      %v9456 = vsel %vm4122, %v9454, %v9455
      %v9457 = vrot.slane %v9413, 5
      %v9458 = vrot.slane %v9457, 4
      %v9459 = vrot.slane %v9024, 5
      %v9460 = vsel %vm4122, %v9458, %v9459
      %v9461 = vrot.slane %v9459, 4
      %v9462 = vrot.slane %v9025, 5
      %v9463 = vsel %vm4122, %v9461, %v9462
      %v9464 = vrot.slane %v9414, 5
      %v9465 = vrot.slane %v9464, 4
      %v9466 = vrot.slane %v9027, 5
      %v9467 = vsel %vm4122, %v9465, %v9466
      %v9468 = vrot.slane %v9466, 4
      %v9469 = vrot.slane %v9028, 5
      %v9470 = vsel %vm4122, %v9468, %v9469
      %v9471 = vrot.slane %v9415, 5
      %v9472 = vrot.slane %v9471, 4
      %v9473 = vrot.slane %v9030, 5
      %v9474 = vsel %vm4122, %v9472, %v9473
      %v9475 = vrot.slane %v9473, 4
      %v9476 = vrot.slane %v9031, 5
      %v9477 = vsel %vm4122, %v9475, %v9476
      %v9478 = vrot.slane %v9416, 5
      %v9479 = vrot.slane %v9478, 4
      %v9480 = vrot.slane %v9033, 5
      %v9481 = vsel %vm4122, %v9479, %v9480
      %v9482 = vrot.slane %v9480, 4
      %v9483 = vrot.slane %v9034, 5
      %v9484 = vsel %vm4122, %v9482, %v9483
      %v9485 = vrot.slane %v9417, 5
      %v9486 = vrot.slane %v9485, 4
      %v9487 = vrot.slane %v9036, 5
      %v9488 = vsel %vm4122, %v9486, %v9487
      %v9489 = vrot.slane %v9487, 4
      %v9490 = vrot.slane %v9037, 5
      %v9491 = vsel %vm4122, %v9489, %v9490
      %v9492 = vrot.slane %v9418, 5
      %v9493 = vrot.slane %v9492, 4
      %v9494 = vrot.slane %v9039, 5
      %v9495 = vsel %vm4122, %v9493, %v9494
      %v9496 = vrot.slane %v9494, 4
      %v9497 = vrot.slane %v9040, 5
      %v9498 = vsel %vm4122, %v9496, %v9497
      %s9499 = scalar_lea.vmem %s5, 128
      %v9500 = vld [vmem:[%s9499] sm:$0xf]
      %v9501 = vld [vmem:[%s9499 + $0x4] sm:$0xf]
      %v9502 = vld [vmem:[%s9499 + $0x8] sm:$0xf]
      %v9503 = vld [vmem:[%s9499 + $0xc] sm:$0xf]
      %v9504 = vunpack.c.l.b16 %v9446
      %v9505 = vunpack.c.l.b16 %v9449
      %v9506 = vunpack.c.l.b16 %v9453
      %v9507 = vunpack.c.l.b16 %v9456
      %v9508 = vunpack.c.l.b16 %v9460
      %v9509 = vunpack.c.l.b16 %v9463
      %v9510 = vunpack.c.l.b16 %v9467
      %v9511 = vunpack.c.l.b16 %v9470
      %v9512 = vunpack.c.l.b16 %v9474
      %v9513 = vunpack.c.l.b16 %v9477
      %v9514 = vunpack.c.l.b16 %v9481
      %v9515 = vunpack.c.l.b16 %v9484
      %v9516 = vunpack.c.l.b16 %v9488
      %v9517 = vunpack.c.l.b16 %v9491
      %v9518 = vunpack.c.l.b16 %v9495
      %v9519 = vunpack.c.l.b16 %v9498
      %v9520 = vpack.c.b16 %v9505, %v9504
      %v9521 = vpack.c.b16 %v9507, %v9506
      %v9522 = vpack.c.b16 %v9509, %v9508
      %v9523 = vpack.c.b16 %v9511, %v9510
      %v9524 = vpack.c.b16 %v9513, %v9512
      %v9525 = vpack.c.b16 %v9515, %v9514
      %v9526 = vpack.c.b16 %v9517, %v9516
      %v9527 = vpack.c.b16 %v9519, %v9518
      %v9532 = vunpack.c.l.b16 %v9500
      %v9533 = vunpack.c.l.b16 %v9501
      %v9534 = vunpack.c.l.b16 %v9502
      %v9535 = vunpack.c.l.b16 %v9503
      %v9536 = vpack.c.b16 %v9533, %v9532
      %v9537 = vpack.c.b16 %v9535, %v9534
      %v9541 = vsel %vm7382, %v9520, 0
      %v9544 = vsel %vm7382, %v9521, 0
      %v9547 = vsel %vm7382, %v9522, 0
      %v9550 = vsel %vm7382, %v9523, 0
      %v9553 = vsel %vm7382, %v9524, 0
      %v9556 = vsel %vm7382, %v9525, 0
      %v9559 = vsel %vm7382, %v9526, 0
      %v9562 = vsel %vm7382, %v9527, 0
      %9564 = vmatprep.subr.bf16.mxu0 0
      %9565 = vmatpush1.bf16.msra.mxu0 %v9536
      %9566 = vmatprep.subr.bf16.mxu0 0
      %9567 = vmatpush1.bf16.msra.mxu0 %v9537
      %9568 = vmatprep.subr.bf16.mxu0 0
      %9569 = vmatpush1.bf16.msra.mxu0 0
      %9570 = vmatprep.subr.bf16.mxu0 0
      %9571 = vmatpush1.bf16.msra.mxu0 0
      %9572 = vmatprep.subr.bf16.mxu0 0
      %9573 = vmatpush1.bf16.msra.mxu0 0
      %9574 = vmatprep.subr.bf16.mxu0 0
      %9575 = vmatpush1.bf16.msra.mxu0 0
      %9576 = vmatprep.subr.bf16.mxu0 0
      %9577 = vmatpush1.bf16.msra.mxu0 0
      %9578 = vmatprep.subr.bf16.mxu0 0
      %9579 = vmatpush1.bf16.msra.mxu0 0
      %9580 = vmatprep.subr.bf16.mxu0 0
      %9581 = vmatpush1.bf16.msra.mxu0 0
      %9582 = vmatprep.subr.bf16.mxu0 0
      %9583 = vmatpush1.bf16.msra.mxu0 0
      %9584 = vmatprep.subr.bf16.mxu0 0
      %9585 = vmatpush1.bf16.msra.mxu0 0
      %9586 = vmatprep.subr.bf16.mxu0 0
      %9587 = vmatpush1.bf16.msra.mxu0 0
      %9588 = vmatprep.subr.bf16.mxu0 0
      %9589 = vmatpush1.bf16.msra.mxu0 0
      %9590 = vmatprep.subr.bf16.mxu0 0
      %9591 = vmatpush1.bf16.msra.mxu0 0
      %9592 = vmatprep.subr.bf16.mxu0 0
      %9593 = vmatpush1.bf16.msra.mxu0 0
      %9594 = vmatprep.subr.bf16.mxu0 0
      %9595 = vmatpush1.bf16.msra.mxu0 0
      %9596 = vmatprep.mubr.bf16.mxu0 0
      %9597 = vmatmul.mubr.bf16.gmra.mrb[0].mxu0 %v9541
      %v9598 = vpop.f32.mrb[0].mxu0
      %v9599 = vadd.f32 0.0, %v9598
      %v9600 = vpop.f32.mrb[0].mxu0
      %v9601 = vpop.f32.mrb[0].mxu0
      %v9602 = vadd.f32 0.0, %v9601
      %v9603 = vpop.f32.mrb[0].mxu0
      %9604 = vmatprep.mubr.bf16.mxu0 0
      %9605 = vmatmul.mubr.bf16.gmra.mrb[0].mxu0 %v9544
      %v9606 = vpop.f32.mrb[0].mxu0
      %v9607 = vadd.f32 0.0, %v9606
      %v9608 = vpop.f32.mrb[0].mxu0
      %v9609 = vpop.f32.mrb[0].mxu0
      %v9610 = vadd.f32 0.0, %v9609
      %v9611 = vpop.f32.mrb[0].mxu0
      %9612 = vmatprep.mubr.bf16.mxu0 0
      %9613 = vmatmul.mubr.bf16.gmra.mrb[0].mxu0 %v9547
      %v9614 = vpop.f32.mrb[0].mxu0
      %v9615 = vadd.f32 0.0, %v9614
      %v9616 = vpop.f32.mrb[0].mxu0
      %v9617 = vpop.f32.mrb[0].mxu0
      %v9618 = vadd.f32 0.0, %v9617
      %v9619 = vpop.f32.mrb[0].mxu0
      %9620 = vmatprep.mubr.bf16.mxu0 0
      %9621 = vmatmul.mubr.bf16.gmra.mrb[0].mxu0 %v9550
      %v9622 = vpop.f32.mrb[0].mxu0
      %v9623 = vadd.f32 0.0, %v9622
      %v9624 = vpop.f32.mrb[0].mxu0
      %v9625 = vpop.f32.mrb[0].mxu0
      %v9626 = vadd.f32 0.0, %v9625
      %v9627 = vpop.f32.mrb[0].mxu0
      %9628 = vmatprep.mubr.bf16.mxu0 0
      %9629 = vmatmul.mubr.bf16.gmra.mrb[0].mxu0 %v9553
      %v9630 = vpop.f32.mrb[0].mxu0
      %v9631 = vadd.f32 0.0, %v9630
      %v9632 = vpop.f32.mrb[0].mxu0
      %v9633 = vpop.f32.mrb[0].mxu0
      %v9634 = vadd.f32 0.0, %v9633
      %v9635 = vpop.f32.mrb[0].mxu0
      %9636 = vmatprep.mubr.bf16.mxu0 0
      %9637 = vmatmul.mubr.bf16.gmra.mrb[0].mxu0 %v9556
      %v9638 = vpop.f32.mrb[0].mxu0
      %v9639 = vadd.f32 0.0, %v9638
      %v9640 = vpop.f32.mrb[0].mxu0
      %v9641 = vpop.f32.mrb[0].mxu0
      %v9642 = vadd.f32 0.0, %v9641
      %v9643 = vpop.f32.mrb[0].mxu0
      %9644 = vmatprep.mubr.bf16.mxu0 0
      %9645 = vmatmul.mubr.bf16.gmra.mrb[0].mxu0 %v9559
      %v9646 = vpop.f32.mrb[0].mxu0
      %v9647 = vadd.f32 0.0, %v9646
      %v9648 = vpop.f32.mrb[0].mxu0
      %v9649 = vpop.f32.mrb[0].mxu0
      %v9650 = vadd.f32 0.0, %v9649
      %v9651 = vpop.f32.mrb[0].mxu0
      %9652 = vmatprep.mubr.bf16.mxu0 0
      %9653 = vmatmul.mubr.bf16.gmra.mrb[0].mxu0 %v9562
      %v9654 = vpop.f32.mrb[0].mxu0
      %v9655 = vadd.f32 0.0, %v9654
      %v9656 = vpop.f32.mrb[0].mxu0
      %v9657 = vpop.f32.mrb[0].mxu0
      %v9658 = vadd.f32 0.0, %v9657
      %v9659 = vpop.f32.mrb[0].mxu0
      %9660 = vdwg.mxu0
      %v9661 = vadd.f32 %v9395, %v9599
      %v9662 = vadd.f32 %v9396, %v9602
      %v9663 = vadd.f32 %v9397, %v9607
      %v9664 = vadd.f32 %v9398, %v9610
      %v9665 = vadd.f32 %v9399, %v9615
      %v9666 = vadd.f32 %v9400, %v9618
      %v9667 = vadd.f32 %v9401, %v9623
      %v9668 = vadd.f32 %v9402, %v9626
      %v9669 = vadd.f32 %v9403, %v9631
      %v9670 = vadd.f32 %v9404, %v9634
      %v9671 = vadd.f32 %v9405, %v9639
      %v9672 = vadd.f32 %v9406, %v9642
      %v9673 = vadd.f32 %v9407, %v9647
      %v9674 = vadd.f32 %v9408, %v9650
      %v9675 = vadd.f32 %v9409, %v9655
      %v9676 = vadd.f32 %v9410, %v9658
      %v9677 = vld [vmem:[%s6] sm:$0x1]
      %v9679 = vlaneseq
      %v9680 = vshrl.u32 %v9679, 7
      %v9681 = vsub.s32 0, %v9680
      %v9682 = vrot.slane %v9677, %v9681
      %v9684 = vadd.f32 %v9661, %v9682
      %v9685 = vadd.f32 %v9662, %v9682
      %v9686 = vadd.f32 %v9663, %v9682
      %v9687 = vadd.f32 %v9664, %v9682
      %v9688 = vadd.f32 %v9665, %v9682
      %v9689 = vadd.f32 %v9666, %v9682
      %v9690 = vadd.f32 %v9667, %v9682
      %v9691 = vadd.f32 %v9668, %v9682
      %v9692 = vadd.f32 %v9669, %v9682
      %v9693 = vadd.f32 %v9670, %v9682
      %v9694 = vadd.f32 %v9671, %v9682
      %v9695 = vadd.f32 %v9672, %v9682
      %v9696 = vadd.f32 %v9673, %v9682
      %v9697 = vadd.f32 %v9674, %v9682
      %v9698 = vadd.f32 %v9675, %v9682
      %v9699 = vadd.f32 %v9676, %v9682
      %vm9700 = vcmask 31744
      %9701 = vst.msk [vmem:[%s316] sm:$0xff] %vm9700, %v9684
      %9702 = vst.msk [vmem:[%s316 + $0x8] sm:$0xff] %vm9700, %v9685
      %9703 = vst.msk [vmem:[%s316 + $0x10] sm:$0xff] %vm9700, %v9686
      %9704 = vst.msk [vmem:[%s316 + $0x18] sm:$0xff] %vm9700, %v9687
      %9705 = vst.msk [vmem:[%s316 + $0x20] sm:$0xff] %vm9700, %v9688
      %9706 = vst.msk [vmem:[%s316 + $0x28] sm:$0xff] %vm9700, %v9689
      %9707 = vst.msk [vmem:[%s316 + $0x30] sm:$0xff] %vm9700, %v9690
      %9708 = vst.msk [vmem:[%s316 + $0x38] sm:$0xff] %vm9700, %v9691
      %9709 = vst.msk [vmem:[%s316 + $0x40] sm:$0xff] %vm9700, %v9692
      %9710 = vst.msk [vmem:[%s316 + $0x48] sm:$0xff] %vm9700, %v9693
      %9711 = vst.msk [vmem:[%s316 + $0x50] sm:$0xff] %vm9700, %v9694
      %9712 = vst.msk [vmem:[%s316 + $0x58] sm:$0xff] %vm9700, %v9695
      %9713 = vst.msk [vmem:[%s316 + $0x60] sm:$0xff] %vm9700, %v9696
      %9714 = vst.msk [vmem:[%s316 + $0x68] sm:$0xff] %vm9700, %v9697
      %9715 = vst.msk [vmem:[%s316 + $0x70] sm:$0xff] %vm9700, %v9698
      %9716 = vst.msk [vmem:[%s316 + $0x78] sm:$0xff] %vm9700, %v9699
      %s9717 = smul.u32 8, %s23
      %p9718 = scmp.lt.s32.totalorder %s22, 1
      %s9719 = scalar_select %p9718, %s22, 1
      %p9720 = scmp.lt.s32.totalorder %s9717, 15
      %s9721 = scalar_select %p9720, %s9717, 15
      %s9722 = smul.addr %s9721, 2
      %s9723 = smul.addr %s9719, 32
      %s9724 = sadd.s32 %s9722, %s9723
      %s9725 = smul.addr %s9724, 8
      %s9726 = scalar_lea.vmem %s7, %s9725
      // Predicated region
      $region49: #{espcn_forward.1} parent=47 // pred_check
        %p9727 = pneg %p204
      $region50: #{espcn_forward.1} parent=47 // pred_check_branch
        %9729 = sbr.rel (%p9727) target = $region52
      $region51: #{espcn_forward.1} parent=47 // pred_region
        %s9730 = smul.u32 8, %s23
      $region52: #{espcn_forward.1} parent=47 // pred_fallthru
        _
    $region48: #{espcn_forward.1} parent=5 // pred_fallthru
      _
    %p9731 = scmp.le.s32.totalorder 2, %s13
    // Predicated region
    $region53: #{espcn_forward.1} parent=5 // pred_check
      %p9732 = pneg %p9731
    $region54: #{espcn_forward.1} parent=5 // pred_check_branch
      %9734 = sbr.rel (%p9732) target = $region56
    $region55: #{espcn_forward.1} parent=5 // pred_region
      %s9735 = ssub.s32 %s13, 2
      // Predicated region
      $region57: #{espcn_forward.1} parent=55 // pred_check
        %p9736 = pneg %p210
      $region58: #{espcn_forward.1} parent=55 // pred_check_branch
        %9738 = sbr.rel (%p9736) target = $region60
      $region59: #{espcn_forward.1} parent=55 // pred_region
        %s9739 = smul.u32 8, %s25
        %p9740 = scmp.lt.s32.totalorder %s24, 1
        %s9741 = scalar_select %p9740, %s24, 1
        %p9742 = scmp.lt.s32.totalorder %s9739, 15
        %s9743 = scalar_select %p9742, %s9739, 15
        %s9744 = smul.addr %s9743, 2
        %s9745 = smul.addr %s9741, 32
        %s9746 = sadd.s32 %s9744, %s9745
        %s9747 = smul.addr %s9746, 8
        %s9748 = scalar_lea.vmem %s7, %s9747
      $region60: #{espcn_forward.1} parent=55 // pred_fallthru
        _
    $region56: #{espcn_forward.1} parent=5 // pred_fallthru
      _
  $region6: #{espcn_forward.1} parent=0 // loop_footer
    %s17 = sadd.s32 1, %s13
  $region7: #{espcn_forward.1} parent=0 // loop_footer_branch
    %12 = sbr.rel target = $region3
  $region8: #{espcn_forward.1} parent=0 // loop_exit
    _

</llo_original>
